<compile_context>
chip_gen: v5e
topology: v5e:2x2
jax: 0.10.0
libtpu: 0.0.40
codegen_flags: <defaults>
</compile_context>

<pallas_src>
import jax
import jax.numpy as jnp
from jax.experimental import pallas as pl
from jax.experimental.pallas import tpu as pltpu


_PARALLEL = pltpu.CompilerParams(dimension_semantics=("parallel",))


# ----------------------------------------------------------------------------
# Kernels
# ----------------------------------------------------------------------------
def _make_conv_pool_kernel(H, W, Wp, Cin, Cout):
    """Fused 3x3 same-conv + bias + ReLU + 2x2 max-pool for one image.

    The padded image is flattened over (H, W) and split by row-parity of the
    flat index (xe/xo), so every (dy, j) tap is a *contiguous* row slice.
    Output rows are pooled columns (h, w2); the two w-parities live in the lane
    dim (2*Cout), so the pool reduces to a lane-half max + a sublane-half max.
    """
    M2 = H * (Wp // 2)  # conv rows at w-pair granularity

    def kernel(xe_ref, xo_ref, w_ref, b_ref, o_ref):
        acc = jnp.zeros((M2, 2 * Cout), jnp.float32)
        for dy in range(3):
            for j in range(4):                      # j = w-parity + dx
                t = dy * 4 + j
                off = dy * Wp + j                   # offset in the flat padded image
                src = xe_ref if off % 2 == 0 else xo_ref
                lo = off // 2
                xs = src[lo:lo + M2, :]             # [M2, Cin] contiguous rows
                wt = w_ref[t]                       # [Cin, 2*Cout]
                if Cin == 1:
                    # conv1: K=1 -> VPU broadcast MAC in f32, skip the MXU.
                    acc = acc + xs.astype(jnp.float32) * wt.astype(jnp.float32)
                else:
                    acc = acc + jnp.dot(xs, wt, preferred_element_type=jnp.float32)
        acc = jnp.maximum(acc + b_ref[...], 0.0)                    # bias + ReLU (f32)
        mw = jnp.maximum(acc[:, :Cout], acc[:, Cout:])              # pool over w (parity lanes)
        y = mw.reshape(H // 2, Wp, Cout)                            # tile-aligned split (Wp % 8 == 0)
        mp = jnp.maximum(y[:, :Wp // 2, :], y[:, Wp // 2:, :])      # pool over h
        o_ref[...] = mp[:, :W // 2, :].astype(o_ref.dtype)          # drop pad columns

    return kernel


def _make_conv_kernel(H, W, Wp, Cin, Cout):
    """Fused 3x3 same-conv + bias + ReLU; output kept in flat [H*Wp, Cout] form."""
    M = H * Wp

    def kernel(x_ref, w_ref, b_ref, o_ref):
        acc = jnp.zeros((M, Cout), jnp.float32)
        for dy in range(3):
            for dx in range(3):
                off = dy * Wp + dx
                xs = x_ref[off:off + M, :]          # [M, Cin] contiguous rows
                acc = acc + jnp.dot(xs, w_ref[dy * 3 + dx],
                                    preferred_element_type=jnp.float32)
        acc = jnp.maximum(acc + b_ref[...], 0.0)
        o_ref[...] = acc.astype(o_ref.dtype)

    return kernel


def _head_kernel(x_ref, w1_ref, b1_ref, w2_ref, b2_ref, o_ref):
    """Fused classifier head: fc1 + bias + ReLU + fc2 + bias + softmax."""
    h = jnp.dot(x_ref[...], w1_ref[...], preferred_element_type=jnp.float32)
    h = jnp.maximum(h + b1_ref[...], 0.0)
    logits = jnp.dot(h.astype(jnp.bfloat16), w2_ref[...],
                     preferred_element_type=jnp.float32) + b2_ref[...]
    m = jnp.max(logits, axis=-1, keepdims=True)
    e = jnp.exp(logits - m)
    s = jnp.sum(e, axis=-1, keepdims=True)
    o_ref[...] = (e * pl.reciprocal(s, approx=True)).astype(o_ref.dtype)


# ----------------------------------------------------------------------------
# Wrappers (glue is only: zero-pad, metadata reshapes, parity split of input)
# ----------------------------------------------------------------------------
def conv3x3_relu_pool(x_nhwc, w_big, b2, *, Wp, Cout, out_dtype=jnp.bfloat16):
    """Conv2d(k=3,s=1,p=1) + ReLU + MaxPool2d(2,2), one image per grid step."""
    B, H, W, Cin = x_nhwc.shape
    Lp = (H + 3) * Wp
    xp = jnp.pad(x_nhwc, ((0, 0), (1, 2), (1, Wp - 1 - W), (0, 0)))
    xf = xp.reshape(B, Lp, Cin)
    x_even = xf[:, 0::2, :]
    x_odd = xf[:, 1::2, :]
    kernel = _make_conv_pool_kernel(H, W, Wp, Cin, Cout)
    return pl.pallas_call(
        kernel,
        out_shape=jax.ShapeDtypeStruct((B, H // 2, W // 2, Cout), out_dtype),
        grid=(B,),
        in_specs=[
            pl.BlockSpec((None, Lp // 2, Cin), lambda b: (b, 0, 0)),
            pl.BlockSpec((None, Lp // 2, Cin), lambda b: (b, 0, 0)),
            pl.BlockSpec((12, Cin, 2 * Cout), lambda b: (0, 0, 0)),
            pl.BlockSpec((1, 2 * Cout), lambda b: (0, 0)),
        ],
        out_specs=pl.BlockSpec((None, H // 2, W // 2, Cout), lambda b: (b, 0, 0, 0)),
        compiler_params=_PARALLEL,
    )(x_even, x_odd, w_big, b2)


def conv3x3_relu(x_nhwc, w_taps, b, *, Wp, Cout, out_dtype=jnp.bfloat16):
    """Conv2d(k=3,s=1,p=1) + ReLU; output stays in flat [H*Wp, Cout] layout
    (the two pad columns per row are absorbed by zero rows of fc1's weight)."""
    B, H, W, Cin = x_nhwc.shape
    Lp = (H + 3) * Wp
    xp = jnp.pad(x_nhwc, ((0, 0), (1, 2), (1, Wp - 1 - W), (0, 0)))
    xf = xp.reshape(B, Lp, Cin)
    kernel = _make_conv_kernel(H, W, Wp, Cin, Cout)
    return pl.pallas_call(
        kernel,
        out_shape=jax.ShapeDtypeStruct((B, H * Wp, Cout), out_dtype),
        grid=(B,),
        in_specs=[
            pl.BlockSpec((None, Lp, Cin), lambda b: (b, 0, 0)),
            pl.BlockSpec((9, Cin, Cout), lambda b: (0, 0, 0)),
            pl.BlockSpec((1, Cout), lambda b: (0, 0)),
        ],
        out_specs=pl.BlockSpec((None, H * Wp, Cout), lambda b: (b, 0, 0)),
        compiler_params=_PARALLEL,
    )(xf, w_taps, b)


def dense_head(xflat, w1, b1, w2, b2):
    """Fused fc1 + ReLU + fc2 + softmax over row tiles of the batch."""
    B, K = xflat.shape
    TB = B if B <= 128 else 128
    return pl.pallas_call(
        _head_kernel,
        out_shape=jax.ShapeDtypeStruct((B, 10), jnp.float32),
        grid=(pl.cdiv(B, TB),),
        in_specs=[
            pl.BlockSpec((TB, K), lambda i: (i, 0)),
            pl.BlockSpec((K, 128), lambda i: (0, 0)),
            pl.BlockSpec((1, 128), lambda i: (0, 0)),
            pl.BlockSpec((128, 10), lambda i: (0, 0)),
            pl.BlockSpec((1, 10), lambda i: (0, 0)),
        ],
        out_specs=pl.BlockSpec((TB, 10), lambda i: (i, 0)),
        compiler_params=_PARALLEL,
    )(xflat, w1, b1, w2, b2)


# ----------------------------------------------------------------------------
# One-time weight preprocessing (hoisted out of the forward pass)
# ----------------------------------------------------------------------------
def _prep_conv_pool_weights(w_oihw, b_o, dtype):
    """Torch [O,I,3,3] -> [12, I, 2*O]; taps indexed (dy, j=dx+p), lanes (p, o)."""
    O, I = w_oihw.shape[0], w_oihw.shape[1]
    wb = jnp.zeros((3, 4, I, 2, O), jnp.float32)
    for p in range(2):
        for dx in range(3):
            tap = jnp.transpose(w_oihw[:, :, :, dx], (2, 1, 0))   # [3(dy), I, O]
            wb = wb.at[:, p + dx, :, p, :].set(tap)
    w_big = wb.reshape(12, I, 2 * O).astype(dtype)
    b2 = jnp.tile(b_o.reshape(1, O).astype(jnp.float32), (1, 2))
    return w_big, b2


def _prep_conv_weights(w_oihw, b_o, dtype):
    """Torch [O,I,3,3] -> per-tap [9, I, O] (tap index = dy*3+dx)."""
    O, I = w_oihw.shape[0], w_oihw.shape[1]
    w_taps = jnp.transpose(w_oihw, (2, 3, 1, 0)).reshape(9, I, O).astype(dtype)
    return w_taps, b_o.reshape(1, O).astype(jnp.float32)


def prepare_params(raw):
    p = {}
    p["c1_w"], p["c1_b"] = _prep_conv_pool_weights(raw["w1"], raw["b1"], jnp.float32)   # VPU path
    p["c2_w"], p["c2_b"] = _prep_conv_pool_weights(raw["w2"], raw["b2"], jnp.bfloat16)
    p["c3_w"], p["c3_b"] = _prep_conv_weights(raw["w3"], raw["b3"], jnp.bfloat16)
    # fc1 absorbs (a) torch's (C,H,W) flatten order and (b) conv3's flat [7,9,64]
    # output layout (2 zero-weight pad columns) -> no activation transpose/crop.
    t = raw["fc1_w"].reshape(128, 64, 7, 7)            # [out, c, h, w]
    t = jnp.transpose(t, (2, 3, 1, 0))                 # [h, w, c, out]
    t = jnp.pad(t, ((0, 0), (0, 2), (0, 0), (0, 0)))   # w: 7 -> Wp=9
    p["fc1_w"] = t.reshape(7 * 9 * 64, 128).astype(jnp.bfloat16)
    p["fc1_b"] = raw["fc1_b"].reshape(1, 128).astype(jnp.float32)
    p["fc2_w"] = raw["fc2_w"].T.astype(jnp.bfloat16)   # [128, 10]
    p["fc2_b"] = raw["fc2_b"].reshape(1, 10).astype(jnp.float32)
    return p


def init_params(key):
    ks = jax.random.split(key, 10)

    def conv_w(k, o, i):
        return jax.random.normal(k, (o, i, 3, 3), jnp.float32) / jnp.sqrt(9.0 * i)

    def lin_w(k, o, i):
        return jax.random.normal(k, (o, i), jnp.float32) / jnp.sqrt(float(i))

    raw = {
        "w1": conv_w(ks[0], 16, 1),
        "b1": jax.random.normal(ks[1], (16,), jnp.float32) * 0.01,
        "w2": conv_w(ks[2], 32, 16),
        "b2": jax.random.normal(ks[3], (32,), jnp.float32) * 0.01,
        "w3": conv_w(ks[4], 64, 32),
        "b3": jax.random.normal(ks[5], (64,), jnp.float32) * 0.01,
        "fc1_w": lin_w(ks[6], 128, 7 * 7 * 64),   # torch Linear weight: [out, in]
        "fc1_b": jax.random.normal(ks[7], (128,), jnp.float32) * 0.01,
        "fc2_w": lin_w(ks[8], 10, 128),
        "fc2_b": jax.random.normal(ks[9], (10,), jnp.float32) * 0.01,
    }
    return prepare_params(raw)


# ----------------------------------------------------------------------------
# Forward pass (matches Net.forward semantics)
# ----------------------------------------------------------------------------
def net_forward(params, x_nchw):
    B = x_nchw.shape[0]
    x = x_nchw.astype(jnp.float32).reshape(B, 28, 28, 1)   # NCHW, C=1 -> NHWC (pure reshape)
    x = conv3x3_relu_pool(x, params["c1_w"], params["c1_b"], Wp=32, Cout=16)  # [B,14,14,16]
    x = conv3x3_relu_pool(x, params["c2_w"], params["c2_b"], Wp=16, Cout=32)  # [B, 7, 7,32]
    x = conv3x3_relu(x, params["c3_w"], params["c3_b"], Wp=9, Cout=64)        # [B,63,64]
    x = x.reshape(B, 7 * 9 * 64)                                              # [B,4032]
    return dense_head(x, params["fc1_w"], params["fc1_b"],
                      params["fc2_w"], params["fc2_b"])                       # [B,10]


if __name__ == "__main__":
    key = jax.random.PRNGKey(0)
    k_param, k_input = jax.random.split(key)
    params = init_params(k_param)
    # MNIST-style input: batch=2, NCHW [2,1,28,28] (28x28 is required by the
    # hard-coded 7*7*64 flatten in the module).
    x = jax.random.normal(k_input, (2, 1, 28, 28), jnp.float32)
    out = jax.block_until_ready(jax.jit(net_forward)(params, x))
    assert out.shape == (2, 10)
    assert bool(jnp.all(jnp.isfinite(out)))
    print("KERNEL_OK")
</pallas_src>

<mosaic_0001>
module attributes {stable_mosaic.version = 11 : i64} {
  func.func @kernel(%arg0: i32, %arg1: memref<1x496x1xf32, #tpu.memory_space<vmem>>, %arg2: memref<1x496x1xf32, #tpu.memory_space<vmem>>, %arg3: memref<12x1x32xf32, #tpu.memory_space<vmem>>, %arg4: memref<1x32xf32, #tpu.memory_space<vmem>>, %arg5: memref<1x14x14x16xbf16, #tpu.memory_space<vmem>>) attributes {dimension_semantics = [#tpu.dimension_semantics<parallel>], iteration_bounds = array<i64: 2>, scalar_prefetch = 0 : i64, scratch_operands = 0 : i64, tpu.core_type = #tpu.core_type<tc>, window_params = [{transform_indices = @transform_0, window_bounds = array<i64: 1, 496, 1>}, {transform_indices = @transform_1, window_bounds = array<i64: 1, 496, 1>}, {pipeline_mode = #tpu.pipeline_mode<synchronous>, transform_indices = @transform_2, window_bounds = array<i64: 12, 1, 32>}, {pipeline_mode = #tpu.pipeline_mode<synchronous>, transform_indices = @transform_3, window_bounds = array<i64: 1, 32>}, {transform_indices = @transform_4, window_bounds = array<i64: 1, 14, 14, 16>}]} {
    %cst = arith.constant 0.000000e+00 : f32
    %0 = vector.broadcast %cst : f32 to vector<448x32xf32>
    %c0 = arith.constant 0 : index
    %c0_0 = arith.constant 0 : index
    %c0_1 = arith.constant 0 : index
    %1 = vector.load %arg1[%c0, %c0_0, %c0_1] : memref<1x496x1xf32, #tpu.memory_space<vmem>>, vector<1x448x1xf32>
    %2 = vector.shape_cast %1 : vector<1x448x1xf32> to vector<448x1xf32>
    %c0_2 = arith.constant 0 : index
    %c0_3 = arith.constant 0 : index
    %c0_4 = arith.constant 0 : index
    %3 = vector.load %arg3[%c0_2, %c0_3, %c0_4] : memref<12x1x32xf32, #tpu.memory_space<vmem>>, vector<1x1x32xf32>
    %4 = vector.shape_cast %3 : vector<1x1x32xf32> to vector<1x32xf32>
    %5 = vector.broadcast %2 : vector<448x1xf32> to vector<448x32xf32>
    %6 = vector.broadcast %4 : vector<1x32xf32> to vector<448x32xf32>
    %7 = arith.mulf %5, %6 : vector<448x32xf32>
    %8 = arith.addf %0, %7 : vector<448x32xf32>
    %c0_5 = arith.constant 0 : index
    %c0_6 = arith.constant 0 : index
    %c0_7 = arith.constant 0 : index
    %9 = vector.load %arg2[%c0_5, %c0_6, %c0_7] : memref<1x496x1xf32, #tpu.memory_space<vmem>>, vector<1x448x1xf32>
    %10 = vector.shape_cast %9 : vector<1x448x1xf32> to vector<448x1xf32>
    %c1 = arith.constant 1 : index
    %c0_8 = arith.constant 0 : index
    %c0_9 = arith.constant 0 : index
    %11 = vector.load %arg3[%c1, %c0_8, %c0_9] : memref<12x1x32xf32, #tpu.memory_space<vmem>>, vector<1x1x32xf32>
    %12 = vector.shape_cast %11 : vector<1x1x32xf32> to vector<1x32xf32>
    %13 = vector.broadcast %10 : vector<448x1xf32> to vector<448x32xf32>
    %14 = vector.broadcast %12 : vector<1x32xf32> to vector<448x32xf32>
    %15 = arith.mulf %13, %14 : vector<448x32xf32>
    %16 = arith.addf %8, %15 : vector<448x32xf32>
    %c0_10 = arith.constant 0 : index
    %c1_11 = arith.constant 1 : index
    %c0_12 = arith.constant 0 : index
    %17 = vector.load %arg1[%c0_10, %c1_11, %c0_12] : memref<1x496x1xf32, #tpu.memory_space<vmem>>, vector<1x448x1xf32>
    %18 = vector.shape_cast %17 : vector<1x448x1xf32> to vector<448x1xf32>
    %c2 = arith.constant 2 : index
    %c0_13 = arith.constant 0 : index
    %c0_14 = arith.constant 0 : index
    %19 = vector.load %arg3[%c2, %c0_13, %c0_14] : memref<12x1x32xf32, #tpu.memory_space<vmem>>, vector<1x1x32xf32>
    %20 = vector.shape_cast %19 : vector<1x1x32xf32> to vector<1x32xf32>
    %21 = vector.broadcast %18 : vector<448x1xf32> to vector<448x32xf32>
    %22 = vector.broadcast %20 : vector<1x32xf32> to vector<448x32xf32>
    %23 = arith.mulf %21, %22 : vector<448x32xf32>
    %24 = arith.addf %16, %23 : vector<448x32xf32>
    %c0_15 = arith.constant 0 : index
    %c1_16 = arith.constant 1 : index
    %c0_17 = arith.constant 0 : index
    %25 = vector.load %arg2[%c0_15, %c1_16, %c0_17] : memref<1x496x1xf32, #tpu.memory_space<vmem>>, vector<1x448x1xf32>
    %26 = vector.shape_cast %25 : vector<1x448x1xf32> to vector<448x1xf32>
    %c3 = arith.constant 3 : index
    %c0_18 = arith.constant 0 : index
    %c0_19 = arith.constant 0 : index
    %27 = vector.load %arg3[%c3, %c0_18, %c0_19] : memref<12x1x32xf32, #tpu.memory_space<vmem>>, vector<1x1x32xf32>
    %28 = vector.shape_cast %27 : vector<1x1x32xf32> to vector<1x32xf32>
    %29 = vector.broadcast %26 : vector<448x1xf32> to vector<448x32xf32>
    %30 = vector.broadcast %28 : vector<1x32xf32> to vector<448x32xf32>
    %31 = arith.mulf %29, %30 : vector<448x32xf32>
    %32 = arith.addf %24, %31 : vector<448x32xf32>
    %c0_20 = arith.constant 0 : index
    %c16 = arith.constant 16 : index
    %c0_21 = arith.constant 0 : index
    %33 = vector.load %arg1[%c0_20, %c16, %c0_21] : memref<1x496x1xf32, #tpu.memory_space<vmem>>, vector<1x448x1xf32>
    %34 = vector.shape_cast %33 : vector<1x448x1xf32> to vector<448x1xf32>
    %c4 = arith.constant 4 : index
    %c0_22 = arith.constant 0 : index
    %c0_23 = arith.constant 0 : index
    %35 = vector.load %arg3[%c4, %c0_22, %c0_23] : memref<12x1x32xf32, #tpu.memory_space<vmem>>, vector<1x1x32xf32>
    %36 = vector.shape_cast %35 : vector<1x1x32xf32> to vector<1x32xf32>
    %37 = vector.broadcast %34 : vector<448x1xf32> to vector<448x32xf32>
    %38 = vector.broadcast %36 : vector<1x32xf32> to vector<448x32xf32>
    %39 = arith.mulf %37, %38 : vector<448x32xf32>
    %40 = arith.addf %32, %39 : vector<448x32xf32>
    %c0_24 = arith.constant 0 : index
    %c16_25 = arith.constant 16 : index
    %c0_26 = arith.constant 0 : index
    %41 = vector.load %arg2[%c0_24, %c16_25, %c0_26] : memref<1x496x1xf32, #tpu.memory_space<vmem>>, vector<1x448x1xf32>
    %42 = vector.shape_cast %41 : vector<1x448x1xf32> to vector<448x1xf32>
    %c5 = arith.constant 5 : index
    %c0_27 = arith.constant 0 : index
    %c0_28 = arith.constant 0 : index
    %43 = vector.load %arg3[%c5, %c0_27, %c0_28] : memref<12x1x32xf32, #tpu.memory_space<vmem>>, vector<1x1x32xf32>
    %44 = vector.shape_cast %43 : vector<1x1x32xf32> to vector<1x32xf32>
    %45 = vector.broadcast %42 : vector<448x1xf32> to vector<448x32xf32>
    %46 = vector.broadcast %44 : vector<1x32xf32> to vector<448x32xf32>
    %47 = arith.mulf %45, %46 : vector<448x32xf32>
    %48 = arith.addf %40, %47 : vector<448x32xf32>
    %c0_29 = arith.constant 0 : index
    %c17 = arith.constant 17 : index
    %c0_30 = arith.constant 0 : index
    %49 = vector.load %arg1[%c0_29, %c17, %c0_30] : memref<1x496x1xf32, #tpu.memory_space<vmem>>, vector<1x448x1xf32>
    %50 = vector.shape_cast %49 : vector<1x448x1xf32> to vector<448x1xf32>
    %c6 = arith.constant 6 : index
    %c0_31 = arith.constant 0 : index
    %c0_32 = arith.constant 0 : index
    %51 = vector.load %arg3[%c6, %c0_31, %c0_32] : memref<12x1x32xf32, #tpu.memory_space<vmem>>, vector<1x1x32xf32>
    %52 = vector.shape_cast %51 : vector<1x1x32xf32> to vector<1x32xf32>
    %53 = vector.broadcast %50 : vector<448x1xf32> to vector<448x32xf32>
    %54 = vector.broadcast %52 : vector<1x32xf32> to vector<448x32xf32>
    %55 = arith.mulf %53, %54 : vector<448x32xf32>
    %56 = arith.addf %48, %55 : vector<448x32xf32>
    %c0_33 = arith.constant 0 : index
    %c17_34 = arith.constant 17 : index
    %c0_35 = arith.constant 0 : index
    %57 = vector.load %arg2[%c0_33, %c17_34, %c0_35] : memref<1x496x1xf32, #tpu.memory_space<vmem>>, vector<1x448x1xf32>
    %58 = vector.shape_cast %57 : vector<1x448x1xf32> to vector<448x1xf32>
    %c7 = arith.constant 7 : index
    %c0_36 = arith.constant 0 : index
    %c0_37 = arith.constant 0 : index
    %59 = vector.load %arg3[%c7, %c0_36, %c0_37] : memref<12x1x32xf32, #tpu.memory_space<vmem>>, vector<1x1x32xf32>
    %60 = vector.shape_cast %59 : vector<1x1x32xf32> to vector<1x32xf32>
    %61 = vector.broadcast %58 : vector<448x1xf32> to vector<448x32xf32>
    %62 = vector.broadcast %60 : vector<1x32xf32> to vector<448x32xf32>
    %63 = arith.mulf %61, %62 : vector<448x32xf32>
    %64 = arith.addf %56, %63 : vector<448x32xf32>
    %c0_38 = arith.constant 0 : index
    %c32 = arith.constant 32 : index
    %c0_39 = arith.constant 0 : index
    %65 = vector.load %arg1[%c0_38, %c32, %c0_39] : memref<1x496x1xf32, #tpu.memory_space<vmem>>, vector<1x448x1xf32>
    %66 = vector.shape_cast %65 : vector<1x448x1xf32> to vector<448x1xf32>
    %c8 = arith.constant 8 : index
    %c0_40 = arith.constant 0 : index
    %c0_41 = arith.constant 0 : index
    %67 = vector.load %arg3[%c8, %c0_40, %c0_41] : memref<12x1x32xf32, #tpu.memory_space<vmem>>, vector<1x1x32xf32>
    %68 = vector.shape_cast %67 : vector<1x1x32xf32> to vector<1x32xf32>
    %69 = vector.broadcast %66 : vector<448x1xf32> to vector<448x32xf32>
    %70 = vector.broadcast %68 : vector<1x32xf32> to vector<448x32xf32>
    %71 = arith.mulf %69, %70 : vector<448x32xf32>
    %72 = arith.addf %64, %71 : vector<448x32xf32>
    %c0_42 = arith.constant 0 : index
    %c32_43 = arith.constant 32 : index
    %c0_44 = arith.constant 0 : index
    %73 = vector.load %arg2[%c0_42, %c32_43, %c0_44] : memref<1x496x1xf32, #tpu.memory_space<vmem>>, vector<1x448x1xf32>
    %74 = vector.shape_cast %73 : vector<1x448x1xf32> to vector<448x1xf32>
    %c9 = arith.constant 9 : index
    %c0_45 = arith.constant 0 : index
    %c0_46 = arith.constant 0 : index
    %75 = vector.load %arg3[%c9, %c0_45, %c0_46] : memref<12x1x32xf32, #tpu.memory_space<vmem>>, vector<1x1x32xf32>
    %76 = vector.shape_cast %75 : vector<1x1x32xf32> to vector<1x32xf32>
    %77 = vector.broadcast %74 : vector<448x1xf32> to vector<448x32xf32>
    %78 = vector.broadcast %76 : vector<1x32xf32> to vector<448x32xf32>
    %79 = arith.mulf %77, %78 : vector<448x32xf32>
    %80 = arith.addf %72, %79 : vector<448x32xf32>
    %c0_47 = arith.constant 0 : index
    %c33 = arith.constant 33 : index
    %c0_48 = arith.constant 0 : index
    %81 = vector.load %arg1[%c0_47, %c33, %c0_48] : memref<1x496x1xf32, #tpu.memory_space<vmem>>, vector<1x448x1xf32>
    %82 = vector.shape_cast %81 : vector<1x448x1xf32> to vector<448x1xf32>
    %c10 = arith.constant 10 : index
    %c0_49 = arith.constant 0 : index
    %c0_50 = arith.constant 0 : index
    %83 = vector.load %arg3[%c10, %c0_49, %c0_50] : memref<12x1x32xf32, #tpu.memory_space<vmem>>, vector<1x1x32xf32>
    %84 = vector.shape_cast %83 : vector<1x1x32xf32> to vector<1x32xf32>
    %85 = vector.broadcast %82 : vector<448x1xf32> to vector<448x32xf32>
    %86 = vector.broadcast %84 : vector<1x32xf32> to vector<448x32xf32>
    %87 = arith.mulf %85, %86 : vector<448x32xf32>
    %88 = arith.addf %80, %87 : vector<448x32xf32>
    %c0_51 = arith.constant 0 : index
    %c33_52 = arith.constant 33 : index
    %c0_53 = arith.constant 0 : index
    %89 = vector.load %arg2[%c0_51, %c33_52, %c0_53] : memref<1x496x1xf32, #tpu.memory_space<vmem>>, vector<1x448x1xf32>
    %90 = vector.shape_cast %89 : vector<1x448x1xf32> to vector<448x1xf32>
    %c11 = arith.constant 11 : index
    %c0_54 = arith.constant 0 : index
    %c0_55 = arith.constant 0 : index
    %91 = vector.load %arg3[%c11, %c0_54, %c0_55] : memref<12x1x32xf32, #tpu.memory_space<vmem>>, vector<1x1x32xf32>
    %92 = vector.shape_cast %91 : vector<1x1x32xf32> to vector<1x32xf32>
    %93 = vector.broadcast %90 : vector<448x1xf32> to vector<448x32xf32>
    %94 = vector.broadcast %92 : vector<1x32xf32> to vector<448x32xf32>
    %95 = arith.mulf %93, %94 : vector<448x32xf32>
    %96 = arith.addf %88, %95 : vector<448x32xf32>
    %c0_56 = arith.constant 0 : index
    %c0_57 = arith.constant 0 : index
    %97 = vector.load %arg4[%c0_56, %c0_57] : memref<1x32xf32, #tpu.memory_space<vmem>>, vector<1x32xf32>
    %98 = vector.broadcast %97 : vector<1x32xf32> to vector<448x32xf32>
    %99 = arith.addf %96, %98 : vector<448x32xf32>
    %cst_58 = arith.constant 0.000000e+00 : f32
    %100 = vector.broadcast %cst_58 : f32 to vector<448x32xf32>
    %101 = arith.maximumf %99, %100 : vector<448x32xf32>
    %102 = vector.extract_strided_slice %101 {offsets = [0, 0], sizes = [448, 16], strides = [1, 1]} : vector<448x32xf32> to vector<448x16xf32>
    %103 = vector.extract_strided_slice %101 {offsets = [0, 16], sizes = [448, 16], strides = [1, 1]} : vector<448x32xf32> to vector<448x16xf32>
    %104 = arith.maximumf %102, %103 : vector<448x16xf32>
    %105 = vector.shape_cast %104 : vector<448x16xf32> to vector<14x32x16xf32>
    %106 = vector.extract_strided_slice %105 {offsets = [0, 0, 0], sizes = [14, 16, 16], strides = [1, 1, 1]} : vector<14x32x16xf32> to vector<14x16x16xf32>
    %107 = vector.extract_strided_slice %105 {offsets = [0, 16, 0], sizes = [14, 16, 16], strides = [1, 1, 1]} : vector<14x32x16xf32> to vector<14x16x16xf32>
    %108 = arith.maximumf %106, %107 : vector<14x16x16xf32>
    %109 = vector.extract_strided_slice %108 {offsets = [0, 0, 0], sizes = [14, 14, 16], strides = [1, 1, 1]} : vector<14x16x16xf32> to vector<14x14x16xf32>
    %110 = arith.truncf %109 : vector<14x14x16xf32> to vector<14x14x16xbf16>
    %c0_59 = arith.constant 0 : index
    %c0_60 = arith.constant 0 : index
    %c0_61 = arith.constant 0 : index
    %c0_62 = arith.constant 0 : index
    %111 = vector.load %arg5[%c0_59, %c0_60, %c0_61, %c0_62] : memref<1x14x14x16xbf16, #tpu.memory_space<vmem>>, vector<1x14x14x16xbf16>
    %112 = vector.shape_cast %111 : vector<1x14x14x16xbf16> to vector<14x14x16xbf16>
    %113 = vector.shape_cast %110 : vector<14x14x16xbf16> to vector<1x14x14x16xbf16>
    tpu.vector_store %arg5[%c0_59, %c0_60, %c0_61, %c0_62], %113 {strides = array<i32>} : memref<1x14x14x16xbf16, #tpu.memory_space<vmem>>, vector<1x14x14x16xbf16>,
    return
  }
  func.func @transform_0(%arg0: i32) -> (i32, i32, i32) {
    %c0_i32 = arith.constant 0 : i32
    %c0_i32_0 = arith.constant 0 : i32
    %c0_i32_1 = arith.constant 0 : i32
    return %arg0, %c0_i32, %c0_i32_0 : i32, i32, i32
  }
  func.func @transform_1(%arg0: i32) -> (i32, i32, i32) {
    %c0_i32 = arith.constant 0 : i32
    %c0_i32_0 = arith.constant 0 : i32
    %c0_i32_1 = arith.constant 0 : i32
    return %arg0, %c0_i32, %c0_i32_0 : i32, i32, i32
  }
  func.func @transform_2(%arg0: i32) -> (i32, i32, i32) {
    %c0_i32 = arith.constant 0 : i32
    %c0_i32_0 = arith.constant 0 : i32
    %c0_i32_1 = arith.constant 0 : i32
    %c0_i32_2 = arith.constant 0 : i32
    return %c0_i32, %c0_i32_0, %c0_i32_1 : i32, i32, i32
  }
  func.func @transform_3(%arg0: i32) -> (i32, i32) {
    %c0_i32 = arith.constant 0 : i32
    %c0_i32_0 = arith.constant 0 : i32
    %c0_i32_1 = arith.constant 0 : i32
    return %c0_i32, %c0_i32_0 : i32, i32
  }
  func.func @transform_4(%arg0: i32) -> (i32, i32, i32, i32) {
    %c0_i32 = arith.constant 0 : i32
    %c0_i32_0 = arith.constant 0 : i32
    %c0_i32_1 = arith.constant 0 : i32
    %c0_i32_2 = arith.constant 0 : i32
    return %arg0, %c0_i32, %c0_i32_0, %c0_i32_1 : i32, i32, i32, i32
  }
}

module attributes {stable_mosaic.version = 11 : i64} {
  func.func @kernel(%arg0: i32, %arg1: memref<1x136x16xbf16, #tpu.memory_space<vmem>>, %arg2: memref<1x136x16xbf16, #tpu.memory_space<vmem>>, %arg3: memref<12x16x64xbf16, #tpu.memory_space<vmem>>, %arg4: memref<1x64xf32, #tpu.memory_space<vmem>>, %arg5: memref<1x7x7x32xbf16, #tpu.memory_space<vmem>>) attributes {dimension_semantics = [#tpu.dimension_semantics<parallel>], iteration_bounds = array<i64: 2>, scalar_prefetch = 0 : i64, scratch_operands = 0 : i64, tpu.core_type = #tpu.core_type<tc>, window_params = [{transform_indices = @transform_0, window_bounds = array<i64: 1, 136, 16>}, {transform_indices = @transform_1, window_bounds = array<i64: 1, 136, 16>}, {pipeline_mode = #tpu.pipeline_mode<synchronous>, transform_indices = @transform_2, window_bounds = array<i64: 12, 16, 64>}, {pipeline_mode = #tpu.pipeline_mode<synchronous>, transform_indices = @transform_3, window_bounds = array<i64: 1, 64>}, {transform_indices = @transform_4, window_bounds = array<i64: 1, 7, 7, 32>}]} {
    %cst = arith.constant 0.000000e+00 : f32
    %0 = vector.broadcast %cst : f32 to vector<112x64xf32>
    %c0 = arith.constant 0 : index
    %c0_0 = arith.constant 0 : index
    %c0_1 = arith.constant 0 : index
    %1 = vector.load %arg1[%c0, %c0_0, %c0_1] : memref<1x136x16xbf16, #tpu.memory_space<vmem>>, vector<1x112x16xbf16>
    %2 = vector.shape_cast %1 : vector<1x112x16xbf16> to vector<112x16xbf16>
    %c0_2 = arith.constant 0 : index
    %c0_3 = arith.constant 0 : index
    %c0_4 = arith.constant 0 : index
    %3 = vector.load %arg3[%c0_2, %c0_3, %c0_4] : memref<12x16x64xbf16, #tpu.memory_space<vmem>>, vector<1x16x64xbf16>
    %4 = vector.shape_cast %3 : vector<1x16x64xbf16> to vector<16x64xbf16>
    %cst_5 = arith.constant dense<0.000000e+00> : vector<112x64xf32>
    %5 = tpu.matmul %2, %4, %cst_5 {dimension_numbers = #tpu.dot_dimension_numbers<[1], [0], [0], [1], [0, 0, 1, 1], [], []>} : vector<112x16xbf16>, vector<16x64xbf16>, vector<112x64xf32> -> vector<112x64xf32>
    %6 = arith.addf %0, %5 : vector<112x64xf32>
    %c0_6 = arith.constant 0 : index
    %c0_7 = arith.constant 0 : index
    %c0_8 = arith.constant 0 : index
    %7 = vector.load %arg2[%c0_6, %c0_7, %c0_8] : memref<1x136x16xbf16, #tpu.memory_space<vmem>>, vector<1x112x16xbf16>
    %8 = vector.shape_cast %7 : vector<1x112x16xbf16> to vector<112x16xbf16>
    %c1 = arith.constant 1 : index
    %c0_9 = arith.constant 0 : index
    %c0_10 = arith.constant 0 : index
    %9 = vector.load %arg3[%c1, %c0_9, %c0_10] : memref<12x16x64xbf16, #tpu.memory_space<vmem>>, vector<1x16x64xbf16>
    %10 = vector.shape_cast %9 : vector<1x16x64xbf16> to vector<16x64xbf16>
    %cst_11 = arith.constant dense<0.000000e+00> : vector<112x64xf32>
    %11 = tpu.matmul %8, %10, %cst_11 {dimension_numbers = #tpu.dot_dimension_numbers<[1], [0], [0], [1], [0, 0, 1, 1], [], []>} : vector<112x16xbf16>, vector<16x64xbf16>, vector<112x64xf32> -> vector<112x64xf32>
    %12 = arith.addf %6, %11 : vector<112x64xf32>
    %c0_12 = arith.constant 0 : index
    %c1_13 = arith.constant 1 : index
    %c0_14 = arith.constant 0 : index
    %13 = vector.load %arg1[%c0_12, %c1_13, %c0_14] : memref<1x136x16xbf16, #tpu.memory_space<vmem>>, vector<1x112x16xbf16>
    %14 = vector.shape_cast %13 : vector<1x112x16xbf16> to vector<112x16xbf16>
    %c2 = arith.constant 2 : index
    %c0_15 = arith.constant 0 : index
    %c0_16 = arith.constant 0 : index
    %15 = vector.load %arg3[%c2, %c0_15, %c0_16] : memref<12x16x64xbf16, #tpu.memory_space<vmem>>, vector<1x16x64xbf16>
    %16 = vector.shape_cast %15 : vector<1x16x64xbf16> to vector<16x64xbf16>
    %cst_17 = arith.constant dense<0.000000e+00> : vector<112x64xf32>
    %17 = tpu.matmul %14, %16, %cst_17 {dimension_numbers = #tpu.dot_dimension_numbers<[1], [0], [0], [1], [0, 0, 1, 1], [], []>} : vector<112x16xbf16>, vector<16x64xbf16>, vector<112x64xf32> -> vector<112x64xf32>
    %18 = arith.addf %12, %17 : vector<112x64xf32>
    %c0_18 = arith.constant 0 : index
    %c1_19 = arith.constant 1 : index
    %c0_20 = arith.constant 0 : index
    %19 = vector.load %arg2[%c0_18, %c1_19, %c0_20] : memref<1x136x16xbf16, #tpu.memory_space<vmem>>, vector<1x112x16xbf16>
    %20 = vector.shape_cast %19 : vector<1x112x16xbf16> to vector<112x16xbf16>
    %c3 = arith.constant 3 : index
    %c0_21 = arith.constant 0 : index
    %c0_22 = arith.constant 0 : index
    %21 = vector.load %arg3[%c3, %c0_21, %c0_22] : memref<12x16x64xbf16, #tpu.memory_space<vmem>>, vector<1x16x64xbf16>
    %22 = vector.shape_cast %21 : vector<1x16x64xbf16> to vector<16x64xbf16>
    %cst_23 = arith.constant dense<0.000000e+00> : vector<112x64xf32>
    %23 = tpu.matmul %20, %22, %cst_23 {dimension_numbers = #tpu.dot_dimension_numbers<[1], [0], [0], [1], [0, 0, 1, 1], [], []>} : vector<112x16xbf16>, vector<16x64xbf16>, vector<112x64xf32> -> vector<112x64xf32>
    %24 = arith.addf %18, %23 : vector<112x64xf32>
    %c0_24 = arith.constant 0 : index
    %c8 = arith.constant 8 : index
    %c0_25 = arith.constant 0 : index
    %25 = vector.load %arg1[%c0_24, %c8, %c0_25] : memref<1x136x16xbf16, #tpu.memory_space<vmem>>, vector<1x112x16xbf16>
    %26 = vector.shape_cast %25 : vector<1x112x16xbf16> to vector<112x16xbf16>
    %c4 = arith.constant 4 : index
    %c0_26 = arith.constant 0 : index
    %c0_27 = arith.constant 0 : index
    %27 = vector.load %arg3[%c4, %c0_26, %c0_27] : memref<12x16x64xbf16, #tpu.memory_space<vmem>>, vector<1x16x64xbf16>
    %28 = vector.shape_cast %27 : vector<1x16x64xbf16> to vector<16x64xbf16>
    %cst_28 = arith.constant dense<0.000000e+00> : vector<112x64xf32>
    %29 = tpu.matmul %26, %28, %cst_28 {dimension_numbers = #tpu.dot_dimension_numbers<[1], [0], [0], [1], [0, 0, 1, 1], [], []>} : vector<112x16xbf16>, vector<16x64xbf16>, vector<112x64xf32> -> vector<112x64xf32>
    %30 = arith.addf %24, %29 : vector<112x64xf32>
    %c0_29 = arith.constant 0 : index
    %c8_30 = arith.constant 8 : index
    %c0_31 = arith.constant 0 : index
    %31 = vector.load %arg2[%c0_29, %c8_30, %c0_31] : memref<1x136x16xbf16, #tpu.memory_space<vmem>>, vector<1x112x16xbf16>
    %32 = vector.shape_cast %31 : vector<1x112x16xbf16> to vector<112x16xbf16>
    %c5 = arith.constant 5 : index
    %c0_32 = arith.constant 0 : index
    %c0_33 = arith.constant 0 : index
    %33 = vector.load %arg3[%c5, %c0_32, %c0_33] : memref<12x16x64xbf16, #tpu.memory_space<vmem>>, vector<1x16x64xbf16>
    %34 = vector.shape_cast %33 : vector<1x16x64xbf16> to vector<16x64xbf16>
    %cst_34 = arith.constant dense<0.000000e+00> : vector<112x64xf32>
    %35 = tpu.matmul %32, %34, %cst_34 {dimension_numbers = #tpu.dot_dimension_numbers<[1], [0], [0], [1], [0, 0, 1, 1], [], []>} : vector<112x16xbf16>, vector<16x64xbf16>, vector<112x64xf32> -> vector<112x64xf32>
    %36 = arith.addf %30, %35 : vector<112x64xf32>
    %c0_35 = arith.constant 0 : index
    %c9 = arith.constant 9 : index
    %c0_36 = arith.constant 0 : index
    %37 = vector.load %arg1[%c0_35, %c9, %c0_36] : memref<1x136x16xbf16, #tpu.memory_space<vmem>>, vector<1x112x16xbf16>
    %38 = vector.shape_cast %37 : vector<1x112x16xbf16> to vector<112x16xbf16>
    %c6 = arith.constant 6 : index
    %c0_37 = arith.constant 0 : index
    %c0_38 = arith.constant 0 : index
    %39 = vector.load %arg3[%c6, %c0_37, %c0_38] : memref<12x16x64xbf16, #tpu.memory_space<vmem>>, vector<1x16x64xbf16>
    %40 = vector.shape_cast %39 : vector<1x16x64xbf16> to vector<16x64xbf16>
    %cst_39 = arith.constant dense<0.000000e+00> : vector<112x64xf32>
    %41 = tpu.matmul %38, %40, %cst_39 {dimension_numbers = #tpu.dot_dimension_numbers<[1], [0], [0], [1], [0, 0, 1, 1], [], []>} : vector<112x16xbf16>, vector<16x64xbf16>, vector<112x64xf32> -> vector<112x64xf32>
    %42 = arith.addf %36, %41 : vector<112x64xf32>
    %c0_40 = arith.constant 0 : index
    %c9_41 = arith.constant 9 : index
    %c0_42 = arith.constant 0 : index
    %43 = vector.load %arg2[%c0_40, %c9_41, %c0_42] : memref<1x136x16xbf16, #tpu.memory_space<vmem>>, vector<1x112x16xbf16>
    %44 = vector.shape_cast %43 : vector<1x112x16xbf16> to vector<112x16xbf16>
    %c7 = arith.constant 7 : index
    %c0_43 = arith.constant 0 : index
    %c0_44 = arith.constant 0 : index
    %45 = vector.load %arg3[%c7, %c0_43, %c0_44] : memref<12x16x64xbf16, #tpu.memory_space<vmem>>, vector<1x16x64xbf16>
    %46 = vector.shape_cast %45 : vector<1x16x64xbf16> to vector<16x64xbf16>
    %cst_45 = arith.constant dense<0.000000e+00> : vector<112x64xf32>
    %47 = tpu.matmul %44, %46, %cst_45 {dimension_numbers = #tpu.dot_dimension_numbers<[1], [0], [0], [1], [0, 0, 1, 1], [], []>} : vector<112x16xbf16>, vector<16x64xbf16>, vector<112x64xf32> -> vector<112x64xf32>
    %48 = arith.addf %42, %47 : vector<112x64xf32>
    %c0_46 = arith.constant 0 : index
    %c16 = arith.constant 16 : index
    %c0_47 = arith.constant 0 : index
    %49 = vector.load %arg1[%c0_46, %c16, %c0_47] : memref<1x136x16xbf16, #tpu.memory_space<vmem>>, vector<1x112x16xbf16>
    %50 = vector.shape_cast %49 : vector<1x112x16xbf16> to vector<112x16xbf16>
    %c8_48 = arith.constant 8 : index
    %c0_49 = arith.constant 0 : index
    %c0_50 = arith.constant 0 : index
    %51 = vector.load %arg3[%c8_48, %c0_49, %c0_50] : memref<12x16x64xbf16, #tpu.memory_space<vmem>>, vector<1x16x64xbf16>
    %52 = vector.shape_cast %51 : vector<1x16x64xbf16> to vector<16x64xbf16>
    %cst_51 = arith.constant dense<0.000000e+00> : vector<112x64xf32>
    %53 = tpu.matmul %50, %52, %cst_51 {dimension_numbers = #tpu.dot_dimension_numbers<[1], [0], [0], [1], [0, 0, 1, 1], [], []>} : vector<112x16xbf16>, vector<16x64xbf16>, vector<112x64xf32> -> vector<112x64xf32>
    %54 = arith.addf %48, %53 : vector<112x64xf32>
    %c0_52 = arith.constant 0 : index
    %c16_53 = arith.constant 16 : index
    %c0_54 = arith.constant 0 : index
    %55 = vector.load %arg2[%c0_52, %c16_53, %c0_54] : memref<1x136x16xbf16, #tpu.memory_space<vmem>>, vector<1x112x16xbf16>
    %56 = vector.shape_cast %55 : vector<1x112x16xbf16> to vector<112x16xbf16>
    %c9_55 = arith.constant 9 : index
    %c0_56 = arith.constant 0 : index
    %c0_57 = arith.constant 0 : index
    %57 = vector.load %arg3[%c9_55, %c0_56, %c0_57] : memref<12x16x64xbf16, #tpu.memory_space<vmem>>, vector<1x16x64xbf16>
    %58 = vector.shape_cast %57 : vector<1x16x64xbf16> to vector<16x64xbf16>
    %cst_58 = arith.constant dense<0.000000e+00> : vector<112x64xf32>
    %59 = tpu.matmul %56, %58, %cst_58 {dimension_numbers = #tpu.dot_dimension_numbers<[1], [0], [0], [1], [0, 0, 1, 1], [], []>} : vector<112x16xbf16>, vector<16x64xbf16>, vector<112x64xf32> -> vector<112x64xf32>
    %60 = arith.addf %54, %59 : vector<112x64xf32>
    %c0_59 = arith.constant 0 : index
    %c17 = arith.constant 17 : index
    %c0_60 = arith.constant 0 : index
    %61 = vector.load %arg1[%c0_59, %c17, %c0_60] : memref<1x136x16xbf16, #tpu.memory_space<vmem>>, vector<1x112x16xbf16>
    %62 = vector.shape_cast %61 : vector<1x112x16xbf16> to vector<112x16xbf16>
    %c10 = arith.constant 10 : index
    %c0_61 = arith.constant 0 : index
    %c0_62 = arith.constant 0 : index
    %63 = vector.load %arg3[%c10, %c0_61, %c0_62] : memref<12x16x64xbf16, #tpu.memory_space<vmem>>, vector<1x16x64xbf16>
    %64 = vector.shape_cast %63 : vector<1x16x64xbf16> to vector<16x64xbf16>
    %cst_63 = arith.constant dense<0.000000e+00> : vector<112x64xf32>
    %65 = tpu.matmul %62, %64, %cst_63 {dimension_numbers = #tpu.dot_dimension_numbers<[1], [0], [0], [1], [0, 0, 1, 1], [], []>} : vector<112x16xbf16>, vector<16x64xbf16>, vector<112x64xf32> -> vector<112x64xf32>
    %66 = arith.addf %60, %65 : vector<112x64xf32>
    %c0_64 = arith.constant 0 : index
    %c17_65 = arith.constant 17 : index
    %c0_66 = arith.constant 0 : index
    %67 = vector.load %arg2[%c0_64, %c17_65, %c0_66] : memref<1x136x16xbf16, #tpu.memory_space<vmem>>, vector<1x112x16xbf16>
    %68 = vector.shape_cast %67 : vector<1x112x16xbf16> to vector<112x16xbf16>
    %c11 = arith.constant 11 : index
    %c0_67 = arith.constant 0 : index
    %c0_68 = arith.constant 0 : index
    %69 = vector.load %arg3[%c11, %c0_67, %c0_68] : memref<12x16x64xbf16, #tpu.memory_space<vmem>>, vector<1x16x64xbf16>
    %70 = vector.shape_cast %69 : vector<1x16x64xbf16> to vector<16x64xbf16>
    %cst_69 = arith.constant dense<0.000000e+00> : vector<112x64xf32>
    %71 = tpu.matmul %68, %70, %cst_69 {dimension_numbers = #tpu.dot_dimension_numbers<[1], [0], [0], [1], [0, 0, 1, 1], [], []>} : vector<112x16xbf16>, vector<16x64xbf16>, vector<112x64xf32> -> vector<112x64xf32>
    %72 = arith.addf %66, %71 : vector<112x64xf32>
    %c0_70 = arith.constant 0 : index
    %c0_71 = arith.constant 0 : index
    %73 = vector.load %arg4[%c0_70, %c0_71] : memref<1x64xf32, #tpu.memory_space<vmem>>, vector<1x64xf32>
    %74 = vector.broadcast %73 : vector<1x64xf32> to vector<112x64xf32>
    %75 = arith.addf %72, %74 : vector<112x64xf32>
    %cst_72 = arith.constant 0.000000e+00 : f32
    %76 = vector.broadcast %cst_72 : f32 to vector<112x64xf32>
    %77 = arith.maximumf %75, %76 : vector<112x64xf32>
    %78 = vector.extract_strided_slice %77 {offsets = [0, 0], sizes = [112, 32], strides = [1, 1]} : vector<112x64xf32> to vector<112x32xf32>
    %79 = vector.extract_strided_slice %77 {offsets = [0, 32], sizes = [112, 32], strides = [1, 1]} : vector<112x64xf32> to vector<112x32xf32>
    %80 = arith.maximumf %78, %79 : vector<112x32xf32>
    %81 = vector.shape_cast %80 : vector<112x32xf32> to vector<7x16x32xf32>
    %82 = vector.extract_strided_slice %81 {offsets = [0, 0, 0], sizes = [7, 8, 32], strides = [1, 1, 1]} : vector<7x16x32xf32> to vector<7x8x32xf32>
    %83 = vector.extract_strided_slice %81 {offsets = [0, 8, 0], sizes = [7, 8, 32], strides = [1, 1, 1]} : vector<7x16x32xf32> to vector<7x8x32xf32>
    %84 = arith.maximumf %82, %83 : vector<7x8x32xf32>
    %85 = vector.extract_strided_slice %84 {offsets = [0, 0, 0], sizes = [7, 7, 32], strides = [1, 1, 1]} : vector<7x8x32xf32> to vector<7x7x32xf32>
    %86 = arith.truncf %85 : vector<7x7x32xf32> to vector<7x7x32xbf16>
    %c0_73 = arith.constant 0 : index
    %c0_74 = arith.constant 0 : index
    %c0_75 = arith.constant 0 : index
    %c0_76 = arith.constant 0 : index
    %87 = vector.load %arg5[%c0_73, %c0_74, %c0_75, %c0_76] : memref<1x7x7x32xbf16, #tpu.memory_space<vmem>>, vector<1x7x7x32xbf16>
    %88 = vector.shape_cast %87 : vector<1x7x7x32xbf16> to vector<7x7x32xbf16>
    %89 = vector.shape_cast %86 : vector<7x7x32xbf16> to vector<1x7x7x32xbf16>
    tpu.vector_store %arg5[%c0_73, %c0_74, %c0_75, %c0_76], %89 {strides = array<i32>} : memref<1x7x7x32xbf16, #tpu.memory_space<vmem>>, vector<1x7x7x32xbf16>,
    return
  }
  func.func @transform_0(%arg0: i32) -> (i32, i32, i32) {
    %c0_i32 = arith.constant 0 : i32
    %c0_i32_0 = arith.constant 0 : i32
    %c0_i32_1 = arith.constant 0 : i32
    return %arg0, %c0_i32, %c0_i32_0 : i32, i32, i32
  }
  func.func @transform_1(%arg0: i32) -> (i32, i32, i32) {
    %c0_i32 = arith.constant 0 : i32
    %c0_i32_0 = arith.constant 0 : i32
    %c0_i32_1 = arith.constant 0 : i32
    return %arg0, %c0_i32, %c0_i32_0 : i32, i32, i32
  }
  func.func @transform_2(%arg0: i32) -> (i32, i32, i32) {
    %c0_i32 = arith.constant 0 : i32
    %c0_i32_0 = arith.constant 0 : i32
    %c0_i32_1 = arith.constant 0 : i32
    %c0_i32_2 = arith.constant 0 : i32
    return %c0_i32, %c0_i32_0, %c0_i32_1 : i32, i32, i32
  }
  func.func @transform_3(%arg0: i32) -> (i32, i32) {
    %c0_i32 = arith.constant 0 : i32
    %c0_i32_0 = arith.constant 0 : i32
    %c0_i32_1 = arith.constant 0 : i32
    return %c0_i32, %c0_i32_0 : i32, i32
  }
  func.func @transform_4(%arg0: i32) -> (i32, i32, i32, i32) {
    %c0_i32 = arith.constant 0 : i32
    %c0_i32_0 = arith.constant 0 : i32
    %c0_i32_1 = arith.constant 0 : i32
    %c0_i32_2 = arith.constant 0 : i32
    return %arg0, %c0_i32, %c0_i32_0, %c0_i32_1 : i32, i32, i32, i32
  }
}

module attributes {stable_mosaic.version = 11 : i64} {
  func.func @kernel(%arg0: i32, %arg1: memref<1x90x32xbf16, #tpu.memory_space<vmem>>, %arg2: memref<9x32x64xbf16, #tpu.memory_space<vmem>>, %arg3: memref<1x64xf32, #tpu.memory_space<vmem>>, %arg4: memref<1x63x64xbf16, #tpu.memory_space<vmem>>) attributes {dimension_semantics = [#tpu.dimension_semantics<parallel>], iteration_bounds = array<i64: 2>, scalar_prefetch = 0 : i64, scratch_operands = 0 : i64, tpu.core_type = #tpu.core_type<tc>, window_params = [{transform_indices = @transform_0, window_bounds = array<i64: 1, 90, 32>}, {pipeline_mode = #tpu.pipeline_mode<synchronous>, transform_indices = @transform_1, window_bounds = array<i64: 9, 32, 64>}, {pipeline_mode = #tpu.pipeline_mode<synchronous>, transform_indices = @transform_2, window_bounds = array<i64: 1, 64>}, {transform_indices = @transform_3, window_bounds = array<i64: 1, 63, 64>}]} {
    %cst = arith.constant 0.000000e+00 : f32
    %0 = vector.broadcast %cst : f32 to vector<63x64xf32>
    %c0 = arith.constant 0 : index
    %c0_0 = arith.constant 0 : index
    %c0_1 = arith.constant 0 : index
    %1 = vector.load %arg1[%c0, %c0_0, %c0_1] : memref<1x90x32xbf16, #tpu.memory_space<vmem>>, vector<1x63x32xbf16>
    %2 = vector.shape_cast %1 : vector<1x63x32xbf16> to vector<63x32xbf16>
    %c0_2 = arith.constant 0 : index
    %c0_3 = arith.constant 0 : index
    %c0_4 = arith.constant 0 : index
    %3 = vector.load %arg2[%c0_2, %c0_3, %c0_4] : memref<9x32x64xbf16, #tpu.memory_space<vmem>>, vector<1x32x64xbf16>
    %4 = vector.shape_cast %3 : vector<1x32x64xbf16> to vector<32x64xbf16>
    %cst_5 = arith.constant dense<0.000000e+00> : vector<63x64xf32>
    %5 = tpu.matmul %2, %4, %cst_5 {dimension_numbers = #tpu.dot_dimension_numbers<[1], [0], [0], [1], [0, 0, 1, 1], [], []>} : vector<63x32xbf16>, vector<32x64xbf16>, vector<63x64xf32> -> vector<63x64xf32>
    %6 = arith.addf %0, %5 : vector<63x64xf32>
    %c0_6 = arith.constant 0 : index
    %c1 = arith.constant 1 : index
    %c0_7 = arith.constant 0 : index
    %7 = vector.load %arg1[%c0_6, %c1, %c0_7] : memref<1x90x32xbf16, #tpu.memory_space<vmem>>, vector<1x63x32xbf16>
    %8 = vector.shape_cast %7 : vector<1x63x32xbf16> to vector<63x32xbf16>
    %c1_8 = arith.constant 1 : index
    %c0_9 = arith.constant 0 : index
    %c0_10 = arith.constant 0 : index
    %9 = vector.load %arg2[%c1_8, %c0_9, %c0_10] : memref<9x32x64xbf16, #tpu.memory_space<vmem>>, vector<1x32x64xbf16>
    %10 = vector.shape_cast %9 : vector<1x32x64xbf16> to vector<32x64xbf16>
    %cst_11 = arith.constant dense<0.000000e+00> : vector<63x64xf32>
    %11 = tpu.matmul %8, %10, %cst_11 {dimension_numbers = #tpu.dot_dimension_numbers<[1], [0], [0], [1], [0, 0, 1, 1], [], []>} : vector<63x32xbf16>, vector<32x64xbf16>, vector<63x64xf32> -> vector<63x64xf32>
    %12 = arith.addf %6, %11 : vector<63x64xf32>
    %c0_12 = arith.constant 0 : index
    %c2 = arith.constant 2 : index
    %c0_13 = arith.constant 0 : index
    %13 = vector.load %arg1[%c0_12, %c2, %c0_13] : memref<1x90x32xbf16, #tpu.memory_space<vmem>>, vector<1x63x32xbf16>
    %14 = vector.shape_cast %13 : vector<1x63x32xbf16> to vector<63x32xbf16>
    %c2_14 = arith.constant 2 : index
    %c0_15 = arith.constant 0 : index
    %c0_16 = arith.constant 0 : index
    %15 = vector.load %arg2[%c2_14, %c0_15, %c0_16] : memref<9x32x64xbf16, #tpu.memory_space<vmem>>, vector<1x32x64xbf16>
    %16 = vector.shape_cast %15 : vector<1x32x64xbf16> to vector<32x64xbf16>
    %cst_17 = arith.constant dense<0.000000e+00> : vector<63x64xf32>
    %17 = tpu.matmul %14, %16, %cst_17 {dimension_numbers = #tpu.dot_dimension_numbers<[1], [0], [0], [1], [0, 0, 1, 1], [], []>} : vector<63x32xbf16>, vector<32x64xbf16>, vector<63x64xf32> -> vector<63x64xf32>
    %18 = arith.addf %12, %17 : vector<63x64xf32>
    %c0_18 = arith.constant 0 : index
    %c9 = arith.constant 9 : index
    %c0_19 = arith.constant 0 : index
    %19 = vector.load %arg1[%c0_18, %c9, %c0_19] : memref<1x90x32xbf16, #tpu.memory_space<vmem>>, vector<1x63x32xbf16>
    %20 = vector.shape_cast %19 : vector<1x63x32xbf16> to vector<63x32xbf16>
    %c3 = arith.constant 3 : index
    %c0_20 = arith.constant 0 : index
    %c0_21 = arith.constant 0 : index
    %21 = vector.load %arg2[%c3, %c0_20, %c0_21] : memref<9x32x64xbf16, #tpu.memory_space<vmem>>, vector<1x32x64xbf16>
    %22 = vector.shape_cast %21 : vector<1x32x64xbf16> to vector<32x64xbf16>
    %cst_22 = arith.constant dense<0.000000e+00> : vector<63x64xf32>
    %23 = tpu.matmul %20, %22, %cst_22 {dimension_numbers = #tpu.dot_dimension_numbers<[1], [0], [0], [1], [0, 0, 1, 1], [], []>} : vector<63x32xbf16>, vector<32x64xbf16>, vector<63x64xf32> -> vector<63x64xf32>
    %24 = arith.addf %18, %23 : vector<63x64xf32>
    %c0_23 = arith.constant 0 : index
    %c10 = arith.constant 10 : index
    %c0_24 = arith.constant 0 : index
    %25 = vector.load %arg1[%c0_23, %c10, %c0_24] : memref<1x90x32xbf16, #tpu.memory_space<vmem>>, vector<1x63x32xbf16>
    %26 = vector.shape_cast %25 : vector<1x63x32xbf16> to vector<63x32xbf16>
    %c4 = arith.constant 4 : index
    %c0_25 = arith.constant 0 : index
    %c0_26 = arith.constant 0 : index
    %27 = vector.load %arg2[%c4, %c0_25, %c0_26] : memref<9x32x64xbf16, #tpu.memory_space<vmem>>, vector<1x32x64xbf16>
    %28 = vector.shape_cast %27 : vector<1x32x64xbf16> to vector<32x64xbf16>
    %cst_27 = arith.constant dense<0.000000e+00> : vector<63x64xf32>
    %29 = tpu.matmul %26, %28, %cst_27 {dimension_numbers = #tpu.dot_dimension_numbers<[1], [0], [0], [1], [0, 0, 1, 1], [], []>} : vector<63x32xbf16>, vector<32x64xbf16>, vector<63x64xf32> -> vector<63x64xf32>
    %30 = arith.addf %24, %29 : vector<63x64xf32>
    %c0_28 = arith.constant 0 : index
    %c11 = arith.constant 11 : index
    %c0_29 = arith.constant 0 : index
    %31 = vector.load %arg1[%c0_28, %c11, %c0_29] : memref<1x90x32xbf16, #tpu.memory_space<vmem>>, vector<1x63x32xbf16>
    %32 = vector.shape_cast %31 : vector<1x63x32xbf16> to vector<63x32xbf16>
    %c5 = arith.constant 5 : index
    %c0_30 = arith.constant 0 : index
    %c0_31 = arith.constant 0 : index
    %33 = vector.load %arg2[%c5, %c0_30, %c0_31] : memref<9x32x64xbf16, #tpu.memory_space<vmem>>, vector<1x32x64xbf16>
    %34 = vector.shape_cast %33 : vector<1x32x64xbf16> to vector<32x64xbf16>
    %cst_32 = arith.constant dense<0.000000e+00> : vector<63x64xf32>
    %35 = tpu.matmul %32, %34, %cst_32 {dimension_numbers = #tpu.dot_dimension_numbers<[1], [0], [0], [1], [0, 0, 1, 1], [], []>} : vector<63x32xbf16>, vector<32x64xbf16>, vector<63x64xf32> -> vector<63x64xf32>
    %36 = arith.addf %30, %35 : vector<63x64xf32>
    %c0_33 = arith.constant 0 : index
    %c18 = arith.constant 18 : index
    %c0_34 = arith.constant 0 : index
    %37 = vector.load %arg1[%c0_33, %c18, %c0_34] : memref<1x90x32xbf16, #tpu.memory_space<vmem>>, vector<1x63x32xbf16>
    %38 = vector.shape_cast %37 : vector<1x63x32xbf16> to vector<63x32xbf16>
    %c6 = arith.constant 6 : index
    %c0_35 = arith.constant 0 : index
    %c0_36 = arith.constant 0 : index
    %39 = vector.load %arg2[%c6, %c0_35, %c0_36] : memref<9x32x64xbf16, #tpu.memory_space<vmem>>, vector<1x32x64xbf16>
    %40 = vector.shape_cast %39 : vector<1x32x64xbf16> to vector<32x64xbf16>
    %cst_37 = arith.constant dense<0.000000e+00> : vector<63x64xf32>
    %41 = tpu.matmul %38, %40, %cst_37 {dimension_numbers = #tpu.dot_dimension_numbers<[1], [0], [0], [1], [0, 0, 1, 1], [], []>} : vector<63x32xbf16>, vector<32x64xbf16>, vector<63x64xf32> -> vector<63x64xf32>
    %42 = arith.addf %36, %41 : vector<63x64xf32>
    %c0_38 = arith.constant 0 : index
    %c19 = arith.constant 19 : index
    %c0_39 = arith.constant 0 : index
    %43 = vector.load %arg1[%c0_38, %c19, %c0_39] : memref<1x90x32xbf16, #tpu.memory_space<vmem>>, vector<1x63x32xbf16>
    %44 = vector.shape_cast %43 : vector<1x63x32xbf16> to vector<63x32xbf16>
    %c7 = arith.constant 7 : index
    %c0_40 = arith.constant 0 : index
    %c0_41 = arith.constant 0 : index
    %45 = vector.load %arg2[%c7, %c0_40, %c0_41] : memref<9x32x64xbf16, #tpu.memory_space<vmem>>, vector<1x32x64xbf16>
    %46 = vector.shape_cast %45 : vector<1x32x64xbf16> to vector<32x64xbf16>
    %cst_42 = arith.constant dense<0.000000e+00> : vector<63x64xf32>
    %47 = tpu.matmul %44, %46, %cst_42 {dimension_numbers = #tpu.dot_dimension_numbers<[1], [0], [0], [1], [0, 0, 1, 1], [], []>} : vector<63x32xbf16>, vector<32x64xbf16>, vector<63x64xf32> -> vector<63x64xf32>
    %48 = arith.addf %42, %47 : vector<63x64xf32>
    %c0_43 = arith.constant 0 : index
    %c20 = arith.constant 20 : index
    %c0_44 = arith.constant 0 : index
    %49 = vector.load %arg1[%c0_43, %c20, %c0_44] : memref<1x90x32xbf16, #tpu.memory_space<vmem>>, vector<1x63x32xbf16>
    %50 = vector.shape_cast %49 : vector<1x63x32xbf16> to vector<63x32xbf16>
    %c8 = arith.constant 8 : index
    %c0_45 = arith.constant 0 : index
    %c0_46 = arith.constant 0 : index
    %51 = vector.load %arg2[%c8, %c0_45, %c0_46] : memref<9x32x64xbf16, #tpu.memory_space<vmem>>, vector<1x32x64xbf16>
    %52 = vector.shape_cast %51 : vector<1x32x64xbf16> to vector<32x64xbf16>
    %cst_47 = arith.constant dense<0.000000e+00> : vector<63x64xf32>
    %53 = tpu.matmul %50, %52, %cst_47 {dimension_numbers = #tpu.dot_dimension_numbers<[1], [0], [0], [1], [0, 0, 1, 1], [], []>} : vector<63x32xbf16>, vector<32x64xbf16>, vector<63x64xf32> -> vector<63x64xf32>
    %54 = arith.addf %48, %53 : vector<63x64xf32>
    %c0_48 = arith.constant 0 : index
    %c0_49 = arith.constant 0 : index
    %55 = vector.load %arg3[%c0_48, %c0_49] : memref<1x64xf32, #tpu.memory_space<vmem>>, vector<1x64xf32>
    %56 = vector.broadcast %55 : vector<1x64xf32> to vector<63x64xf32>
    %57 = arith.addf %54, %56 : vector<63x64xf32>
    %cst_50 = arith.constant 0.000000e+00 : f32
    %58 = vector.broadcast %cst_50 : f32 to vector<63x64xf32>
    %59 = arith.maximumf %57, %58 : vector<63x64xf32>
    %60 = arith.truncf %59 : vector<63x64xf32> to vector<63x64xbf16>
    %c0_51 = arith.constant 0 : index
    %c0_52 = arith.constant 0 : index
    %c0_53 = arith.constant 0 : index
    %61 = vector.load %arg4[%c0_51, %c0_52, %c0_53] : memref<1x63x64xbf16, #tpu.memory_space<vmem>>, vector<1x63x64xbf16>
    %62 = vector.shape_cast %61 : vector<1x63x64xbf16> to vector<63x64xbf16>
    %63 = vector.shape_cast %60 : vector<63x64xbf16> to vector<1x63x64xbf16>
    tpu.vector_store %arg4[%c0_51, %c0_52, %c0_53], %63 {strides = array<i32>} : memref<1x63x64xbf16, #tpu.memory_space<vmem>>, vector<1x63x64xbf16>,
    return
  }
  func.func @transform_0(%arg0: i32) -> (i32, i32, i32) {
    %c0_i32 = arith.constant 0 : i32
    %c0_i32_0 = arith.constant 0 : i32
    %c0_i32_1 = arith.constant 0 : i32
    return %arg0, %c0_i32, %c0_i32_0 : i32, i32, i32
  }
  func.func @transform_1(%arg0: i32) -> (i32, i32, i32) {
    %c0_i32 = arith.constant 0 : i32
    %c0_i32_0 = arith.constant 0 : i32
    %c0_i32_1 = arith.constant 0 : i32
    %c0_i32_2 = arith.constant 0 : i32
    return %c0_i32, %c0_i32_0, %c0_i32_1 : i32, i32, i32
  }
  func.func @transform_2(%arg0: i32) -> (i32, i32) {
    %c0_i32 = arith.constant 0 : i32
    %c0_i32_0 = arith.constant 0 : i32
    %c0_i32_1 = arith.constant 0 : i32
    return %c0_i32, %c0_i32_0 : i32, i32
  }
  func.func @transform_3(%arg0: i32) -> (i32, i32, i32) {
    %c0_i32 = arith.constant 0 : i32
    %c0_i32_0 = arith.constant 0 : i32
    %c0_i32_1 = arith.constant 0 : i32
    return %arg0, %c0_i32, %c0_i32_0 : i32, i32, i32
  }
}

module attributes {stable_mosaic.version = 11 : i64} {
  func.func @_head_kernel(%arg0: i32, %arg1: memref<2x4032xbf16, #tpu.memory_space<vmem>>, %arg2: memref<4032x128xbf16, #tpu.memory_space<vmem>>, %arg3: memref<1x128xf32, #tpu.memory_space<vmem>>, %arg4: memref<128x10xbf16, #tpu.memory_space<vmem>>, %arg5: memref<1x10xf32, #tpu.memory_space<vmem>>, %arg6: memref<2x10xf32, #tpu.memory_space<vmem>>) attributes {dimension_semantics = [#tpu.dimension_semantics<parallel>], iteration_bounds = array<i64: 1>, scalar_prefetch = 0 : i64, scratch_operands = 0 : i64, tpu.core_type = #tpu.core_type<tc>, window_params = [{transform_indices = @transform_0, window_bounds = array<i64: 2, 4032>}, {pipeline_mode = #tpu.pipeline_mode<synchronous>, transform_indices = @transform_1, window_bounds = array<i64: 4032, 128>}, {pipeline_mode = #tpu.pipeline_mode<synchronous>, transform_indices = @transform_2, window_bounds = array<i64: 1, 128>}, {pipeline_mode = #tpu.pipeline_mode<synchronous>, transform_indices = @transform_3, window_bounds = array<i64: 128, 10>}, {pipeline_mode = #tpu.pipeline_mode<synchronous>, transform_indices = @transform_4, window_bounds = array<i64: 1, 10>}, {transform_indices = @transform_5, window_bounds = array<i64: 2, 10>}]} {
    %c0 = arith.constant 0 : index
    %c0_0 = arith.constant 0 : index
    %0 = vector.load %arg1[%c0, %c0_0] : memref<2x4032xbf16, #tpu.memory_space<vmem>>, vector<2x4032xbf16>
    %c0_1 = arith.constant 0 : index
    %c0_2 = arith.constant 0 : index
    %1 = vector.load %arg2[%c0_1, %c0_2] : memref<4032x128xbf16, #tpu.memory_space<vmem>>, vector<4032x128xbf16>
    %cst = arith.constant dense<0.000000e+00> : vector<2x128xf32>
    %2 = tpu.matmul %0, %1, %cst {dimension_numbers = #tpu.dot_dimension_numbers<[1], [0], [0], [1], [0, 0, 1, 1], [], []>} : vector<2x4032xbf16>, vector<4032x128xbf16>, vector<2x128xf32> -> vector<2x128xf32>
    %c0_3 = arith.constant 0 : index
    %c0_4 = arith.constant 0 : index
    %3 = vector.load %arg3[%c0_3, %c0_4] : memref<1x128xf32, #tpu.memory_space<vmem>>, vector<1x128xf32>
    %4 = vector.broadcast %3 : vector<1x128xf32> to vector<2x128xf32>
    %5 = arith.addf %2, %4 : vector<2x128xf32>
    %cst_5 = arith.constant 0.000000e+00 : f32
    %6 = vector.broadcast %cst_5 : f32 to vector<2x128xf32>
    %7 = arith.maximumf %5, %6 : vector<2x128xf32>
    %8 = arith.truncf %7 : vector<2x128xf32> to vector<2x128xbf16>
    %c0_6 = arith.constant 0 : index
    %c0_7 = arith.constant 0 : index
    %9 = vector.load %arg4[%c0_6, %c0_7] : memref<128x10xbf16, #tpu.memory_space<vmem>>, vector<128x10xbf16>
    %cst_8 = arith.constant dense<0.000000e+00> : vector<2x10xf32>
    %10 = tpu.matmul %8, %9, %cst_8 {dimension_numbers = #tpu.dot_dimension_numbers<[1], [0], [0], [1], [0, 0, 1, 1], [], []>} : vector<2x128xbf16>, vector<128x10xbf16>, vector<2x10xf32> -> vector<2x10xf32>
    %c0_9 = arith.constant 0 : index
    %c0_10 = arith.constant 0 : index
    %11 = vector.load %arg5[%c0_9, %c0_10] : memref<1x10xf32, #tpu.memory_space<vmem>>, vector<1x10xf32>
    %12 = vector.broadcast %11 : vector<1x10xf32> to vector<2x10xf32>
    %13 = arith.addf %10, %12 : vector<2x10xf32>
    %cst_11 = arith.constant dense<0xFF800000> : vector<2xf32>
    %14 = vector.multi_reduction <maximumf>, %13, %cst_11 [1] : vector<2x10xf32> to vector<2xf32>
    %15 = vector.shape_cast %14 : vector<2xf32> to vector<2x1xf32>
    %16 = vector.broadcast %15 : vector<2x1xf32> to vector<2x10xf32>
    %17 = arith.subf %13, %16 : vector<2x10xf32>
    %18 = math.exp %17 : vector<2x10xf32>
    %cst_12 = arith.constant dense<0.000000e+00> : vector<2xf32>
    %19 = vector.multi_reduction <add>, %18, %cst_12 [1] : vector<2x10xf32> to vector<2xf32>
    %20 = vector.shape_cast %19 : vector<2xf32> to vector<2x1xf32>
    %21 = tpu.reciprocal %20 {approx = true} : vector<2x1xf32> -> vector<2x1xf32>
    %22 = vector.broadcast %21 : vector<2x1xf32> to vector<2x10xf32>
    %23 = arith.mulf %18, %22 : vector<2x10xf32>
    %c0_13 = arith.constant 0 : index
    %c0_14 = arith.constant 0 : index
    %24 = vector.load %arg6[%c0_13, %c0_14] : memref<2x10xf32, #tpu.memory_space<vmem>>, vector<2x10xf32>
    tpu.vector_store %arg6[%c0_13, %c0_14], %23 {strides = array<i32>} : memref<2x10xf32, #tpu.memory_space<vmem>>, vector<2x10xf32>,
    return
  }
  func.func @transform_0(%arg0: i32) -> (i32, i32) {
    %c0_i32 = arith.constant 0 : i32
    %c0_i32_0 = arith.constant 0 : i32
    return %arg0, %c0_i32 : i32, i32
  }
  func.func @transform_1(%arg0: i32) -> (i32, i32) {
    %c0_i32 = arith.constant 0 : i32
    %c0_i32_0 = arith.constant 0 : i32
    %c0_i32_1 = arith.constant 0 : i32
    return %c0_i32, %c0_i32_0 : i32, i32
  }
  func.func @transform_2(%arg0: i32) -> (i32, i32) {
    %c0_i32 = arith.constant 0 : i32
    %c0_i32_0 = arith.constant 0 : i32
    %c0_i32_1 = arith.constant 0 : i32
    return %c0_i32, %c0_i32_0 : i32, i32
  }
  func.func @transform_3(%arg0: i32) -> (i32, i32) {
    %c0_i32 = arith.constant 0 : i32
    %c0_i32_0 = arith.constant 0 : i32
    %c0_i32_1 = arith.constant 0 : i32
    return %c0_i32, %c0_i32_0 : i32, i32
  }
  func.func @transform_4(%arg0: i32) -> (i32, i32) {
    %c0_i32 = arith.constant 0 : i32
    %c0_i32_0 = arith.constant 0 : i32
    %c0_i32_1 = arith.constant 0 : i32
    return %c0_i32, %c0_i32_0 : i32, i32
  }
  func.func @transform_5(%arg0: i32) -> (i32, i32) {
    %c0_i32 = arith.constant 0 : i32
    %c0_i32_0 = arith.constant 0 : i32
    return %arg0, %c0_i32 : i32, i32
  }
}

</mosaic_0001>

<llo_original>
// kernel: net_forward.6
$region0: #{net_forward.6}
  #allocation0 [shape = 'u32[]', space=smem, size = 0x4, offset = 0x4, fixed_abs, tag = 'smem constant byte address 0x4 - core index']
  #allocation1 [shape = 'u32[72,128]{1,0:T(1,128)}', space=vmem, size = 0x9000, scoped, tag = 'internal scratch']
  %s0 = inlined_call_operand.vmem [shape: bf16[2,90,32], index: 0, kind: input, shape index: {}]
  %s1 = inlined_call_operand.vmem [shape: bf16[9,32,64], index: 1, kind: input, shape index: {}]
  %s2 = inlined_call_operand.vmem [shape: f32[1,64], index: 2, kind: input, shape index: {}]
  %s3 = inlined_call_operand.vmem [shape: bf16[2,63,64], index: 3, kind: output, shape index: {}]
  %s4 = sld [smem:[#allocation0]]
  $region45: #{net_forward.6} parent=0
    _
  %s6 = ssub.s32 1, %s4
  %s7 = scalar_select 0, %s6, %s4
  loop: start=0, step=1, limit=4
  $region2: #{net_forward.6} parent=0 // loop_pre_header
    _
  $region3: #{net_forward.6} parent=0 // loop_header
    %s9 = sphi 0, %s13
    %p10 = scmp.ge.s32.totalorder %s9, 4
    %s19 = sphi 0, %s21
    %s22 = sphi 0, %s19
    %s23 = sphi 0, %s22
    %s39 = sphi 0, %s23
    %s43 = sphi 0, %s43
    %s45 = sphi 0, %s43
    %s46 = sphi 0, %s45
    %s60 = sphi 0, %s46
    %s64 = sphi 0, %s64
    %s66 = sphi 0, %s64
    %s67 = sphi 0, %s66
    %s81 = sphi 0, %s67
    %s87 = sphi 0, %s89
    %s90 = sphi 0, %s87
    %s91 = sphi 0, %s90
    %s107 = sphi 0, %s91
  $region4: #{net_forward.6} parent=0 // loop_header_branch
    %12 = sbr.rel (%p10) target = $region8
  $region5: #{net_forward.6} parent=0 // loop_body
    %s14 = ssub.s32 %s9, 1
    %s15 = ssub.s32 %s9, 2
    %s16 = sadd.s32 %s9, 1
    %s17 = ssub.s32 %s9, %s16
    %p18 = scmp.eq.s32.totalorder %s17, 0
    %s20 = sadd.s32 %s19, 1
    %s21 = scalar_select %p18, %s19, %s20
    %p24 = pneg %p18
    %p25 = scmp.eq.s32.totalorder %s9, 1
    %p26 = por %p24, %p25
    %p27 = scmp.ne.s32.totalorder %s19, %s22
    %p28 = scmp.eq.s32.totalorder %s9, 0
    %p29 = por %p27, %p28
    %p30 = scmp.ne.s32.totalorder %s19, %s22
    %p31 = scmp.eq.s32.totalorder %s14, 1
    %p32 = por %p30, %p31
    %p33 = scmp.ne.s32.totalorder %s22, %s23
    %p34 = scmp.eq.s32.totalorder %s14, 0
    %p35 = por %p33, %p34
    %p36 = scmp.ne.s32.totalorder %s22, %s23
    %p37 = scmp.eq.s32.totalorder %s15, 1
    %p38 = por %p36, %p37
    %p40 = scmp.ne.s32.totalorder %s23, %s39
    %p41 = scmp.eq.s32.totalorder %s15, 0
    %p42 = por %p40, %p41
    %s44 = sadd.s32 %s43, 1
    %p47 = scmp.eq.s32.totalorder %s9, 1
    %p48 = scmp.ne.s32.totalorder %s43, %s45
    %p49 = scmp.eq.s32.totalorder %s9, 0
    %p50 = por %p48, %p49
    %p51 = scmp.ne.s32.totalorder %s43, %s45
    %p52 = scmp.eq.s32.totalorder %s14, 1
    %p53 = por %p51, %p52
    %p54 = scmp.ne.s32.totalorder %s45, %s46
    %p55 = scmp.eq.s32.totalorder %s14, 0
    %p56 = por %p54, %p55
    %p57 = scmp.ne.s32.totalorder %s45, %s46
    %p58 = scmp.eq.s32.totalorder %s15, 1
    %p59 = por %p57, %p58
    %p61 = scmp.ne.s32.totalorder %s46, %s60
    %p62 = scmp.eq.s32.totalorder %s15, 0
    %p63 = por %p61, %p62
    %s65 = sadd.s32 %s64, 1
    %p68 = scmp.eq.s32.totalorder %s9, 1
    %p69 = scmp.ne.s32.totalorder %s64, %s66
    %p70 = scmp.eq.s32.totalorder %s9, 0
    %p71 = por %p69, %p70
    %p72 = scmp.ne.s32.totalorder %s64, %s66
    %p73 = scmp.eq.s32.totalorder %s14, 1
    %p74 = por %p72, %p73
    %p75 = scmp.ne.s32.totalorder %s66, %s67
    %p76 = scmp.eq.s32.totalorder %s14, 0
    %p77 = por %p75, %p76
    %p78 = scmp.ne.s32.totalorder %s66, %s67
    %p79 = scmp.eq.s32.totalorder %s15, 1
    %p80 = por %p78, %p79
    %p82 = scmp.ne.s32.totalorder %s67, %s81
    %p83 = scmp.eq.s32.totalorder %s15, 0
    %p84 = por %p82, %p83
    %s85 = ssub.s32 %s9, %s16
    %p86 = scmp.eq.s32.totalorder %s85, 0
    %s88 = sadd.s32 %s87, 1
    %s89 = scalar_select %p86, %s87, %s88
    %p92 = pneg %p86
    %p93 = scmp.eq.s32.totalorder %s9, 1
    %p94 = por %p92, %p93
    %p95 = scmp.ne.s32.totalorder %s87, %s90
    %p96 = scmp.eq.s32.totalorder %s9, 0
    %p97 = por %p95, %p96
    %p98 = scmp.ne.s32.totalorder %s87, %s90
    %p99 = scmp.eq.s32.totalorder %s14, 1
    %p100 = por %p98, %p99
    %p101 = scmp.ne.s32.totalorder %s90, %s91
    %p102 = scmp.eq.s32.totalorder %s14, 0
    %p103 = por %p101, %p102
    %p104 = scmp.ne.s32.totalorder %s90, %s91
    %p105 = scmp.eq.s32.totalorder %s15, 1
    %p106 = por %p104, %p105
    %p108 = scmp.ne.s32.totalorder %s91, %s107
    %p109 = scmp.eq.s32.totalorder %s15, 0
    %p110 = por %p108, %p109
    %p111 = scmp.le.s32.totalorder 1, %s9
    %p112 = scmp.lt.s32.totalorder %s9, 3
    %p113 = pnand %p111, %p112
    %p114 = pneg %p113
    // Predicated region
    $region9: #{net_forward.6} parent=5 // pred_check
      _
    $region10: #{net_forward.6} parent=5 // pred_check_branch
      %116 = sbr.rel (%p113) target = $region12
    $region11: #{net_forward.6} parent=5 // pred_region
      %s117 = ssub.s32 %s9, 1
      // Predicated region
      $region13: #{net_forward.6} parent=11 // pred_check
        %p118 = pneg %p56
      $region14: #{net_forward.6} parent=11 // pred_check_branch
        %120 = sbr.rel (%p118) target = $region16
      $region15: #{net_forward.6} parent=11 // pred_region
        _
      $region16: #{net_forward.6} parent=11 // pred_fallthru
        _
      // Predicated region
      $region17: #{net_forward.6} parent=11 // pred_check
        %p121 = pneg %p77
      $region18: #{net_forward.6} parent=11 // pred_check_branch
        %123 = sbr.rel (%p121) target = $region20
      $region19: #{net_forward.6} parent=11 // pred_region
        _
      $region20: #{net_forward.6} parent=11 // pred_fallthru
        _
    $region12: #{net_forward.6} parent=5 // pred_fallthru
      _
    %p124 = scmp.lt.s32.totalorder %s9, 2
    // Predicated region
    $region21: #{net_forward.6} parent=5 // pred_check
      %p125 = pneg %p124
    $region22: #{net_forward.6} parent=5 // pred_check_branch
      %127 = sbr.rel (%p125) target = $region24
    $region23: #{net_forward.6} parent=5 // pred_region
      // Predicated region
      $region25: #{net_forward.6} parent=23 // pred_check
        %p128 = pneg %p29
      $region26: #{net_forward.6} parent=23 // pred_check_branch
        %130 = sbr.rel (%p128) target = $region28
      $region27: #{net_forward.6} parent=23 // pred_region
        %p131 = scmp.lt.s32.totalorder %s9, 1
        %s132 = scalar_select %p131, %s9, 1
        %s133 = smul.addr %s132, 12
        %s134 = smul.addr %s133, 4
        %s135 = scalar_lea.vmem %s0, %s134
      $region28: #{net_forward.6} parent=23 // pred_fallthru
        _
    $region24: #{net_forward.6} parent=5 // pred_fallthru
      _
    %p136 = scmp.le.s32.totalorder 1, %s9
    %p137 = scmp.lt.s32.totalorder %s9, 3
    %p138 = pnand %p136, %p137
    %p139 = pneg %p138
    // Predicated region
    $region29: #{net_forward.6} parent=5 // pred_check
      _
    $region30: #{net_forward.6} parent=5 // pred_check_branch
      %141 = sbr.rel (%p138) target = $region32
    $region31: #{net_forward.6} parent=5 // pred_region
      %s142 = ssub.s32 %s9, 1
      %p143 = scmp.lt.s32.totalorder %s14, 1
      %s144 = scalar_select %p143, %s14, 1
      %s145 = smul.addr %s144, 12
      %s146 = smul.addr %s145, 4
      %s147 = scalar_lea.vmem %s0, %s146
      %p148 = pneg %p35
      %p149 = pneg %p32
      %p150 = pneg %p56
      %p151 = pneg %p53
      %p152 = pneg %p77
      %p153 = pneg %p74
      %p154 = pneg %p103
      %p155 = pneg %p100
      %p156 = scmp.lt.s32.totalorder %s14, 1
      %s157 = scalar_select %p156, %s14, 1
      %s158 = smul.addr %s157, 8
      %s159 = smul.addr %s158, 4
      %s160 = scalar_lea.vmem %s3, %s159
      %p161 = scmp.lt.s32.totalorder %s14, 1
      %s162 = scalar_select %p161, %s14, 1
      %s163 = smul.addr %s162, 12
      %s164 = smul.addr %s163, 4
      %s165 = scalar_lea.vmem %s0, %s164
      %p166 = scmp.lt.s32.totalorder %s14, 1
      %s167 = scalar_select %p166, %s14, 1
      %s168 = smul.addr %s167, 8
      %s169 = smul.addr %s168, 4
      %s170 = scalar_lea.vmem %s3, %s169
      %v172 = vld [vmem:[%s165] sm:$0xf]
      %v173 = vld [vmem:[%s165 + $0x4] sm:$0xf]
      %v174 = vld [vmem:[%s165 + $0x8] sm:$0xf]
      %v175 = vld [vmem:[%s165 + $0xc] sm:$0xf]
      %v176 = vld [vmem:[%s165 + $0x10] sm:$0xf]
      %v177 = vld [vmem:[%s165 + $0x14] sm:$0xf]
      %v178 = vld [vmem:[%s165 + $0x18] sm:$0xf]
      %v179 = vld [vmem:[%s165 + $0x1c] sm:$0xf]
      %v180 = vld [vmem:[%s1] sm:$0xf]
      %v181 = vld [vmem:[%s1 + $0x4] sm:$0xf]
      %v182 = vld [vmem:[%s1 + $0x8] sm:$0xf]
      %v183 = vld [vmem:[%s1 + $0xc] sm:$0xf]
      %s184 = scalar_lea.vmem %s1, 16
      %v185 = vld [vmem:[%s184] sm:$0xf]
      %v186 = vld [vmem:[%s184 + $0x4] sm:$0xf]
      %v187 = vld [vmem:[%s184 + $0x8] sm:$0xf]
      %v188 = vld [vmem:[%s184 + $0xc] sm:$0xf]
      %v197 = vunpack.c.l.b16 %v172
      %v198 = vunpack.c.l.b16 %v173
      %v199 = vunpack.c.l.b16 %v174
      %v200 = vunpack.c.l.b16 %v175
      %v201 = vunpack.c.l.b16 %v176
      %v202 = vunpack.c.l.b16 %v177
      %v203 = vunpack.c.l.b16 %v178
      %v204 = vunpack.c.l.b16 %v179
      %v205 = vpack.c.b16 %v198, %v197
      %v206 = vpack.c.b16 %v200, %v199
      %v207 = vpack.c.b16 %v202, %v201
      %v208 = vpack.c.b16 %v204, %v203
      %vm209 = vsmask.f32 7424
      %v211 = vshrl.u32 %v205, 16
      %v213 = vshll.u32 %v205, 16
      %v215 = vrot.slane %v213, 1
      %v216 = vor.u32 %v211, %v215
      %v218 = vshll.u32 %v206, 16
      %v220 = vrot.slane %v218, 1
      %v221 = vsel %vm209, %v216, %v220
      %v222 = vshrl.u32 %v206, 16
      %v224 = vor.u32 %v222, %v220
      %v226 = vshll.u32 %v207, 16
      %v228 = vrot.slane %v226, 1
      %v229 = vsel %vm209, %v224, %v228
      %v230 = vshrl.u32 %v207, 16
      %v232 = vor.u32 %v230, %v228
      %v234 = vshll.u32 %v208, 16
      %v236 = vrot.slane %v234, 1
      %v237 = vsel %vm209, %v232, %v236
      %v238 = vshrl.u32 %v208, 16
      %v240 = vor.u32 %v238, %v236
      %v245 = vunpack.c.l.b16 %v185
      %v246 = vunpack.c.l.b16 %v186
      %v247 = vunpack.c.l.b16 %v187
      %v248 = vunpack.c.l.b16 %v188
      %v249 = vpack.c.b16 %v246, %v245
      %v250 = vpack.c.b16 %v248, %v247
      %vm253 = vcmask 261120
      %v255 = vsel %vm253, %v221, 0
      %v258 = vsel %vm253, %v229, 0
      %v261 = vsel %vm253, %v237, 0
      %v264 = vsel %vm253, %v240, 0
      %266 = vmatpush.bf16.msra.mxu0 0
      %267 = vmatpush.bf16.msra.mxu0 0
      %268 = vmatpush.bf16.msra.mxu0 0
      %269 = vmatpush.bf16.msra.mxu0 0
      %270 = vmatpush.bf16.msra.mxu0 0
      %271 = vmatpush.bf16.msra.mxu0 0
      %272 = vmatpush.bf16.msra.mxu0 %v250
      %273 = vmatpush.bf16.msra.mxu0 %v249
      %274 = vmatmul.bf16.gmra.mxu0 %v255
      %v275 = vpop.f32.mrf.mxu0
      %v276 = vadd.f32 0.0, %v275
      %v277 = vpop.f32.mrf.mxu0
      %v278 = vadd.f32 0.0, %v277
      %279 = vmatmul.bf16.gmra.mxu0 %v258
      %v280 = vpop.f32.mrf.mxu0
      %v281 = vadd.f32 0.0, %v280
      %v282 = vpop.f32.mrf.mxu0
      %v283 = vadd.f32 0.0, %v282
      %284 = vmatmul.bf16.gmra.mxu0 %v261
      %v285 = vpop.f32.mrf.mxu0
      %v286 = vadd.f32 0.0, %v285
      %v287 = vpop.f32.mrf.mxu0
      %v288 = vadd.f32 0.0, %v287
      %289 = vmatmul.bf16.gmra.mxu0 %v264
      %v290 = vpop.f32.mrf.mxu0
      %v291 = vadd.f32 0.0, %v290
      %v292 = vpop.f32.mrf.mxu0
      %v293 = vadd.f32 0.0, %v292
      %294 = vdwg.mxu0
      %v299 = vunpack.c.l.b16 %v180
      %v300 = vunpack.c.l.b16 %v181
      %v301 = vunpack.c.l.b16 %v182
      %v302 = vunpack.c.l.b16 %v183
      %v303 = vpack.c.b16 %v300, %v299
      %v304 = vpack.c.b16 %v302, %v301
      %v307 = vsel %vm253, %v205, 0
      %v309 = vsel %vm253, %v206, 0
      %v311 = vsel %vm253, %v207, 0
      %v313 = vsel %vm253, %v208, 0
      %315 = vmatpush.bf16.msra.mxu0 0
      %316 = vmatpush.bf16.msra.mxu0 0
      %317 = vmatpush.bf16.msra.mxu0 0
      %318 = vmatpush.bf16.msra.mxu0 0
      %319 = vmatpush.bf16.msra.mxu0 0
      %320 = vmatpush.bf16.msra.mxu0 0
      %321 = vmatpush.bf16.msra.mxu0 %v304
      %322 = vmatpush.bf16.msra.mxu0 %v303
      %323 = vmatmul.bf16.gmra.mxu0 %v307
      %v324 = vpop.f32.mrf.mxu0
      %v325 = vadd.f32 %v276, %v324
      %v326 = vpop.f32.mrf.mxu0
      %v327 = vadd.f32 %v278, %v326
      %328 = vmatmul.bf16.gmra.mxu0 %v309
      %v329 = vpop.f32.mrf.mxu0
      %v330 = vadd.f32 %v281, %v329
      %v331 = vpop.f32.mrf.mxu0
      %v332 = vadd.f32 %v283, %v331
      %333 = vmatmul.bf16.gmra.mxu0 %v311
      %v334 = vpop.f32.mrf.mxu0
      %v335 = vadd.f32 %v286, %v334
      %v336 = vpop.f32.mrf.mxu0
      %v337 = vadd.f32 %v288, %v336
      %338 = vmatmul.bf16.gmra.mxu0 %v313
      %v339 = vpop.f32.mrf.mxu0
      %v340 = vadd.f32 %v291, %v339
      %v341 = vpop.f32.mrf.mxu0
      %v342 = vadd.f32 %v293, %v341
      %343 = vdwg.mxu0
      %v344 = vld [vmem:[%s165] sm:$0xe]
      %v345 = vld [vmem:[%s165 + $0x4] sm:$0xf]
      %v346 = vld [vmem:[%s165 + $0x8] sm:$0xf]
      %v347 = vld [vmem:[%s165 + $0xc] sm:$0xf]
      %v348 = vld [vmem:[%s165 + $0x10] sm:$0xf]
      %v349 = vld [vmem:[%s165 + $0x14] sm:$0xf]
      %v350 = vld [vmem:[%s165 + $0x18] sm:$0xf]
      %v351 = vld [vmem:[%s165 + $0x1c] sm:$0xf]
      %v352 = vld [vmem:[%s165 + $0x20] sm:$0x1]
      %s353 = scalar_lea.vmem %s1, 32
      %v354 = vld [vmem:[%s353] sm:$0xf]
      %v355 = vld [vmem:[%s353 + $0x4] sm:$0xf]
      %v356 = vld [vmem:[%s353 + $0x8] sm:$0xf]
      %v357 = vld [vmem:[%s353 + $0xc] sm:$0xf]
      %v367 = vunpack.c.l.b16 %v344
      %v368 = vunpack.c.l.b16 %v345
      %v369 = vunpack.c.l.b16 %v346
      %v370 = vunpack.c.l.b16 %v347
      %v371 = vunpack.c.l.b16 %v348
      %v372 = vunpack.c.l.b16 %v349
      %v373 = vunpack.c.l.b16 %v350
      %v374 = vunpack.c.l.b16 %v351
      %v375 = vunpack.c.l.b16 %v352
      %v376 = vpack.c.b16 %v368, %v367
      %v377 = vpack.c.b16 %v370, %v369
      %v378 = vpack.c.b16 %v372, %v371
      %v379 = vpack.c.b16 %v374, %v373
      %v380 = vpack.c.b16 %v375, %v375
      %vm381 = vcmask 1046528
      %v382 = vrot.slane %v376, 1
      %v383 = vrot.slane %v377, 1
      %v384 = vsel %vm381, %v382, %v383
      %v385 = vrot.slane %v378, 1
      %v386 = vsel %vm381, %v383, %v385
      %v387 = vrot.slane %v379, 1
      %v388 = vsel %vm381, %v385, %v387
      %v389 = vrot.slane %v380, 1
      %v390 = vsel %vm381, %v387, %v389
      %v395 = vunpack.c.l.b16 %v354
      %v396 = vunpack.c.l.b16 %v355
      %v397 = vunpack.c.l.b16 %v356
      %v398 = vunpack.c.l.b16 %v357
      %v399 = vpack.c.b16 %v396, %v395
      %v400 = vpack.c.b16 %v398, %v397
      %v404 = vsel %vm253, %v384, 0
      %v407 = vsel %vm253, %v386, 0
      %v410 = vsel %vm253, %v388, 0
      %v413 = vsel %vm253, %v390, 0
      %415 = vmatpush.bf16.msra.mxu0 0
      %416 = vmatpush.bf16.msra.mxu0 0
      %417 = vmatpush.bf16.msra.mxu0 0
      %418 = vmatpush.bf16.msra.mxu0 0
      %419 = vmatpush.bf16.msra.mxu0 0
      %420 = vmatpush.bf16.msra.mxu0 0
      %421 = vmatpush.bf16.msra.mxu0 %v400
      %422 = vmatpush.bf16.msra.mxu0 %v399
      %423 = vmatmul.bf16.gmra.mxu0 %v404
      %v424 = vpop.f32.mrf.mxu0
      %v425 = vadd.f32 0.0, %v424
      %v426 = vpop.f32.mrf.mxu0
      %v427 = vadd.f32 0.0, %v426
      %428 = vmatmul.bf16.gmra.mxu0 %v407
      %v429 = vpop.f32.mrf.mxu0
      %v430 = vadd.f32 0.0, %v429
      %v431 = vpop.f32.mrf.mxu0
      %v432 = vadd.f32 0.0, %v431
      %433 = vmatmul.bf16.gmra.mxu0 %v410
      %v434 = vpop.f32.mrf.mxu0
      %v435 = vadd.f32 0.0, %v434
      %v436 = vpop.f32.mrf.mxu0
      %v437 = vadd.f32 0.0, %v436
      %438 = vmatmul.bf16.gmra.mxu0 %v413
      %v439 = vpop.f32.mrf.mxu0
      %v440 = vadd.f32 0.0, %v439
      %v441 = vpop.f32.mrf.mxu0
      %v442 = vadd.f32 0.0, %v441
      %443 = vdwg.mxu0
      %v444 = vadd.f32 %v325, %v425
      %v445 = vadd.f32 %v327, %v427
      %v446 = vadd.f32 %v330, %v430
      %v447 = vadd.f32 %v332, %v432
      %v448 = vadd.f32 %v335, %v435
      %v449 = vadd.f32 %v337, %v437
      %v450 = vadd.f32 %v340, %v440
      %v451 = vadd.f32 %v342, %v442
      %v452 = vld [vmem:[%s165 + $0x20] sm:$0xf]
      %s453 = scalar_lea.vmem %s1, 48
      %v454 = vld [vmem:[%s453] sm:$0xf]
      %v455 = vld [vmem:[%s453 + $0x4] sm:$0xf]
      %v456 = vld [vmem:[%s453 + $0x8] sm:$0xf]
      %v457 = vld [vmem:[%s453 + $0xc] sm:$0xf]
      %v459 = vunpack.c.l.b16 %v452
      %v460 = vpack.c.b16 %v369, %v368
      %v461 = vpack.c.b16 %v371, %v370
      %v462 = vpack.c.b16 %v373, %v372
      %v463 = vpack.c.b16 %v459, %v374
      %v465 = vshrl.u32 %v460, 16
      %v467 = vshll.u32 %v460, 16
      %v469 = vrot.slane %v467, 1
      %v470 = vor.u32 %v465, %v469
      %v472 = vshll.u32 %v461, 16
      %v474 = vrot.slane %v472, 1
      %v475 = vsel %vm209, %v470, %v474
      %v476 = vshrl.u32 %v461, 16
      %v478 = vor.u32 %v476, %v474
      %v480 = vshll.u32 %v462, 16
      %v482 = vrot.slane %v480, 1
      %v483 = vsel %vm209, %v478, %v482
      %v484 = vshrl.u32 %v462, 16
      %v486 = vor.u32 %v484, %v482
      %v488 = vshll.u32 %v463, 16
      %v490 = vrot.slane %v488, 1
      %v491 = vsel %vm209, %v486, %v490
      %v492 = vshrl.u32 %v463, 16
      %v494 = vor.u32 %v492, %v490
      %v499 = vunpack.c.l.b16 %v454
      %v500 = vunpack.c.l.b16 %v455
      %v501 = vunpack.c.l.b16 %v456
      %v502 = vunpack.c.l.b16 %v457
      %v503 = vpack.c.b16 %v500, %v499
      %v504 = vpack.c.b16 %v502, %v501
      %v508 = vsel %vm253, %v475, 0
      %v511 = vsel %vm253, %v483, 0
      %v514 = vsel %vm253, %v491, 0
      %v517 = vsel %vm253, %v494, 0
      %519 = vmatpush.bf16.msra.mxu0 0
      %520 = vmatpush.bf16.msra.mxu0 0
      %521 = vmatpush.bf16.msra.mxu0 0
      %522 = vmatpush.bf16.msra.mxu0 0
      %523 = vmatpush.bf16.msra.mxu0 0
      %524 = vmatpush.bf16.msra.mxu0 0
      %525 = vmatpush.bf16.msra.mxu0 %v504
      %526 = vmatpush.bf16.msra.mxu0 %v503
      %527 = vmatmul.bf16.gmra.mxu0 %v508
      %v528 = vpop.f32.mrf.mxu0
      %v529 = vadd.f32 0.0, %v528
      %v530 = vpop.f32.mrf.mxu0
      %v531 = vadd.f32 0.0, %v530
      %532 = vmatmul.bf16.gmra.mxu0 %v511
      %v533 = vpop.f32.mrf.mxu0
      %v534 = vadd.f32 0.0, %v533
      %v535 = vpop.f32.mrf.mxu0
      %v536 = vadd.f32 0.0, %v535
      %537 = vmatmul.bf16.gmra.mxu0 %v514
      %v538 = vpop.f32.mrf.mxu0
      %v539 = vadd.f32 0.0, %v538
      %v540 = vpop.f32.mrf.mxu0
      %v541 = vadd.f32 0.0, %v540
      %542 = vmatmul.bf16.gmra.mxu0 %v517
      %v543 = vpop.f32.mrf.mxu0
      %v544 = vadd.f32 0.0, %v543
      %v545 = vpop.f32.mrf.mxu0
      %v546 = vadd.f32 0.0, %v545
      %547 = vdwg.mxu0
      %v548 = vadd.f32 %v444, %v529
      %v549 = vadd.f32 %v445, %v531
      %v550 = vadd.f32 %v446, %v534
      %v551 = vadd.f32 %v447, %v536
      %v552 = vadd.f32 %v448, %v539
      %v553 = vadd.f32 %v449, %v541
      %v554 = vadd.f32 %v450, %v544
      %v555 = vadd.f32 %v451, %v546
      %v556 = vld [vmem:[%s165 + $0x4] sm:$0xe]
      %v557 = vld [vmem:[%s165 + $0x8] sm:$0xf]
      %v558 = vld [vmem:[%s165 + $0xc] sm:$0xf]
      %v559 = vld [vmem:[%s165 + $0x10] sm:$0xf]
      %v560 = vld [vmem:[%s165 + $0x14] sm:$0xf]
      %v561 = vld [vmem:[%s165 + $0x18] sm:$0xf]
      %v562 = vld [vmem:[%s165 + $0x1c] sm:$0xf]
      %v563 = vld [vmem:[%s165 + $0x20] sm:$0xf]
      %v564 = vld [vmem:[%s165 + $0x24] sm:$0x1]
      %s565 = scalar_lea.vmem %s1, 64
      %v566 = vld [vmem:[%s565] sm:$0xf]
      %v567 = vld [vmem:[%s565 + $0x4] sm:$0xf]
      %v568 = vld [vmem:[%s565 + $0x8] sm:$0xf]
      %v569 = vld [vmem:[%s565 + $0xc] sm:$0xf]
      %v579 = vunpack.c.l.b16 %v556
      %v580 = vunpack.c.l.b16 %v557
      %v581 = vunpack.c.l.b16 %v558
      %v582 = vunpack.c.l.b16 %v559
      %v583 = vunpack.c.l.b16 %v560
      %v584 = vunpack.c.l.b16 %v561
      %v585 = vunpack.c.l.b16 %v562
      %v586 = vunpack.c.l.b16 %v563
      %v587 = vunpack.c.l.b16 %v564
      %v588 = vpack.c.b16 %v580, %v579
      %v589 = vpack.c.b16 %v582, %v581
      %v590 = vpack.c.b16 %v584, %v583
      %v591 = vpack.c.b16 %v586, %v585
      %v592 = vpack.c.b16 %v587, %v587
      %v593 = vrot.slane %v588, 1
      %v594 = vrot.slane %v589, 1
      %v595 = vsel %vm381, %v593, %v594
      %v596 = vrot.slane %v590, 1
      %v597 = vsel %vm381, %v594, %v596
      %v598 = vrot.slane %v591, 1
      %v599 = vsel %vm381, %v596, %v598
      %v600 = vrot.slane %v592, 1
      %v601 = vsel %vm381, %v598, %v600
      %v606 = vunpack.c.l.b16 %v566
      %v607 = vunpack.c.l.b16 %v567
      %v608 = vunpack.c.l.b16 %v568
      %v609 = vunpack.c.l.b16 %v569
      %v610 = vpack.c.b16 %v607, %v606
      %v611 = vpack.c.b16 %v609, %v608
      %v615 = vsel %vm253, %v595, 0
      %v618 = vsel %vm253, %v597, 0
      %v621 = vsel %vm253, %v599, 0
      %v624 = vsel %vm253, %v601, 0
      %626 = vmatpush.bf16.msra.mxu0 0
      %627 = vmatpush.bf16.msra.mxu0 0
      %628 = vmatpush.bf16.msra.mxu0 0
      %629 = vmatpush.bf16.msra.mxu0 0
      %630 = vmatpush.bf16.msra.mxu0 0
      %631 = vmatpush.bf16.msra.mxu0 0
      %632 = vmatpush.bf16.msra.mxu0 %v611
      %633 = vmatpush.bf16.msra.mxu0 %v610
      %634 = vmatmul.bf16.gmra.mxu0 %v615
      %v635 = vpop.f32.mrf.mxu0
      %v636 = vadd.f32 0.0, %v635
      %v637 = vpop.f32.mrf.mxu0
      %v638 = vadd.f32 0.0, %v637
      %639 = vmatmul.bf16.gmra.mxu0 %v618
      %v640 = vpop.f32.mrf.mxu0
      %v641 = vadd.f32 0.0, %v640
      %v642 = vpop.f32.mrf.mxu0
      %v643 = vadd.f32 0.0, %v642
      %644 = vmatmul.bf16.gmra.mxu0 %v621
      %v645 = vpop.f32.mrf.mxu0
      %v646 = vadd.f32 0.0, %v645
      %v647 = vpop.f32.mrf.mxu0
      %v648 = vadd.f32 0.0, %v647
      %649 = vmatmul.bf16.gmra.mxu0 %v624
      %v650 = vpop.f32.mrf.mxu0
      %v651 = vadd.f32 0.0, %v650
      %v652 = vpop.f32.mrf.mxu0
      %v653 = vadd.f32 0.0, %v652
      %654 = vdwg.mxu0
      %v655 = vadd.f32 %v548, %v636
      %v656 = vadd.f32 %v549, %v638
      %v657 = vadd.f32 %v550, %v641
      %v658 = vadd.f32 %v551, %v643
      %v659 = vadd.f32 %v552, %v646
      %v660 = vadd.f32 %v553, %v648
      %v661 = vadd.f32 %v554, %v651
      %v662 = vadd.f32 %v555, %v653
      %s663 = scalar_lea.vmem %s1, 80
      %v664 = vld [vmem:[%s663] sm:$0xf]
      %v665 = vld [vmem:[%s663 + $0x4] sm:$0xf]
      %v666 = vld [vmem:[%s663 + $0x8] sm:$0xf]
      %v667 = vld [vmem:[%s663 + $0xc] sm:$0xf]
      %vm668 = vsmask.f32 6400
      %v670 = vshrl.u32 %v588, 16
      %v672 = vrot.slane %v670, 1
      %v673 = vshll.u32 %v588, 16
      %v675 = vrot.slane %v673, 2
      %v676 = vor.u32 %v672, %v675
      %v678 = vshrl.u32 %v589, 16
      %v680 = vrot.slane %v678, 1
      %v681 = vshll.u32 %v589, 16
      %v683 = vrot.slane %v681, 2
      %v684 = vor.u32 %v680, %v683
      %v685 = vsel %vm668, %v676, %v684
      %v687 = vshrl.u32 %v590, 16
      %v689 = vrot.slane %v687, 1
      %v690 = vshll.u32 %v590, 16
      %v692 = vrot.slane %v690, 2
      %v693 = vor.u32 %v689, %v692
      %v694 = vsel %vm668, %v684, %v693
      %v696 = vshrl.u32 %v591, 16
      %v698 = vrot.slane %v696, 1
      %v699 = vshll.u32 %v591, 16
      %v701 = vrot.slane %v699, 2
      %v702 = vor.u32 %v698, %v701
      %v703 = vsel %vm668, %v693, %v702
      %v705 = vshrl.u32 %v592, 16
      %v707 = vrot.slane %v705, 1
      %v708 = vshll.u32 %v592, 16
      %v710 = vrot.slane %v708, 2
      %v711 = vor.u32 %v707, %v710
      %v712 = vsel %vm668, %v702, %v711
      %v717 = vunpack.c.l.b16 %v664
      %v718 = vunpack.c.l.b16 %v665
      %v719 = vunpack.c.l.b16 %v666
      %v720 = vunpack.c.l.b16 %v667
      %v721 = vpack.c.b16 %v718, %v717
      %v722 = vpack.c.b16 %v720, %v719
      %v726 = vsel %vm253, %v685, 0
      %v729 = vsel %vm253, %v694, 0
      %v732 = vsel %vm253, %v703, 0
      %v735 = vsel %vm253, %v712, 0
      %737 = vmatpush.bf16.msra.mxu0 0
      %738 = vmatpush.bf16.msra.mxu0 0
      %739 = vmatpush.bf16.msra.mxu0 0
      %740 = vmatpush.bf16.msra.mxu0 0
      %741 = vmatpush.bf16.msra.mxu0 0
      %742 = vmatpush.bf16.msra.mxu0 0
      %743 = vmatpush.bf16.msra.mxu0 %v722
      %744 = vmatpush.bf16.msra.mxu0 %v721
      %745 = vmatmul.bf16.gmra.mxu0 %v726
      %v746 = vpop.f32.mrf.mxu0
      %v747 = vadd.f32 0.0, %v746
      %v748 = vpop.f32.mrf.mxu0
      %v749 = vadd.f32 0.0, %v748
      %750 = vmatmul.bf16.gmra.mxu0 %v729
      %v751 = vpop.f32.mrf.mxu0
      %v752 = vadd.f32 0.0, %v751
      %v753 = vpop.f32.mrf.mxu0
      %v754 = vadd.f32 0.0, %v753
      %755 = vmatmul.bf16.gmra.mxu0 %v732
      %v756 = vpop.f32.mrf.mxu0
      %v757 = vadd.f32 0.0, %v756
      %v758 = vpop.f32.mrf.mxu0
      %v759 = vadd.f32 0.0, %v758
      %760 = vmatmul.bf16.gmra.mxu0 %v735
      %v761 = vpop.f32.mrf.mxu0
      %v762 = vadd.f32 0.0, %v761
      %v763 = vpop.f32.mrf.mxu0
      %v764 = vadd.f32 0.0, %v763
      %765 = vdwg.mxu0
      %v766 = vadd.f32 %v655, %v747
      %v767 = vadd.f32 %v656, %v749
      %v768 = vadd.f32 %v657, %v752
      %v769 = vadd.f32 %v658, %v754
      %v770 = vadd.f32 %v659, %v757
      %v771 = vadd.f32 %v660, %v759
      %v772 = vadd.f32 %v661, %v762
      %v773 = vadd.f32 %v662, %v764
      %v774 = vld [vmem:[%s165 + $0x8] sm:$0xe]
      %v775 = vld [vmem:[%s165 + $0xc] sm:$0xf]
      %v776 = vld [vmem:[%s165 + $0x10] sm:$0xf]
      %v777 = vld [vmem:[%s165 + $0x14] sm:$0xf]
      %v778 = vld [vmem:[%s165 + $0x18] sm:$0xf]
      %v779 = vld [vmem:[%s165 + $0x1c] sm:$0xf]
      %v780 = vld [vmem:[%s165 + $0x20] sm:$0xf]
      %v781 = vld [vmem:[%s165 + $0x24] sm:$0xf]
      %v782 = vld [vmem:[%s165 + $0x28] sm:$0x1]
      %s783 = scalar_lea.vmem %s1, 96
      %v784 = vld [vmem:[%s783] sm:$0xf]
      %v785 = vld [vmem:[%s783 + $0x4] sm:$0xf]
      %v786 = vld [vmem:[%s783 + $0x8] sm:$0xf]
      %v787 = vld [vmem:[%s783 + $0xc] sm:$0xf]
      %v797 = vunpack.c.l.b16 %v774
      %v798 = vunpack.c.l.b16 %v775
      %v799 = vunpack.c.l.b16 %v776
      %v800 = vunpack.c.l.b16 %v777
      %v801 = vunpack.c.l.b16 %v778
      %v802 = vunpack.c.l.b16 %v779
      %v803 = vunpack.c.l.b16 %v780
      %v804 = vunpack.c.l.b16 %v781
      %v805 = vunpack.c.l.b16 %v782
      %v806 = vpack.c.b16 %v798, %v797
      %v807 = vpack.c.b16 %v800, %v799
      %v808 = vpack.c.b16 %v802, %v801
      %v809 = vpack.c.b16 %v804, %v803
      %v810 = vpack.c.b16 %v805, %v805
      %v811 = vrot.slane %v806, 1
      %v812 = vrot.slane %v807, 1
      %v813 = vsel %vm381, %v811, %v812
      %v814 = vrot.slane %v808, 1
      %v815 = vsel %vm381, %v812, %v814
      %v816 = vrot.slane %v809, 1
      %v817 = vsel %vm381, %v814, %v816
      %v818 = vrot.slane %v810, 1
      %v819 = vsel %vm381, %v816, %v818
      %v824 = vunpack.c.l.b16 %v784
      %v825 = vunpack.c.l.b16 %v785
      %v826 = vunpack.c.l.b16 %v786
      %v827 = vunpack.c.l.b16 %v787
      %v828 = vpack.c.b16 %v825, %v824
      %v829 = vpack.c.b16 %v827, %v826
      %v833 = vsel %vm253, %v813, 0
      %v836 = vsel %vm253, %v815, 0
      %v839 = vsel %vm253, %v817, 0
      %v842 = vsel %vm253, %v819, 0
      %844 = vmatpush.bf16.msra.mxu0 0
      %845 = vmatpush.bf16.msra.mxu0 0
      %846 = vmatpush.bf16.msra.mxu0 0
      %847 = vmatpush.bf16.msra.mxu0 0
      %848 = vmatpush.bf16.msra.mxu0 0
      %849 = vmatpush.bf16.msra.mxu0 0
      %850 = vmatpush.bf16.msra.mxu0 %v829
      %851 = vmatpush.bf16.msra.mxu0 %v828
      %852 = vmatmul.bf16.gmra.mxu0 %v833
      %v853 = vpop.f32.mrf.mxu0
      %v854 = vadd.f32 0.0, %v853
      %v855 = vpop.f32.mrf.mxu0
      %v856 = vadd.f32 0.0, %v855
      %857 = vmatmul.bf16.gmra.mxu0 %v836
      %v858 = vpop.f32.mrf.mxu0
      %v859 = vadd.f32 0.0, %v858
      %v860 = vpop.f32.mrf.mxu0
      %v861 = vadd.f32 0.0, %v860
      %862 = vmatmul.bf16.gmra.mxu0 %v839
      %v863 = vpop.f32.mrf.mxu0
      %v864 = vadd.f32 0.0, %v863
      %v865 = vpop.f32.mrf.mxu0
      %v866 = vadd.f32 0.0, %v865
      %867 = vmatmul.bf16.gmra.mxu0 %v842
      %v868 = vpop.f32.mrf.mxu0
      %v869 = vadd.f32 0.0, %v868
      %v870 = vpop.f32.mrf.mxu0
      %v871 = vadd.f32 0.0, %v870
      %872 = vdwg.mxu0
      %v873 = vadd.f32 %v766, %v854
      %v874 = vadd.f32 %v767, %v856
      %v875 = vadd.f32 %v768, %v859
      %v876 = vadd.f32 %v769, %v861
      %v877 = vadd.f32 %v770, %v864
      %v878 = vadd.f32 %v771, %v866
      %v879 = vadd.f32 %v772, %v869
      %v880 = vadd.f32 %v773, %v871
      %s881 = scalar_lea.vmem %s1, 112
      %v882 = vld [vmem:[%s881] sm:$0xf]
      %v883 = vld [vmem:[%s881 + $0x4] sm:$0xf]
      %v884 = vld [vmem:[%s881 + $0x8] sm:$0xf]
      %v885 = vld [vmem:[%s881 + $0xc] sm:$0xf]
      %v887 = vshrl.u32 %v806, 16
      %v889 = vrot.slane %v887, 1
      %v890 = vshll.u32 %v806, 16
      %v892 = vrot.slane %v890, 2
      %v893 = vor.u32 %v889, %v892
      %v895 = vshrl.u32 %v807, 16
      %v897 = vrot.slane %v895, 1
      %v898 = vshll.u32 %v807, 16
      %v900 = vrot.slane %v898, 2
      %v901 = vor.u32 %v897, %v900
      %v902 = vsel %vm668, %v893, %v901
      %v904 = vshrl.u32 %v808, 16
      %v906 = vrot.slane %v904, 1
      %v907 = vshll.u32 %v808, 16
      %v909 = vrot.slane %v907, 2
      %v910 = vor.u32 %v906, %v909
      %v911 = vsel %vm668, %v901, %v910
      %v913 = vshrl.u32 %v809, 16
      %v915 = vrot.slane %v913, 1
      %v916 = vshll.u32 %v809, 16
      %v918 = vrot.slane %v916, 2
      %v919 = vor.u32 %v915, %v918
      %v920 = vsel %vm668, %v910, %v919
      %v922 = vshrl.u32 %v810, 16
      %v924 = vrot.slane %v922, 1
      %v925 = vshll.u32 %v810, 16
      %v927 = vrot.slane %v925, 2
      %v928 = vor.u32 %v924, %v927
      %v929 = vsel %vm668, %v919, %v928
      %v934 = vunpack.c.l.b16 %v882
      %v935 = vunpack.c.l.b16 %v883
      %v936 = vunpack.c.l.b16 %v884
      %v937 = vunpack.c.l.b16 %v885
      %v938 = vpack.c.b16 %v935, %v934
      %v939 = vpack.c.b16 %v937, %v936
      %v943 = vsel %vm253, %v902, 0
      %v946 = vsel %vm253, %v911, 0
      %v949 = vsel %vm253, %v920, 0
      %v952 = vsel %vm253, %v929, 0
      %954 = vmatpush.bf16.msra.mxu0 0
      %955 = vmatpush.bf16.msra.mxu0 0
      %956 = vmatpush.bf16.msra.mxu0 0
      %957 = vmatpush.bf16.msra.mxu0 0
      %958 = vmatpush.bf16.msra.mxu0 0
      %959 = vmatpush.bf16.msra.mxu0 0
      %960 = vmatpush.bf16.msra.mxu0 %v939
      %961 = vmatpush.bf16.msra.mxu0 %v938
      %962 = vmatmul.bf16.gmra.mxu0 %v943
      %v963 = vpop.f32.mrf.mxu0
      %v964 = vadd.f32 0.0, %v963
      %v965 = vpop.f32.mrf.mxu0
      %v966 = vadd.f32 0.0, %v965
      %967 = vmatmul.bf16.gmra.mxu0 %v946
      %v968 = vpop.f32.mrf.mxu0
      %v969 = vadd.f32 0.0, %v968
      %v970 = vpop.f32.mrf.mxu0
      %v971 = vadd.f32 0.0, %v970
      %972 = vmatmul.bf16.gmra.mxu0 %v949
      %v973 = vpop.f32.mrf.mxu0
      %v974 = vadd.f32 0.0, %v973
      %v975 = vpop.f32.mrf.mxu0
      %v976 = vadd.f32 0.0, %v975
      %977 = vmatmul.bf16.gmra.mxu0 %v952
      %v978 = vpop.f32.mrf.mxu0
      %v979 = vadd.f32 0.0, %v978
      %v980 = vpop.f32.mrf.mxu0
      %v981 = vadd.f32 0.0, %v980
      %982 = vdwg.mxu0
      %v983 = vadd.f32 %v873, %v964
      %v984 = vadd.f32 %v874, %v966
      %v985 = vadd.f32 %v875, %v969
      %v986 = vadd.f32 %v876, %v971
      %v987 = vadd.f32 %v877, %v974
      %v988 = vadd.f32 %v878, %v976
      %v989 = vadd.f32 %v879, %v979
      %v990 = vadd.f32 %v880, %v981
      %v991 = vld [vmem:[%s165 + $0x8] sm:$0xc]
      %v992 = vld [vmem:[%s165 + $0x28] sm:$0x3]
      %s993 = scalar_lea.vmem %s1, 128
      %v994 = vld [vmem:[%s993] sm:$0xf]
      %v995 = vld [vmem:[%s993 + $0x4] sm:$0xf]
      %v996 = vld [vmem:[%s993 + $0x8] sm:$0xf]
      %v997 = vld [vmem:[%s993 + $0xc] sm:$0xf]
      %v1000 = vunpack.c.l.b16 %v991
      %v1001 = vunpack.c.l.b16 %v992
      %v1002 = vpack.c.b16 %v798, %v1000
      %v1003 = vpack.c.b16 %v1001, %v1001
      %vm1004 = vcmask 1045504
      %v1005 = vrot.slane %v1002, 2
      %v1006 = vrot.slane %v807, 2
      %v1007 = vsel %vm1004, %v1005, %v1006
      %v1008 = vrot.slane %v808, 2
      %v1009 = vsel %vm1004, %v1006, %v1008
      %v1010 = vrot.slane %v809, 2
      %v1011 = vsel %vm1004, %v1008, %v1010
      %v1012 = vrot.slane %v1003, 2
      %v1013 = vsel %vm1004, %v1010, %v1012
      %v1018 = vunpack.c.l.b16 %v994
      %v1019 = vunpack.c.l.b16 %v995
      %v1020 = vunpack.c.l.b16 %v996
      %v1021 = vunpack.c.l.b16 %v997
      %v1022 = vpack.c.b16 %v1019, %v1018
      %v1023 = vpack.c.b16 %v1021, %v1020
      %v1027 = vsel %vm253, %v1007, 0
      %v1030 = vsel %vm253, %v1009, 0
      %v1033 = vsel %vm253, %v1011, 0
      %v1036 = vsel %vm253, %v1013, 0
      %1038 = vmatpush.bf16.msra.mxu0 0
      %1039 = vmatpush.bf16.msra.mxu0 0
      %1040 = vmatpush.bf16.msra.mxu0 0
      %1041 = vmatpush.bf16.msra.mxu0 0
      %1042 = vmatpush.bf16.msra.mxu0 0
      %1043 = vmatpush.bf16.msra.mxu0 0
      %1044 = vmatpush.bf16.msra.mxu0 %v1023
      %1045 = vmatpush.bf16.msra.mxu0 %v1022
      %1046 = vmatmul.bf16.gmra.mxu0 %v1027
      %v1047 = vpop.f32.mrf.mxu0
      %v1048 = vadd.f32 0.0, %v1047
      %v1049 = vpop.f32.mrf.mxu0
      %v1050 = vadd.f32 0.0, %v1049
      %1051 = vmatmul.bf16.gmra.mxu0 %v1030
      %v1052 = vpop.f32.mrf.mxu0
      %v1053 = vadd.f32 0.0, %v1052
      %v1054 = vpop.f32.mrf.mxu0
      %v1055 = vadd.f32 0.0, %v1054
      %1056 = vmatmul.bf16.gmra.mxu0 %v1033
      %v1057 = vpop.f32.mrf.mxu0
      %v1058 = vadd.f32 0.0, %v1057
      %v1059 = vpop.f32.mrf.mxu0
      %v1060 = vadd.f32 0.0, %v1059
      %1061 = vmatmul.bf16.gmra.mxu0 %v1036
      %v1062 = vpop.f32.mrf.mxu0
      %v1063 = vadd.f32 0.0, %v1062
      %v1064 = vpop.f32.mrf.mxu0
      %v1065 = vadd.f32 0.0, %v1064
      %1066 = vdwg.mxu0
      %v1067 = vadd.f32 %v983, %v1048
      %v1068 = vadd.f32 %v984, %v1050
      %v1069 = vadd.f32 %v985, %v1053
      %v1070 = vadd.f32 %v986, %v1055
      %v1071 = vadd.f32 %v987, %v1058
      %v1072 = vadd.f32 %v988, %v1060
      %v1073 = vadd.f32 %v989, %v1063
      %v1074 = vadd.f32 %v990, %v1065
      %v1075 = vld [vmem:[%s2] sm:$0x1]
      %v1077 = vperm.slane %v1075, 0
      %v1079 = vadd.f32 %v1067, %v1077
      %v1080 = vadd.f32 %v1068, %v1077
      %v1081 = vadd.f32 %v1069, %v1077
      %v1082 = vadd.f32 %v1070, %v1077
      %v1083 = vadd.f32 %v1071, %v1077
      %v1084 = vadd.f32 %v1072, %v1077
      %v1085 = vadd.f32 %v1073, %v1077
      %v1086 = vadd.f32 %v1074, %v1077
      %v1087 = vmax.f32 %v1079, 0.0
      %v1088 = vmax.f32 %v1080, 0.0
      %v1089 = vmax.f32 %v1081, 0.0
      %v1090 = vmax.f32 %v1082, 0.0
      %v1091 = vmax.f32 %v1083, 0.0
      %v1092 = vmax.f32 %v1084, 0.0
      %v1093 = vmax.f32 %v1085, 0.0
      %v1094 = vmax.f32 %v1086, 0.0
      %v1095 = vpack.c.bf16 %v1087, %v1087
      %v1096 = vpack.c.bf16 %v1088, %v1088
      %v1097 = vpack.c.bf16 %v1089, %v1089
      %v1098 = vpack.c.bf16 %v1090, %v1090
      %v1099 = vpack.c.bf16 %v1091, %v1091
      %v1100 = vpack.c.bf16 %v1092, %v1092
      %v1101 = vpack.c.bf16 %v1093, %v1093
      %v1102 = vpack.c.bf16 %v1094, %v1094
      %vm1103 = vcmask 519168
      %1104 = vst.msk [vmem:[%s170] sm:$0xf] %vm1103, %v1095
      %1105 = vst.msk [vmem:[%s170 + $0x4] sm:$0xf] %vm1103, %v1096
      %1106 = vst.msk [vmem:[%s170 + $0x8] sm:$0xf] %vm1103, %v1097
      %1107 = vst.msk [vmem:[%s170 + $0xc] sm:$0xf] %vm1103, %v1098
      %1108 = vst.msk [vmem:[%s170 + $0x10] sm:$0xf] %vm1103, %v1099
      %1109 = vst.msk [vmem:[%s170 + $0x14] sm:$0xf] %vm1103, %v1100
      %1110 = vst.msk [vmem:[%s170 + $0x18] sm:$0xf] %vm1103, %v1101
      %vm1111 = vcmask 519168
      %vm1112 = vsmask.f32 3328
      %vm1113 = vmand %vm1111, %vm1112
      %v1114 = vld [vmem:[%s170 + $0x1c] sm:$0xf]
      %v1115 = vsel %vm1113, %v1102, %v1114
      %1116 = vst [vmem:[%s170 + $0x1c] sm:$0xf] %v1115
      %p1117 = scmp.lt.s32.totalorder %s14, 1
      %s1118 = scalar_select %p1117, %s14, 1
      %s1119 = smul.addr %s1118, 8
      %s1120 = smul.addr %s1119, 4
      %s1121 = scalar_lea.vmem %s3, %s1120
      // Predicated region
      $region33: #{net_forward.6} parent=31 // pred_check
        %p1122 = pneg %p100
      $region34: #{net_forward.6} parent=31 // pred_check_branch
        %1124 = sbr.rel (%p1122) target = $region36
      $region35: #{net_forward.6} parent=31 // pred_region
        _
      $region36: #{net_forward.6} parent=31 // pred_fallthru
        _
    $region32: #{net_forward.6} parent=5 // pred_fallthru
      _
    %p1125 = scmp.le.s32.totalorder 2, %s9
    // Predicated region
    $region37: #{net_forward.6} parent=5 // pred_check
      %p1126 = pneg %p1125
    $region38: #{net_forward.6} parent=5 // pred_check_branch
      %1128 = sbr.rel (%p1126) target = $region40
    $region39: #{net_forward.6} parent=5 // pred_region
      %s1129 = ssub.s32 %s9, 2
      // Predicated region
      $region41: #{net_forward.6} parent=39 // pred_check
        %p1130 = pneg %p106
      $region42: #{net_forward.6} parent=39 // pred_check_branch
        %1132 = sbr.rel (%p1130) target = $region44
      $region43: #{net_forward.6} parent=39 // pred_region
        %p1133 = scmp.lt.s32.totalorder %s15, 1
        %s1134 = scalar_select %p1133, %s15, 1
        %s1135 = smul.addr %s1134, 8
        %s1136 = smul.addr %s1135, 4
        %s1137 = scalar_lea.vmem %s3, %s1136
      $region44: #{net_forward.6} parent=39 // pred_fallthru
        _
    $region40: #{net_forward.6} parent=5 // pred_fallthru
      _
  $region6: #{net_forward.6} parent=0 // loop_footer
    %s13 = sadd.s32 1, %s9
  $region7: #{net_forward.6} parent=0 // loop_footer_branch
    %8 = sbr.rel target = $region3
  $region8: #{net_forward.6} parent=0 // loop_exit
    _

// kernel: net_forward.5
$region0: #{net_forward.5}
  #allocation0 [shape = 'u32[]', space=smem, size = 0x4, offset = 0x4, fixed_abs, tag = 'smem constant byte address 0x4 - core index']
  #allocation1 [shape = 'u32[72,128]{1,0:T(1,128)}', space=vmem, size = 0x9000, scoped, tag = 'internal scratch']
  %s0 = inlined_call_operand.vmem [shape: bf16[2,136,16], index: 0, kind: input, shape index: {}]
  %s1 = inlined_call_operand.vmem [shape: bf16[2,136,16], index: 1, kind: input, shape index: {}]
  %s2 = inlined_call_operand.vmem [shape: bf16[12,16,64], index: 2, kind: input, shape index: {}]
  %s3 = inlined_call_operand.vmem [shape: f32[1,64], index: 3, kind: input, shape index: {}]
  %s4 = inlined_call_operand.vmem [shape: bf16[2,7,7,32], index: 4, kind: output, shape index: {}]
  %s5 = sld [smem:[#allocation0]]
  $region49: #{net_forward.5} parent=0
    _
  %s7 = ssub.s32 1, %s5
  %s8 = scalar_select 0, %s7, %s5
  loop: start=0, step=1, limit=4
  $region2: #{net_forward.5} parent=0 // loop_pre_header
    _
  $region3: #{net_forward.5} parent=0 // loop_header
    %s10 = sphi 0, %s14
    %p11 = scmp.ge.s32.totalorder %s10, 4
    %s20 = sphi 0, %s22
    %s23 = sphi 0, %s20
    %s24 = sphi 0, %s23
    %s40 = sphi 0, %s24
    %s46 = sphi 0, %s48
    %s49 = sphi 0, %s46
    %s50 = sphi 0, %s49
    %s66 = sphi 0, %s50
    %s70 = sphi 0, %s70
    %s72 = sphi 0, %s70
    %s73 = sphi 0, %s72
    %s87 = sphi 0, %s73
    %s91 = sphi 0, %s91
    %s93 = sphi 0, %s91
    %s94 = sphi 0, %s93
    %s108 = sphi 0, %s94
    %s114 = sphi 0, %s116
    %s117 = sphi 0, %s114
    %s118 = sphi 0, %s117
    %s134 = sphi 0, %s118
  $region4: #{net_forward.5} parent=0 // loop_header_branch
    %13 = sbr.rel (%p11) target = $region8
  $region5: #{net_forward.5} parent=0 // loop_body
    %s15 = ssub.s32 %s10, 1
    %s16 = ssub.s32 %s10, 2
    %s17 = sadd.s32 %s10, 1
    %s18 = ssub.s32 %s10, %s17
    %p19 = scmp.eq.s32.totalorder %s18, 0
    %s21 = sadd.s32 %s20, 1
    %s22 = scalar_select %p19, %s20, %s21
    %p25 = pneg %p19
    %p26 = scmp.eq.s32.totalorder %s10, 1
    %p27 = por %p25, %p26
    %p28 = scmp.ne.s32.totalorder %s20, %s23
    %p29 = scmp.eq.s32.totalorder %s10, 0
    %p30 = por %p28, %p29
    %p31 = scmp.ne.s32.totalorder %s20, %s23
    %p32 = scmp.eq.s32.totalorder %s15, 1
    %p33 = por %p31, %p32
    %p34 = scmp.ne.s32.totalorder %s23, %s24
    %p35 = scmp.eq.s32.totalorder %s15, 0
    %p36 = por %p34, %p35
    %p37 = scmp.ne.s32.totalorder %s23, %s24
    %p38 = scmp.eq.s32.totalorder %s16, 1
    %p39 = por %p37, %p38
    %p41 = scmp.ne.s32.totalorder %s24, %s40
    %p42 = scmp.eq.s32.totalorder %s16, 0
    %p43 = por %p41, %p42
    %s44 = ssub.s32 %s10, %s17
    %p45 = scmp.eq.s32.totalorder %s44, 0
    %s47 = sadd.s32 %s46, 1
    %s48 = scalar_select %p45, %s46, %s47
    %p51 = pneg %p45
    %p52 = scmp.eq.s32.totalorder %s10, 1
    %p53 = por %p51, %p52
    %p54 = scmp.ne.s32.totalorder %s46, %s49
    %p55 = scmp.eq.s32.totalorder %s10, 0
    %p56 = por %p54, %p55
    %p57 = scmp.ne.s32.totalorder %s46, %s49
    %p58 = scmp.eq.s32.totalorder %s15, 1
    %p59 = por %p57, %p58
    %p60 = scmp.ne.s32.totalorder %s49, %s50
    %p61 = scmp.eq.s32.totalorder %s15, 0
    %p62 = por %p60, %p61
    %p63 = scmp.ne.s32.totalorder %s49, %s50
    %p64 = scmp.eq.s32.totalorder %s16, 1
    %p65 = por %p63, %p64
    %p67 = scmp.ne.s32.totalorder %s50, %s66
    %p68 = scmp.eq.s32.totalorder %s16, 0
    %p69 = por %p67, %p68
    %s71 = sadd.s32 %s70, 1
    %p74 = scmp.eq.s32.totalorder %s10, 1
    %p75 = scmp.ne.s32.totalorder %s70, %s72
    %p76 = scmp.eq.s32.totalorder %s10, 0
    %p77 = por %p75, %p76
    %p78 = scmp.ne.s32.totalorder %s70, %s72
    %p79 = scmp.eq.s32.totalorder %s15, 1
    %p80 = por %p78, %p79
    %p81 = scmp.ne.s32.totalorder %s72, %s73
    %p82 = scmp.eq.s32.totalorder %s15, 0
    %p83 = por %p81, %p82
    %p84 = scmp.ne.s32.totalorder %s72, %s73
    %p85 = scmp.eq.s32.totalorder %s16, 1
    %p86 = por %p84, %p85
    %p88 = scmp.ne.s32.totalorder %s73, %s87
    %p89 = scmp.eq.s32.totalorder %s16, 0
    %p90 = por %p88, %p89
    %s92 = sadd.s32 %s91, 1
    %p95 = scmp.eq.s32.totalorder %s10, 1
    %p96 = scmp.ne.s32.totalorder %s91, %s93
    %p97 = scmp.eq.s32.totalorder %s10, 0
    %p98 = por %p96, %p97
    %p99 = scmp.ne.s32.totalorder %s91, %s93
    %p100 = scmp.eq.s32.totalorder %s15, 1
    %p101 = por %p99, %p100
    %p102 = scmp.ne.s32.totalorder %s93, %s94
    %p103 = scmp.eq.s32.totalorder %s15, 0
    %p104 = por %p102, %p103
    %p105 = scmp.ne.s32.totalorder %s93, %s94
    %p106 = scmp.eq.s32.totalorder %s16, 1
    %p107 = por %p105, %p106
    %p109 = scmp.ne.s32.totalorder %s94, %s108
    %p110 = scmp.eq.s32.totalorder %s16, 0
    %p111 = por %p109, %p110
    %s112 = ssub.s32 %s10, %s17
    %p113 = scmp.eq.s32.totalorder %s112, 0
    %s115 = sadd.s32 %s114, 1
    %s116 = scalar_select %p113, %s114, %s115
    %p119 = pneg %p113
    %p120 = scmp.eq.s32.totalorder %s10, 1
    %p121 = por %p119, %p120
    %p122 = scmp.ne.s32.totalorder %s114, %s117
    %p123 = scmp.eq.s32.totalorder %s10, 0
    %p124 = por %p122, %p123
    %p125 = scmp.ne.s32.totalorder %s114, %s117
    %p126 = scmp.eq.s32.totalorder %s15, 1
    %p127 = por %p125, %p126
    %p128 = scmp.ne.s32.totalorder %s117, %s118
    %p129 = scmp.eq.s32.totalorder %s15, 0
    %p130 = por %p128, %p129
    %p131 = scmp.ne.s32.totalorder %s117, %s118
    %p132 = scmp.eq.s32.totalorder %s16, 1
    %p133 = por %p131, %p132
    %p135 = scmp.ne.s32.totalorder %s118, %s134
    %p136 = scmp.eq.s32.totalorder %s16, 0
    %p137 = por %p135, %p136
    %p138 = scmp.le.s32.totalorder 1, %s10
    %p139 = scmp.lt.s32.totalorder %s10, 3
    %p140 = pnand %p138, %p139
    %p141 = pneg %p140
    // Predicated region
    $region9: #{net_forward.5} parent=5 // pred_check
      _
    $region10: #{net_forward.5} parent=5 // pred_check_branch
      %143 = sbr.rel (%p140) target = $region12
    $region11: #{net_forward.5} parent=5 // pred_region
      %s144 = ssub.s32 %s10, 1
      // Predicated region
      $region13: #{net_forward.5} parent=11 // pred_check
        %p145 = pneg %p83
      $region14: #{net_forward.5} parent=11 // pred_check_branch
        %147 = sbr.rel (%p145) target = $region16
      $region15: #{net_forward.5} parent=11 // pred_region
        _
      $region16: #{net_forward.5} parent=11 // pred_fallthru
        _
      // Predicated region
      $region17: #{net_forward.5} parent=11 // pred_check
        %p148 = pneg %p104
      $region18: #{net_forward.5} parent=11 // pred_check_branch
        %150 = sbr.rel (%p148) target = $region20
      $region19: #{net_forward.5} parent=11 // pred_region
        _
      $region20: #{net_forward.5} parent=11 // pred_fallthru
        _
    $region12: #{net_forward.5} parent=5 // pred_fallthru
      _
    %p151 = scmp.lt.s32.totalorder %s10, 2
    // Predicated region
    $region21: #{net_forward.5} parent=5 // pred_check
      %p152 = pneg %p151
    $region22: #{net_forward.5} parent=5 // pred_check_branch
      %154 = sbr.rel (%p152) target = $region24
    $region23: #{net_forward.5} parent=5 // pred_region
      // Predicated region
      $region25: #{net_forward.5} parent=23 // pred_check
        %p155 = pneg %p30
      $region26: #{net_forward.5} parent=23 // pred_check_branch
        %157 = sbr.rel (%p155) target = $region28
      $region27: #{net_forward.5} parent=23 // pred_region
        %p158 = scmp.lt.s32.totalorder %s10, 1
        %s159 = scalar_select %p158, %s10, 1
        %s160 = smul.addr %s159, 17
        %s161 = smul.addr %s160, 4
        %s162 = scalar_lea.vmem %s0, %s161
      $region28: #{net_forward.5} parent=23 // pred_fallthru
        _
      // Predicated region
      $region29: #{net_forward.5} parent=23 // pred_check
        %p163 = pneg %p56
      $region30: #{net_forward.5} parent=23 // pred_check_branch
        %165 = sbr.rel (%p163) target = $region32
      $region31: #{net_forward.5} parent=23 // pred_region
        %p166 = scmp.lt.s32.totalorder %s10, 1
        %s167 = scalar_select %p166, %s10, 1
        %s168 = smul.addr %s167, 17
        %s169 = smul.addr %s168, 4
        %s170 = scalar_lea.vmem %s1, %s169
      $region32: #{net_forward.5} parent=23 // pred_fallthru
        _
    $region24: #{net_forward.5} parent=5 // pred_fallthru
      _
    %p171 = scmp.le.s32.totalorder 1, %s10
    %p172 = scmp.lt.s32.totalorder %s10, 3
    %p173 = pnand %p171, %p172
    %p174 = pneg %p173
    // Predicated region
    $region33: #{net_forward.5} parent=5 // pred_check
      _
    $region34: #{net_forward.5} parent=5 // pred_check_branch
      %176 = sbr.rel (%p173) target = $region36
    $region35: #{net_forward.5} parent=5 // pred_region
      %s177 = ssub.s32 %s10, 1
      %p178 = scmp.lt.s32.totalorder %s15, 1
      %s179 = scalar_select %p178, %s15, 1
      %s180 = smul.addr %s179, 17
      %s181 = smul.addr %s180, 4
      %s182 = scalar_lea.vmem %s0, %s181
      %p183 = pneg %p36
      %p184 = pneg %p33
      %p185 = scmp.lt.s32.totalorder %s15, 1
      %s186 = scalar_select %p185, %s15, 1
      %s187 = smul.addr %s186, 17
      %s188 = smul.addr %s187, 4
      %s189 = scalar_lea.vmem %s1, %s188
      %p190 = pneg %p62
      %p191 = pneg %p59
      %p192 = pneg %p83
      %p193 = pneg %p80
      %p194 = pneg %p104
      %p195 = pneg %p101
      %p196 = pneg %p130
      %p197 = pneg %p127
      %p198 = scmp.lt.s32.totalorder %s15, 1
      %s199 = scalar_select %p198, %s15, 1
      %s200 = smul.addr %s199, 7
      %s201 = smul.addr %s200, 4
      %s202 = scalar_lea.vmem %s4, %s201
      %p203 = scmp.lt.s32.totalorder %s15, 1
      %s204 = scalar_select %p203, %s15, 1
      %s205 = smul.addr %s204, 17
      %s206 = smul.addr %s205, 4
      %s207 = scalar_lea.vmem %s0, %s206
      %p208 = scmp.lt.s32.totalorder %s15, 1
      %s209 = scalar_select %p208, %s15, 1
      %s210 = smul.addr %s209, 17
      %s211 = smul.addr %s210, 4
      %s212 = scalar_lea.vmem %s1, %s211
      %p213 = scmp.lt.s32.totalorder %s15, 1
      %s214 = scalar_select %p213, %s15, 1
      %s215 = smul.addr %s214, 7
      %s216 = smul.addr %s215, 4
      %s217 = scalar_lea.vmem %s4, %s216
      %v219 = vld [vmem:[%s207] sm:$0xf]
      %v220 = vld [vmem:[%s207 + $0x4] sm:$0xf]
      %v221 = vld [vmem:[%s207 + $0x8] sm:$0xf]
      %v222 = vld [vmem:[%s207 + $0xc] sm:$0xf]
      %v223 = vld [vmem:[%s207 + $0x10] sm:$0xf]
      %v224 = vld [vmem:[%s207 + $0x14] sm:$0xf]
      %v225 = vld [vmem:[%s207 + $0x18] sm:$0xf]
      %v226 = vld [vmem:[%s207 + $0x1c] sm:$0xf]
      %v227 = vld [vmem:[%s207 + $0x20] sm:$0xf]
      %v228 = vld [vmem:[%s207 + $0x24] sm:$0xf]
      %v229 = vld [vmem:[%s207 + $0x28] sm:$0xf]
      %v230 = vld [vmem:[%s207 + $0x2c] sm:$0xf]
      %v231 = vld [vmem:[%s207 + $0x30] sm:$0xf]
      %v232 = vld [vmem:[%s207 + $0x34] sm:$0xf]
      %v233 = vld [vmem:[%s2] sm:$0xf]
      %v234 = vld [vmem:[%s2 + $0x4] sm:$0xf]
      %v235 = vld [vmem:[%s212] sm:$0xf]
      %v236 = vld [vmem:[%s212 + $0x4] sm:$0xf]
      %v237 = vld [vmem:[%s212 + $0x8] sm:$0xf]
      %v238 = vld [vmem:[%s212 + $0xc] sm:$0xf]
      %v239 = vld [vmem:[%s212 + $0x10] sm:$0xf]
      %v240 = vld [vmem:[%s212 + $0x14] sm:$0xf]
      %v241 = vld [vmem:[%s212 + $0x18] sm:$0xf]
      %v242 = vld [vmem:[%s212 + $0x1c] sm:$0xf]
      %v243 = vld [vmem:[%s212 + $0x20] sm:$0xf]
      %v244 = vld [vmem:[%s212 + $0x24] sm:$0xf]
      %v245 = vld [vmem:[%s212 + $0x28] sm:$0xf]
      %v246 = vld [vmem:[%s212 + $0x2c] sm:$0xf]
      %v247 = vld [vmem:[%s212 + $0x30] sm:$0xf]
      %v248 = vld [vmem:[%s212 + $0x34] sm:$0xf]
      %s249 = scalar_lea.vmem %s2, 8
      %v250 = vld [vmem:[%s249] sm:$0xf]
      %v251 = vld [vmem:[%s249 + $0x4] sm:$0xf]
      %v266 = vunpack.c.l.b16 %v235
      %v267 = vunpack.c.l.b16 %v236
      %v268 = vunpack.c.l.b16 %v237
      %v269 = vunpack.c.l.b16 %v238
      %v270 = vunpack.c.l.b16 %v239
      %v271 = vunpack.c.l.b16 %v240
      %v272 = vunpack.c.l.b16 %v241
      %v273 = vunpack.c.l.b16 %v242
      %v274 = vunpack.c.l.b16 %v243
      %v275 = vunpack.c.l.b16 %v244
      %v276 = vunpack.c.l.b16 %v245
      %v277 = vunpack.c.l.b16 %v246
      %v278 = vunpack.c.l.b16 %v247
      %v279 = vunpack.c.l.b16 %v248
      %v280 = vpack.c.b16 %v267, %v266
      %v281 = vpack.c.b16 %v269, %v268
      %v282 = vpack.c.b16 %v271, %v270
      %v283 = vpack.c.b16 %v273, %v272
      %v284 = vpack.c.b16 %v275, %v274
      %v285 = vpack.c.b16 %v277, %v276
      %v286 = vpack.c.b16 %v279, %v278
      %v289 = vunpack.c.l.b16 %v250
      %v290 = vunpack.c.l.b16 %v251
      %v291 = vpack.c.b16 %v290, %v289
      %vm293 = vcmask 130048
      %v295 = vsel %vm293, %v280, 0
      %v298 = vsel %vm293, %v281, 0
      %v301 = vsel %vm293, %v282, 0
      %v304 = vsel %vm293, %v283, 0
      %v307 = vsel %vm293, %v284, 0
      %v310 = vsel %vm293, %v285, 0
      %v313 = vsel %vm293, %v286, 0
      %315 = vmatpush.bf16.msra.mxu0 0
      %316 = vmatpush.bf16.msra.mxu0 0
      %317 = vmatpush.bf16.msra.mxu0 0
      %318 = vmatpush.bf16.msra.mxu0 0
      %319 = vmatpush.bf16.msra.mxu0 0
      %320 = vmatpush.bf16.msra.mxu0 0
      %321 = vmatpush.bf16.msra.mxu0 0
      %322 = vmatpush.bf16.msra.mxu0 %v291
      %323 = vmatmul.bf16.gmra.mxu0 %v295
      %v324 = vpop.f32.mrf.mxu0
      %v325 = vadd.f32 0.0, %v324
      %v326 = vpop.f32.mrf.mxu0
      %v327 = vadd.f32 0.0, %v326
      %328 = vmatmul.bf16.gmra.mxu0 %v298
      %v329 = vpop.f32.mrf.mxu0
      %v330 = vadd.f32 0.0, %v329
      %v331 = vpop.f32.mrf.mxu0
      %v332 = vadd.f32 0.0, %v331
      %333 = vmatmul.bf16.gmra.mxu0 %v301
      %v334 = vpop.f32.mrf.mxu0
      %v335 = vadd.f32 0.0, %v334
      %v336 = vpop.f32.mrf.mxu0
      %v337 = vadd.f32 0.0, %v336
      %338 = vmatmul.bf16.gmra.mxu0 %v304
      %v339 = vpop.f32.mrf.mxu0
      %v340 = vadd.f32 0.0, %v339
      %v341 = vpop.f32.mrf.mxu0
      %v342 = vadd.f32 0.0, %v341
      %343 = vmatmul.bf16.gmra.mxu0 %v307
      %v344 = vpop.f32.mrf.mxu0
      %v345 = vadd.f32 0.0, %v344
      %v346 = vpop.f32.mrf.mxu0
      %v347 = vadd.f32 0.0, %v346
      %348 = vmatmul.bf16.gmra.mxu0 %v310
      %v349 = vpop.f32.mrf.mxu0
      %v350 = vadd.f32 0.0, %v349
      %v351 = vpop.f32.mrf.mxu0
      %v352 = vadd.f32 0.0, %v351
      %353 = vmatmul.bf16.gmra.mxu0 %v313
      %v354 = vpop.f32.mrf.mxu0
      %v355 = vadd.f32 0.0, %v354
      %v356 = vpop.f32.mrf.mxu0
      %v357 = vadd.f32 0.0, %v356
      %358 = vdwg.mxu0
      %v373 = vunpack.c.l.b16 %v219
      %v374 = vunpack.c.l.b16 %v220
      %v375 = vunpack.c.l.b16 %v221
      %v376 = vunpack.c.l.b16 %v222
      %v377 = vunpack.c.l.b16 %v223
      %v378 = vunpack.c.l.b16 %v224
      %v379 = vunpack.c.l.b16 %v225
      %v380 = vunpack.c.l.b16 %v226
      %v381 = vunpack.c.l.b16 %v227
      %v382 = vunpack.c.l.b16 %v228
      %v383 = vunpack.c.l.b16 %v229
      %v384 = vunpack.c.l.b16 %v230
      %v385 = vunpack.c.l.b16 %v231
      %v386 = vunpack.c.l.b16 %v232
      %v387 = vpack.c.b16 %v374, %v373
      %v388 = vpack.c.b16 %v376, %v375
      %v389 = vpack.c.b16 %v378, %v377
      %v390 = vpack.c.b16 %v380, %v379
      %v391 = vpack.c.b16 %v382, %v381
      %v392 = vpack.c.b16 %v384, %v383
      %v393 = vpack.c.b16 %v386, %v385
      %v396 = vunpack.c.l.b16 %v233
      %v397 = vunpack.c.l.b16 %v234
      %v398 = vpack.c.b16 %v397, %v396
      %v401 = vsel %vm293, %v387, 0
      %v404 = vsel %vm293, %v388, 0
      %v407 = vsel %vm293, %v389, 0
      %v410 = vsel %vm293, %v390, 0
      %v413 = vsel %vm293, %v391, 0
      %v416 = vsel %vm293, %v392, 0
      %v419 = vsel %vm293, %v393, 0
      %421 = vmatpush.bf16.msra.mxu0 0
      %422 = vmatpush.bf16.msra.mxu0 0
      %423 = vmatpush.bf16.msra.mxu0 0
      %424 = vmatpush.bf16.msra.mxu0 0
      %425 = vmatpush.bf16.msra.mxu0 0
      %426 = vmatpush.bf16.msra.mxu0 0
      %427 = vmatpush.bf16.msra.mxu0 0
      %428 = vmatpush.bf16.msra.mxu0 %v398
      %429 = vmatmul.bf16.gmra.mxu0 %v401
      %v430 = vpop.f32.mrf.mxu0
      %v431 = vadd.f32 %v325, %v430
      %v432 = vpop.f32.mrf.mxu0
      %v433 = vadd.f32 %v327, %v432
      %434 = vmatmul.bf16.gmra.mxu0 %v404
      %v435 = vpop.f32.mrf.mxu0
      %v436 = vadd.f32 %v330, %v435
      %v437 = vpop.f32.mrf.mxu0
      %v438 = vadd.f32 %v332, %v437
      %439 = vmatmul.bf16.gmra.mxu0 %v407
      %v440 = vpop.f32.mrf.mxu0
      %v441 = vadd.f32 %v335, %v440
      %v442 = vpop.f32.mrf.mxu0
      %v443 = vadd.f32 %v337, %v442
      %444 = vmatmul.bf16.gmra.mxu0 %v410
      %v445 = vpop.f32.mrf.mxu0
      %v446 = vadd.f32 %v340, %v445
      %v447 = vpop.f32.mrf.mxu0
      %v448 = vadd.f32 %v342, %v447
      %449 = vmatmul.bf16.gmra.mxu0 %v413
      %v450 = vpop.f32.mrf.mxu0
      %v451 = vadd.f32 %v345, %v450
      %v452 = vpop.f32.mrf.mxu0
      %v453 = vadd.f32 %v347, %v452
      %454 = vmatmul.bf16.gmra.mxu0 %v416
      %v455 = vpop.f32.mrf.mxu0
      %v456 = vadd.f32 %v350, %v455
      %v457 = vpop.f32.mrf.mxu0
      %v458 = vadd.f32 %v352, %v457
      %459 = vmatmul.bf16.gmra.mxu0 %v419
      %v460 = vpop.f32.mrf.mxu0
      %v461 = vadd.f32 %v355, %v460
      %v462 = vpop.f32.mrf.mxu0
      %v463 = vadd.f32 %v357, %v462
      %464 = vdwg.mxu0
      %v465 = vld [vmem:[%s207] sm:$0xf]
      %v466 = vld [vmem:[%s207 + $0x4] sm:$0xf]
      %v467 = vld [vmem:[%s207 + $0x8] sm:$0xf]
      %v468 = vld [vmem:[%s207 + $0xc] sm:$0xf]
      %v469 = vld [vmem:[%s207 + $0x10] sm:$0xf]
      %v470 = vld [vmem:[%s207 + $0x14] sm:$0xf]
      %v471 = vld [vmem:[%s207 + $0x18] sm:$0xf]
      %v472 = vld [vmem:[%s207 + $0x1c] sm:$0xf]
      %v473 = vld [vmem:[%s207 + $0x20] sm:$0xf]
      %v474 = vld [vmem:[%s207 + $0x24] sm:$0xf]
      %v475 = vld [vmem:[%s207 + $0x28] sm:$0xf]
      %v476 = vld [vmem:[%s207 + $0x2c] sm:$0xf]
      %v477 = vld [vmem:[%s207 + $0x30] sm:$0xf]
      %v478 = vld [vmem:[%s207 + $0x34] sm:$0xf]
      %v479 = vld [vmem:[%s207 + $0x38] sm:$0x1]
      %s480 = scalar_lea.vmem %s2, 16
      %v481 = vld [vmem:[%s480] sm:$0xf]
      %v482 = vld [vmem:[%s480 + $0x4] sm:$0xf]
      %v498 = vunpack.c.l.b16 %v465
      %v499 = vunpack.c.l.b16 %v466
      %v500 = vunpack.c.l.b16 %v467
      %v501 = vunpack.c.l.b16 %v468
      %v502 = vunpack.c.l.b16 %v469
      %v503 = vunpack.c.l.b16 %v470
      %v504 = vunpack.c.l.b16 %v471
      %v505 = vunpack.c.l.b16 %v472
      %v506 = vunpack.c.l.b16 %v473
      %v507 = vunpack.c.l.b16 %v474
      %v508 = vunpack.c.l.b16 %v475
      %v509 = vunpack.c.l.b16 %v476
      %v510 = vunpack.c.l.b16 %v477
      %v511 = vunpack.c.l.b16 %v478
      %v512 = vunpack.c.l.b16 %v479
      %v513 = vpack.c.b16 %v499, %v498
      %v514 = vpack.c.b16 %v501, %v500
      %v515 = vpack.c.b16 %v503, %v502
      %v516 = vpack.c.b16 %v505, %v504
      %v517 = vpack.c.b16 %v507, %v506
      %v518 = vpack.c.b16 %v509, %v508
      %v519 = vpack.c.b16 %v511, %v510
      %v520 = vpack.c.b16 %v512, %v512
      %vm521 = vsmask.f32 7424
      %v523 = vshrl.u32 %v513, 16
      %v525 = vshll.u32 %v513, 16
      %v527 = vrot.slane %v525, 1
      %v528 = vor.u32 %v523, %v527
      %v530 = vshll.u32 %v514, 16
      %v532 = vrot.slane %v530, 1
      %v533 = vsel %vm521, %v528, %v532
      %v534 = vshrl.u32 %v514, 16
      %v536 = vor.u32 %v534, %v532
      %v538 = vshll.u32 %v515, 16
      %v540 = vrot.slane %v538, 1
      %v541 = vsel %vm521, %v536, %v540
      %v542 = vshrl.u32 %v515, 16
      %v544 = vor.u32 %v542, %v540
      %v546 = vshll.u32 %v516, 16
      %v548 = vrot.slane %v546, 1
      %v549 = vsel %vm521, %v544, %v548
      %v550 = vshrl.u32 %v516, 16
      %v552 = vor.u32 %v550, %v548
      %v554 = vshll.u32 %v517, 16
      %v556 = vrot.slane %v554, 1
      %v557 = vsel %vm521, %v552, %v556
      %v558 = vshrl.u32 %v517, 16
      %v560 = vor.u32 %v558, %v556
      %v562 = vshll.u32 %v518, 16
      %v564 = vrot.slane %v562, 1
      %v565 = vsel %vm521, %v560, %v564
      %v566 = vshrl.u32 %v518, 16
      %v568 = vor.u32 %v566, %v564
      %v570 = vshll.u32 %v519, 16
      %v572 = vrot.slane %v570, 1
      %v573 = vsel %vm521, %v568, %v572
      %v574 = vshrl.u32 %v519, 16
      %v576 = vor.u32 %v574, %v572
      %v578 = vshll.u32 %v520, 16
      %v580 = vrot.slane %v578, 1
      %v581 = vsel %vm521, %v576, %v580
      %v584 = vunpack.c.l.b16 %v481
      %v585 = vunpack.c.l.b16 %v482
      %v586 = vpack.c.b16 %v585, %v584
      %v589 = vsel %vm293, %v533, 0
      %v592 = vsel %vm293, %v541, 0
      %v595 = vsel %vm293, %v549, 0
      %v598 = vsel %vm293, %v557, 0
      %v601 = vsel %vm293, %v565, 0
      %v604 = vsel %vm293, %v573, 0
      %v607 = vsel %vm293, %v581, 0
      %609 = vmatpush.bf16.msra.mxu0 0
      %610 = vmatpush.bf16.msra.mxu0 0
      %611 = vmatpush.bf16.msra.mxu0 0
      %612 = vmatpush.bf16.msra.mxu0 0
      %613 = vmatpush.bf16.msra.mxu0 0
      %614 = vmatpush.bf16.msra.mxu0 0
      %615 = vmatpush.bf16.msra.mxu0 0
      %616 = vmatpush.bf16.msra.mxu0 %v586
      %617 = vmatmul.bf16.gmra.mxu0 %v589
      %v618 = vpop.f32.mrf.mxu0
      %v619 = vadd.f32 0.0, %v618
      %v620 = vpop.f32.mrf.mxu0
      %v621 = vadd.f32 0.0, %v620
      %622 = vmatmul.bf16.gmra.mxu0 %v592
      %v623 = vpop.f32.mrf.mxu0
      %v624 = vadd.f32 0.0, %v623
      %v625 = vpop.f32.mrf.mxu0
      %v626 = vadd.f32 0.0, %v625
      %627 = vmatmul.bf16.gmra.mxu0 %v595
      %v628 = vpop.f32.mrf.mxu0
      %v629 = vadd.f32 0.0, %v628
      %v630 = vpop.f32.mrf.mxu0
      %v631 = vadd.f32 0.0, %v630
      %632 = vmatmul.bf16.gmra.mxu0 %v598
      %v633 = vpop.f32.mrf.mxu0
      %v634 = vadd.f32 0.0, %v633
      %v635 = vpop.f32.mrf.mxu0
      %v636 = vadd.f32 0.0, %v635
      %637 = vmatmul.bf16.gmra.mxu0 %v601
      %v638 = vpop.f32.mrf.mxu0
      %v639 = vadd.f32 0.0, %v638
      %v640 = vpop.f32.mrf.mxu0
      %v641 = vadd.f32 0.0, %v640
      %642 = vmatmul.bf16.gmra.mxu0 %v604
      %v643 = vpop.f32.mrf.mxu0
      %v644 = vadd.f32 0.0, %v643
      %v645 = vpop.f32.mrf.mxu0
      %v646 = vadd.f32 0.0, %v645
      %647 = vmatmul.bf16.gmra.mxu0 %v607
      %v648 = vpop.f32.mrf.mxu0
      %v649 = vadd.f32 0.0, %v648
      %v650 = vpop.f32.mrf.mxu0
      %v651 = vadd.f32 0.0, %v650
      %652 = vdwg.mxu0
      %v653 = vadd.f32 %v431, %v619
      %v654 = vadd.f32 %v433, %v621
      %v655 = vadd.f32 %v436, %v624
      %v656 = vadd.f32 %v438, %v626
      %v657 = vadd.f32 %v441, %v629
      %v658 = vadd.f32 %v443, %v631
      %v659 = vadd.f32 %v446, %v634
      %v660 = vadd.f32 %v448, %v636
      %v661 = vadd.f32 %v451, %v639
      %v662 = vadd.f32 %v453, %v641
      %v663 = vadd.f32 %v456, %v644
      %v664 = vadd.f32 %v458, %v646
      %v665 = vadd.f32 %v461, %v649
      %v666 = vadd.f32 %v463, %v651
      %v667 = vld [vmem:[%s212] sm:$0xf]
      %v668 = vld [vmem:[%s212 + $0x4] sm:$0xf]
      %v669 = vld [vmem:[%s212 + $0x8] sm:$0xf]
      %v670 = vld [vmem:[%s212 + $0xc] sm:$0xf]
      %v671 = vld [vmem:[%s212 + $0x10] sm:$0xf]
      %v672 = vld [vmem:[%s212 + $0x14] sm:$0xf]
      %v673 = vld [vmem:[%s212 + $0x18] sm:$0xf]
      %v674 = vld [vmem:[%s212 + $0x1c] sm:$0xf]
      %v675 = vld [vmem:[%s212 + $0x20] sm:$0xf]
      %v676 = vld [vmem:[%s212 + $0x24] sm:$0xf]
      %v677 = vld [vmem:[%s212 + $0x28] sm:$0xf]
      %v678 = vld [vmem:[%s212 + $0x2c] sm:$0xf]
      %v679 = vld [vmem:[%s212 + $0x30] sm:$0xf]
      %v680 = vld [vmem:[%s212 + $0x34] sm:$0xf]
      %v681 = vld [vmem:[%s212 + $0x38] sm:$0x1]
      %s682 = scalar_lea.vmem %s2, 24
      %v683 = vld [vmem:[%s682] sm:$0xf]
      %v684 = vld [vmem:[%s682 + $0x4] sm:$0xf]
      %v700 = vunpack.c.l.b16 %v667
      %v701 = vunpack.c.l.b16 %v668
      %v702 = vunpack.c.l.b16 %v669
      %v703 = vunpack.c.l.b16 %v670
      %v704 = vunpack.c.l.b16 %v671
      %v705 = vunpack.c.l.b16 %v672
      %v706 = vunpack.c.l.b16 %v673
      %v707 = vunpack.c.l.b16 %v674
      %v708 = vunpack.c.l.b16 %v675
      %v709 = vunpack.c.l.b16 %v676
      %v710 = vunpack.c.l.b16 %v677
      %v711 = vunpack.c.l.b16 %v678
      %v712 = vunpack.c.l.b16 %v679
      %v713 = vunpack.c.l.b16 %v680
      %v714 = vunpack.c.l.b16 %v681
      %v715 = vpack.c.b16 %v701, %v700
      %v716 = vpack.c.b16 %v703, %v702
      %v717 = vpack.c.b16 %v705, %v704
      %v718 = vpack.c.b16 %v707, %v706
      %v719 = vpack.c.b16 %v709, %v708
      %v720 = vpack.c.b16 %v711, %v710
      %v721 = vpack.c.b16 %v713, %v712
      %v722 = vpack.c.b16 %v714, %v714
      %v724 = vshrl.u32 %v715, 16
      %v726 = vshll.u32 %v715, 16
      %v728 = vrot.slane %v726, 1
      %v729 = vor.u32 %v724, %v728
      %v731 = vshll.u32 %v716, 16
      %v733 = vrot.slane %v731, 1
      %v734 = vsel %vm521, %v729, %v733
      %v735 = vshrl.u32 %v716, 16
      %v737 = vor.u32 %v735, %v733
      %v739 = vshll.u32 %v717, 16
      %v741 = vrot.slane %v739, 1
      %v742 = vsel %vm521, %v737, %v741
      %v743 = vshrl.u32 %v717, 16
      %v745 = vor.u32 %v743, %v741
      %v747 = vshll.u32 %v718, 16
      %v749 = vrot.slane %v747, 1
      %v750 = vsel %vm521, %v745, %v749
      %v751 = vshrl.u32 %v718, 16
      %v753 = vor.u32 %v751, %v749
      %v755 = vshll.u32 %v719, 16
      %v757 = vrot.slane %v755, 1
      %v758 = vsel %vm521, %v753, %v757
      %v759 = vshrl.u32 %v719, 16
      %v761 = vor.u32 %v759, %v757
      %v763 = vshll.u32 %v720, 16
      %v765 = vrot.slane %v763, 1
      %v766 = vsel %vm521, %v761, %v765
      %v767 = vshrl.u32 %v720, 16
      %v769 = vor.u32 %v767, %v765
      %v771 = vshll.u32 %v721, 16
      %v773 = vrot.slane %v771, 1
      %v774 = vsel %vm521, %v769, %v773
      %v775 = vshrl.u32 %v721, 16
      %v777 = vor.u32 %v775, %v773
      %v779 = vshll.u32 %v722, 16
      %v781 = vrot.slane %v779, 1
      %v782 = vsel %vm521, %v777, %v781
      %v785 = vunpack.c.l.b16 %v683
      %v786 = vunpack.c.l.b16 %v684
      %v787 = vpack.c.b16 %v786, %v785
      %v790 = vsel %vm293, %v734, 0
      %v793 = vsel %vm293, %v742, 0
      %v796 = vsel %vm293, %v750, 0
      %v799 = vsel %vm293, %v758, 0
      %v802 = vsel %vm293, %v766, 0
      %v805 = vsel %vm293, %v774, 0
      %v808 = vsel %vm293, %v782, 0
      %810 = vmatpush.bf16.msra.mxu0 0
      %811 = vmatpush.bf16.msra.mxu0 0
      %812 = vmatpush.bf16.msra.mxu0 0
      %813 = vmatpush.bf16.msra.mxu0 0
      %814 = vmatpush.bf16.msra.mxu0 0
      %815 = vmatpush.bf16.msra.mxu0 0
      %816 = vmatpush.bf16.msra.mxu0 0
      %817 = vmatpush.bf16.msra.mxu0 %v787
      %818 = vmatmul.bf16.gmra.mxu0 %v790
      %v819 = vpop.f32.mrf.mxu0
      %v820 = vadd.f32 0.0, %v819
      %v821 = vpop.f32.mrf.mxu0
      %v822 = vadd.f32 0.0, %v821
      %823 = vmatmul.bf16.gmra.mxu0 %v793
      %v824 = vpop.f32.mrf.mxu0
      %v825 = vadd.f32 0.0, %v824
      %v826 = vpop.f32.mrf.mxu0
      %v827 = vadd.f32 0.0, %v826
      %828 = vmatmul.bf16.gmra.mxu0 %v796
      %v829 = vpop.f32.mrf.mxu0
      %v830 = vadd.f32 0.0, %v829
      %v831 = vpop.f32.mrf.mxu0
      %v832 = vadd.f32 0.0, %v831
      %833 = vmatmul.bf16.gmra.mxu0 %v799
      %v834 = vpop.f32.mrf.mxu0
      %v835 = vadd.f32 0.0, %v834
      %v836 = vpop.f32.mrf.mxu0
      %v837 = vadd.f32 0.0, %v836
      %838 = vmatmul.bf16.gmra.mxu0 %v802
      %v839 = vpop.f32.mrf.mxu0
      %v840 = vadd.f32 0.0, %v839
      %v841 = vpop.f32.mrf.mxu0
      %v842 = vadd.f32 0.0, %v841
      %843 = vmatmul.bf16.gmra.mxu0 %v805
      %v844 = vpop.f32.mrf.mxu0
      %v845 = vadd.f32 0.0, %v844
      %v846 = vpop.f32.mrf.mxu0
      %v847 = vadd.f32 0.0, %v846
      %848 = vmatmul.bf16.gmra.mxu0 %v808
      %v849 = vpop.f32.mrf.mxu0
      %v850 = vadd.f32 0.0, %v849
      %v851 = vpop.f32.mrf.mxu0
      %v852 = vadd.f32 0.0, %v851
      %853 = vdwg.mxu0
      %v854 = vadd.f32 %v653, %v820
      %v855 = vadd.f32 %v654, %v822
      %v856 = vadd.f32 %v655, %v825
      %v857 = vadd.f32 %v656, %v827
      %v858 = vadd.f32 %v657, %v830
      %v859 = vadd.f32 %v658, %v832
      %v860 = vadd.f32 %v659, %v835
      %v861 = vadd.f32 %v660, %v837
      %v862 = vadd.f32 %v661, %v840
      %v863 = vadd.f32 %v662, %v842
      %v864 = vadd.f32 %v663, %v845
      %v865 = vadd.f32 %v664, %v847
      %v866 = vadd.f32 %v665, %v850
      %v867 = vadd.f32 %v666, %v852
      %v868 = vld [vmem:[%s207 + $0x38] sm:$0xf]
      %s869 = scalar_lea.vmem %s2, 32
      %v870 = vld [vmem:[%s869] sm:$0xf]
      %v871 = vld [vmem:[%s869 + $0x4] sm:$0xf]
      %v873 = vunpack.c.l.b16 %v868
      %v874 = vpack.c.b16 %v500, %v499
      %v875 = vpack.c.b16 %v502, %v501
      %v876 = vpack.c.b16 %v504, %v503
      %v877 = vpack.c.b16 %v506, %v505
      %v878 = vpack.c.b16 %v508, %v507
      %v879 = vpack.c.b16 %v510, %v509
      %v880 = vpack.c.b16 %v873, %v511
      %v883 = vunpack.c.l.b16 %v870
      %v884 = vunpack.c.l.b16 %v871
      %v885 = vpack.c.b16 %v884, %v883
      %v888 = vsel %vm293, %v874, 0
      %v891 = vsel %vm293, %v875, 0
      %v894 = vsel %vm293, %v876, 0
      %v897 = vsel %vm293, %v877, 0
      %v900 = vsel %vm293, %v878, 0
      %v903 = vsel %vm293, %v879, 0
      %v906 = vsel %vm293, %v880, 0
      %908 = vmatpush.bf16.msra.mxu0 0
      %909 = vmatpush.bf16.msra.mxu0 0
      %910 = vmatpush.bf16.msra.mxu0 0
      %911 = vmatpush.bf16.msra.mxu0 0
      %912 = vmatpush.bf16.msra.mxu0 0
      %913 = vmatpush.bf16.msra.mxu0 0
      %914 = vmatpush.bf16.msra.mxu0 0
      %915 = vmatpush.bf16.msra.mxu0 %v885
      %916 = vmatmul.bf16.gmra.mxu0 %v888
      %v917 = vpop.f32.mrf.mxu0
      %v918 = vadd.f32 0.0, %v917
      %v919 = vpop.f32.mrf.mxu0
      %v920 = vadd.f32 0.0, %v919
      %921 = vmatmul.bf16.gmra.mxu0 %v891
      %v922 = vpop.f32.mrf.mxu0
      %v923 = vadd.f32 0.0, %v922
      %v924 = vpop.f32.mrf.mxu0
      %v925 = vadd.f32 0.0, %v924
      %926 = vmatmul.bf16.gmra.mxu0 %v894
      %v927 = vpop.f32.mrf.mxu0
      %v928 = vadd.f32 0.0, %v927
      %v929 = vpop.f32.mrf.mxu0
      %v930 = vadd.f32 0.0, %v929
      %931 = vmatmul.bf16.gmra.mxu0 %v897
      %v932 = vpop.f32.mrf.mxu0
      %v933 = vadd.f32 0.0, %v932
      %v934 = vpop.f32.mrf.mxu0
      %v935 = vadd.f32 0.0, %v934
      %936 = vmatmul.bf16.gmra.mxu0 %v900
      %v937 = vpop.f32.mrf.mxu0
      %v938 = vadd.f32 0.0, %v937
      %v939 = vpop.f32.mrf.mxu0
      %v940 = vadd.f32 0.0, %v939
      %941 = vmatmul.bf16.gmra.mxu0 %v903
      %v942 = vpop.f32.mrf.mxu0
      %v943 = vadd.f32 0.0, %v942
      %v944 = vpop.f32.mrf.mxu0
      %v945 = vadd.f32 0.0, %v944
      %946 = vmatmul.bf16.gmra.mxu0 %v906
      %v947 = vpop.f32.mrf.mxu0
      %v948 = vadd.f32 0.0, %v947
      %v949 = vpop.f32.mrf.mxu0
      %v950 = vadd.f32 0.0, %v949
      %951 = vdwg.mxu0
      %v952 = vadd.f32 %v854, %v918
      %v953 = vadd.f32 %v855, %v920
      %v954 = vadd.f32 %v856, %v923
      %v955 = vadd.f32 %v857, %v925
      %v956 = vadd.f32 %v858, %v928
      %v957 = vadd.f32 %v859, %v930
      %v958 = vadd.f32 %v860, %v933
      %v959 = vadd.f32 %v861, %v935
      %v960 = vadd.f32 %v862, %v938
      %v961 = vadd.f32 %v863, %v940
      %v962 = vadd.f32 %v864, %v943
      %v963 = vadd.f32 %v865, %v945
      %v964 = vadd.f32 %v866, %v948
      %v965 = vadd.f32 %v867, %v950
      %v966 = vld [vmem:[%s212 + $0x38] sm:$0xf]
      %s967 = scalar_lea.vmem %s2, 40
      %v968 = vld [vmem:[%s967] sm:$0xf]
      %v969 = vld [vmem:[%s967 + $0x4] sm:$0xf]
      %v971 = vunpack.c.l.b16 %v966
      %v972 = vpack.c.b16 %v702, %v701
      %v973 = vpack.c.b16 %v704, %v703
      %v974 = vpack.c.b16 %v706, %v705
      %v975 = vpack.c.b16 %v708, %v707
      %v976 = vpack.c.b16 %v710, %v709
      %v977 = vpack.c.b16 %v712, %v711
      %v978 = vpack.c.b16 %v971, %v713
      %v981 = vunpack.c.l.b16 %v968
      %v982 = vunpack.c.l.b16 %v969
      %v983 = vpack.c.b16 %v982, %v981
      %v986 = vsel %vm293, %v972, 0
      %v989 = vsel %vm293, %v973, 0
      %v992 = vsel %vm293, %v974, 0
      %v995 = vsel %vm293, %v975, 0
      %v998 = vsel %vm293, %v976, 0
      %v1001 = vsel %vm293, %v977, 0
      %v1004 = vsel %vm293, %v978, 0
      %1006 = vmatpush.bf16.msra.mxu0 0
      %1007 = vmatpush.bf16.msra.mxu0 0
      %1008 = vmatpush.bf16.msra.mxu0 0
      %1009 = vmatpush.bf16.msra.mxu0 0
      %1010 = vmatpush.bf16.msra.mxu0 0
      %1011 = vmatpush.bf16.msra.mxu0 0
      %1012 = vmatpush.bf16.msra.mxu0 0
      %1013 = vmatpush.bf16.msra.mxu0 %v983
      %1014 = vmatmul.bf16.gmra.mxu0 %v986
      %v1015 = vpop.f32.mrf.mxu0
      %v1016 = vadd.f32 0.0, %v1015
      %v1017 = vpop.f32.mrf.mxu0
      %v1018 = vadd.f32 0.0, %v1017
      %1019 = vmatmul.bf16.gmra.mxu0 %v989
      %v1020 = vpop.f32.mrf.mxu0
      %v1021 = vadd.f32 0.0, %v1020
      %v1022 = vpop.f32.mrf.mxu0
      %v1023 = vadd.f32 0.0, %v1022
      %1024 = vmatmul.bf16.gmra.mxu0 %v992
      %v1025 = vpop.f32.mrf.mxu0
      %v1026 = vadd.f32 0.0, %v1025
      %v1027 = vpop.f32.mrf.mxu0
      %v1028 = vadd.f32 0.0, %v1027
      %1029 = vmatmul.bf16.gmra.mxu0 %v995
      %v1030 = vpop.f32.mrf.mxu0
      %v1031 = vadd.f32 0.0, %v1030
      %v1032 = vpop.f32.mrf.mxu0
      %v1033 = vadd.f32 0.0, %v1032
      %1034 = vmatmul.bf16.gmra.mxu0 %v998
      %v1035 = vpop.f32.mrf.mxu0
      %v1036 = vadd.f32 0.0, %v1035
      %v1037 = vpop.f32.mrf.mxu0
      %v1038 = vadd.f32 0.0, %v1037
      %1039 = vmatmul.bf16.gmra.mxu0 %v1001
      %v1040 = vpop.f32.mrf.mxu0
      %v1041 = vadd.f32 0.0, %v1040
      %v1042 = vpop.f32.mrf.mxu0
      %v1043 = vadd.f32 0.0, %v1042
      %1044 = vmatmul.bf16.gmra.mxu0 %v1004
      %v1045 = vpop.f32.mrf.mxu0
      %v1046 = vadd.f32 0.0, %v1045
      %v1047 = vpop.f32.mrf.mxu0
      %v1048 = vadd.f32 0.0, %v1047
      %1049 = vdwg.mxu0
      %v1050 = vadd.f32 %v952, %v1016
      %v1051 = vadd.f32 %v953, %v1018
      %v1052 = vadd.f32 %v954, %v1021
      %v1053 = vadd.f32 %v955, %v1023
      %v1054 = vadd.f32 %v956, %v1026
      %v1055 = vadd.f32 %v957, %v1028
      %v1056 = vadd.f32 %v958, %v1031
      %v1057 = vadd.f32 %v959, %v1033
      %v1058 = vadd.f32 %v960, %v1036
      %v1059 = vadd.f32 %v961, %v1038
      %v1060 = vadd.f32 %v962, %v1041
      %v1061 = vadd.f32 %v963, %v1043
      %v1062 = vadd.f32 %v964, %v1046
      %v1063 = vadd.f32 %v965, %v1048
      %v1064 = vld [vmem:[%s207 + $0x4] sm:$0xf]
      %v1065 = vld [vmem:[%s207 + $0x8] sm:$0xf]
      %v1066 = vld [vmem:[%s207 + $0xc] sm:$0xf]
      %v1067 = vld [vmem:[%s207 + $0x10] sm:$0xf]
      %v1068 = vld [vmem:[%s207 + $0x14] sm:$0xf]
      %v1069 = vld [vmem:[%s207 + $0x18] sm:$0xf]
      %v1070 = vld [vmem:[%s207 + $0x1c] sm:$0xf]
      %v1071 = vld [vmem:[%s207 + $0x20] sm:$0xf]
      %v1072 = vld [vmem:[%s207 + $0x24] sm:$0xf]
      %v1073 = vld [vmem:[%s207 + $0x28] sm:$0xf]
      %v1074 = vld [vmem:[%s207 + $0x2c] sm:$0xf]
      %v1075 = vld [vmem:[%s207 + $0x30] sm:$0xf]
      %v1076 = vld [vmem:[%s207 + $0x34] sm:$0xf]
      %v1077 = vld [vmem:[%s207 + $0x38] sm:$0xf]
      %v1078 = vld [vmem:[%s207 + $0x3c] sm:$0x1]
      %s1079 = scalar_lea.vmem %s2, 48
      %v1080 = vld [vmem:[%s1079] sm:$0xf]
      %v1081 = vld [vmem:[%s1079 + $0x4] sm:$0xf]
      %v1097 = vunpack.c.l.b16 %v1064
      %v1098 = vunpack.c.l.b16 %v1065
      %v1099 = vunpack.c.l.b16 %v1066
      %v1100 = vunpack.c.l.b16 %v1067
      %v1101 = vunpack.c.l.b16 %v1068
      %v1102 = vunpack.c.l.b16 %v1069
      %v1103 = vunpack.c.l.b16 %v1070
      %v1104 = vunpack.c.l.b16 %v1071
      %v1105 = vunpack.c.l.b16 %v1072
      %v1106 = vunpack.c.l.b16 %v1073
      %v1107 = vunpack.c.l.b16 %v1074
      %v1108 = vunpack.c.l.b16 %v1075
      %v1109 = vunpack.c.l.b16 %v1076
      %v1110 = vunpack.c.l.b16 %v1077
      %v1111 = vunpack.c.l.b16 %v1078
      %v1112 = vpack.c.b16 %v1098, %v1097
      %v1113 = vpack.c.b16 %v1100, %v1099
      %v1114 = vpack.c.b16 %v1102, %v1101
      %v1115 = vpack.c.b16 %v1104, %v1103
      %v1116 = vpack.c.b16 %v1106, %v1105
      %v1117 = vpack.c.b16 %v1108, %v1107
      %v1118 = vpack.c.b16 %v1110, %v1109
      %v1119 = vpack.c.b16 %v1111, %v1111
      %v1121 = vshrl.u32 %v1112, 16
      %v1123 = vshll.u32 %v1112, 16
      %v1125 = vrot.slane %v1123, 1
      %v1126 = vor.u32 %v1121, %v1125
      %v1128 = vshll.u32 %v1113, 16
      %v1130 = vrot.slane %v1128, 1
      %v1131 = vsel %vm521, %v1126, %v1130
      %v1132 = vshrl.u32 %v1113, 16
      %v1134 = vor.u32 %v1132, %v1130
      %v1136 = vshll.u32 %v1114, 16
      %v1138 = vrot.slane %v1136, 1
      %v1139 = vsel %vm521, %v1134, %v1138
      %v1140 = vshrl.u32 %v1114, 16
      %v1142 = vor.u32 %v1140, %v1138
      %v1144 = vshll.u32 %v1115, 16
      %v1146 = vrot.slane %v1144, 1
      %v1147 = vsel %vm521, %v1142, %v1146
      %v1148 = vshrl.u32 %v1115, 16
      %v1150 = vor.u32 %v1148, %v1146
      %v1152 = vshll.u32 %v1116, 16
      %v1154 = vrot.slane %v1152, 1
      %v1155 = vsel %vm521, %v1150, %v1154
      %v1156 = vshrl.u32 %v1116, 16
      %v1158 = vor.u32 %v1156, %v1154
      %v1160 = vshll.u32 %v1117, 16
      %v1162 = vrot.slane %v1160, 1
      %v1163 = vsel %vm521, %v1158, %v1162
      %v1164 = vshrl.u32 %v1117, 16
      %v1166 = vor.u32 %v1164, %v1162
      %v1168 = vshll.u32 %v1118, 16
      %v1170 = vrot.slane %v1168, 1
      %v1171 = vsel %vm521, %v1166, %v1170
      %v1172 = vshrl.u32 %v1118, 16
      %v1174 = vor.u32 %v1172, %v1170
      %v1176 = vshll.u32 %v1119, 16
      %v1178 = vrot.slane %v1176, 1
      %v1179 = vsel %vm521, %v1174, %v1178
      %v1182 = vunpack.c.l.b16 %v1080
      %v1183 = vunpack.c.l.b16 %v1081
      %v1184 = vpack.c.b16 %v1183, %v1182
      %v1187 = vsel %vm293, %v1131, 0
      %v1190 = vsel %vm293, %v1139, 0
      %v1193 = vsel %vm293, %v1147, 0
      %v1196 = vsel %vm293, %v1155, 0
      %v1199 = vsel %vm293, %v1163, 0
      %v1202 = vsel %vm293, %v1171, 0
      %v1205 = vsel %vm293, %v1179, 0
      %1207 = vmatpush.bf16.msra.mxu0 0
      %1208 = vmatpush.bf16.msra.mxu0 0
      %1209 = vmatpush.bf16.msra.mxu0 0
      %1210 = vmatpush.bf16.msra.mxu0 0
      %1211 = vmatpush.bf16.msra.mxu0 0
      %1212 = vmatpush.bf16.msra.mxu0 0
      %1213 = vmatpush.bf16.msra.mxu0 0
      %1214 = vmatpush.bf16.msra.mxu0 %v1184
      %1215 = vmatmul.bf16.gmra.mxu0 %v1187
      %v1216 = vpop.f32.mrf.mxu0
      %v1217 = vadd.f32 0.0, %v1216
      %v1218 = vpop.f32.mrf.mxu0
      %v1219 = vadd.f32 0.0, %v1218
      %1220 = vmatmul.bf16.gmra.mxu0 %v1190
      %v1221 = vpop.f32.mrf.mxu0
      %v1222 = vadd.f32 0.0, %v1221
      %v1223 = vpop.f32.mrf.mxu0
      %v1224 = vadd.f32 0.0, %v1223
      %1225 = vmatmul.bf16.gmra.mxu0 %v1193
      %v1226 = vpop.f32.mrf.mxu0
      %v1227 = vadd.f32 0.0, %v1226
      %v1228 = vpop.f32.mrf.mxu0
      %v1229 = vadd.f32 0.0, %v1228
      %1230 = vmatmul.bf16.gmra.mxu0 %v1196
      %v1231 = vpop.f32.mrf.mxu0
      %v1232 = vadd.f32 0.0, %v1231
      %v1233 = vpop.f32.mrf.mxu0
      %v1234 = vadd.f32 0.0, %v1233
      %1235 = vmatmul.bf16.gmra.mxu0 %v1199
      %v1236 = vpop.f32.mrf.mxu0
      %v1237 = vadd.f32 0.0, %v1236
      %v1238 = vpop.f32.mrf.mxu0
      %v1239 = vadd.f32 0.0, %v1238
      %1240 = vmatmul.bf16.gmra.mxu0 %v1202
      %v1241 = vpop.f32.mrf.mxu0
      %v1242 = vadd.f32 0.0, %v1241
      %v1243 = vpop.f32.mrf.mxu0
      %v1244 = vadd.f32 0.0, %v1243
      %1245 = vmatmul.bf16.gmra.mxu0 %v1205
      %v1246 = vpop.f32.mrf.mxu0
      %v1247 = vadd.f32 0.0, %v1246
      %v1248 = vpop.f32.mrf.mxu0
      %v1249 = vadd.f32 0.0, %v1248
      %1250 = vdwg.mxu0
      %v1251 = vadd.f32 %v1050, %v1217
      %v1252 = vadd.f32 %v1051, %v1219
      %v1253 = vadd.f32 %v1052, %v1222
      %v1254 = vadd.f32 %v1053, %v1224
      %v1255 = vadd.f32 %v1054, %v1227
      %v1256 = vadd.f32 %v1055, %v1229
      %v1257 = vadd.f32 %v1056, %v1232
      %v1258 = vadd.f32 %v1057, %v1234
      %v1259 = vadd.f32 %v1058, %v1237
      %v1260 = vadd.f32 %v1059, %v1239
      %v1261 = vadd.f32 %v1060, %v1242
      %v1262 = vadd.f32 %v1061, %v1244
      %v1263 = vadd.f32 %v1062, %v1247
      %v1264 = vadd.f32 %v1063, %v1249
      %v1265 = vld [vmem:[%s212 + $0x4] sm:$0xf]
      %v1266 = vld [vmem:[%s212 + $0x8] sm:$0xf]
      %v1267 = vld [vmem:[%s212 + $0xc] sm:$0xf]
      %v1268 = vld [vmem:[%s212 + $0x10] sm:$0xf]
      %v1269 = vld [vmem:[%s212 + $0x14] sm:$0xf]
      %v1270 = vld [vmem:[%s212 + $0x18] sm:$0xf]
      %v1271 = vld [vmem:[%s212 + $0x1c] sm:$0xf]
      %v1272 = vld [vmem:[%s212 + $0x20] sm:$0xf]
      %v1273 = vld [vmem:[%s212 + $0x24] sm:$0xf]
      %v1274 = vld [vmem:[%s212 + $0x28] sm:$0xf]
      %v1275 = vld [vmem:[%s212 + $0x2c] sm:$0xf]
      %v1276 = vld [vmem:[%s212 + $0x30] sm:$0xf]
      %v1277 = vld [vmem:[%s212 + $0x34] sm:$0xf]
      %v1278 = vld [vmem:[%s212 + $0x38] sm:$0xf]
      %v1279 = vld [vmem:[%s212 + $0x3c] sm:$0x1]
      %s1280 = scalar_lea.vmem %s2, 56
      %v1281 = vld [vmem:[%s1280] sm:$0xf]
      %v1282 = vld [vmem:[%s1280 + $0x4] sm:$0xf]
      %v1298 = vunpack.c.l.b16 %v1265
      %v1299 = vunpack.c.l.b16 %v1266
      %v1300 = vunpack.c.l.b16 %v1267
      %v1301 = vunpack.c.l.b16 %v1268
      %v1302 = vunpack.c.l.b16 %v1269
      %v1303 = vunpack.c.l.b16 %v1270
      %v1304 = vunpack.c.l.b16 %v1271
      %v1305 = vunpack.c.l.b16 %v1272
      %v1306 = vunpack.c.l.b16 %v1273
      %v1307 = vunpack.c.l.b16 %v1274
      %v1308 = vunpack.c.l.b16 %v1275
      %v1309 = vunpack.c.l.b16 %v1276
      %v1310 = vunpack.c.l.b16 %v1277
      %v1311 = vunpack.c.l.b16 %v1278
      %v1312 = vunpack.c.l.b16 %v1279
      %v1313 = vpack.c.b16 %v1299, %v1298
      %v1314 = vpack.c.b16 %v1301, %v1300
      %v1315 = vpack.c.b16 %v1303, %v1302
      %v1316 = vpack.c.b16 %v1305, %v1304
      %v1317 = vpack.c.b16 %v1307, %v1306
      %v1318 = vpack.c.b16 %v1309, %v1308
      %v1319 = vpack.c.b16 %v1311, %v1310
      %v1320 = vpack.c.b16 %v1312, %v1312
      %v1322 = vshrl.u32 %v1313, 16
      %v1324 = vshll.u32 %v1313, 16
      %v1326 = vrot.slane %v1324, 1
      %v1327 = vor.u32 %v1322, %v1326
      %v1329 = vshll.u32 %v1314, 16
      %v1331 = vrot.slane %v1329, 1
      %v1332 = vsel %vm521, %v1327, %v1331
      %v1333 = vshrl.u32 %v1314, 16
      %v1335 = vor.u32 %v1333, %v1331
      %v1337 = vshll.u32 %v1315, 16
      %v1339 = vrot.slane %v1337, 1
      %v1340 = vsel %vm521, %v1335, %v1339
      %v1341 = vshrl.u32 %v1315, 16
      %v1343 = vor.u32 %v1341, %v1339
      %v1345 = vshll.u32 %v1316, 16
      %v1347 = vrot.slane %v1345, 1
      %v1348 = vsel %vm521, %v1343, %v1347
      %v1349 = vshrl.u32 %v1316, 16
      %v1351 = vor.u32 %v1349, %v1347
      %v1353 = vshll.u32 %v1317, 16
      %v1355 = vrot.slane %v1353, 1
      %v1356 = vsel %vm521, %v1351, %v1355
      %v1357 = vshrl.u32 %v1317, 16
      %v1359 = vor.u32 %v1357, %v1355
      %v1361 = vshll.u32 %v1318, 16
      %v1363 = vrot.slane %v1361, 1
      %v1364 = vsel %vm521, %v1359, %v1363
      %v1365 = vshrl.u32 %v1318, 16
      %v1367 = vor.u32 %v1365, %v1363
      %v1369 = vshll.u32 %v1319, 16
      %v1371 = vrot.slane %v1369, 1
      %v1372 = vsel %vm521, %v1367, %v1371
      %v1373 = vshrl.u32 %v1319, 16
      %v1375 = vor.u32 %v1373, %v1371
      %v1377 = vshll.u32 %v1320, 16
      %v1379 = vrot.slane %v1377, 1
      %v1380 = vsel %vm521, %v1375, %v1379
      %v1383 = vunpack.c.l.b16 %v1281
      %v1384 = vunpack.c.l.b16 %v1282
      %v1385 = vpack.c.b16 %v1384, %v1383
      %v1388 = vsel %vm293, %v1332, 0
      %v1391 = vsel %vm293, %v1340, 0
      %v1394 = vsel %vm293, %v1348, 0
      %v1397 = vsel %vm293, %v1356, 0
      %v1400 = vsel %vm293, %v1364, 0
      %v1403 = vsel %vm293, %v1372, 0
      %v1406 = vsel %vm293, %v1380, 0
      %1408 = vmatpush.bf16.msra.mxu0 0
      %1409 = vmatpush.bf16.msra.mxu0 0
      %1410 = vmatpush.bf16.msra.mxu0 0
      %1411 = vmatpush.bf16.msra.mxu0 0
      %1412 = vmatpush.bf16.msra.mxu0 0
      %1413 = vmatpush.bf16.msra.mxu0 0
      %1414 = vmatpush.bf16.msra.mxu0 0
      %1415 = vmatpush.bf16.msra.mxu0 %v1385
      %1416 = vmatmul.bf16.gmra.mxu0 %v1388
      %v1417 = vpop.f32.mrf.mxu0
      %v1418 = vadd.f32 0.0, %v1417
      %v1419 = vpop.f32.mrf.mxu0
      %v1420 = vadd.f32 0.0, %v1419
      %1421 = vmatmul.bf16.gmra.mxu0 %v1391
      %v1422 = vpop.f32.mrf.mxu0
      %v1423 = vadd.f32 0.0, %v1422
      %v1424 = vpop.f32.mrf.mxu0
      %v1425 = vadd.f32 0.0, %v1424
      %1426 = vmatmul.bf16.gmra.mxu0 %v1394
      %v1427 = vpop.f32.mrf.mxu0
      %v1428 = vadd.f32 0.0, %v1427
      %v1429 = vpop.f32.mrf.mxu0
      %v1430 = vadd.f32 0.0, %v1429
      %1431 = vmatmul.bf16.gmra.mxu0 %v1397
      %v1432 = vpop.f32.mrf.mxu0
      %v1433 = vadd.f32 0.0, %v1432
      %v1434 = vpop.f32.mrf.mxu0
      %v1435 = vadd.f32 0.0, %v1434
      %1436 = vmatmul.bf16.gmra.mxu0 %v1400
      %v1437 = vpop.f32.mrf.mxu0
      %v1438 = vadd.f32 0.0, %v1437
      %v1439 = vpop.f32.mrf.mxu0
      %v1440 = vadd.f32 0.0, %v1439
      %1441 = vmatmul.bf16.gmra.mxu0 %v1403
      %v1442 = vpop.f32.mrf.mxu0
      %v1443 = vadd.f32 0.0, %v1442
      %v1444 = vpop.f32.mrf.mxu0
      %v1445 = vadd.f32 0.0, %v1444
      %1446 = vmatmul.bf16.gmra.mxu0 %v1406
      %v1447 = vpop.f32.mrf.mxu0
      %v1448 = vadd.f32 0.0, %v1447
      %v1449 = vpop.f32.mrf.mxu0
      %v1450 = vadd.f32 0.0, %v1449
      %1451 = vdwg.mxu0
      %v1452 = vadd.f32 %v1251, %v1418
      %v1453 = vadd.f32 %v1252, %v1420
      %v1454 = vadd.f32 %v1253, %v1423
      %v1455 = vadd.f32 %v1254, %v1425
      %v1456 = vadd.f32 %v1255, %v1428
      %v1457 = vadd.f32 %v1256, %v1430
      %v1458 = vadd.f32 %v1257, %v1433
      %v1459 = vadd.f32 %v1258, %v1435
      %v1460 = vadd.f32 %v1259, %v1438
      %v1461 = vadd.f32 %v1260, %v1440
      %v1462 = vadd.f32 %v1261, %v1443
      %v1463 = vadd.f32 %v1262, %v1445
      %v1464 = vadd.f32 %v1263, %v1448
      %v1465 = vadd.f32 %v1264, %v1450
      %v1466 = vld [vmem:[%s207 + $0x3c] sm:$0xf]
      %s1467 = scalar_lea.vmem %s2, 64
      %v1468 = vld [vmem:[%s1467] sm:$0xf]
      %v1469 = vld [vmem:[%s1467 + $0x4] sm:$0xf]
      %v1471 = vunpack.c.l.b16 %v1466
      %v1472 = vpack.c.b16 %v1099, %v1098
      %v1473 = vpack.c.b16 %v1101, %v1100
      %v1474 = vpack.c.b16 %v1103, %v1102
      %v1475 = vpack.c.b16 %v1105, %v1104
      %v1476 = vpack.c.b16 %v1107, %v1106
      %v1477 = vpack.c.b16 %v1109, %v1108
      %v1478 = vpack.c.b16 %v1471, %v1110
      %v1481 = vunpack.c.l.b16 %v1468
      %v1482 = vunpack.c.l.b16 %v1469
      %v1483 = vpack.c.b16 %v1482, %v1481
      %v1486 = vsel %vm293, %v1472, 0
      %v1489 = vsel %vm293, %v1473, 0
      %v1492 = vsel %vm293, %v1474, 0
      %v1495 = vsel %vm293, %v1475, 0
      %v1498 = vsel %vm293, %v1476, 0
      %v1501 = vsel %vm293, %v1477, 0
      %v1504 = vsel %vm293, %v1478, 0
      %1506 = vmatpush.bf16.msra.mxu0 0
      %1507 = vmatpush.bf16.msra.mxu0 0
      %1508 = vmatpush.bf16.msra.mxu0 0
      %1509 = vmatpush.bf16.msra.mxu0 0
      %1510 = vmatpush.bf16.msra.mxu0 0
      %1511 = vmatpush.bf16.msra.mxu0 0
      %1512 = vmatpush.bf16.msra.mxu0 0
      %1513 = vmatpush.bf16.msra.mxu0 %v1483
      %1514 = vmatmul.bf16.gmra.mxu0 %v1486
      %v1515 = vpop.f32.mrf.mxu0
      %v1516 = vadd.f32 0.0, %v1515
      %v1517 = vpop.f32.mrf.mxu0
      %v1518 = vadd.f32 0.0, %v1517
      %1519 = vmatmul.bf16.gmra.mxu0 %v1489
      %v1520 = vpop.f32.mrf.mxu0
      %v1521 = vadd.f32 0.0, %v1520
      %v1522 = vpop.f32.mrf.mxu0
      %v1523 = vadd.f32 0.0, %v1522
      %1524 = vmatmul.bf16.gmra.mxu0 %v1492
      %v1525 = vpop.f32.mrf.mxu0
      %v1526 = vadd.f32 0.0, %v1525
      %v1527 = vpop.f32.mrf.mxu0
      %v1528 = vadd.f32 0.0, %v1527
      %1529 = vmatmul.bf16.gmra.mxu0 %v1495
      %v1530 = vpop.f32.mrf.mxu0
      %v1531 = vadd.f32 0.0, %v1530
      %v1532 = vpop.f32.mrf.mxu0
      %v1533 = vadd.f32 0.0, %v1532
      %1534 = vmatmul.bf16.gmra.mxu0 %v1498
      %v1535 = vpop.f32.mrf.mxu0
      %v1536 = vadd.f32 0.0, %v1535
      %v1537 = vpop.f32.mrf.mxu0
      %v1538 = vadd.f32 0.0, %v1537
      %1539 = vmatmul.bf16.gmra.mxu0 %v1501
      %v1540 = vpop.f32.mrf.mxu0
      %v1541 = vadd.f32 0.0, %v1540
      %v1542 = vpop.f32.mrf.mxu0
      %v1543 = vadd.f32 0.0, %v1542
      %1544 = vmatmul.bf16.gmra.mxu0 %v1504
      %v1545 = vpop.f32.mrf.mxu0
      %v1546 = vadd.f32 0.0, %v1545
      %v1547 = vpop.f32.mrf.mxu0
      %v1548 = vadd.f32 0.0, %v1547
      %1549 = vdwg.mxu0
      %v1550 = vadd.f32 %v1452, %v1516
      %v1551 = vadd.f32 %v1453, %v1518
      %v1552 = vadd.f32 %v1454, %v1521
      %v1553 = vadd.f32 %v1455, %v1523
      %v1554 = vadd.f32 %v1456, %v1526
      %v1555 = vadd.f32 %v1457, %v1528
      %v1556 = vadd.f32 %v1458, %v1531
      %v1557 = vadd.f32 %v1459, %v1533
      %v1558 = vadd.f32 %v1460, %v1536
      %v1559 = vadd.f32 %v1461, %v1538
      %v1560 = vadd.f32 %v1462, %v1541
      %v1561 = vadd.f32 %v1463, %v1543
      %v1562 = vadd.f32 %v1464, %v1546
      %v1563 = vadd.f32 %v1465, %v1548
      %v1564 = vld [vmem:[%s212 + $0x3c] sm:$0xf]
      %s1565 = scalar_lea.vmem %s2, 72
      %v1566 = vld [vmem:[%s1565] sm:$0xf]
      %v1567 = vld [vmem:[%s1565 + $0x4] sm:$0xf]
      %v1569 = vunpack.c.l.b16 %v1564
      %v1570 = vpack.c.b16 %v1300, %v1299
      %v1571 = vpack.c.b16 %v1302, %v1301
      %v1572 = vpack.c.b16 %v1304, %v1303
      %v1573 = vpack.c.b16 %v1306, %v1305
      %v1574 = vpack.c.b16 %v1308, %v1307
      %v1575 = vpack.c.b16 %v1310, %v1309
      %v1576 = vpack.c.b16 %v1569, %v1311
      %v1579 = vunpack.c.l.b16 %v1566
      %v1580 = vunpack.c.l.b16 %v1567
      %v1581 = vpack.c.b16 %v1580, %v1579
      %v1584 = vsel %vm293, %v1570, 0
      %v1587 = vsel %vm293, %v1571, 0
      %v1590 = vsel %vm293, %v1572, 0
      %v1593 = vsel %vm293, %v1573, 0
      %v1596 = vsel %vm293, %v1574, 0
      %v1599 = vsel %vm293, %v1575, 0
      %v1602 = vsel %vm293, %v1576, 0
      %1604 = vmatpush.bf16.msra.mxu0 0
      %1605 = vmatpush.bf16.msra.mxu0 0
      %1606 = vmatpush.bf16.msra.mxu0 0
      %1607 = vmatpush.bf16.msra.mxu0 0
      %1608 = vmatpush.bf16.msra.mxu0 0
      %1609 = vmatpush.bf16.msra.mxu0 0
      %1610 = vmatpush.bf16.msra.mxu0 0
      %1611 = vmatpush.bf16.msra.mxu0 %v1581
      %1612 = vmatmul.bf16.gmra.mxu0 %v1584
      %v1613 = vpop.f32.mrf.mxu0
      %v1614 = vadd.f32 0.0, %v1613
      %v1615 = vpop.f32.mrf.mxu0
      %v1616 = vadd.f32 0.0, %v1615
      %1617 = vmatmul.bf16.gmra.mxu0 %v1587
      %v1618 = vpop.f32.mrf.mxu0
      %v1619 = vadd.f32 0.0, %v1618
      %v1620 = vpop.f32.mrf.mxu0
      %v1621 = vadd.f32 0.0, %v1620
      %1622 = vmatmul.bf16.gmra.mxu0 %v1590
      %v1623 = vpop.f32.mrf.mxu0
      %v1624 = vadd.f32 0.0, %v1623
      %v1625 = vpop.f32.mrf.mxu0
      %v1626 = vadd.f32 0.0, %v1625
      %1627 = vmatmul.bf16.gmra.mxu0 %v1593
      %v1628 = vpop.f32.mrf.mxu0
      %v1629 = vadd.f32 0.0, %v1628
      %v1630 = vpop.f32.mrf.mxu0
      %v1631 = vadd.f32 0.0, %v1630
      %1632 = vmatmul.bf16.gmra.mxu0 %v1596
      %v1633 = vpop.f32.mrf.mxu0
      %v1634 = vadd.f32 0.0, %v1633
      %v1635 = vpop.f32.mrf.mxu0
      %v1636 = vadd.f32 0.0, %v1635
      %1637 = vmatmul.bf16.gmra.mxu0 %v1599
      %v1638 = vpop.f32.mrf.mxu0
      %v1639 = vadd.f32 0.0, %v1638
      %v1640 = vpop.f32.mrf.mxu0
      %v1641 = vadd.f32 0.0, %v1640
      %1642 = vmatmul.bf16.gmra.mxu0 %v1602
      %v1643 = vpop.f32.mrf.mxu0
      %v1644 = vadd.f32 0.0, %v1643
      %v1645 = vpop.f32.mrf.mxu0
      %v1646 = vadd.f32 0.0, %v1645
      %1647 = vdwg.mxu0
      %v1648 = vadd.f32 %v1550, %v1614
      %v1649 = vadd.f32 %v1551, %v1616
      %v1650 = vadd.f32 %v1552, %v1619
      %v1651 = vadd.f32 %v1553, %v1621
      %v1652 = vadd.f32 %v1554, %v1624
      %v1653 = vadd.f32 %v1555, %v1626
      %v1654 = vadd.f32 %v1556, %v1629
      %v1655 = vadd.f32 %v1557, %v1631
      %v1656 = vadd.f32 %v1558, %v1634
      %v1657 = vadd.f32 %v1559, %v1636
      %v1658 = vadd.f32 %v1560, %v1639
      %v1659 = vadd.f32 %v1561, %v1641
      %v1660 = vadd.f32 %v1562, %v1644
      %v1661 = vadd.f32 %v1563, %v1646
      %v1662 = vld [vmem:[%s207 + $0x8] sm:$0xf]
      %v1663 = vld [vmem:[%s207 + $0xc] sm:$0xf]
      %v1664 = vld [vmem:[%s207 + $0x10] sm:$0xf]
      %v1665 = vld [vmem:[%s207 + $0x14] sm:$0xf]
      %v1666 = vld [vmem:[%s207 + $0x18] sm:$0xf]
      %v1667 = vld [vmem:[%s207 + $0x1c] sm:$0xf]
      %v1668 = vld [vmem:[%s207 + $0x20] sm:$0xf]
      %v1669 = vld [vmem:[%s207 + $0x24] sm:$0xf]
      %v1670 = vld [vmem:[%s207 + $0x28] sm:$0xf]
      %v1671 = vld [vmem:[%s207 + $0x2c] sm:$0xf]
      %v1672 = vld [vmem:[%s207 + $0x30] sm:$0xf]
      %v1673 = vld [vmem:[%s207 + $0x34] sm:$0xf]
      %v1674 = vld [vmem:[%s207 + $0x38] sm:$0xf]
      %v1675 = vld [vmem:[%s207 + $0x3c] sm:$0xf]
      %v1676 = vld [vmem:[%s207 + $0x40] sm:$0x1]
      %s1677 = scalar_lea.vmem %s2, 80
      %v1678 = vld [vmem:[%s1677] sm:$0xf]
      %v1679 = vld [vmem:[%s1677 + $0x4] sm:$0xf]
      %v1695 = vunpack.c.l.b16 %v1662
      %v1696 = vunpack.c.l.b16 %v1663
      %v1697 = vunpack.c.l.b16 %v1664
      %v1698 = vunpack.c.l.b16 %v1665
      %v1699 = vunpack.c.l.b16 %v1666
      %v1700 = vunpack.c.l.b16 %v1667
      %v1701 = vunpack.c.l.b16 %v1668
      %v1702 = vunpack.c.l.b16 %v1669
      %v1703 = vunpack.c.l.b16 %v1670
      %v1704 = vunpack.c.l.b16 %v1671
      %v1705 = vunpack.c.l.b16 %v1672
      %v1706 = vunpack.c.l.b16 %v1673
      %v1707 = vunpack.c.l.b16 %v1674
      %v1708 = vunpack.c.l.b16 %v1675
      %v1709 = vunpack.c.l.b16 %v1676
      %v1710 = vpack.c.b16 %v1696, %v1695
      %v1711 = vpack.c.b16 %v1698, %v1697
      %v1712 = vpack.c.b16 %v1700, %v1699
      %v1713 = vpack.c.b16 %v1702, %v1701
      %v1714 = vpack.c.b16 %v1704, %v1703
      %v1715 = vpack.c.b16 %v1706, %v1705
      %v1716 = vpack.c.b16 %v1708, %v1707
      %v1717 = vpack.c.b16 %v1709, %v1709
      %v1719 = vshrl.u32 %v1710, 16
      %v1721 = vshll.u32 %v1710, 16
      %v1723 = vrot.slane %v1721, 1
      %v1724 = vor.u32 %v1719, %v1723
      %v1726 = vshll.u32 %v1711, 16
      %v1728 = vrot.slane %v1726, 1
      %v1729 = vsel %vm521, %v1724, %v1728
      %v1730 = vshrl.u32 %v1711, 16
      %v1732 = vor.u32 %v1730, %v1728
      %v1734 = vshll.u32 %v1712, 16
      %v1736 = vrot.slane %v1734, 1
      %v1737 = vsel %vm521, %v1732, %v1736
      %v1738 = vshrl.u32 %v1712, 16
      %v1740 = vor.u32 %v1738, %v1736
      %v1742 = vshll.u32 %v1713, 16
      %v1744 = vrot.slane %v1742, 1
      %v1745 = vsel %vm521, %v1740, %v1744
      %v1746 = vshrl.u32 %v1713, 16
      %v1748 = vor.u32 %v1746, %v1744
      %v1750 = vshll.u32 %v1714, 16
      %v1752 = vrot.slane %v1750, 1
      %v1753 = vsel %vm521, %v1748, %v1752
      %v1754 = vshrl.u32 %v1714, 16
      %v1756 = vor.u32 %v1754, %v1752
      %v1758 = vshll.u32 %v1715, 16
      %v1760 = vrot.slane %v1758, 1
      %v1761 = vsel %vm521, %v1756, %v1760
      %v1762 = vshrl.u32 %v1715, 16
      %v1764 = vor.u32 %v1762, %v1760
      %v1766 = vshll.u32 %v1716, 16
      %v1768 = vrot.slane %v1766, 1
      %v1769 = vsel %vm521, %v1764, %v1768
      %v1770 = vshrl.u32 %v1716, 16
      %v1772 = vor.u32 %v1770, %v1768
      %v1774 = vshll.u32 %v1717, 16
      %v1776 = vrot.slane %v1774, 1
      %v1777 = vsel %vm521, %v1772, %v1776
      %v1780 = vunpack.c.l.b16 %v1678
      %v1781 = vunpack.c.l.b16 %v1679
      %v1782 = vpack.c.b16 %v1781, %v1780
      %v1785 = vsel %vm293, %v1729, 0
      %v1788 = vsel %vm293, %v1737, 0
      %v1791 = vsel %vm293, %v1745, 0
      %v1794 = vsel %vm293, %v1753, 0
      %v1797 = vsel %vm293, %v1761, 0
      %v1800 = vsel %vm293, %v1769, 0
      %v1803 = vsel %vm293, %v1777, 0
      %1805 = vmatpush.bf16.msra.mxu0 0
      %1806 = vmatpush.bf16.msra.mxu0 0
      %1807 = vmatpush.bf16.msra.mxu0 0
      %1808 = vmatpush.bf16.msra.mxu0 0
      %1809 = vmatpush.bf16.msra.mxu0 0
      %1810 = vmatpush.bf16.msra.mxu0 0
      %1811 = vmatpush.bf16.msra.mxu0 0
      %1812 = vmatpush.bf16.msra.mxu0 %v1782
      %1813 = vmatmul.bf16.gmra.mxu0 %v1785
      %v1814 = vpop.f32.mrf.mxu0
      %v1815 = vadd.f32 0.0, %v1814
      %v1816 = vpop.f32.mrf.mxu0
      %v1817 = vadd.f32 0.0, %v1816
      %1818 = vmatmul.bf16.gmra.mxu0 %v1788
      %v1819 = vpop.f32.mrf.mxu0
      %v1820 = vadd.f32 0.0, %v1819
      %v1821 = vpop.f32.mrf.mxu0
      %v1822 = vadd.f32 0.0, %v1821
      %1823 = vmatmul.bf16.gmra.mxu0 %v1791
      %v1824 = vpop.f32.mrf.mxu0
      %v1825 = vadd.f32 0.0, %v1824
      %v1826 = vpop.f32.mrf.mxu0
      %v1827 = vadd.f32 0.0, %v1826
      %1828 = vmatmul.bf16.gmra.mxu0 %v1794
      %v1829 = vpop.f32.mrf.mxu0
      %v1830 = vadd.f32 0.0, %v1829
      %v1831 = vpop.f32.mrf.mxu0
      %v1832 = vadd.f32 0.0, %v1831
      %1833 = vmatmul.bf16.gmra.mxu0 %v1797
      %v1834 = vpop.f32.mrf.mxu0
      %v1835 = vadd.f32 0.0, %v1834
      %v1836 = vpop.f32.mrf.mxu0
      %v1837 = vadd.f32 0.0, %v1836
      %1838 = vmatmul.bf16.gmra.mxu0 %v1800
      %v1839 = vpop.f32.mrf.mxu0
      %v1840 = vadd.f32 0.0, %v1839
      %v1841 = vpop.f32.mrf.mxu0
      %v1842 = vadd.f32 0.0, %v1841
      %1843 = vmatmul.bf16.gmra.mxu0 %v1803
      %v1844 = vpop.f32.mrf.mxu0
      %v1845 = vadd.f32 0.0, %v1844
      %v1846 = vpop.f32.mrf.mxu0
      %v1847 = vadd.f32 0.0, %v1846
      %1848 = vdwg.mxu0
      %v1849 = vadd.f32 %v1648, %v1815
      %v1850 = vadd.f32 %v1649, %v1817
      %v1851 = vadd.f32 %v1650, %v1820
      %v1852 = vadd.f32 %v1651, %v1822
      %v1853 = vadd.f32 %v1652, %v1825
      %v1854 = vadd.f32 %v1653, %v1827
      %v1855 = vadd.f32 %v1654, %v1830
      %v1856 = vadd.f32 %v1655, %v1832
      %v1857 = vadd.f32 %v1656, %v1835
      %v1858 = vadd.f32 %v1657, %v1837
      %v1859 = vadd.f32 %v1658, %v1840
      %v1860 = vadd.f32 %v1659, %v1842
      %v1861 = vadd.f32 %v1660, %v1845
      %v1862 = vadd.f32 %v1661, %v1847
      %v1863 = vld [vmem:[%s212 + $0x8] sm:$0xf]
      %v1864 = vld [vmem:[%s212 + $0xc] sm:$0xf]
      %v1865 = vld [vmem:[%s212 + $0x10] sm:$0xf]
      %v1866 = vld [vmem:[%s212 + $0x14] sm:$0xf]
      %v1867 = vld [vmem:[%s212 + $0x18] sm:$0xf]
      %v1868 = vld [vmem:[%s212 + $0x1c] sm:$0xf]
      %v1869 = vld [vmem:[%s212 + $0x20] sm:$0xf]
      %v1870 = vld [vmem:[%s212 + $0x24] sm:$0xf]
      %v1871 = vld [vmem:[%s212 + $0x28] sm:$0xf]
      %v1872 = vld [vmem:[%s212 + $0x2c] sm:$0xf]
      %v1873 = vld [vmem:[%s212 + $0x30] sm:$0xf]
      %v1874 = vld [vmem:[%s212 + $0x34] sm:$0xf]
      %v1875 = vld [vmem:[%s212 + $0x38] sm:$0xf]
      %v1876 = vld [vmem:[%s212 + $0x3c] sm:$0xf]
      %v1877 = vld [vmem:[%s212 + $0x40] sm:$0x1]
      %s1878 = scalar_lea.vmem %s2, 88
      %v1879 = vld [vmem:[%s1878] sm:$0xf]
      %v1880 = vld [vmem:[%s1878 + $0x4] sm:$0xf]
      %v1896 = vunpack.c.l.b16 %v1863
      %v1897 = vunpack.c.l.b16 %v1864
      %v1898 = vunpack.c.l.b16 %v1865
      %v1899 = vunpack.c.l.b16 %v1866
      %v1900 = vunpack.c.l.b16 %v1867
      %v1901 = vunpack.c.l.b16 %v1868
      %v1902 = vunpack.c.l.b16 %v1869
      %v1903 = vunpack.c.l.b16 %v1870
      %v1904 = vunpack.c.l.b16 %v1871
      %v1905 = vunpack.c.l.b16 %v1872
      %v1906 = vunpack.c.l.b16 %v1873
      %v1907 = vunpack.c.l.b16 %v1874
      %v1908 = vunpack.c.l.b16 %v1875
      %v1909 = vunpack.c.l.b16 %v1876
      %v1910 = vunpack.c.l.b16 %v1877
      %v1911 = vpack.c.b16 %v1897, %v1896
      %v1912 = vpack.c.b16 %v1899, %v1898
      %v1913 = vpack.c.b16 %v1901, %v1900
      %v1914 = vpack.c.b16 %v1903, %v1902
      %v1915 = vpack.c.b16 %v1905, %v1904
      %v1916 = vpack.c.b16 %v1907, %v1906
      %v1917 = vpack.c.b16 %v1909, %v1908
      %v1918 = vpack.c.b16 %v1910, %v1910
      %v1920 = vshrl.u32 %v1911, 16
      %v1922 = vshll.u32 %v1911, 16
      %v1924 = vrot.slane %v1922, 1
      %v1925 = vor.u32 %v1920, %v1924
      %v1927 = vshll.u32 %v1912, 16
      %v1929 = vrot.slane %v1927, 1
      %v1930 = vsel %vm521, %v1925, %v1929
      %v1931 = vshrl.u32 %v1912, 16
      %v1933 = vor.u32 %v1931, %v1929
      %v1935 = vshll.u32 %v1913, 16
      %v1937 = vrot.slane %v1935, 1
      %v1938 = vsel %vm521, %v1933, %v1937
      %v1939 = vshrl.u32 %v1913, 16
      %v1941 = vor.u32 %v1939, %v1937
      %v1943 = vshll.u32 %v1914, 16
      %v1945 = vrot.slane %v1943, 1
      %v1946 = vsel %vm521, %v1941, %v1945
      %v1947 = vshrl.u32 %v1914, 16
      %v1949 = vor.u32 %v1947, %v1945
      %v1951 = vshll.u32 %v1915, 16
      %v1953 = vrot.slane %v1951, 1
      %v1954 = vsel %vm521, %v1949, %v1953
      %v1955 = vshrl.u32 %v1915, 16
      %v1957 = vor.u32 %v1955, %v1953
      %v1959 = vshll.u32 %v1916, 16
      %v1961 = vrot.slane %v1959, 1
      %v1962 = vsel %vm521, %v1957, %v1961
      %v1963 = vshrl.u32 %v1916, 16
      %v1965 = vor.u32 %v1963, %v1961
      %v1967 = vshll.u32 %v1917, 16
      %v1969 = vrot.slane %v1967, 1
      %v1970 = vsel %vm521, %v1965, %v1969
      %v1971 = vshrl.u32 %v1917, 16
      %v1973 = vor.u32 %v1971, %v1969
      %v1975 = vshll.u32 %v1918, 16
      %v1977 = vrot.slane %v1975, 1
      %v1978 = vsel %vm521, %v1973, %v1977
      %v1981 = vunpack.c.l.b16 %v1879
      %v1982 = vunpack.c.l.b16 %v1880
      %v1983 = vpack.c.b16 %v1982, %v1981
      %v1986 = vsel %vm293, %v1930, 0
      %v1989 = vsel %vm293, %v1938, 0
      %v1992 = vsel %vm293, %v1946, 0
      %v1995 = vsel %vm293, %v1954, 0
      %v1998 = vsel %vm293, %v1962, 0
      %v2001 = vsel %vm293, %v1970, 0
      %v2004 = vsel %vm293, %v1978, 0
      %2006 = vmatpush.bf16.msra.mxu0 0
      %2007 = vmatpush.bf16.msra.mxu0 0
      %2008 = vmatpush.bf16.msra.mxu0 0
      %2009 = vmatpush.bf16.msra.mxu0 0
      %2010 = vmatpush.bf16.msra.mxu0 0
      %2011 = vmatpush.bf16.msra.mxu0 0
      %2012 = vmatpush.bf16.msra.mxu0 0
      %2013 = vmatpush.bf16.msra.mxu0 %v1983
      %2014 = vmatmul.bf16.gmra.mxu0 %v1986
      %v2015 = vpop.f32.mrf.mxu0
      %v2016 = vadd.f32 0.0, %v2015
      %v2017 = vpop.f32.mrf.mxu0
      %v2018 = vadd.f32 0.0, %v2017
      %2019 = vmatmul.bf16.gmra.mxu0 %v1989
      %v2020 = vpop.f32.mrf.mxu0
      %v2021 = vadd.f32 0.0, %v2020
      %v2022 = vpop.f32.mrf.mxu0
      %v2023 = vadd.f32 0.0, %v2022
      %2024 = vmatmul.bf16.gmra.mxu0 %v1992
      %v2025 = vpop.f32.mrf.mxu0
      %v2026 = vadd.f32 0.0, %v2025
      %v2027 = vpop.f32.mrf.mxu0
      %v2028 = vadd.f32 0.0, %v2027
      %2029 = vmatmul.bf16.gmra.mxu0 %v1995
      %v2030 = vpop.f32.mrf.mxu0
      %v2031 = vadd.f32 0.0, %v2030
      %v2032 = vpop.f32.mrf.mxu0
      %v2033 = vadd.f32 0.0, %v2032
      %2034 = vmatmul.bf16.gmra.mxu0 %v1998
      %v2035 = vpop.f32.mrf.mxu0
      %v2036 = vadd.f32 0.0, %v2035
      %v2037 = vpop.f32.mrf.mxu0
      %v2038 = vadd.f32 0.0, %v2037
      %2039 = vmatmul.bf16.gmra.mxu0 %v2001
      %v2040 = vpop.f32.mrf.mxu0
      %v2041 = vadd.f32 0.0, %v2040
      %v2042 = vpop.f32.mrf.mxu0
      %v2043 = vadd.f32 0.0, %v2042
      %2044 = vmatmul.bf16.gmra.mxu0 %v2004
      %v2045 = vpop.f32.mrf.mxu0
      %v2046 = vadd.f32 0.0, %v2045
      %v2047 = vpop.f32.mrf.mxu0
      %v2048 = vadd.f32 0.0, %v2047
      %2049 = vdwg.mxu0
      %v2050 = vadd.f32 %v1849, %v2016
      %v2051 = vadd.f32 %v1850, %v2018
      %v2052 = vadd.f32 %v1851, %v2021
      %v2053 = vadd.f32 %v1852, %v2023
      %v2054 = vadd.f32 %v1853, %v2026
      %v2055 = vadd.f32 %v1854, %v2028
      %v2056 = vadd.f32 %v1855, %v2031
      %v2057 = vadd.f32 %v1856, %v2033
      %v2058 = vadd.f32 %v1857, %v2036
      %v2059 = vadd.f32 %v1858, %v2038
      %v2060 = vadd.f32 %v1859, %v2041
      %v2061 = vadd.f32 %v1860, %v2043
      %v2062 = vadd.f32 %v1861, %v2046
      %v2063 = vadd.f32 %v1862, %v2048
      %v2064 = vld [vmem:[%s3] sm:$0x1]
      %v2066 = vperm.slane %v2064, 0
      %v2068 = vadd.f32 %v2050, %v2066
      %v2069 = vadd.f32 %v2051, %v2066
      %v2070 = vadd.f32 %v2052, %v2066
      %v2071 = vadd.f32 %v2053, %v2066
      %v2072 = vadd.f32 %v2054, %v2066
      %v2073 = vadd.f32 %v2055, %v2066
      %v2074 = vadd.f32 %v2056, %v2066
      %v2075 = vadd.f32 %v2057, %v2066
      %v2076 = vadd.f32 %v2058, %v2066
      %v2077 = vadd.f32 %v2059, %v2066
      %v2078 = vadd.f32 %v2060, %v2066
      %v2079 = vadd.f32 %v2061, %v2066
      %v2080 = vadd.f32 %v2062, %v2066
      %v2081 = vadd.f32 %v2063, %v2066
      %v2082 = vmax.f32 %v2068, 0.0
      %v2083 = vmax.f32 %v2069, 0.0
      %v2084 = vmax.f32 %v2070, 0.0
      %v2085 = vmax.f32 %v2071, 0.0
      %v2086 = vmax.f32 %v2072, 0.0
      %v2087 = vmax.f32 %v2073, 0.0
      %v2088 = vmax.f32 %v2074, 0.0
      %v2089 = vmax.f32 %v2075, 0.0
      %v2090 = vmax.f32 %v2076, 0.0
      %v2091 = vmax.f32 %v2077, 0.0
      %v2092 = vmax.f32 %v2078, 0.0
      %v2093 = vmax.f32 %v2079, 0.0
      %v2094 = vmax.f32 %v2080, 0.0
      %v2095 = vmax.f32 %v2081, 0.0
      %2110 = vrot.lane.b32.xlu0 %v2082, 96
      %v2111 = vpop.permute.xlu0 %2110
      %2112 = vrot.lane.b32.xlu0 %v2083, 96
      %v2113 = vpop.permute.xlu0 %2112
      %2114 = vrot.lane.b32.xlu0 %v2084, 96
      %v2115 = vpop.permute.xlu0 %2114
      %2116 = vrot.lane.b32.xlu0 %v2085, 96
      %v2117 = vpop.permute.xlu0 %2116
      %2118 = vrot.lane.b32.xlu0 %v2086, 96
      %v2119 = vpop.permute.xlu0 %2118
      %2120 = vrot.lane.b32.xlu0 %v2087, 96
      %v2121 = vpop.permute.xlu0 %2120
      %2122 = vrot.lane.b32.xlu0 %v2088, 96
      %v2123 = vpop.permute.xlu0 %2122
      %2124 = vrot.lane.b32.xlu0 %v2089, 96
      %v2125 = vpop.permute.xlu0 %2124
      %2126 = vrot.lane.b32.xlu0 %v2090, 96
      %v2127 = vpop.permute.xlu0 %2126
      %2128 = vrot.lane.b32.xlu0 %v2091, 96
      %v2129 = vpop.permute.xlu0 %2128
      %2130 = vrot.lane.b32.xlu0 %v2092, 96
      %v2131 = vpop.permute.xlu0 %2130
      %2132 = vrot.lane.b32.xlu0 %v2093, 96
      %v2133 = vpop.permute.xlu0 %2132
      %2134 = vrot.lane.b32.xlu0 %v2094, 96
      %v2135 = vpop.permute.xlu0 %2134
      %2136 = vrot.lane.b32.xlu0 %v2095, 96
      %v2137 = vpop.permute.xlu0 %2136
      %v2152 = vmax.f32 %v2082, %v2111
      %v2153 = vmax.f32 %v2083, %v2113
      %v2154 = vmax.f32 %v2084, %v2115
      %v2155 = vmax.f32 %v2085, %v2117
      %v2156 = vmax.f32 %v2086, %v2119
      %v2157 = vmax.f32 %v2087, %v2121
      %v2158 = vmax.f32 %v2088, %v2123
      %v2159 = vmax.f32 %v2089, %v2125
      %v2160 = vmax.f32 %v2090, %v2127
      %v2161 = vmax.f32 %v2091, %v2129
      %v2162 = vmax.f32 %v2092, %v2131
      %v2163 = vmax.f32 %v2093, %v2133
      %v2164 = vmax.f32 %v2094, %v2135
      %v2165 = vmax.f32 %v2095, %v2137
      %v2166 = vmax.f32 %v2152, %v2153
      %v2167 = vmax.f32 %v2154, %v2155
      %v2168 = vmax.f32 %v2156, %v2157
      %v2169 = vmax.f32 %v2158, %v2159
      %v2170 = vmax.f32 %v2160, %v2161
      %v2171 = vmax.f32 %v2162, %v2163
      %v2172 = vmax.f32 %v2164, %v2165
      %v2173 = vpack.c.bf16 %v2166, %v2166
      %v2174 = vpack.c.bf16 %v2167, %v2167
      %v2175 = vpack.c.bf16 %v2168, %v2168
      %v2176 = vpack.c.bf16 %v2169, %v2169
      %v2177 = vpack.c.bf16 %v2170, %v2170
      %v2178 = vpack.c.bf16 %v2171, %v2171
      %v2179 = vpack.c.bf16 %v2172, %v2172
      %vm2180 = vcmask 257024
      %vm2181 = vsmask.f32 3328
      %vm2182 = vmand %vm2180, %vm2181
      %v2183 = vld [vmem:[%s217] sm:$0xf]
      %v2184 = vsel %vm2182, %v2173, %v2183
      %2185 = vst [vmem:[%s217] sm:$0xf] %v2184
      %v2186 = vld [vmem:[%s217 + $0x4] sm:$0xf]
      %v2187 = vsel %vm2182, %v2174, %v2186
      %2188 = vst [vmem:[%s217 + $0x4] sm:$0xf] %v2187
      %v2189 = vld [vmem:[%s217 + $0x8] sm:$0xf]
      %v2190 = vsel %vm2182, %v2175, %v2189
      %2191 = vst [vmem:[%s217 + $0x8] sm:$0xf] %v2190
      %v2192 = vld [vmem:[%s217 + $0xc] sm:$0xf]
      %v2193 = vsel %vm2182, %v2176, %v2192
      %2194 = vst [vmem:[%s217 + $0xc] sm:$0xf] %v2193
      %v2195 = vld [vmem:[%s217 + $0x10] sm:$0xf]
      %v2196 = vsel %vm2182, %v2177, %v2195
      %2197 = vst [vmem:[%s217 + $0x10] sm:$0xf] %v2196
      %v2198 = vld [vmem:[%s217 + $0x14] sm:$0xf]
      %v2199 = vsel %vm2182, %v2178, %v2198
      %2200 = vst [vmem:[%s217 + $0x14] sm:$0xf] %v2199
      %v2201 = vld [vmem:[%s217 + $0x18] sm:$0xf]
      %v2202 = vsel %vm2182, %v2179, %v2201
      %2203 = vst [vmem:[%s217 + $0x18] sm:$0xf] %v2202
      %p2204 = scmp.lt.s32.totalorder %s15, 1
      %s2205 = scalar_select %p2204, %s15, 1
      %s2206 = smul.addr %s2205, 7
      %s2207 = smul.addr %s2206, 4
      %s2208 = scalar_lea.vmem %s4, %s2207
      // Predicated region
      $region37: #{net_forward.5} parent=35 // pred_check
        %p2209 = pneg %p127
      $region38: #{net_forward.5} parent=35 // pred_check_branch
        %2211 = sbr.rel (%p2209) target = $region40
      $region39: #{net_forward.5} parent=35 // pred_region
        _
      $region40: #{net_forward.5} parent=35 // pred_fallthru
        _
    $region36: #{net_forward.5} parent=5 // pred_fallthru
      _
    %p2212 = scmp.le.s32.totalorder 2, %s10
    // Predicated region
    $region41: #{net_forward.5} parent=5 // pred_check
      %p2213 = pneg %p2212
    $region42: #{net_forward.5} parent=5 // pred_check_branch
      %2215 = sbr.rel (%p2213) target = $region44
    $region43: #{net_forward.5} parent=5 // pred_region
      %s2216 = ssub.s32 %s10, 2
      // Predicated region
      $region45: #{net_forward.5} parent=43 // pred_check
        %p2217 = pneg %p133
      $region46: #{net_forward.5} parent=43 // pred_check_branch
        %2219 = sbr.rel (%p2217) target = $region48
      $region47: #{net_forward.5} parent=43 // pred_region
        %p2220 = scmp.lt.s32.totalorder %s16, 1
        %s2221 = scalar_select %p2220, %s16, 1
        %s2222 = smul.addr %s2221, 7
        %s2223 = smul.addr %s2222, 4
        %s2224 = scalar_lea.vmem %s4, %s2223
      $region48: #{net_forward.5} parent=43 // pred_fallthru
        _
    $region44: #{net_forward.5} parent=5 // pred_fallthru
      _
  $region6: #{net_forward.5} parent=0 // loop_footer
    %s14 = sadd.s32 1, %s10
  $region7: #{net_forward.5} parent=0 // loop_footer_branch
    %9 = sbr.rel target = $region3
  $region8: #{net_forward.5} parent=0 // loop_exit
    _

// kernel: net_forward.4
$region0: #{net_forward.4}
  #allocation0 [shape = 'u32[]', space=smem, size = 0x4, offset = 0x4, fixed_abs, tag = 'smem constant byte address 0x4 - core index']
  #allocation1 [shape = 'u32[72,128]{1,0:T(1,128)}', space=vmem, size = 0x9000, scoped, tag = 'internal scratch']
  %s0 = inlined_call_operand.vmem [shape: f32[2,496,1], index: 0, kind: input, shape index: {}]
  %s1 = inlined_call_operand.vmem [shape: f32[2,496,1], index: 1, kind: input, shape index: {}]
  %s2 = inlined_call_operand.vmem [shape: f32[12,1,32], index: 2, kind: input, shape index: {}]
  %s3 = inlined_call_operand.vmem [shape: f32[1,32], index: 3, kind: input, shape index: {}]
  %s4 = inlined_call_operand.vmem [shape: bf16[2,14,14,16], index: 4, kind: output, shape index: {}]
  %s5 = sld [smem:[#allocation0]]
  $region49: #{net_forward.4} parent=0
    _
  %s7 = ssub.s32 1, %s5
  %s8 = scalar_select 0, %s7, %s5
  loop: start=0, step=1, limit=4
  $region2: #{net_forward.4} parent=0 // loop_pre_header
    _
  $region3: #{net_forward.4} parent=0 // loop_header
    %s10 = sphi 0, %s14
    %p11 = scmp.ge.s32.totalorder %s10, 4
    %s20 = sphi 0, %s22
    %s23 = sphi 0, %s20
    %s24 = sphi 0, %s23
    %s40 = sphi 0, %s24
    %s46 = sphi 0, %s48
    %s49 = sphi 0, %s46
    %s50 = sphi 0, %s49
    %s66 = sphi 0, %s50
    %s70 = sphi 0, %s70
    %s72 = sphi 0, %s70
    %s73 = sphi 0, %s72
    %s87 = sphi 0, %s73
    %s91 = sphi 0, %s91
    %s93 = sphi 0, %s91
    %s94 = sphi 0, %s93
    %s108 = sphi 0, %s94
    %s114 = sphi 0, %s116
    %s117 = sphi 0, %s114
    %s118 = sphi 0, %s117
    %s134 = sphi 0, %s118
  $region4: #{net_forward.4} parent=0 // loop_header_branch
    %13 = sbr.rel (%p11) target = $region8
  $region5: #{net_forward.4} parent=0 // loop_body
    %s15 = ssub.s32 %s10, 1
    %s16 = ssub.s32 %s10, 2
    %s17 = sadd.s32 %s10, 1
    %s18 = ssub.s32 %s10, %s17
    %p19 = scmp.eq.s32.totalorder %s18, 0
    %s21 = sadd.s32 %s20, 1
    %s22 = scalar_select %p19, %s20, %s21
    %p25 = pneg %p19
    %p26 = scmp.eq.s32.totalorder %s10, 1
    %p27 = por %p25, %p26
    %p28 = scmp.ne.s32.totalorder %s20, %s23
    %p29 = scmp.eq.s32.totalorder %s10, 0
    %p30 = por %p28, %p29
    %p31 = scmp.ne.s32.totalorder %s20, %s23
    %p32 = scmp.eq.s32.totalorder %s15, 1
    %p33 = por %p31, %p32
    %p34 = scmp.ne.s32.totalorder %s23, %s24
    %p35 = scmp.eq.s32.totalorder %s15, 0
    %p36 = por %p34, %p35
    %p37 = scmp.ne.s32.totalorder %s23, %s24
    %p38 = scmp.eq.s32.totalorder %s16, 1
    %p39 = por %p37, %p38
    %p41 = scmp.ne.s32.totalorder %s24, %s40
    %p42 = scmp.eq.s32.totalorder %s16, 0
    %p43 = por %p41, %p42
    %s44 = ssub.s32 %s10, %s17
    %p45 = scmp.eq.s32.totalorder %s44, 0
    %s47 = sadd.s32 %s46, 1
    %s48 = scalar_select %p45, %s46, %s47
    %p51 = pneg %p45
    %p52 = scmp.eq.s32.totalorder %s10, 1
    %p53 = por %p51, %p52
    %p54 = scmp.ne.s32.totalorder %s46, %s49
    %p55 = scmp.eq.s32.totalorder %s10, 0
    %p56 = por %p54, %p55
    %p57 = scmp.ne.s32.totalorder %s46, %s49
    %p58 = scmp.eq.s32.totalorder %s15, 1
    %p59 = por %p57, %p58
    %p60 = scmp.ne.s32.totalorder %s49, %s50
    %p61 = scmp.eq.s32.totalorder %s15, 0
    %p62 = por %p60, %p61
    %p63 = scmp.ne.s32.totalorder %s49, %s50
    %p64 = scmp.eq.s32.totalorder %s16, 1
    %p65 = por %p63, %p64
    %p67 = scmp.ne.s32.totalorder %s50, %s66
    %p68 = scmp.eq.s32.totalorder %s16, 0
    %p69 = por %p67, %p68
    %s71 = sadd.s32 %s70, 1
    %p74 = scmp.eq.s32.totalorder %s10, 1
    %p75 = scmp.ne.s32.totalorder %s70, %s72
    %p76 = scmp.eq.s32.totalorder %s10, 0
    %p77 = por %p75, %p76
    %p78 = scmp.ne.s32.totalorder %s70, %s72
    %p79 = scmp.eq.s32.totalorder %s15, 1
    %p80 = por %p78, %p79
    %p81 = scmp.ne.s32.totalorder %s72, %s73
    %p82 = scmp.eq.s32.totalorder %s15, 0
    %p83 = por %p81, %p82
    %p84 = scmp.ne.s32.totalorder %s72, %s73
    %p85 = scmp.eq.s32.totalorder %s16, 1
    %p86 = por %p84, %p85
    %p88 = scmp.ne.s32.totalorder %s73, %s87
    %p89 = scmp.eq.s32.totalorder %s16, 0
    %p90 = por %p88, %p89
    %s92 = sadd.s32 %s91, 1
    %p95 = scmp.eq.s32.totalorder %s10, 1
    %p96 = scmp.ne.s32.totalorder %s91, %s93
    %p97 = scmp.eq.s32.totalorder %s10, 0
    %p98 = por %p96, %p97
    %p99 = scmp.ne.s32.totalorder %s91, %s93
    %p100 = scmp.eq.s32.totalorder %s15, 1
    %p101 = por %p99, %p100
    %p102 = scmp.ne.s32.totalorder %s93, %s94
    %p103 = scmp.eq.s32.totalorder %s15, 0
    %p104 = por %p102, %p103
    %p105 = scmp.ne.s32.totalorder %s93, %s94
    %p106 = scmp.eq.s32.totalorder %s16, 1
    %p107 = por %p105, %p106
    %p109 = scmp.ne.s32.totalorder %s94, %s108
    %p110 = scmp.eq.s32.totalorder %s16, 0
    %p111 = por %p109, %p110
    %s112 = ssub.s32 %s10, %s17
    %p113 = scmp.eq.s32.totalorder %s112, 0
    %s115 = sadd.s32 %s114, 1
    %s116 = scalar_select %p113, %s114, %s115
    %p119 = pneg %p113
    %p120 = scmp.eq.s32.totalorder %s10, 1
    %p121 = por %p119, %p120
    %p122 = scmp.ne.s32.totalorder %s114, %s117
    %p123 = scmp.eq.s32.totalorder %s10, 0
    %p124 = por %p122, %p123
    %p125 = scmp.ne.s32.totalorder %s114, %s117
    %p126 = scmp.eq.s32.totalorder %s15, 1
    %p127 = por %p125, %p126
    %p128 = scmp.ne.s32.totalorder %s117, %s118
    %p129 = scmp.eq.s32.totalorder %s15, 0
    %p130 = por %p128, %p129
    %p131 = scmp.ne.s32.totalorder %s117, %s118
    %p132 = scmp.eq.s32.totalorder %s16, 1
    %p133 = por %p131, %p132
    %p135 = scmp.ne.s32.totalorder %s118, %s134
    %p136 = scmp.eq.s32.totalorder %s16, 0
    %p137 = por %p135, %p136
    %p138 = scmp.le.s32.totalorder 1, %s10
    %p139 = scmp.lt.s32.totalorder %s10, 3
    %p140 = pnand %p138, %p139
    %p141 = pneg %p140
    // Predicated region
    $region9: #{net_forward.4} parent=5 // pred_check
      _
    $region10: #{net_forward.4} parent=5 // pred_check_branch
      %143 = sbr.rel (%p140) target = $region12
    $region11: #{net_forward.4} parent=5 // pred_region
      %s144 = ssub.s32 %s10, 1
      // Predicated region
      $region13: #{net_forward.4} parent=11 // pred_check
        %p145 = pneg %p83
      $region14: #{net_forward.4} parent=11 // pred_check_branch
        %147 = sbr.rel (%p145) target = $region16
      $region15: #{net_forward.4} parent=11 // pred_region
        _
      $region16: #{net_forward.4} parent=11 // pred_fallthru
        _
      // Predicated region
      $region17: #{net_forward.4} parent=11 // pred_check
        %p148 = pneg %p104
      $region18: #{net_forward.4} parent=11 // pred_check_branch
        %150 = sbr.rel (%p148) target = $region20
      $region19: #{net_forward.4} parent=11 // pred_region
        _
      $region20: #{net_forward.4} parent=11 // pred_fallthru
        _
    $region12: #{net_forward.4} parent=5 // pred_fallthru
      _
    %p151 = scmp.lt.s32.totalorder %s10, 2
    // Predicated region
    $region21: #{net_forward.4} parent=5 // pred_check
      %p152 = pneg %p151
    $region22: #{net_forward.4} parent=5 // pred_check_branch
      %154 = sbr.rel (%p152) target = $region24
    $region23: #{net_forward.4} parent=5 // pred_region
      // Predicated region
      $region25: #{net_forward.4} parent=23 // pred_check
        %p155 = pneg %p30
      $region26: #{net_forward.4} parent=23 // pred_check_branch
        %157 = sbr.rel (%p155) target = $region28
      $region27: #{net_forward.4} parent=23 // pred_region
        %p158 = scmp.lt.s32.totalorder %s10, 1
        %s159 = scalar_select %p158, %s10, 1
        %s160 = smul.addr %s159, 62
        %s161 = smul.addr %s160, 8
        %s162 = scalar_lea.vmem %s0, %s161
      $region28: #{net_forward.4} parent=23 // pred_fallthru
        _
      // Predicated region
      $region29: #{net_forward.4} parent=23 // pred_check
        %p163 = pneg %p56
      $region30: #{net_forward.4} parent=23 // pred_check_branch
        %165 = sbr.rel (%p163) target = $region32
      $region31: #{net_forward.4} parent=23 // pred_region
        %p166 = scmp.lt.s32.totalorder %s10, 1
        %s167 = scalar_select %p166, %s10, 1
        %s168 = smul.addr %s167, 62
        %s169 = smul.addr %s168, 8
        %s170 = scalar_lea.vmem %s1, %s169
      $region32: #{net_forward.4} parent=23 // pred_fallthru
        _
    $region24: #{net_forward.4} parent=5 // pred_fallthru
      _
    %p171 = scmp.le.s32.totalorder 1, %s10
    %p172 = scmp.lt.s32.totalorder %s10, 3
    %p173 = pnand %p171, %p172
    %p174 = pneg %p173
    // Predicated region
    $region33: #{net_forward.4} parent=5 // pred_check
      _
    $region34: #{net_forward.4} parent=5 // pred_check_branch
      %176 = sbr.rel (%p173) target = $region36
    $region35: #{net_forward.4} parent=5 // pred_region
      %s177 = ssub.s32 %s10, 1
      %p178 = scmp.lt.s32.totalorder %s15, 1
      %s179 = scalar_select %p178, %s15, 1
      %s180 = smul.addr %s179, 62
      %s181 = smul.addr %s180, 8
      %s182 = scalar_lea.vmem %s0, %s181
      %p183 = pneg %p36
      %p184 = pneg %p33
      %p185 = scmp.lt.s32.totalorder %s15, 1
      %s186 = scalar_select %p185, %s15, 1
      %s187 = smul.addr %s186, 62
      %s188 = smul.addr %s187, 8
      %s189 = scalar_lea.vmem %s1, %s188
      %p190 = pneg %p62
      %p191 = pneg %p59
      %p192 = pneg %p83
      %p193 = pneg %p80
      %p194 = pneg %p104
      %p195 = pneg %p101
      %p196 = pneg %p130
      %p197 = pneg %p127
      %p198 = scmp.lt.s32.totalorder %s15, 1
      %s199 = scalar_select %p198, %s15, 1
      %s200 = smul.addr %s199, 28
      %s201 = smul.addr %s200, 4
      %s202 = scalar_lea.vmem %s4, %s201
      %p203 = scmp.lt.s32.totalorder %s15, 1
      %s204 = scalar_select %p203, %s15, 1
      %s205 = smul.addr %s204, 62
      %s206 = smul.addr %s205, 8
      %s207 = scalar_lea.vmem %s0, %s206
      %p208 = scmp.lt.s32.totalorder %s15, 1
      %s209 = scalar_select %p208, %s15, 1
      %s210 = smul.addr %s209, 62
      %s211 = smul.addr %s210, 8
      %s212 = scalar_lea.vmem %s1, %s211
      %p213 = scmp.lt.s32.totalorder %s15, 1
      %s214 = scalar_select %p213, %s15, 1
      %s215 = smul.addr %s214, 28
      %s216 = smul.addr %s215, 4
      %s217 = scalar_lea.vmem %s4, %s216
      %v218 = vld [vmem:[%s207] sm:$0xff]
      %v219 = vld [vmem:[%s207 + $0x8] sm:$0xff]
      %v220 = vld [vmem:[%s207 + $0x10] sm:$0xff]
      %v221 = vld [vmem:[%s207 + $0x18] sm:$0xff]
      %v222 = vld [vmem:[%s207 + $0x20] sm:$0xff]
      %v223 = vld [vmem:[%s207 + $0x28] sm:$0xff]
      %v224 = vld [vmem:[%s207 + $0x30] sm:$0xff]
      %v225 = vld [vmem:[%s207 + $0x38] sm:$0xff]
      %v226 = vld [vmem:[%s207 + $0x40] sm:$0xff]
      %v227 = vld [vmem:[%s207 + $0x48] sm:$0xff]
      %v228 = vld [vmem:[%s207 + $0x50] sm:$0xff]
      %v229 = vld [vmem:[%s207 + $0x58] sm:$0xff]
      %v230 = vld [vmem:[%s207 + $0x60] sm:$0xff]
      %v231 = vld [vmem:[%s207 + $0x68] sm:$0xff]
      %v232 = vld [vmem:[%s207 + $0x70] sm:$0xff]
      %v233 = vld [vmem:[%s207 + $0x78] sm:$0xff]
      %v234 = vld [vmem:[%s207 + $0x80] sm:$0xff]
      %v235 = vld [vmem:[%s207 + $0x88] sm:$0xff]
      %v236 = vld [vmem:[%s207 + $0x90] sm:$0xff]
      %v237 = vld [vmem:[%s207 + $0x98] sm:$0xff]
      %v238 = vld [vmem:[%s207 + $0xa0] sm:$0xff]
      %v239 = vld [vmem:[%s207 + $0xa8] sm:$0xff]
      %v240 = vld [vmem:[%s207 + $0xb0] sm:$0xff]
      %v241 = vld [vmem:[%s207 + $0xb8] sm:$0xff]
      %v242 = vld [vmem:[%s207 + $0xc0] sm:$0xff]
      %v243 = vld [vmem:[%s207 + $0xc8] sm:$0xff]
      %v244 = vld [vmem:[%s207 + $0xd0] sm:$0xff]
      %v245 = vld [vmem:[%s207 + $0xd8] sm:$0xff]
      %v246 = vld [vmem:[%s207 + $0xe0] sm:$0xff]
      %v247 = vld [vmem:[%s207 + $0xe8] sm:$0xff]
      %v248 = vld [vmem:[%s207 + $0xf0] sm:$0xff]
      %v249 = vld [vmem:[%s207 + $0xf8] sm:$0xff]
      %v250 = vld [vmem:[%s207 + $0x100] sm:$0xff]
      %v251 = vld [vmem:[%s207 + $0x108] sm:$0xff]
      %v252 = vld [vmem:[%s207 + $0x110] sm:$0xff]
      %v253 = vld [vmem:[%s207 + $0x118] sm:$0xff]
      %v254 = vld [vmem:[%s207 + $0x120] sm:$0xff]
      %v255 = vld [vmem:[%s207 + $0x128] sm:$0xff]
      %v256 = vld [vmem:[%s207 + $0x130] sm:$0xff]
      %v257 = vld [vmem:[%s207 + $0x138] sm:$0xff]
      %v258 = vld [vmem:[%s207 + $0x140] sm:$0xff]
      %v259 = vld [vmem:[%s207 + $0x148] sm:$0xff]
      %v260 = vld [vmem:[%s207 + $0x150] sm:$0xff]
      %v261 = vld [vmem:[%s207 + $0x158] sm:$0xff]
      %v262 = vld [vmem:[%s207 + $0x160] sm:$0xff]
      %v263 = vld [vmem:[%s207 + $0x168] sm:$0xff]
      %v264 = vld [vmem:[%s207 + $0x170] sm:$0xff]
      %v265 = vld [vmem:[%s207 + $0x178] sm:$0xff]
      %v266 = vld [vmem:[%s207 + $0x180] sm:$0xff]
      %v267 = vld [vmem:[%s207 + $0x188] sm:$0xff]
      %v268 = vld [vmem:[%s207 + $0x190] sm:$0xff]
      %v269 = vld [vmem:[%s207 + $0x198] sm:$0xff]
      %v270 = vld [vmem:[%s207 + $0x1a0] sm:$0xff]
      %v271 = vld [vmem:[%s207 + $0x1a8] sm:$0xff]
      %v272 = vld [vmem:[%s207 + $0x1b0] sm:$0xff]
      %v273 = vld [vmem:[%s207 + $0x1b8] sm:$0xff]
      %v274 = vld [vmem:[%s2] sm:$0x1]
      %276 = vset.pattern.permute.xlu0 0
      %277 = vperm.xlu0 %276, %v218
      %v278 = vpop.permute.xlu0 %277
      %281 = vset.pattern.permute.xlu0 0
      %282 = vperm.xlu0 %281, %v219
      %v283 = vpop.permute.xlu0 %282
      %286 = vset.pattern.permute.xlu0 0
      %287 = vperm.xlu0 %286, %v220
      %v288 = vpop.permute.xlu0 %287
      %291 = vset.pattern.permute.xlu0 0
      %292 = vperm.xlu0 %291, %v221
      %v293 = vpop.permute.xlu0 %292
      %296 = vset.pattern.permute.xlu0 0
      %297 = vperm.xlu0 %296, %v222
      %v298 = vpop.permute.xlu0 %297
      %301 = vset.pattern.permute.xlu0 0
      %302 = vperm.xlu0 %301, %v223
      %v303 = vpop.permute.xlu0 %302
      %306 = vset.pattern.permute.xlu0 0
      %307 = vperm.xlu0 %306, %v224
      %v308 = vpop.permute.xlu0 %307
      %311 = vset.pattern.permute.xlu0 0
      %312 = vperm.xlu0 %311, %v225
      %v313 = vpop.permute.xlu0 %312
      %316 = vset.pattern.permute.xlu0 0
      %317 = vperm.xlu0 %316, %v226
      %v318 = vpop.permute.xlu0 %317
      %321 = vset.pattern.permute.xlu0 0
      %322 = vperm.xlu0 %321, %v227
      %v323 = vpop.permute.xlu0 %322
      %326 = vset.pattern.permute.xlu0 0
      %327 = vperm.xlu0 %326, %v228
      %v328 = vpop.permute.xlu0 %327
      %331 = vset.pattern.permute.xlu0 0
      %332 = vperm.xlu0 %331, %v229
      %v333 = vpop.permute.xlu0 %332
      %336 = vset.pattern.permute.xlu0 0
      %337 = vperm.xlu0 %336, %v230
      %v338 = vpop.permute.xlu0 %337
      %341 = vset.pattern.permute.xlu0 0
      %342 = vperm.xlu0 %341, %v231
      %v343 = vpop.permute.xlu0 %342
      %346 = vset.pattern.permute.xlu0 0
      %347 = vperm.xlu0 %346, %v232
      %v348 = vpop.permute.xlu0 %347
      %351 = vset.pattern.permute.xlu0 0
      %352 = vperm.xlu0 %351, %v233
      %v353 = vpop.permute.xlu0 %352
      %356 = vset.pattern.permute.xlu0 0
      %357 = vperm.xlu0 %356, %v234
      %v358 = vpop.permute.xlu0 %357
      %361 = vset.pattern.permute.xlu0 0
      %362 = vperm.xlu0 %361, %v235
      %v363 = vpop.permute.xlu0 %362
      %366 = vset.pattern.permute.xlu0 0
      %367 = vperm.xlu0 %366, %v236
      %v368 = vpop.permute.xlu0 %367
      %371 = vset.pattern.permute.xlu0 0
      %372 = vperm.xlu0 %371, %v237
      %v373 = vpop.permute.xlu0 %372
      %376 = vset.pattern.permute.xlu0 0
      %377 = vperm.xlu0 %376, %v238
      %v378 = vpop.permute.xlu0 %377
      %381 = vset.pattern.permute.xlu0 0
      %382 = vperm.xlu0 %381, %v239
      %v383 = vpop.permute.xlu0 %382
      %386 = vset.pattern.permute.xlu0 0
      %387 = vperm.xlu0 %386, %v240
      %v388 = vpop.permute.xlu0 %387
      %391 = vset.pattern.permute.xlu0 0
      %392 = vperm.xlu0 %391, %v241
      %v393 = vpop.permute.xlu0 %392
      %396 = vset.pattern.permute.xlu0 0
      %397 = vperm.xlu0 %396, %v242
      %v398 = vpop.permute.xlu0 %397
      %401 = vset.pattern.permute.xlu0 0
      %402 = vperm.xlu0 %401, %v243
      %v403 = vpop.permute.xlu0 %402
      %406 = vset.pattern.permute.xlu0 0
      %407 = vperm.xlu0 %406, %v244
      %v408 = vpop.permute.xlu0 %407
      %411 = vset.pattern.permute.xlu0 0
      %412 = vperm.xlu0 %411, %v245
      %v413 = vpop.permute.xlu0 %412
      %416 = vset.pattern.permute.xlu0 0
      %417 = vperm.xlu0 %416, %v246
      %v418 = vpop.permute.xlu0 %417
      %421 = vset.pattern.permute.xlu0 0
      %422 = vperm.xlu0 %421, %v247
      %v423 = vpop.permute.xlu0 %422
      %426 = vset.pattern.permute.xlu0 0
      %427 = vperm.xlu0 %426, %v248
      %v428 = vpop.permute.xlu0 %427
      %431 = vset.pattern.permute.xlu0 0
      %432 = vperm.xlu0 %431, %v249
      %v433 = vpop.permute.xlu0 %432
      %436 = vset.pattern.permute.xlu0 0
      %437 = vperm.xlu0 %436, %v250
      %v438 = vpop.permute.xlu0 %437
      %441 = vset.pattern.permute.xlu0 0
      %442 = vperm.xlu0 %441, %v251
      %v443 = vpop.permute.xlu0 %442
      %446 = vset.pattern.permute.xlu0 0
      %447 = vperm.xlu0 %446, %v252
      %v448 = vpop.permute.xlu0 %447
      %451 = vset.pattern.permute.xlu0 0
      %452 = vperm.xlu0 %451, %v253
      %v453 = vpop.permute.xlu0 %452
      %456 = vset.pattern.permute.xlu0 0
      %457 = vperm.xlu0 %456, %v254
      %v458 = vpop.permute.xlu0 %457
      %461 = vset.pattern.permute.xlu0 0
      %462 = vperm.xlu0 %461, %v255
      %v463 = vpop.permute.xlu0 %462
      %466 = vset.pattern.permute.xlu0 0
      %467 = vperm.xlu0 %466, %v256
      %v468 = vpop.permute.xlu0 %467
      %471 = vset.pattern.permute.xlu0 0
      %472 = vperm.xlu0 %471, %v257
      %v473 = vpop.permute.xlu0 %472
      %476 = vset.pattern.permute.xlu0 0
      %477 = vperm.xlu0 %476, %v258
      %v478 = vpop.permute.xlu0 %477
      %481 = vset.pattern.permute.xlu0 0
      %482 = vperm.xlu0 %481, %v259
      %v483 = vpop.permute.xlu0 %482
      %486 = vset.pattern.permute.xlu0 0
      %487 = vperm.xlu0 %486, %v260
      %v488 = vpop.permute.xlu0 %487
      %491 = vset.pattern.permute.xlu0 0
      %492 = vperm.xlu0 %491, %v261
      %v493 = vpop.permute.xlu0 %492
      %496 = vset.pattern.permute.xlu0 0
      %497 = vperm.xlu0 %496, %v262
      %v498 = vpop.permute.xlu0 %497
      %501 = vset.pattern.permute.xlu0 0
      %502 = vperm.xlu0 %501, %v263
      %v503 = vpop.permute.xlu0 %502
      %506 = vset.pattern.permute.xlu0 0
      %507 = vperm.xlu0 %506, %v264
      %v508 = vpop.permute.xlu0 %507
      %511 = vset.pattern.permute.xlu0 0
      %512 = vperm.xlu0 %511, %v265
      %v513 = vpop.permute.xlu0 %512
      %516 = vset.pattern.permute.xlu0 0
      %517 = vperm.xlu0 %516, %v266
      %v518 = vpop.permute.xlu0 %517
      %521 = vset.pattern.permute.xlu0 0
      %522 = vperm.xlu0 %521, %v267
      %v523 = vpop.permute.xlu0 %522
      %526 = vset.pattern.permute.xlu0 0
      %527 = vperm.xlu0 %526, %v268
      %v528 = vpop.permute.xlu0 %527
      %531 = vset.pattern.permute.xlu0 0
      %532 = vperm.xlu0 %531, %v269
      %v533 = vpop.permute.xlu0 %532
      %536 = vset.pattern.permute.xlu0 0
      %537 = vperm.xlu0 %536, %v270
      %v538 = vpop.permute.xlu0 %537
      %541 = vset.pattern.permute.xlu0 0
      %542 = vperm.xlu0 %541, %v271
      %v543 = vpop.permute.xlu0 %542
      %546 = vset.pattern.permute.xlu0 0
      %547 = vperm.xlu0 %546, %v272
      %v548 = vpop.permute.xlu0 %547
      %551 = vset.pattern.permute.xlu0 0
      %552 = vperm.xlu0 %551, %v273
      %v553 = vpop.permute.xlu0 %552
      %v556 = vperm.slane %v274, 0
      %v558 = vmul.f32 %v278, %v556
      %v559 = vmul.f32 %v283, %v556
      %v560 = vmul.f32 %v288, %v556
      %v561 = vmul.f32 %v293, %v556
      %v562 = vmul.f32 %v298, %v556
      %v563 = vmul.f32 %v303, %v556
      %v564 = vmul.f32 %v308, %v556
      %v565 = vmul.f32 %v313, %v556
      %v566 = vmul.f32 %v318, %v556
      %v567 = vmul.f32 %v323, %v556
      %v568 = vmul.f32 %v328, %v556
      %v569 = vmul.f32 %v333, %v556
      %v570 = vmul.f32 %v338, %v556
      %v571 = vmul.f32 %v343, %v556
      %v572 = vmul.f32 %v348, %v556
      %v573 = vmul.f32 %v353, %v556
      %v574 = vmul.f32 %v358, %v556
      %v575 = vmul.f32 %v363, %v556
      %v576 = vmul.f32 %v368, %v556
      %v577 = vmul.f32 %v373, %v556
      %v578 = vmul.f32 %v378, %v556
      %v579 = vmul.f32 %v383, %v556
      %v580 = vmul.f32 %v388, %v556
      %v581 = vmul.f32 %v393, %v556
      %v582 = vmul.f32 %v398, %v556
      %v583 = vmul.f32 %v403, %v556
      %v584 = vmul.f32 %v408, %v556
      %v585 = vmul.f32 %v413, %v556
      %v586 = vmul.f32 %v418, %v556
      %v587 = vmul.f32 %v423, %v556
      %v588 = vmul.f32 %v428, %v556
      %v589 = vmul.f32 %v433, %v556
      %v590 = vmul.f32 %v438, %v556
      %v591 = vmul.f32 %v443, %v556
      %v592 = vmul.f32 %v448, %v556
      %v593 = vmul.f32 %v453, %v556
      %v594 = vmul.f32 %v458, %v556
      %v595 = vmul.f32 %v463, %v556
      %v596 = vmul.f32 %v468, %v556
      %v597 = vmul.f32 %v473, %v556
      %v598 = vmul.f32 %v478, %v556
      %v599 = vmul.f32 %v483, %v556
      %v600 = vmul.f32 %v488, %v556
      %v601 = vmul.f32 %v493, %v556
      %v602 = vmul.f32 %v498, %v556
      %v603 = vmul.f32 %v503, %v556
      %v604 = vmul.f32 %v508, %v556
      %v605 = vmul.f32 %v513, %v556
      %v606 = vmul.f32 %v518, %v556
      %v607 = vmul.f32 %v523, %v556
      %v608 = vmul.f32 %v528, %v556
      %v609 = vmul.f32 %v533, %v556
      %v610 = vmul.f32 %v538, %v556
      %v611 = vmul.f32 %v543, %v556
      %v612 = vmul.f32 %v548, %v556
      %v613 = vmul.f32 %v553, %v556
      %v614 = vadd.f32 %v558, 0.0
      %v615 = vadd.f32 %v559, 0.0
      %v616 = vadd.f32 %v560, 0.0
      %v617 = vadd.f32 %v561, 0.0
      %v618 = vadd.f32 %v562, 0.0
      %v619 = vadd.f32 %v563, 0.0
      %v620 = vadd.f32 %v564, 0.0
      %v621 = vadd.f32 %v565, 0.0
      %v622 = vadd.f32 %v566, 0.0
      %v623 = vadd.f32 %v567, 0.0
      %v624 = vadd.f32 %v568, 0.0
      %v625 = vadd.f32 %v569, 0.0
      %v626 = vadd.f32 %v570, 0.0
      %v627 = vadd.f32 %v571, 0.0
      %v628 = vadd.f32 %v572, 0.0
      %v629 = vadd.f32 %v573, 0.0
      %v630 = vadd.f32 %v574, 0.0
      %v631 = vadd.f32 %v575, 0.0
      %v632 = vadd.f32 %v576, 0.0
      %v633 = vadd.f32 %v577, 0.0
      %v634 = vadd.f32 %v578, 0.0
      %v635 = vadd.f32 %v579, 0.0
      %v636 = vadd.f32 %v580, 0.0
      %v637 = vadd.f32 %v581, 0.0
      %v638 = vadd.f32 %v582, 0.0
      %v639 = vadd.f32 %v583, 0.0
      %v640 = vadd.f32 %v584, 0.0
      %v641 = vadd.f32 %v585, 0.0
      %v642 = vadd.f32 %v586, 0.0
      %v643 = vadd.f32 %v587, 0.0
      %v644 = vadd.f32 %v588, 0.0
      %v645 = vadd.f32 %v589, 0.0
      %v646 = vadd.f32 %v590, 0.0
      %v647 = vadd.f32 %v591, 0.0
      %v648 = vadd.f32 %v592, 0.0
      %v649 = vadd.f32 %v593, 0.0
      %v650 = vadd.f32 %v594, 0.0
      %v651 = vadd.f32 %v595, 0.0
      %v652 = vadd.f32 %v596, 0.0
      %v653 = vadd.f32 %v597, 0.0
      %v654 = vadd.f32 %v598, 0.0
      %v655 = vadd.f32 %v599, 0.0
      %v656 = vadd.f32 %v600, 0.0
      %v657 = vadd.f32 %v601, 0.0
      %v658 = vadd.f32 %v602, 0.0
      %v659 = vadd.f32 %v603, 0.0
      %v660 = vadd.f32 %v604, 0.0
      %v661 = vadd.f32 %v605, 0.0
      %v662 = vadd.f32 %v606, 0.0
      %v663 = vadd.f32 %v607, 0.0
      %v664 = vadd.f32 %v608, 0.0
      %v665 = vadd.f32 %v609, 0.0
      %v666 = vadd.f32 %v610, 0.0
      %v667 = vadd.f32 %v611, 0.0
      %v668 = vadd.f32 %v612, 0.0
      %v669 = vadd.f32 %v613, 0.0
      %v670 = vld [vmem:[%s212] sm:$0xff]
      %v671 = vld [vmem:[%s212 + $0x8] sm:$0xff]
      %v672 = vld [vmem:[%s212 + $0x10] sm:$0xff]
      %v673 = vld [vmem:[%s212 + $0x18] sm:$0xff]
      %v674 = vld [vmem:[%s212 + $0x20] sm:$0xff]
      %v675 = vld [vmem:[%s212 + $0x28] sm:$0xff]
      %v676 = vld [vmem:[%s212 + $0x30] sm:$0xff]
      %v677 = vld [vmem:[%s212 + $0x38] sm:$0xff]
      %v678 = vld [vmem:[%s212 + $0x40] sm:$0xff]
      %v679 = vld [vmem:[%s212 + $0x48] sm:$0xff]
      %v680 = vld [vmem:[%s212 + $0x50] sm:$0xff]
      %v681 = vld [vmem:[%s212 + $0x58] sm:$0xff]
      %v682 = vld [vmem:[%s212 + $0x60] sm:$0xff]
      %v683 = vld [vmem:[%s212 + $0x68] sm:$0xff]
      %v684 = vld [vmem:[%s212 + $0x70] sm:$0xff]
      %v685 = vld [vmem:[%s212 + $0x78] sm:$0xff]
      %v686 = vld [vmem:[%s212 + $0x80] sm:$0xff]
      %v687 = vld [vmem:[%s212 + $0x88] sm:$0xff]
      %v688 = vld [vmem:[%s212 + $0x90] sm:$0xff]
      %v689 = vld [vmem:[%s212 + $0x98] sm:$0xff]
      %v690 = vld [vmem:[%s212 + $0xa0] sm:$0xff]
      %v691 = vld [vmem:[%s212 + $0xa8] sm:$0xff]
      %v692 = vld [vmem:[%s212 + $0xb0] sm:$0xff]
      %v693 = vld [vmem:[%s212 + $0xb8] sm:$0xff]
      %v694 = vld [vmem:[%s212 + $0xc0] sm:$0xff]
      %v695 = vld [vmem:[%s212 + $0xc8] sm:$0xff]
      %v696 = vld [vmem:[%s212 + $0xd0] sm:$0xff]
      %v697 = vld [vmem:[%s212 + $0xd8] sm:$0xff]
      %v698 = vld [vmem:[%s212 + $0xe0] sm:$0xff]
      %v699 = vld [vmem:[%s212 + $0xe8] sm:$0xff]
      %v700 = vld [vmem:[%s212 + $0xf0] sm:$0xff]
      %v701 = vld [vmem:[%s212 + $0xf8] sm:$0xff]
      %v702 = vld [vmem:[%s212 + $0x100] sm:$0xff]
      %v703 = vld [vmem:[%s212 + $0x108] sm:$0xff]
      %v704 = vld [vmem:[%s212 + $0x110] sm:$0xff]
      %v705 = vld [vmem:[%s212 + $0x118] sm:$0xff]
      %v706 = vld [vmem:[%s212 + $0x120] sm:$0xff]
      %v707 = vld [vmem:[%s212 + $0x128] sm:$0xff]
      %v708 = vld [vmem:[%s212 + $0x130] sm:$0xff]
      %v709 = vld [vmem:[%s212 + $0x138] sm:$0xff]
      %v710 = vld [vmem:[%s212 + $0x140] sm:$0xff]
      %v711 = vld [vmem:[%s212 + $0x148] sm:$0xff]
      %v712 = vld [vmem:[%s212 + $0x150] sm:$0xff]
      %v713 = vld [vmem:[%s212 + $0x158] sm:$0xff]
      %v714 = vld [vmem:[%s212 + $0x160] sm:$0xff]
      %v715 = vld [vmem:[%s212 + $0x168] sm:$0xff]
      %v716 = vld [vmem:[%s212 + $0x170] sm:$0xff]
      %v717 = vld [vmem:[%s212 + $0x178] sm:$0xff]
      %v718 = vld [vmem:[%s212 + $0x180] sm:$0xff]
      %v719 = vld [vmem:[%s212 + $0x188] sm:$0xff]
      %v720 = vld [vmem:[%s212 + $0x190] sm:$0xff]
      %v721 = vld [vmem:[%s212 + $0x198] sm:$0xff]
      %v722 = vld [vmem:[%s212 + $0x1a0] sm:$0xff]
      %v723 = vld [vmem:[%s212 + $0x1a8] sm:$0xff]
      %v724 = vld [vmem:[%s212 + $0x1b0] sm:$0xff]
      %v725 = vld [vmem:[%s212 + $0x1b8] sm:$0xff]
      %s726 = scalar_lea.vmem %s2, 1
      %v727 = vld [vmem:[%s726] sm:$0x1]
      %729 = vset.pattern.permute.xlu0 0
      %730 = vperm.xlu0 %729, %v670
      %v731 = vpop.permute.xlu0 %730
      %734 = vset.pattern.permute.xlu0 0
      %735 = vperm.xlu0 %734, %v671
      %v736 = vpop.permute.xlu0 %735
      %739 = vset.pattern.permute.xlu0 0
      %740 = vperm.xlu0 %739, %v672
      %v741 = vpop.permute.xlu0 %740
      %744 = vset.pattern.permute.xlu0 0
      %745 = vperm.xlu0 %744, %v673
      %v746 = vpop.permute.xlu0 %745
      %749 = vset.pattern.permute.xlu0 0
      %750 = vperm.xlu0 %749, %v674
      %v751 = vpop.permute.xlu0 %750
      %754 = vset.pattern.permute.xlu0 0
      %755 = vperm.xlu0 %754, %v675
      %v756 = vpop.permute.xlu0 %755
      %759 = vset.pattern.permute.xlu0 0
      %760 = vperm.xlu0 %759, %v676
      %v761 = vpop.permute.xlu0 %760
      %764 = vset.pattern.permute.xlu0 0
      %765 = vperm.xlu0 %764, %v677
      %v766 = vpop.permute.xlu0 %765
      %769 = vset.pattern.permute.xlu0 0
      %770 = vperm.xlu0 %769, %v678
      %v771 = vpop.permute.xlu0 %770
      %774 = vset.pattern.permute.xlu0 0
      %775 = vperm.xlu0 %774, %v679
      %v776 = vpop.permute.xlu0 %775
      %779 = vset.pattern.permute.xlu0 0
      %780 = vperm.xlu0 %779, %v680
      %v781 = vpop.permute.xlu0 %780
      %784 = vset.pattern.permute.xlu0 0
      %785 = vperm.xlu0 %784, %v681
      %v786 = vpop.permute.xlu0 %785
      %789 = vset.pattern.permute.xlu0 0
      %790 = vperm.xlu0 %789, %v682
      %v791 = vpop.permute.xlu0 %790
      %794 = vset.pattern.permute.xlu0 0
      %795 = vperm.xlu0 %794, %v683
      %v796 = vpop.permute.xlu0 %795
      %799 = vset.pattern.permute.xlu0 0
      %800 = vperm.xlu0 %799, %v684
      %v801 = vpop.permute.xlu0 %800
      %804 = vset.pattern.permute.xlu0 0
      %805 = vperm.xlu0 %804, %v685
      %v806 = vpop.permute.xlu0 %805
      %809 = vset.pattern.permute.xlu0 0
      %810 = vperm.xlu0 %809, %v686
      %v811 = vpop.permute.xlu0 %810
      %814 = vset.pattern.permute.xlu0 0
      %815 = vperm.xlu0 %814, %v687
      %v816 = vpop.permute.xlu0 %815
      %819 = vset.pattern.permute.xlu0 0
      %820 = vperm.xlu0 %819, %v688
      %v821 = vpop.permute.xlu0 %820
      %824 = vset.pattern.permute.xlu0 0
      %825 = vperm.xlu0 %824, %v689
      %v826 = vpop.permute.xlu0 %825
      %829 = vset.pattern.permute.xlu0 0
      %830 = vperm.xlu0 %829, %v690
      %v831 = vpop.permute.xlu0 %830
      %834 = vset.pattern.permute.xlu0 0
      %835 = vperm.xlu0 %834, %v691
      %v836 = vpop.permute.xlu0 %835
      %839 = vset.pattern.permute.xlu0 0
      %840 = vperm.xlu0 %839, %v692
      %v841 = vpop.permute.xlu0 %840
      %844 = vset.pattern.permute.xlu0 0
      %845 = vperm.xlu0 %844, %v693
      %v846 = vpop.permute.xlu0 %845
      %849 = vset.pattern.permute.xlu0 0
      %850 = vperm.xlu0 %849, %v694
      %v851 = vpop.permute.xlu0 %850
      %854 = vset.pattern.permute.xlu0 0
      %855 = vperm.xlu0 %854, %v695
      %v856 = vpop.permute.xlu0 %855
      %859 = vset.pattern.permute.xlu0 0
      %860 = vperm.xlu0 %859, %v696
      %v861 = vpop.permute.xlu0 %860
      %864 = vset.pattern.permute.xlu0 0
      %865 = vperm.xlu0 %864, %v697
      %v866 = vpop.permute.xlu0 %865
      %869 = vset.pattern.permute.xlu0 0
      %870 = vperm.xlu0 %869, %v698
      %v871 = vpop.permute.xlu0 %870
      %874 = vset.pattern.permute.xlu0 0
      %875 = vperm.xlu0 %874, %v699
      %v876 = vpop.permute.xlu0 %875
      %879 = vset.pattern.permute.xlu0 0
      %880 = vperm.xlu0 %879, %v700
      %v881 = vpop.permute.xlu0 %880
      %884 = vset.pattern.permute.xlu0 0
      %885 = vperm.xlu0 %884, %v701
      %v886 = vpop.permute.xlu0 %885
      %889 = vset.pattern.permute.xlu0 0
      %890 = vperm.xlu0 %889, %v702
      %v891 = vpop.permute.xlu0 %890
      %894 = vset.pattern.permute.xlu0 0
      %895 = vperm.xlu0 %894, %v703
      %v896 = vpop.permute.xlu0 %895
      %899 = vset.pattern.permute.xlu0 0
      %900 = vperm.xlu0 %899, %v704
      %v901 = vpop.permute.xlu0 %900
      %904 = vset.pattern.permute.xlu0 0
      %905 = vperm.xlu0 %904, %v705
      %v906 = vpop.permute.xlu0 %905
      %909 = vset.pattern.permute.xlu0 0
      %910 = vperm.xlu0 %909, %v706
      %v911 = vpop.permute.xlu0 %910
      %914 = vset.pattern.permute.xlu0 0
      %915 = vperm.xlu0 %914, %v707
      %v916 = vpop.permute.xlu0 %915
      %919 = vset.pattern.permute.xlu0 0
      %920 = vperm.xlu0 %919, %v708
      %v921 = vpop.permute.xlu0 %920
      %924 = vset.pattern.permute.xlu0 0
      %925 = vperm.xlu0 %924, %v709
      %v926 = vpop.permute.xlu0 %925
      %929 = vset.pattern.permute.xlu0 0
      %930 = vperm.xlu0 %929, %v710
      %v931 = vpop.permute.xlu0 %930
      %934 = vset.pattern.permute.xlu0 0
      %935 = vperm.xlu0 %934, %v711
      %v936 = vpop.permute.xlu0 %935
      %939 = vset.pattern.permute.xlu0 0
      %940 = vperm.xlu0 %939, %v712
      %v941 = vpop.permute.xlu0 %940
      %944 = vset.pattern.permute.xlu0 0
      %945 = vperm.xlu0 %944, %v713
      %v946 = vpop.permute.xlu0 %945
      %949 = vset.pattern.permute.xlu0 0
      %950 = vperm.xlu0 %949, %v714
      %v951 = vpop.permute.xlu0 %950
      %954 = vset.pattern.permute.xlu0 0
      %955 = vperm.xlu0 %954, %v715
      %v956 = vpop.permute.xlu0 %955
      %959 = vset.pattern.permute.xlu0 0
      %960 = vperm.xlu0 %959, %v716
      %v961 = vpop.permute.xlu0 %960
      %964 = vset.pattern.permute.xlu0 0
      %965 = vperm.xlu0 %964, %v717
      %v966 = vpop.permute.xlu0 %965
      %969 = vset.pattern.permute.xlu0 0
      %970 = vperm.xlu0 %969, %v718
      %v971 = vpop.permute.xlu0 %970
      %974 = vset.pattern.permute.xlu0 0
      %975 = vperm.xlu0 %974, %v719
      %v976 = vpop.permute.xlu0 %975
      %979 = vset.pattern.permute.xlu0 0
      %980 = vperm.xlu0 %979, %v720
      %v981 = vpop.permute.xlu0 %980
      %984 = vset.pattern.permute.xlu0 0
      %985 = vperm.xlu0 %984, %v721
      %v986 = vpop.permute.xlu0 %985
      %989 = vset.pattern.permute.xlu0 0
      %990 = vperm.xlu0 %989, %v722
      %v991 = vpop.permute.xlu0 %990
      %994 = vset.pattern.permute.xlu0 0
      %995 = vperm.xlu0 %994, %v723
      %v996 = vpop.permute.xlu0 %995
      %999 = vset.pattern.permute.xlu0 0
      %1000 = vperm.xlu0 %999, %v724
      %v1001 = vpop.permute.xlu0 %1000
      %1004 = vset.pattern.permute.xlu0 0
      %1005 = vperm.xlu0 %1004, %v725
      %v1006 = vpop.permute.xlu0 %1005
      %v1009 = vperm.slane %v727, 0
      %v1011 = vmul.f32 %v731, %v1009
      %v1012 = vmul.f32 %v736, %v1009
      %v1013 = vmul.f32 %v741, %v1009
      %v1014 = vmul.f32 %v746, %v1009
      %v1015 = vmul.f32 %v751, %v1009
      %v1016 = vmul.f32 %v756, %v1009
      %v1017 = vmul.f32 %v761, %v1009
      %v1018 = vmul.f32 %v766, %v1009
      %v1019 = vmul.f32 %v771, %v1009
      %v1020 = vmul.f32 %v776, %v1009
      %v1021 = vmul.f32 %v781, %v1009
      %v1022 = vmul.f32 %v786, %v1009
      %v1023 = vmul.f32 %v791, %v1009
      %v1024 = vmul.f32 %v796, %v1009
      %v1025 = vmul.f32 %v801, %v1009
      %v1026 = vmul.f32 %v806, %v1009
      %v1027 = vmul.f32 %v811, %v1009
      %v1028 = vmul.f32 %v816, %v1009
      %v1029 = vmul.f32 %v821, %v1009
      %v1030 = vmul.f32 %v826, %v1009
      %v1031 = vmul.f32 %v831, %v1009
      %v1032 = vmul.f32 %v836, %v1009
      %v1033 = vmul.f32 %v841, %v1009
      %v1034 = vmul.f32 %v846, %v1009
      %v1035 = vmul.f32 %v851, %v1009
      %v1036 = vmul.f32 %v856, %v1009
      %v1037 = vmul.f32 %v861, %v1009
      %v1038 = vmul.f32 %v866, %v1009
      %v1039 = vmul.f32 %v871, %v1009
      %v1040 = vmul.f32 %v876, %v1009
      %v1041 = vmul.f32 %v881, %v1009
      %v1042 = vmul.f32 %v886, %v1009
      %v1043 = vmul.f32 %v891, %v1009
      %v1044 = vmul.f32 %v896, %v1009
      %v1045 = vmul.f32 %v901, %v1009
      %v1046 = vmul.f32 %v906, %v1009
      %v1047 = vmul.f32 %v911, %v1009
      %v1048 = vmul.f32 %v916, %v1009
      %v1049 = vmul.f32 %v921, %v1009
      %v1050 = vmul.f32 %v926, %v1009
      %v1051 = vmul.f32 %v931, %v1009
      %v1052 = vmul.f32 %v936, %v1009
      %v1053 = vmul.f32 %v941, %v1009
      %v1054 = vmul.f32 %v946, %v1009
      %v1055 = vmul.f32 %v951, %v1009
      %v1056 = vmul.f32 %v956, %v1009
      %v1057 = vmul.f32 %v961, %v1009
      %v1058 = vmul.f32 %v966, %v1009
      %v1059 = vmul.f32 %v971, %v1009
      %v1060 = vmul.f32 %v976, %v1009
      %v1061 = vmul.f32 %v981, %v1009
      %v1062 = vmul.f32 %v986, %v1009
      %v1063 = vmul.f32 %v991, %v1009
      %v1064 = vmul.f32 %v996, %v1009
      %v1065 = vmul.f32 %v1001, %v1009
      %v1066 = vmul.f32 %v1006, %v1009
      %v1067 = vadd.f32 %v614, %v1011
      %v1068 = vadd.f32 %v615, %v1012
      %v1069 = vadd.f32 %v616, %v1013
      %v1070 = vadd.f32 %v617, %v1014
      %v1071 = vadd.f32 %v618, %v1015
      %v1072 = vadd.f32 %v619, %v1016
      %v1073 = vadd.f32 %v620, %v1017
      %v1074 = vadd.f32 %v621, %v1018
      %v1075 = vadd.f32 %v622, %v1019
      %v1076 = vadd.f32 %v623, %v1020
      %v1077 = vadd.f32 %v624, %v1021
      %v1078 = vadd.f32 %v625, %v1022
      %v1079 = vadd.f32 %v626, %v1023
      %v1080 = vadd.f32 %v627, %v1024
      %v1081 = vadd.f32 %v628, %v1025
      %v1082 = vadd.f32 %v629, %v1026
      %v1083 = vadd.f32 %v630, %v1027
      %v1084 = vadd.f32 %v631, %v1028
      %v1085 = vadd.f32 %v632, %v1029
      %v1086 = vadd.f32 %v633, %v1030
      %v1087 = vadd.f32 %v634, %v1031
      %v1088 = vadd.f32 %v635, %v1032
      %v1089 = vadd.f32 %v636, %v1033
      %v1090 = vadd.f32 %v637, %v1034
      %v1091 = vadd.f32 %v638, %v1035
      %v1092 = vadd.f32 %v639, %v1036
      %v1093 = vadd.f32 %v640, %v1037
      %v1094 = vadd.f32 %v641, %v1038
      %v1095 = vadd.f32 %v642, %v1039
      %v1096 = vadd.f32 %v643, %v1040
      %v1097 = vadd.f32 %v644, %v1041
      %v1098 = vadd.f32 %v645, %v1042
      %v1099 = vadd.f32 %v646, %v1043
      %v1100 = vadd.f32 %v647, %v1044
      %v1101 = vadd.f32 %v648, %v1045
      %v1102 = vadd.f32 %v649, %v1046
      %v1103 = vadd.f32 %v650, %v1047
      %v1104 = vadd.f32 %v651, %v1048
      %v1105 = vadd.f32 %v652, %v1049
      %v1106 = vadd.f32 %v653, %v1050
      %v1107 = vadd.f32 %v654, %v1051
      %v1108 = vadd.f32 %v655, %v1052
      %v1109 = vadd.f32 %v656, %v1053
      %v1110 = vadd.f32 %v657, %v1054
      %v1111 = vadd.f32 %v658, %v1055
      %v1112 = vadd.f32 %v659, %v1056
      %v1113 = vadd.f32 %v660, %v1057
      %v1114 = vadd.f32 %v661, %v1058
      %v1115 = vadd.f32 %v662, %v1059
      %v1116 = vadd.f32 %v663, %v1060
      %v1117 = vadd.f32 %v664, %v1061
      %v1118 = vadd.f32 %v665, %v1062
      %v1119 = vadd.f32 %v666, %v1063
      %v1120 = vadd.f32 %v667, %v1064
      %v1121 = vadd.f32 %v668, %v1065
      %v1122 = vadd.f32 %v669, %v1066
      %v1123 = vld [vmem:[%s207 + $0x1] sm:$0xff]
      %v1124 = vld [vmem:[%s207 + $0x9] sm:$0xff]
      %v1125 = vld [vmem:[%s207 + $0x11] sm:$0xff]
      %v1126 = vld [vmem:[%s207 + $0x19] sm:$0xff]
      %v1127 = vld [vmem:[%s207 + $0x21] sm:$0xff]
      %v1128 = vld [vmem:[%s207 + $0x29] sm:$0xff]
      %v1129 = vld [vmem:[%s207 + $0x31] sm:$0xff]
      %v1130 = vld [vmem:[%s207 + $0x39] sm:$0xff]
      %v1131 = vld [vmem:[%s207 + $0x41] sm:$0xff]
      %v1132 = vld [vmem:[%s207 + $0x49] sm:$0xff]
      %v1133 = vld [vmem:[%s207 + $0x51] sm:$0xff]
      %v1134 = vld [vmem:[%s207 + $0x59] sm:$0xff]
      %v1135 = vld [vmem:[%s207 + $0x61] sm:$0xff]
      %v1136 = vld [vmem:[%s207 + $0x69] sm:$0xff]
      %v1137 = vld [vmem:[%s207 + $0x71] sm:$0xff]
      %v1138 = vld [vmem:[%s207 + $0x79] sm:$0xff]
      %v1139 = vld [vmem:[%s207 + $0x81] sm:$0xff]
      %v1140 = vld [vmem:[%s207 + $0x89] sm:$0xff]
      %v1141 = vld [vmem:[%s207 + $0x91] sm:$0xff]
      %v1142 = vld [vmem:[%s207 + $0x99] sm:$0xff]
      %v1143 = vld [vmem:[%s207 + $0xa1] sm:$0xff]
      %v1144 = vld [vmem:[%s207 + $0xa9] sm:$0xff]
      %v1145 = vld [vmem:[%s207 + $0xb1] sm:$0xff]
      %v1146 = vld [vmem:[%s207 + $0xb9] sm:$0xff]
      %v1147 = vld [vmem:[%s207 + $0xc1] sm:$0xff]
      %v1148 = vld [vmem:[%s207 + $0xc9] sm:$0xff]
      %v1149 = vld [vmem:[%s207 + $0xd1] sm:$0xff]
      %v1150 = vld [vmem:[%s207 + $0xd9] sm:$0xff]
      %v1151 = vld [vmem:[%s207 + $0xe1] sm:$0xff]
      %v1152 = vld [vmem:[%s207 + $0xe9] sm:$0xff]
      %v1153 = vld [vmem:[%s207 + $0xf1] sm:$0xff]
      %v1154 = vld [vmem:[%s207 + $0xf9] sm:$0xff]
      %v1155 = vld [vmem:[%s207 + $0x101] sm:$0xff]
      %v1156 = vld [vmem:[%s207 + $0x109] sm:$0xff]
      %v1157 = vld [vmem:[%s207 + $0x111] sm:$0xff]
      %v1158 = vld [vmem:[%s207 + $0x119] sm:$0xff]
      %v1159 = vld [vmem:[%s207 + $0x121] sm:$0xff]
      %v1160 = vld [vmem:[%s207 + $0x129] sm:$0xff]
      %v1161 = vld [vmem:[%s207 + $0x131] sm:$0xff]
      %v1162 = vld [vmem:[%s207 + $0x139] sm:$0xff]
      %v1163 = vld [vmem:[%s207 + $0x141] sm:$0xff]
      %v1164 = vld [vmem:[%s207 + $0x149] sm:$0xff]
      %v1165 = vld [vmem:[%s207 + $0x151] sm:$0xff]
      %v1166 = vld [vmem:[%s207 + $0x159] sm:$0xff]
      %v1167 = vld [vmem:[%s207 + $0x161] sm:$0xff]
      %v1168 = vld [vmem:[%s207 + $0x169] sm:$0xff]
      %v1169 = vld [vmem:[%s207 + $0x171] sm:$0xff]
      %v1170 = vld [vmem:[%s207 + $0x179] sm:$0xff]
      %v1171 = vld [vmem:[%s207 + $0x181] sm:$0xff]
      %v1172 = vld [vmem:[%s207 + $0x189] sm:$0xff]
      %v1173 = vld [vmem:[%s207 + $0x191] sm:$0xff]
      %v1174 = vld [vmem:[%s207 + $0x199] sm:$0xff]
      %v1175 = vld [vmem:[%s207 + $0x1a1] sm:$0xff]
      %v1176 = vld [vmem:[%s207 + $0x1a9] sm:$0xff]
      %v1177 = vld [vmem:[%s207 + $0x1b1] sm:$0xff]
      %v1178 = vld [vmem:[%s207 + $0x1b9] sm:$0xff]
      %s1179 = scalar_lea.vmem %s2, 2
      %v1180 = vld [vmem:[%s1179] sm:$0x1]
      %1182 = vset.pattern.permute.xlu0 0
      %1183 = vperm.xlu0 %1182, %v1123
      %v1184 = vpop.permute.xlu0 %1183
      %1187 = vset.pattern.permute.xlu0 0
      %1188 = vperm.xlu0 %1187, %v1124
      %v1189 = vpop.permute.xlu0 %1188
      %1192 = vset.pattern.permute.xlu0 0
      %1193 = vperm.xlu0 %1192, %v1125
      %v1194 = vpop.permute.xlu0 %1193
      %1197 = vset.pattern.permute.xlu0 0
      %1198 = vperm.xlu0 %1197, %v1126
      %v1199 = vpop.permute.xlu0 %1198
      %1202 = vset.pattern.permute.xlu0 0
      %1203 = vperm.xlu0 %1202, %v1127
      %v1204 = vpop.permute.xlu0 %1203
      %1207 = vset.pattern.permute.xlu0 0
      %1208 = vperm.xlu0 %1207, %v1128
      %v1209 = vpop.permute.xlu0 %1208
      %1212 = vset.pattern.permute.xlu0 0
      %1213 = vperm.xlu0 %1212, %v1129
      %v1214 = vpop.permute.xlu0 %1213
      %1217 = vset.pattern.permute.xlu0 0
      %1218 = vperm.xlu0 %1217, %v1130
      %v1219 = vpop.permute.xlu0 %1218
      %1222 = vset.pattern.permute.xlu0 0
      %1223 = vperm.xlu0 %1222, %v1131
      %v1224 = vpop.permute.xlu0 %1223
      %1227 = vset.pattern.permute.xlu0 0
      %1228 = vperm.xlu0 %1227, %v1132
      %v1229 = vpop.permute.xlu0 %1228
      %1232 = vset.pattern.permute.xlu0 0
      %1233 = vperm.xlu0 %1232, %v1133
      %v1234 = vpop.permute.xlu0 %1233
      %1237 = vset.pattern.permute.xlu0 0
      %1238 = vperm.xlu0 %1237, %v1134
      %v1239 = vpop.permute.xlu0 %1238
      %1242 = vset.pattern.permute.xlu0 0
      %1243 = vperm.xlu0 %1242, %v1135
      %v1244 = vpop.permute.xlu0 %1243
      %1247 = vset.pattern.permute.xlu0 0
      %1248 = vperm.xlu0 %1247, %v1136
      %v1249 = vpop.permute.xlu0 %1248
      %1252 = vset.pattern.permute.xlu0 0
      %1253 = vperm.xlu0 %1252, %v1137
      %v1254 = vpop.permute.xlu0 %1253
      %1257 = vset.pattern.permute.xlu0 0
      %1258 = vperm.xlu0 %1257, %v1138
      %v1259 = vpop.permute.xlu0 %1258
      %1262 = vset.pattern.permute.xlu0 0
      %1263 = vperm.xlu0 %1262, %v1139
      %v1264 = vpop.permute.xlu0 %1263
      %1267 = vset.pattern.permute.xlu0 0
      %1268 = vperm.xlu0 %1267, %v1140
      %v1269 = vpop.permute.xlu0 %1268
      %1272 = vset.pattern.permute.xlu0 0
      %1273 = vperm.xlu0 %1272, %v1141
      %v1274 = vpop.permute.xlu0 %1273
      %1277 = vset.pattern.permute.xlu0 0
      %1278 = vperm.xlu0 %1277, %v1142
      %v1279 = vpop.permute.xlu0 %1278
      %1282 = vset.pattern.permute.xlu0 0
      %1283 = vperm.xlu0 %1282, %v1143
      %v1284 = vpop.permute.xlu0 %1283
      %1287 = vset.pattern.permute.xlu0 0
      %1288 = vperm.xlu0 %1287, %v1144
      %v1289 = vpop.permute.xlu0 %1288
      %1292 = vset.pattern.permute.xlu0 0
      %1293 = vperm.xlu0 %1292, %v1145
      %v1294 = vpop.permute.xlu0 %1293
      %1297 = vset.pattern.permute.xlu0 0
      %1298 = vperm.xlu0 %1297, %v1146
      %v1299 = vpop.permute.xlu0 %1298
      %1302 = vset.pattern.permute.xlu0 0
      %1303 = vperm.xlu0 %1302, %v1147
      %v1304 = vpop.permute.xlu0 %1303
      %1307 = vset.pattern.permute.xlu0 0
      %1308 = vperm.xlu0 %1307, %v1148
      %v1309 = vpop.permute.xlu0 %1308
      %1312 = vset.pattern.permute.xlu0 0
      %1313 = vperm.xlu0 %1312, %v1149
      %v1314 = vpop.permute.xlu0 %1313
      %1317 = vset.pattern.permute.xlu0 0
      %1318 = vperm.xlu0 %1317, %v1150
      %v1319 = vpop.permute.xlu0 %1318
      %1322 = vset.pattern.permute.xlu0 0
      %1323 = vperm.xlu0 %1322, %v1151
      %v1324 = vpop.permute.xlu0 %1323
      %1327 = vset.pattern.permute.xlu0 0
      %1328 = vperm.xlu0 %1327, %v1152
      %v1329 = vpop.permute.xlu0 %1328
      %1332 = vset.pattern.permute.xlu0 0
      %1333 = vperm.xlu0 %1332, %v1153
      %v1334 = vpop.permute.xlu0 %1333
      %1337 = vset.pattern.permute.xlu0 0
      %1338 = vperm.xlu0 %1337, %v1154
      %v1339 = vpop.permute.xlu0 %1338
      %1342 = vset.pattern.permute.xlu0 0
      %1343 = vperm.xlu0 %1342, %v1155
      %v1344 = vpop.permute.xlu0 %1343
      %1347 = vset.pattern.permute.xlu0 0
      %1348 = vperm.xlu0 %1347, %v1156
      %v1349 = vpop.permute.xlu0 %1348
      %1352 = vset.pattern.permute.xlu0 0
      %1353 = vperm.xlu0 %1352, %v1157
      %v1354 = vpop.permute.xlu0 %1353
      %1357 = vset.pattern.permute.xlu0 0
      %1358 = vperm.xlu0 %1357, %v1158
      %v1359 = vpop.permute.xlu0 %1358
      %1362 = vset.pattern.permute.xlu0 0
      %1363 = vperm.xlu0 %1362, %v1159
      %v1364 = vpop.permute.xlu0 %1363
      %1367 = vset.pattern.permute.xlu0 0
      %1368 = vperm.xlu0 %1367, %v1160
      %v1369 = vpop.permute.xlu0 %1368
      %1372 = vset.pattern.permute.xlu0 0
      %1373 = vperm.xlu0 %1372, %v1161
      %v1374 = vpop.permute.xlu0 %1373
      %1377 = vset.pattern.permute.xlu0 0
      %1378 = vperm.xlu0 %1377, %v1162
      %v1379 = vpop.permute.xlu0 %1378
      %1382 = vset.pattern.permute.xlu0 0
      %1383 = vperm.xlu0 %1382, %v1163
      %v1384 = vpop.permute.xlu0 %1383
      %1387 = vset.pattern.permute.xlu0 0
      %1388 = vperm.xlu0 %1387, %v1164
      %v1389 = vpop.permute.xlu0 %1388
      %1392 = vset.pattern.permute.xlu0 0
      %1393 = vperm.xlu0 %1392, %v1165
      %v1394 = vpop.permute.xlu0 %1393
      %1397 = vset.pattern.permute.xlu0 0
      %1398 = vperm.xlu0 %1397, %v1166
      %v1399 = vpop.permute.xlu0 %1398
      %1402 = vset.pattern.permute.xlu0 0
      %1403 = vperm.xlu0 %1402, %v1167
      %v1404 = vpop.permute.xlu0 %1403
      %1407 = vset.pattern.permute.xlu0 0
      %1408 = vperm.xlu0 %1407, %v1168
      %v1409 = vpop.permute.xlu0 %1408
      %1412 = vset.pattern.permute.xlu0 0
      %1413 = vperm.xlu0 %1412, %v1169
      %v1414 = vpop.permute.xlu0 %1413
      %1417 = vset.pattern.permute.xlu0 0
      %1418 = vperm.xlu0 %1417, %v1170
      %v1419 = vpop.permute.xlu0 %1418
      %1422 = vset.pattern.permute.xlu0 0
      %1423 = vperm.xlu0 %1422, %v1171
      %v1424 = vpop.permute.xlu0 %1423
      %1427 = vset.pattern.permute.xlu0 0
      %1428 = vperm.xlu0 %1427, %v1172
      %v1429 = vpop.permute.xlu0 %1428
      %1432 = vset.pattern.permute.xlu0 0
      %1433 = vperm.xlu0 %1432, %v1173
      %v1434 = vpop.permute.xlu0 %1433
      %1437 = vset.pattern.permute.xlu0 0
      %1438 = vperm.xlu0 %1437, %v1174
      %v1439 = vpop.permute.xlu0 %1438
      %1442 = vset.pattern.permute.xlu0 0
      %1443 = vperm.xlu0 %1442, %v1175
      %v1444 = vpop.permute.xlu0 %1443
      %1447 = vset.pattern.permute.xlu0 0
      %1448 = vperm.xlu0 %1447, %v1176
      %v1449 = vpop.permute.xlu0 %1448
      %1452 = vset.pattern.permute.xlu0 0
      %1453 = vperm.xlu0 %1452, %v1177
      %v1454 = vpop.permute.xlu0 %1453
      %1457 = vset.pattern.permute.xlu0 0
      %1458 = vperm.xlu0 %1457, %v1178
      %v1459 = vpop.permute.xlu0 %1458
      %v1462 = vperm.slane %v1180, 0
      %v1464 = vmul.f32 %v1184, %v1462
      %v1465 = vmul.f32 %v1189, %v1462
      %v1466 = vmul.f32 %v1194, %v1462
      %v1467 = vmul.f32 %v1199, %v1462
      %v1468 = vmul.f32 %v1204, %v1462
      %v1469 = vmul.f32 %v1209, %v1462
      %v1470 = vmul.f32 %v1214, %v1462
      %v1471 = vmul.f32 %v1219, %v1462
      %v1472 = vmul.f32 %v1224, %v1462
      %v1473 = vmul.f32 %v1229, %v1462
      %v1474 = vmul.f32 %v1234, %v1462
      %v1475 = vmul.f32 %v1239, %v1462
      %v1476 = vmul.f32 %v1244, %v1462
      %v1477 = vmul.f32 %v1249, %v1462
      %v1478 = vmul.f32 %v1254, %v1462
      %v1479 = vmul.f32 %v1259, %v1462
      %v1480 = vmul.f32 %v1264, %v1462
      %v1481 = vmul.f32 %v1269, %v1462
      %v1482 = vmul.f32 %v1274, %v1462
      %v1483 = vmul.f32 %v1279, %v1462
      %v1484 = vmul.f32 %v1284, %v1462
      %v1485 = vmul.f32 %v1289, %v1462
      %v1486 = vmul.f32 %v1294, %v1462
      %v1487 = vmul.f32 %v1299, %v1462
      %v1488 = vmul.f32 %v1304, %v1462
      %v1489 = vmul.f32 %v1309, %v1462
      %v1490 = vmul.f32 %v1314, %v1462
      %v1491 = vmul.f32 %v1319, %v1462
      %v1492 = vmul.f32 %v1324, %v1462
      %v1493 = vmul.f32 %v1329, %v1462
      %v1494 = vmul.f32 %v1334, %v1462
      %v1495 = vmul.f32 %v1339, %v1462
      %v1496 = vmul.f32 %v1344, %v1462
      %v1497 = vmul.f32 %v1349, %v1462
      %v1498 = vmul.f32 %v1354, %v1462
      %v1499 = vmul.f32 %v1359, %v1462
      %v1500 = vmul.f32 %v1364, %v1462
      %v1501 = vmul.f32 %v1369, %v1462
      %v1502 = vmul.f32 %v1374, %v1462
      %v1503 = vmul.f32 %v1379, %v1462
      %v1504 = vmul.f32 %v1384, %v1462
      %v1505 = vmul.f32 %v1389, %v1462
      %v1506 = vmul.f32 %v1394, %v1462
      %v1507 = vmul.f32 %v1399, %v1462
      %v1508 = vmul.f32 %v1404, %v1462
      %v1509 = vmul.f32 %v1409, %v1462
      %v1510 = vmul.f32 %v1414, %v1462
      %v1511 = vmul.f32 %v1419, %v1462
      %v1512 = vmul.f32 %v1424, %v1462
      %v1513 = vmul.f32 %v1429, %v1462
      %v1514 = vmul.f32 %v1434, %v1462
      %v1515 = vmul.f32 %v1439, %v1462
      %v1516 = vmul.f32 %v1444, %v1462
      %v1517 = vmul.f32 %v1449, %v1462
      %v1518 = vmul.f32 %v1454, %v1462
      %v1519 = vmul.f32 %v1459, %v1462
      %v1520 = vadd.f32 %v1067, %v1464
      %v1521 = vadd.f32 %v1068, %v1465
      %v1522 = vadd.f32 %v1069, %v1466
      %v1523 = vadd.f32 %v1070, %v1467
      %v1524 = vadd.f32 %v1071, %v1468
      %v1525 = vadd.f32 %v1072, %v1469
      %v1526 = vadd.f32 %v1073, %v1470
      %v1527 = vadd.f32 %v1074, %v1471
      %v1528 = vadd.f32 %v1075, %v1472
      %v1529 = vadd.f32 %v1076, %v1473
      %v1530 = vadd.f32 %v1077, %v1474
      %v1531 = vadd.f32 %v1078, %v1475
      %v1532 = vadd.f32 %v1079, %v1476
      %v1533 = vadd.f32 %v1080, %v1477
      %v1534 = vadd.f32 %v1081, %v1478
      %v1535 = vadd.f32 %v1082, %v1479
      %v1536 = vadd.f32 %v1083, %v1480
      %v1537 = vadd.f32 %v1084, %v1481
      %v1538 = vadd.f32 %v1085, %v1482
      %v1539 = vadd.f32 %v1086, %v1483
      %v1540 = vadd.f32 %v1087, %v1484
      %v1541 = vadd.f32 %v1088, %v1485
      %v1542 = vadd.f32 %v1089, %v1486
      %v1543 = vadd.f32 %v1090, %v1487
      %v1544 = vadd.f32 %v1091, %v1488
      %v1545 = vadd.f32 %v1092, %v1489
      %v1546 = vadd.f32 %v1093, %v1490
      %v1547 = vadd.f32 %v1094, %v1491
      %v1548 = vadd.f32 %v1095, %v1492
      %v1549 = vadd.f32 %v1096, %v1493
      %v1550 = vadd.f32 %v1097, %v1494
      %v1551 = vadd.f32 %v1098, %v1495
      %v1552 = vadd.f32 %v1099, %v1496
      %v1553 = vadd.f32 %v1100, %v1497
      %v1554 = vadd.f32 %v1101, %v1498
      %v1555 = vadd.f32 %v1102, %v1499
      %v1556 = vadd.f32 %v1103, %v1500
      %v1557 = vadd.f32 %v1104, %v1501
      %v1558 = vadd.f32 %v1105, %v1502
      %v1559 = vadd.f32 %v1106, %v1503
      %v1560 = vadd.f32 %v1107, %v1504
      %v1561 = vadd.f32 %v1108, %v1505
      %v1562 = vadd.f32 %v1109, %v1506
      %v1563 = vadd.f32 %v1110, %v1507
      %v1564 = vadd.f32 %v1111, %v1508
      %v1565 = vadd.f32 %v1112, %v1509
      %v1566 = vadd.f32 %v1113, %v1510
      %v1567 = vadd.f32 %v1114, %v1511
      %v1568 = vadd.f32 %v1115, %v1512
      %v1569 = vadd.f32 %v1116, %v1513
      %v1570 = vadd.f32 %v1117, %v1514
      %v1571 = vadd.f32 %v1118, %v1515
      %v1572 = vadd.f32 %v1119, %v1516
      %v1573 = vadd.f32 %v1120, %v1517
      %v1574 = vadd.f32 %v1121, %v1518
      %v1575 = vadd.f32 %v1122, %v1519
      %v1576 = vld [vmem:[%s212 + $0x1] sm:$0xff]
      %v1577 = vld [vmem:[%s212 + $0x9] sm:$0xff]
      %v1578 = vld [vmem:[%s212 + $0x11] sm:$0xff]
      %v1579 = vld [vmem:[%s212 + $0x19] sm:$0xff]
      %v1580 = vld [vmem:[%s212 + $0x21] sm:$0xff]
      %v1581 = vld [vmem:[%s212 + $0x29] sm:$0xff]
      %v1582 = vld [vmem:[%s212 + $0x31] sm:$0xff]
      %v1583 = vld [vmem:[%s212 + $0x39] sm:$0xff]
      %v1584 = vld [vmem:[%s212 + $0x41] sm:$0xff]
      %v1585 = vld [vmem:[%s212 + $0x49] sm:$0xff]
      %v1586 = vld [vmem:[%s212 + $0x51] sm:$0xff]
      %v1587 = vld [vmem:[%s212 + $0x59] sm:$0xff]
      %v1588 = vld [vmem:[%s212 + $0x61] sm:$0xff]
      %v1589 = vld [vmem:[%s212 + $0x69] sm:$0xff]
      %v1590 = vld [vmem:[%s212 + $0x71] sm:$0xff]
      %v1591 = vld [vmem:[%s212 + $0x79] sm:$0xff]
      %v1592 = vld [vmem:[%s212 + $0x81] sm:$0xff]
      %v1593 = vld [vmem:[%s212 + $0x89] sm:$0xff]
      %v1594 = vld [vmem:[%s212 + $0x91] sm:$0xff]
      %v1595 = vld [vmem:[%s212 + $0x99] sm:$0xff]
      %v1596 = vld [vmem:[%s212 + $0xa1] sm:$0xff]
      %v1597 = vld [vmem:[%s212 + $0xa9] sm:$0xff]
      %v1598 = vld [vmem:[%s212 + $0xb1] sm:$0xff]
      %v1599 = vld [vmem:[%s212 + $0xb9] sm:$0xff]
      %v1600 = vld [vmem:[%s212 + $0xc1] sm:$0xff]
      %v1601 = vld [vmem:[%s212 + $0xc9] sm:$0xff]
      %v1602 = vld [vmem:[%s212 + $0xd1] sm:$0xff]
      %v1603 = vld [vmem:[%s212 + $0xd9] sm:$0xff]
      %v1604 = vld [vmem:[%s212 + $0xe1] sm:$0xff]
      %v1605 = vld [vmem:[%s212 + $0xe9] sm:$0xff]
      %v1606 = vld [vmem:[%s212 + $0xf1] sm:$0xff]
      %v1607 = vld [vmem:[%s212 + $0xf9] sm:$0xff]
      %v1608 = vld [vmem:[%s212 + $0x101] sm:$0xff]
      %v1609 = vld [vmem:[%s212 + $0x109] sm:$0xff]
      %v1610 = vld [vmem:[%s212 + $0x111] sm:$0xff]
      %v1611 = vld [vmem:[%s212 + $0x119] sm:$0xff]
      %v1612 = vld [vmem:[%s212 + $0x121] sm:$0xff]
      %v1613 = vld [vmem:[%s212 + $0x129] sm:$0xff]
      %v1614 = vld [vmem:[%s212 + $0x131] sm:$0xff]
      %v1615 = vld [vmem:[%s212 + $0x139] sm:$0xff]
      %v1616 = vld [vmem:[%s212 + $0x141] sm:$0xff]
      %v1617 = vld [vmem:[%s212 + $0x149] sm:$0xff]
      %v1618 = vld [vmem:[%s212 + $0x151] sm:$0xff]
      %v1619 = vld [vmem:[%s212 + $0x159] sm:$0xff]
      %v1620 = vld [vmem:[%s212 + $0x161] sm:$0xff]
      %v1621 = vld [vmem:[%s212 + $0x169] sm:$0xff]
      %v1622 = vld [vmem:[%s212 + $0x171] sm:$0xff]
      %v1623 = vld [vmem:[%s212 + $0x179] sm:$0xff]
      %v1624 = vld [vmem:[%s212 + $0x181] sm:$0xff]
      %v1625 = vld [vmem:[%s212 + $0x189] sm:$0xff]
      %v1626 = vld [vmem:[%s212 + $0x191] sm:$0xff]
      %v1627 = vld [vmem:[%s212 + $0x199] sm:$0xff]
      %v1628 = vld [vmem:[%s212 + $0x1a1] sm:$0xff]
      %v1629 = vld [vmem:[%s212 + $0x1a9] sm:$0xff]
      %v1630 = vld [vmem:[%s212 + $0x1b1] sm:$0xff]
      %v1631 = vld [vmem:[%s212 + $0x1b9] sm:$0xff]
      %s1632 = scalar_lea.vmem %s2, 3
      %v1633 = vld [vmem:[%s1632] sm:$0x1]
      %1635 = vset.pattern.permute.xlu0 0
      %1636 = vperm.xlu0 %1635, %v1576
      %v1637 = vpop.permute.xlu0 %1636
      %1640 = vset.pattern.permute.xlu0 0
      %1641 = vperm.xlu0 %1640, %v1577
      %v1642 = vpop.permute.xlu0 %1641
      %1645 = vset.pattern.permute.xlu0 0
      %1646 = vperm.xlu0 %1645, %v1578
      %v1647 = vpop.permute.xlu0 %1646
      %1650 = vset.pattern.permute.xlu0 0
      %1651 = vperm.xlu0 %1650, %v1579
      %v1652 = vpop.permute.xlu0 %1651
      %1655 = vset.pattern.permute.xlu0 0
      %1656 = vperm.xlu0 %1655, %v1580
      %v1657 = vpop.permute.xlu0 %1656
      %1660 = vset.pattern.permute.xlu0 0
      %1661 = vperm.xlu0 %1660, %v1581
      %v1662 = vpop.permute.xlu0 %1661
      %1665 = vset.pattern.permute.xlu0 0
      %1666 = vperm.xlu0 %1665, %v1582
      %v1667 = vpop.permute.xlu0 %1666
      %1670 = vset.pattern.permute.xlu0 0
      %1671 = vperm.xlu0 %1670, %v1583
      %v1672 = vpop.permute.xlu0 %1671
      %1675 = vset.pattern.permute.xlu0 0
      %1676 = vperm.xlu0 %1675, %v1584
      %v1677 = vpop.permute.xlu0 %1676
      %1680 = vset.pattern.permute.xlu0 0
      %1681 = vperm.xlu0 %1680, %v1585
      %v1682 = vpop.permute.xlu0 %1681
      %1685 = vset.pattern.permute.xlu0 0
      %1686 = vperm.xlu0 %1685, %v1586
      %v1687 = vpop.permute.xlu0 %1686
      %1690 = vset.pattern.permute.xlu0 0
      %1691 = vperm.xlu0 %1690, %v1587
      %v1692 = vpop.permute.xlu0 %1691
      %1695 = vset.pattern.permute.xlu0 0
      %1696 = vperm.xlu0 %1695, %v1588
      %v1697 = vpop.permute.xlu0 %1696
      %1700 = vset.pattern.permute.xlu0 0
      %1701 = vperm.xlu0 %1700, %v1589
      %v1702 = vpop.permute.xlu0 %1701
      %1705 = vset.pattern.permute.xlu0 0
      %1706 = vperm.xlu0 %1705, %v1590
      %v1707 = vpop.permute.xlu0 %1706
      %1710 = vset.pattern.permute.xlu0 0
      %1711 = vperm.xlu0 %1710, %v1591
      %v1712 = vpop.permute.xlu0 %1711
      %1715 = vset.pattern.permute.xlu0 0
      %1716 = vperm.xlu0 %1715, %v1592
      %v1717 = vpop.permute.xlu0 %1716
      %1720 = vset.pattern.permute.xlu0 0
      %1721 = vperm.xlu0 %1720, %v1593
      %v1722 = vpop.permute.xlu0 %1721
      %1725 = vset.pattern.permute.xlu0 0
      %1726 = vperm.xlu0 %1725, %v1594
      %v1727 = vpop.permute.xlu0 %1726
      %1730 = vset.pattern.permute.xlu0 0
      %1731 = vperm.xlu0 %1730, %v1595
      %v1732 = vpop.permute.xlu0 %1731
      %1735 = vset.pattern.permute.xlu0 0
      %1736 = vperm.xlu0 %1735, %v1596
      %v1737 = vpop.permute.xlu0 %1736
      %1740 = vset.pattern.permute.xlu0 0
      %1741 = vperm.xlu0 %1740, %v1597
      %v1742 = vpop.permute.xlu0 %1741
      %1745 = vset.pattern.permute.xlu0 0
      %1746 = vperm.xlu0 %1745, %v1598
      %v1747 = vpop.permute.xlu0 %1746
      %1750 = vset.pattern.permute.xlu0 0
      %1751 = vperm.xlu0 %1750, %v1599
      %v1752 = vpop.permute.xlu0 %1751
      %1755 = vset.pattern.permute.xlu0 0
      %1756 = vperm.xlu0 %1755, %v1600
      %v1757 = vpop.permute.xlu0 %1756
      %1760 = vset.pattern.permute.xlu0 0
      %1761 = vperm.xlu0 %1760, %v1601
      %v1762 = vpop.permute.xlu0 %1761
      %1765 = vset.pattern.permute.xlu0 0
      %1766 = vperm.xlu0 %1765, %v1602
      %v1767 = vpop.permute.xlu0 %1766
      %1770 = vset.pattern.permute.xlu0 0
      %1771 = vperm.xlu0 %1770, %v1603
      %v1772 = vpop.permute.xlu0 %1771
      %1775 = vset.pattern.permute.xlu0 0
      %1776 = vperm.xlu0 %1775, %v1604
      %v1777 = vpop.permute.xlu0 %1776
      %1780 = vset.pattern.permute.xlu0 0
      %1781 = vperm.xlu0 %1780, %v1605
      %v1782 = vpop.permute.xlu0 %1781
      %1785 = vset.pattern.permute.xlu0 0
      %1786 = vperm.xlu0 %1785, %v1606
      %v1787 = vpop.permute.xlu0 %1786
      %1790 = vset.pattern.permute.xlu0 0
      %1791 = vperm.xlu0 %1790, %v1607
      %v1792 = vpop.permute.xlu0 %1791
      %1795 = vset.pattern.permute.xlu0 0
      %1796 = vperm.xlu0 %1795, %v1608
      %v1797 = vpop.permute.xlu0 %1796
      %1800 = vset.pattern.permute.xlu0 0
      %1801 = vperm.xlu0 %1800, %v1609
      %v1802 = vpop.permute.xlu0 %1801
      %1805 = vset.pattern.permute.xlu0 0
      %1806 = vperm.xlu0 %1805, %v1610
      %v1807 = vpop.permute.xlu0 %1806
      %1810 = vset.pattern.permute.xlu0 0
      %1811 = vperm.xlu0 %1810, %v1611
      %v1812 = vpop.permute.xlu0 %1811
      %1815 = vset.pattern.permute.xlu0 0
      %1816 = vperm.xlu0 %1815, %v1612
      %v1817 = vpop.permute.xlu0 %1816
      %1820 = vset.pattern.permute.xlu0 0
      %1821 = vperm.xlu0 %1820, %v1613
      %v1822 = vpop.permute.xlu0 %1821
      %1825 = vset.pattern.permute.xlu0 0
      %1826 = vperm.xlu0 %1825, %v1614
      %v1827 = vpop.permute.xlu0 %1826
      %1830 = vset.pattern.permute.xlu0 0
      %1831 = vperm.xlu0 %1830, %v1615
      %v1832 = vpop.permute.xlu0 %1831
      %1835 = vset.pattern.permute.xlu0 0
      %1836 = vperm.xlu0 %1835, %v1616
      %v1837 = vpop.permute.xlu0 %1836
      %1840 = vset.pattern.permute.xlu0 0
      %1841 = vperm.xlu0 %1840, %v1617
      %v1842 = vpop.permute.xlu0 %1841
      %1845 = vset.pattern.permute.xlu0 0
      %1846 = vperm.xlu0 %1845, %v1618
      %v1847 = vpop.permute.xlu0 %1846
      %1850 = vset.pattern.permute.xlu0 0
      %1851 = vperm.xlu0 %1850, %v1619
      %v1852 = vpop.permute.xlu0 %1851
      %1855 = vset.pattern.permute.xlu0 0
      %1856 = vperm.xlu0 %1855, %v1620
      %v1857 = vpop.permute.xlu0 %1856
      %1860 = vset.pattern.permute.xlu0 0
      %1861 = vperm.xlu0 %1860, %v1621
      %v1862 = vpop.permute.xlu0 %1861
      %1865 = vset.pattern.permute.xlu0 0
      %1866 = vperm.xlu0 %1865, %v1622
      %v1867 = vpop.permute.xlu0 %1866
      %1870 = vset.pattern.permute.xlu0 0
      %1871 = vperm.xlu0 %1870, %v1623
      %v1872 = vpop.permute.xlu0 %1871
      %1875 = vset.pattern.permute.xlu0 0
      %1876 = vperm.xlu0 %1875, %v1624
      %v1877 = vpop.permute.xlu0 %1876
      %1880 = vset.pattern.permute.xlu0 0
      %1881 = vperm.xlu0 %1880, %v1625
      %v1882 = vpop.permute.xlu0 %1881
      %1885 = vset.pattern.permute.xlu0 0
      %1886 = vperm.xlu0 %1885, %v1626
      %v1887 = vpop.permute.xlu0 %1886
      %1890 = vset.pattern.permute.xlu0 0
      %1891 = vperm.xlu0 %1890, %v1627
      %v1892 = vpop.permute.xlu0 %1891
      %1895 = vset.pattern.permute.xlu0 0
      %1896 = vperm.xlu0 %1895, %v1628
      %v1897 = vpop.permute.xlu0 %1896
      %1900 = vset.pattern.permute.xlu0 0
      %1901 = vperm.xlu0 %1900, %v1629
      %v1902 = vpop.permute.xlu0 %1901
      %1905 = vset.pattern.permute.xlu0 0
      %1906 = vperm.xlu0 %1905, %v1630
      %v1907 = vpop.permute.xlu0 %1906
      %1910 = vset.pattern.permute.xlu0 0
      %1911 = vperm.xlu0 %1910, %v1631
      %v1912 = vpop.permute.xlu0 %1911
      %v1915 = vperm.slane %v1633, 0
      %v1917 = vmul.f32 %v1637, %v1915
      %v1918 = vmul.f32 %v1642, %v1915
      %v1919 = vmul.f32 %v1647, %v1915
      %v1920 = vmul.f32 %v1652, %v1915
      %v1921 = vmul.f32 %v1657, %v1915
      %v1922 = vmul.f32 %v1662, %v1915
      %v1923 = vmul.f32 %v1667, %v1915
      %v1924 = vmul.f32 %v1672, %v1915
      %v1925 = vmul.f32 %v1677, %v1915
      %v1926 = vmul.f32 %v1682, %v1915
      %v1927 = vmul.f32 %v1687, %v1915
      %v1928 = vmul.f32 %v1692, %v1915
      %v1929 = vmul.f32 %v1697, %v1915
      %v1930 = vmul.f32 %v1702, %v1915
      %v1931 = vmul.f32 %v1707, %v1915
      %v1932 = vmul.f32 %v1712, %v1915
      %v1933 = vmul.f32 %v1717, %v1915
      %v1934 = vmul.f32 %v1722, %v1915
      %v1935 = vmul.f32 %v1727, %v1915
      %v1936 = vmul.f32 %v1732, %v1915
      %v1937 = vmul.f32 %v1737, %v1915
      %v1938 = vmul.f32 %v1742, %v1915
      %v1939 = vmul.f32 %v1747, %v1915
      %v1940 = vmul.f32 %v1752, %v1915
      %v1941 = vmul.f32 %v1757, %v1915
      %v1942 = vmul.f32 %v1762, %v1915
      %v1943 = vmul.f32 %v1767, %v1915
      %v1944 = vmul.f32 %v1772, %v1915
      %v1945 = vmul.f32 %v1777, %v1915
      %v1946 = vmul.f32 %v1782, %v1915
      %v1947 = vmul.f32 %v1787, %v1915
      %v1948 = vmul.f32 %v1792, %v1915
      %v1949 = vmul.f32 %v1797, %v1915
      %v1950 = vmul.f32 %v1802, %v1915
      %v1951 = vmul.f32 %v1807, %v1915
      %v1952 = vmul.f32 %v1812, %v1915
      %v1953 = vmul.f32 %v1817, %v1915
      %v1954 = vmul.f32 %v1822, %v1915
      %v1955 = vmul.f32 %v1827, %v1915
      %v1956 = vmul.f32 %v1832, %v1915
      %v1957 = vmul.f32 %v1837, %v1915
      %v1958 = vmul.f32 %v1842, %v1915
      %v1959 = vmul.f32 %v1847, %v1915
      %v1960 = vmul.f32 %v1852, %v1915
      %v1961 = vmul.f32 %v1857, %v1915
      %v1962 = vmul.f32 %v1862, %v1915
      %v1963 = vmul.f32 %v1867, %v1915
      %v1964 = vmul.f32 %v1872, %v1915
      %v1965 = vmul.f32 %v1877, %v1915
      %v1966 = vmul.f32 %v1882, %v1915
      %v1967 = vmul.f32 %v1887, %v1915
      %v1968 = vmul.f32 %v1892, %v1915
      %v1969 = vmul.f32 %v1897, %v1915
      %v1970 = vmul.f32 %v1902, %v1915
      %v1971 = vmul.f32 %v1907, %v1915
      %v1972 = vmul.f32 %v1912, %v1915
      %v1973 = vadd.f32 %v1520, %v1917
      %v1974 = vadd.f32 %v1521, %v1918
      %v1975 = vadd.f32 %v1522, %v1919
      %v1976 = vadd.f32 %v1523, %v1920
      %v1977 = vadd.f32 %v1524, %v1921
      %v1978 = vadd.f32 %v1525, %v1922
      %v1979 = vadd.f32 %v1526, %v1923
      %v1980 = vadd.f32 %v1527, %v1924
      %v1981 = vadd.f32 %v1528, %v1925
      %v1982 = vadd.f32 %v1529, %v1926
      %v1983 = vadd.f32 %v1530, %v1927
      %v1984 = vadd.f32 %v1531, %v1928
      %v1985 = vadd.f32 %v1532, %v1929
      %v1986 = vadd.f32 %v1533, %v1930
      %v1987 = vadd.f32 %v1534, %v1931
      %v1988 = vadd.f32 %v1535, %v1932
      %v1989 = vadd.f32 %v1536, %v1933
      %v1990 = vadd.f32 %v1537, %v1934
      %v1991 = vadd.f32 %v1538, %v1935
      %v1992 = vadd.f32 %v1539, %v1936
      %v1993 = vadd.f32 %v1540, %v1937
      %v1994 = vadd.f32 %v1541, %v1938
      %v1995 = vadd.f32 %v1542, %v1939
      %v1996 = vadd.f32 %v1543, %v1940
      %v1997 = vadd.f32 %v1544, %v1941
      %v1998 = vadd.f32 %v1545, %v1942
      %v1999 = vadd.f32 %v1546, %v1943
      %v2000 = vadd.f32 %v1547, %v1944
      %v2001 = vadd.f32 %v1548, %v1945
      %v2002 = vadd.f32 %v1549, %v1946
      %v2003 = vadd.f32 %v1550, %v1947
      %v2004 = vadd.f32 %v1551, %v1948
      %v2005 = vadd.f32 %v1552, %v1949
      %v2006 = vadd.f32 %v1553, %v1950
      %v2007 = vadd.f32 %v1554, %v1951
      %v2008 = vadd.f32 %v1555, %v1952
      %v2009 = vadd.f32 %v1556, %v1953
      %v2010 = vadd.f32 %v1557, %v1954
      %v2011 = vadd.f32 %v1558, %v1955
      %v2012 = vadd.f32 %v1559, %v1956
      %v2013 = vadd.f32 %v1560, %v1957
      %v2014 = vadd.f32 %v1561, %v1958
      %v2015 = vadd.f32 %v1562, %v1959
      %v2016 = vadd.f32 %v1563, %v1960
      %v2017 = vadd.f32 %v1564, %v1961
      %v2018 = vadd.f32 %v1565, %v1962
      %v2019 = vadd.f32 %v1566, %v1963
      %v2020 = vadd.f32 %v1567, %v1964
      %v2021 = vadd.f32 %v1568, %v1965
      %v2022 = vadd.f32 %v1569, %v1966
      %v2023 = vadd.f32 %v1570, %v1967
      %v2024 = vadd.f32 %v1571, %v1968
      %v2025 = vadd.f32 %v1572, %v1969
      %v2026 = vadd.f32 %v1573, %v1970
      %v2027 = vadd.f32 %v1574, %v1971
      %v2028 = vadd.f32 %v1575, %v1972
      %v2029 = vld [vmem:[%s207 + $0x10] sm:$0xff]
      %v2030 = vld [vmem:[%s207 + $0x18] sm:$0xff]
      %v2031 = vld [vmem:[%s207 + $0x20] sm:$0xff]
      %v2032 = vld [vmem:[%s207 + $0x28] sm:$0xff]
      %v2033 = vld [vmem:[%s207 + $0x30] sm:$0xff]
      %v2034 = vld [vmem:[%s207 + $0x38] sm:$0xff]
      %v2035 = vld [vmem:[%s207 + $0x40] sm:$0xff]
      %v2036 = vld [vmem:[%s207 + $0x48] sm:$0xff]
      %v2037 = vld [vmem:[%s207 + $0x50] sm:$0xff]
      %v2038 = vld [vmem:[%s207 + $0x58] sm:$0xff]
      %v2039 = vld [vmem:[%s207 + $0x60] sm:$0xff]
      %v2040 = vld [vmem:[%s207 + $0x68] sm:$0xff]
      %v2041 = vld [vmem:[%s207 + $0x70] sm:$0xff]
      %v2042 = vld [vmem:[%s207 + $0x78] sm:$0xff]
      %v2043 = vld [vmem:[%s207 + $0x80] sm:$0xff]
      %v2044 = vld [vmem:[%s207 + $0x88] sm:$0xff]
      %v2045 = vld [vmem:[%s207 + $0x90] sm:$0xff]
      %v2046 = vld [vmem:[%s207 + $0x98] sm:$0xff]
      %v2047 = vld [vmem:[%s207 + $0xa0] sm:$0xff]
      %v2048 = vld [vmem:[%s207 + $0xa8] sm:$0xff]
      %v2049 = vld [vmem:[%s207 + $0xb0] sm:$0xff]
      %v2050 = vld [vmem:[%s207 + $0xb8] sm:$0xff]
      %v2051 = vld [vmem:[%s207 + $0xc0] sm:$0xff]
      %v2052 = vld [vmem:[%s207 + $0xc8] sm:$0xff]
      %v2053 = vld [vmem:[%s207 + $0xd0] sm:$0xff]
      %v2054 = vld [vmem:[%s207 + $0xd8] sm:$0xff]
      %v2055 = vld [vmem:[%s207 + $0xe0] sm:$0xff]
      %v2056 = vld [vmem:[%s207 + $0xe8] sm:$0xff]
      %v2057 = vld [vmem:[%s207 + $0xf0] sm:$0xff]
      %v2058 = vld [vmem:[%s207 + $0xf8] sm:$0xff]
      %v2059 = vld [vmem:[%s207 + $0x100] sm:$0xff]
      %v2060 = vld [vmem:[%s207 + $0x108] sm:$0xff]
      %v2061 = vld [vmem:[%s207 + $0x110] sm:$0xff]
      %v2062 = vld [vmem:[%s207 + $0x118] sm:$0xff]
      %v2063 = vld [vmem:[%s207 + $0x120] sm:$0xff]
      %v2064 = vld [vmem:[%s207 + $0x128] sm:$0xff]
      %v2065 = vld [vmem:[%s207 + $0x130] sm:$0xff]
      %v2066 = vld [vmem:[%s207 + $0x138] sm:$0xff]
      %v2067 = vld [vmem:[%s207 + $0x140] sm:$0xff]
      %v2068 = vld [vmem:[%s207 + $0x148] sm:$0xff]
      %v2069 = vld [vmem:[%s207 + $0x150] sm:$0xff]
      %v2070 = vld [vmem:[%s207 + $0x158] sm:$0xff]
      %v2071 = vld [vmem:[%s207 + $0x160] sm:$0xff]
      %v2072 = vld [vmem:[%s207 + $0x168] sm:$0xff]
      %v2073 = vld [vmem:[%s207 + $0x170] sm:$0xff]
      %v2074 = vld [vmem:[%s207 + $0x178] sm:$0xff]
      %v2075 = vld [vmem:[%s207 + $0x180] sm:$0xff]
      %v2076 = vld [vmem:[%s207 + $0x188] sm:$0xff]
      %v2077 = vld [vmem:[%s207 + $0x190] sm:$0xff]
      %v2078 = vld [vmem:[%s207 + $0x198] sm:$0xff]
      %v2079 = vld [vmem:[%s207 + $0x1a0] sm:$0xff]
      %v2080 = vld [vmem:[%s207 + $0x1a8] sm:$0xff]
      %v2081 = vld [vmem:[%s207 + $0x1b0] sm:$0xff]
      %v2082 = vld [vmem:[%s207 + $0x1b8] sm:$0xff]
      %v2083 = vld [vmem:[%s207 + $0x1c0] sm:$0xff]
      %v2084 = vld [vmem:[%s207 + $0x1c8] sm:$0xff]
      %s2085 = scalar_lea.vmem %s2, 4
      %v2086 = vld [vmem:[%s2085] sm:$0x1]
      %2088 = vset.pattern.permute.xlu0 0
      %2089 = vperm.xlu0 %2088, %v2029
      %v2090 = vpop.permute.xlu0 %2089
      %2093 = vset.pattern.permute.xlu0 0
      %2094 = vperm.xlu0 %2093, %v2030
      %v2095 = vpop.permute.xlu0 %2094
      %2098 = vset.pattern.permute.xlu0 0
      %2099 = vperm.xlu0 %2098, %v2031
      %v2100 = vpop.permute.xlu0 %2099
      %2103 = vset.pattern.permute.xlu0 0
      %2104 = vperm.xlu0 %2103, %v2032
      %v2105 = vpop.permute.xlu0 %2104
      %2108 = vset.pattern.permute.xlu0 0
      %2109 = vperm.xlu0 %2108, %v2033
      %v2110 = vpop.permute.xlu0 %2109
      %2113 = vset.pattern.permute.xlu0 0
      %2114 = vperm.xlu0 %2113, %v2034
      %v2115 = vpop.permute.xlu0 %2114
      %2118 = vset.pattern.permute.xlu0 0
      %2119 = vperm.xlu0 %2118, %v2035
      %v2120 = vpop.permute.xlu0 %2119
      %2123 = vset.pattern.permute.xlu0 0
      %2124 = vperm.xlu0 %2123, %v2036
      %v2125 = vpop.permute.xlu0 %2124
      %2128 = vset.pattern.permute.xlu0 0
      %2129 = vperm.xlu0 %2128, %v2037
      %v2130 = vpop.permute.xlu0 %2129
      %2133 = vset.pattern.permute.xlu0 0
      %2134 = vperm.xlu0 %2133, %v2038
      %v2135 = vpop.permute.xlu0 %2134
      %2138 = vset.pattern.permute.xlu0 0
      %2139 = vperm.xlu0 %2138, %v2039
      %v2140 = vpop.permute.xlu0 %2139
      %2143 = vset.pattern.permute.xlu0 0
      %2144 = vperm.xlu0 %2143, %v2040
      %v2145 = vpop.permute.xlu0 %2144
      %2148 = vset.pattern.permute.xlu0 0
      %2149 = vperm.xlu0 %2148, %v2041
      %v2150 = vpop.permute.xlu0 %2149
      %2153 = vset.pattern.permute.xlu0 0
      %2154 = vperm.xlu0 %2153, %v2042
      %v2155 = vpop.permute.xlu0 %2154
      %2158 = vset.pattern.permute.xlu0 0
      %2159 = vperm.xlu0 %2158, %v2043
      %v2160 = vpop.permute.xlu0 %2159
      %2163 = vset.pattern.permute.xlu0 0
      %2164 = vperm.xlu0 %2163, %v2044
      %v2165 = vpop.permute.xlu0 %2164
      %2168 = vset.pattern.permute.xlu0 0
      %2169 = vperm.xlu0 %2168, %v2045
      %v2170 = vpop.permute.xlu0 %2169
      %2173 = vset.pattern.permute.xlu0 0
      %2174 = vperm.xlu0 %2173, %v2046
      %v2175 = vpop.permute.xlu0 %2174
      %2178 = vset.pattern.permute.xlu0 0
      %2179 = vperm.xlu0 %2178, %v2047
      %v2180 = vpop.permute.xlu0 %2179
      %2183 = vset.pattern.permute.xlu0 0
      %2184 = vperm.xlu0 %2183, %v2048
      %v2185 = vpop.permute.xlu0 %2184
      %2188 = vset.pattern.permute.xlu0 0
      %2189 = vperm.xlu0 %2188, %v2049
      %v2190 = vpop.permute.xlu0 %2189
      %2193 = vset.pattern.permute.xlu0 0
      %2194 = vperm.xlu0 %2193, %v2050
      %v2195 = vpop.permute.xlu0 %2194
      %2198 = vset.pattern.permute.xlu0 0
      %2199 = vperm.xlu0 %2198, %v2051
      %v2200 = vpop.permute.xlu0 %2199
      %2203 = vset.pattern.permute.xlu0 0
      %2204 = vperm.xlu0 %2203, %v2052
      %v2205 = vpop.permute.xlu0 %2204
      %2208 = vset.pattern.permute.xlu0 0
      %2209 = vperm.xlu0 %2208, %v2053
      %v2210 = vpop.permute.xlu0 %2209
      %2213 = vset.pattern.permute.xlu0 0
      %2214 = vperm.xlu0 %2213, %v2054
      %v2215 = vpop.permute.xlu0 %2214
      %2218 = vset.pattern.permute.xlu0 0
      %2219 = vperm.xlu0 %2218, %v2055
      %v2220 = vpop.permute.xlu0 %2219
      %2223 = vset.pattern.permute.xlu0 0
      %2224 = vperm.xlu0 %2223, %v2056
      %v2225 = vpop.permute.xlu0 %2224
      %2228 = vset.pattern.permute.xlu0 0
      %2229 = vperm.xlu0 %2228, %v2057
      %v2230 = vpop.permute.xlu0 %2229
      %2233 = vset.pattern.permute.xlu0 0
      %2234 = vperm.xlu0 %2233, %v2058
      %v2235 = vpop.permute.xlu0 %2234
      %2238 = vset.pattern.permute.xlu0 0
      %2239 = vperm.xlu0 %2238, %v2059
      %v2240 = vpop.permute.xlu0 %2239
      %2243 = vset.pattern.permute.xlu0 0
      %2244 = vperm.xlu0 %2243, %v2060
      %v2245 = vpop.permute.xlu0 %2244
      %2248 = vset.pattern.permute.xlu0 0
      %2249 = vperm.xlu0 %2248, %v2061
      %v2250 = vpop.permute.xlu0 %2249
      %2253 = vset.pattern.permute.xlu0 0
      %2254 = vperm.xlu0 %2253, %v2062
      %v2255 = vpop.permute.xlu0 %2254
      %2258 = vset.pattern.permute.xlu0 0
      %2259 = vperm.xlu0 %2258, %v2063
      %v2260 = vpop.permute.xlu0 %2259
      %2263 = vset.pattern.permute.xlu0 0
      %2264 = vperm.xlu0 %2263, %v2064
      %v2265 = vpop.permute.xlu0 %2264
      %2268 = vset.pattern.permute.xlu0 0
      %2269 = vperm.xlu0 %2268, %v2065
      %v2270 = vpop.permute.xlu0 %2269
      %2273 = vset.pattern.permute.xlu0 0
      %2274 = vperm.xlu0 %2273, %v2066
      %v2275 = vpop.permute.xlu0 %2274
      %2278 = vset.pattern.permute.xlu0 0
      %2279 = vperm.xlu0 %2278, %v2067
      %v2280 = vpop.permute.xlu0 %2279
      %2283 = vset.pattern.permute.xlu0 0
      %2284 = vperm.xlu0 %2283, %v2068
      %v2285 = vpop.permute.xlu0 %2284
      %2288 = vset.pattern.permute.xlu0 0
      %2289 = vperm.xlu0 %2288, %v2069
      %v2290 = vpop.permute.xlu0 %2289
      %2293 = vset.pattern.permute.xlu0 0
      %2294 = vperm.xlu0 %2293, %v2070
      %v2295 = vpop.permute.xlu0 %2294
      %2298 = vset.pattern.permute.xlu0 0
      %2299 = vperm.xlu0 %2298, %v2071
      %v2300 = vpop.permute.xlu0 %2299
      %2303 = vset.pattern.permute.xlu0 0
      %2304 = vperm.xlu0 %2303, %v2072
      %v2305 = vpop.permute.xlu0 %2304
      %2308 = vset.pattern.permute.xlu0 0
      %2309 = vperm.xlu0 %2308, %v2073
      %v2310 = vpop.permute.xlu0 %2309
      %2313 = vset.pattern.permute.xlu0 0
      %2314 = vperm.xlu0 %2313, %v2074
      %v2315 = vpop.permute.xlu0 %2314
      %2318 = vset.pattern.permute.xlu0 0
      %2319 = vperm.xlu0 %2318, %v2075
      %v2320 = vpop.permute.xlu0 %2319
      %2323 = vset.pattern.permute.xlu0 0
      %2324 = vperm.xlu0 %2323, %v2076
      %v2325 = vpop.permute.xlu0 %2324
      %2328 = vset.pattern.permute.xlu0 0
      %2329 = vperm.xlu0 %2328, %v2077
      %v2330 = vpop.permute.xlu0 %2329
      %2333 = vset.pattern.permute.xlu0 0
      %2334 = vperm.xlu0 %2333, %v2078
      %v2335 = vpop.permute.xlu0 %2334
      %2338 = vset.pattern.permute.xlu0 0
      %2339 = vperm.xlu0 %2338, %v2079
      %v2340 = vpop.permute.xlu0 %2339
      %2343 = vset.pattern.permute.xlu0 0
      %2344 = vperm.xlu0 %2343, %v2080
      %v2345 = vpop.permute.xlu0 %2344
      %2348 = vset.pattern.permute.xlu0 0
      %2349 = vperm.xlu0 %2348, %v2081
      %v2350 = vpop.permute.xlu0 %2349
      %2353 = vset.pattern.permute.xlu0 0
      %2354 = vperm.xlu0 %2353, %v2082
      %v2355 = vpop.permute.xlu0 %2354
      %2358 = vset.pattern.permute.xlu0 0
      %2359 = vperm.xlu0 %2358, %v2083
      %v2360 = vpop.permute.xlu0 %2359
      %2363 = vset.pattern.permute.xlu0 0
      %2364 = vperm.xlu0 %2363, %v2084
      %v2365 = vpop.permute.xlu0 %2364
      %v2368 = vperm.slane %v2086, 0
      %v2370 = vmul.f32 %v2090, %v2368
      %v2371 = vmul.f32 %v2095, %v2368
      %v2372 = vmul.f32 %v2100, %v2368
      %v2373 = vmul.f32 %v2105, %v2368
      %v2374 = vmul.f32 %v2110, %v2368
      %v2375 = vmul.f32 %v2115, %v2368
      %v2376 = vmul.f32 %v2120, %v2368
      %v2377 = vmul.f32 %v2125, %v2368
      %v2378 = vmul.f32 %v2130, %v2368
      %v2379 = vmul.f32 %v2135, %v2368
      %v2380 = vmul.f32 %v2140, %v2368
      %v2381 = vmul.f32 %v2145, %v2368
      %v2382 = vmul.f32 %v2150, %v2368
      %v2383 = vmul.f32 %v2155, %v2368
      %v2384 = vmul.f32 %v2160, %v2368
      %v2385 = vmul.f32 %v2165, %v2368
      %v2386 = vmul.f32 %v2170, %v2368
      %v2387 = vmul.f32 %v2175, %v2368
      %v2388 = vmul.f32 %v2180, %v2368
      %v2389 = vmul.f32 %v2185, %v2368
      %v2390 = vmul.f32 %v2190, %v2368
      %v2391 = vmul.f32 %v2195, %v2368
      %v2392 = vmul.f32 %v2200, %v2368
      %v2393 = vmul.f32 %v2205, %v2368
      %v2394 = vmul.f32 %v2210, %v2368
      %v2395 = vmul.f32 %v2215, %v2368
      %v2396 = vmul.f32 %v2220, %v2368
      %v2397 = vmul.f32 %v2225, %v2368
      %v2398 = vmul.f32 %v2230, %v2368
      %v2399 = vmul.f32 %v2235, %v2368
      %v2400 = vmul.f32 %v2240, %v2368
      %v2401 = vmul.f32 %v2245, %v2368
      %v2402 = vmul.f32 %v2250, %v2368
      %v2403 = vmul.f32 %v2255, %v2368
      %v2404 = vmul.f32 %v2260, %v2368
      %v2405 = vmul.f32 %v2265, %v2368
      %v2406 = vmul.f32 %v2270, %v2368
      %v2407 = vmul.f32 %v2275, %v2368
      %v2408 = vmul.f32 %v2280, %v2368
      %v2409 = vmul.f32 %v2285, %v2368
      %v2410 = vmul.f32 %v2290, %v2368
      %v2411 = vmul.f32 %v2295, %v2368
      %v2412 = vmul.f32 %v2300, %v2368
      %v2413 = vmul.f32 %v2305, %v2368
      %v2414 = vmul.f32 %v2310, %v2368
      %v2415 = vmul.f32 %v2315, %v2368
      %v2416 = vmul.f32 %v2320, %v2368
      %v2417 = vmul.f32 %v2325, %v2368
      %v2418 = vmul.f32 %v2330, %v2368
      %v2419 = vmul.f32 %v2335, %v2368
      %v2420 = vmul.f32 %v2340, %v2368
      %v2421 = vmul.f32 %v2345, %v2368
      %v2422 = vmul.f32 %v2350, %v2368
      %v2423 = vmul.f32 %v2355, %v2368
      %v2424 = vmul.f32 %v2360, %v2368
      %v2425 = vmul.f32 %v2365, %v2368
      %v2426 = vadd.f32 %v1973, %v2370
      %v2427 = vadd.f32 %v1974, %v2371
      %v2428 = vadd.f32 %v1975, %v2372
      %v2429 = vadd.f32 %v1976, %v2373
      %v2430 = vadd.f32 %v1977, %v2374
      %v2431 = vadd.f32 %v1978, %v2375
      %v2432 = vadd.f32 %v1979, %v2376
      %v2433 = vadd.f32 %v1980, %v2377
      %v2434 = vadd.f32 %v1981, %v2378
      %v2435 = vadd.f32 %v1982, %v2379
      %v2436 = vadd.f32 %v1983, %v2380
      %v2437 = vadd.f32 %v1984, %v2381
      %v2438 = vadd.f32 %v1985, %v2382
      %v2439 = vadd.f32 %v1986, %v2383
      %v2440 = vadd.f32 %v1987, %v2384
      %v2441 = vadd.f32 %v1988, %v2385
      %v2442 = vadd.f32 %v1989, %v2386
      %v2443 = vadd.f32 %v1990, %v2387
      %v2444 = vadd.f32 %v1991, %v2388
      %v2445 = vadd.f32 %v1992, %v2389
      %v2446 = vadd.f32 %v1993, %v2390
      %v2447 = vadd.f32 %v1994, %v2391
      %v2448 = vadd.f32 %v1995, %v2392
      %v2449 = vadd.f32 %v1996, %v2393
      %v2450 = vadd.f32 %v1997, %v2394
      %v2451 = vadd.f32 %v1998, %v2395
      %v2452 = vadd.f32 %v1999, %v2396
      %v2453 = vadd.f32 %v2000, %v2397
      %v2454 = vadd.f32 %v2001, %v2398
      %v2455 = vadd.f32 %v2002, %v2399
      %v2456 = vadd.f32 %v2003, %v2400
      %v2457 = vadd.f32 %v2004, %v2401
      %v2458 = vadd.f32 %v2005, %v2402
      %v2459 = vadd.f32 %v2006, %v2403
      %v2460 = vadd.f32 %v2007, %v2404
      %v2461 = vadd.f32 %v2008, %v2405
      %v2462 = vadd.f32 %v2009, %v2406
      %v2463 = vadd.f32 %v2010, %v2407
      %v2464 = vadd.f32 %v2011, %v2408
      %v2465 = vadd.f32 %v2012, %v2409
      %v2466 = vadd.f32 %v2013, %v2410
      %v2467 = vadd.f32 %v2014, %v2411
      %v2468 = vadd.f32 %v2015, %v2412
      %v2469 = vadd.f32 %v2016, %v2413
      %v2470 = vadd.f32 %v2017, %v2414
      %v2471 = vadd.f32 %v2018, %v2415
      %v2472 = vadd.f32 %v2019, %v2416
      %v2473 = vadd.f32 %v2020, %v2417
      %v2474 = vadd.f32 %v2021, %v2418
      %v2475 = vadd.f32 %v2022, %v2419
      %v2476 = vadd.f32 %v2023, %v2420
      %v2477 = vadd.f32 %v2024, %v2421
      %v2478 = vadd.f32 %v2025, %v2422
      %v2479 = vadd.f32 %v2026, %v2423
      %v2480 = vadd.f32 %v2027, %v2424
      %v2481 = vadd.f32 %v2028, %v2425
      %v2482 = vld [vmem:[%s212 + $0x10] sm:$0xff]
      %v2483 = vld [vmem:[%s212 + $0x18] sm:$0xff]
      %v2484 = vld [vmem:[%s212 + $0x20] sm:$0xff]
      %v2485 = vld [vmem:[%s212 + $0x28] sm:$0xff]
      %v2486 = vld [vmem:[%s212 + $0x30] sm:$0xff]
      %v2487 = vld [vmem:[%s212 + $0x38] sm:$0xff]
      %v2488 = vld [vmem:[%s212 + $0x40] sm:$0xff]
      %v2489 = vld [vmem:[%s212 + $0x48] sm:$0xff]
      %v2490 = vld [vmem:[%s212 + $0x50] sm:$0xff]
      %v2491 = vld [vmem:[%s212 + $0x58] sm:$0xff]
      %v2492 = vld [vmem:[%s212 + $0x60] sm:$0xff]
      %v2493 = vld [vmem:[%s212 + $0x68] sm:$0xff]
      %v2494 = vld [vmem:[%s212 + $0x70] sm:$0xff]
      %v2495 = vld [vmem:[%s212 + $0x78] sm:$0xff]
      %v2496 = vld [vmem:[%s212 + $0x80] sm:$0xff]
      %v2497 = vld [vmem:[%s212 + $0x88] sm:$0xff]
      %v2498 = vld [vmem:[%s212 + $0x90] sm:$0xff]
      %v2499 = vld [vmem:[%s212 + $0x98] sm:$0xff]
      %v2500 = vld [vmem:[%s212 + $0xa0] sm:$0xff]
      %v2501 = vld [vmem:[%s212 + $0xa8] sm:$0xff]
      %v2502 = vld [vmem:[%s212 + $0xb0] sm:$0xff]
      %v2503 = vld [vmem:[%s212 + $0xb8] sm:$0xff]
      %v2504 = vld [vmem:[%s212 + $0xc0] sm:$0xff]
      %v2505 = vld [vmem:[%s212 + $0xc8] sm:$0xff]
      %v2506 = vld [vmem:[%s212 + $0xd0] sm:$0xff]
      %v2507 = vld [vmem:[%s212 + $0xd8] sm:$0xff]
      %v2508 = vld [vmem:[%s212 + $0xe0] sm:$0xff]
      %v2509 = vld [vmem:[%s212 + $0xe8] sm:$0xff]
      %v2510 = vld [vmem:[%s212 + $0xf0] sm:$0xff]
      %v2511 = vld [vmem:[%s212 + $0xf8] sm:$0xff]
      %v2512 = vld [vmem:[%s212 + $0x100] sm:$0xff]
      %v2513 = vld [vmem:[%s212 + $0x108] sm:$0xff]
      %v2514 = vld [vmem:[%s212 + $0x110] sm:$0xff]
      %v2515 = vld [vmem:[%s212 + $0x118] sm:$0xff]
      %v2516 = vld [vmem:[%s212 + $0x120] sm:$0xff]
      %v2517 = vld [vmem:[%s212 + $0x128] sm:$0xff]
      %v2518 = vld [vmem:[%s212 + $0x130] sm:$0xff]
      %v2519 = vld [vmem:[%s212 + $0x138] sm:$0xff]
      %v2520 = vld [vmem:[%s212 + $0x140] sm:$0xff]
      %v2521 = vld [vmem:[%s212 + $0x148] sm:$0xff]
      %v2522 = vld [vmem:[%s212 + $0x150] sm:$0xff]
      %v2523 = vld [vmem:[%s212 + $0x158] sm:$0xff]
      %v2524 = vld [vmem:[%s212 + $0x160] sm:$0xff]
      %v2525 = vld [vmem:[%s212 + $0x168] sm:$0xff]
      %v2526 = vld [vmem:[%s212 + $0x170] sm:$0xff]
      %v2527 = vld [vmem:[%s212 + $0x178] sm:$0xff]
      %v2528 = vld [vmem:[%s212 + $0x180] sm:$0xff]
      %v2529 = vld [vmem:[%s212 + $0x188] sm:$0xff]
      %v2530 = vld [vmem:[%s212 + $0x190] sm:$0xff]
      %v2531 = vld [vmem:[%s212 + $0x198] sm:$0xff]
      %v2532 = vld [vmem:[%s212 + $0x1a0] sm:$0xff]
      %v2533 = vld [vmem:[%s212 + $0x1a8] sm:$0xff]
      %v2534 = vld [vmem:[%s212 + $0x1b0] sm:$0xff]
      %v2535 = vld [vmem:[%s212 + $0x1b8] sm:$0xff]
      %v2536 = vld [vmem:[%s212 + $0x1c0] sm:$0xff]
      %v2537 = vld [vmem:[%s212 + $0x1c8] sm:$0xff]
      %s2538 = scalar_lea.vmem %s2, 5
      %v2539 = vld [vmem:[%s2538] sm:$0x1]
      %2541 = vset.pattern.permute.xlu0 0
      %2542 = vperm.xlu0 %2541, %v2482
      %v2543 = vpop.permute.xlu0 %2542
      %2546 = vset.pattern.permute.xlu0 0
      %2547 = vperm.xlu0 %2546, %v2483
      %v2548 = vpop.permute.xlu0 %2547
      %2551 = vset.pattern.permute.xlu0 0
      %2552 = vperm.xlu0 %2551, %v2484
      %v2553 = vpop.permute.xlu0 %2552
      %2556 = vset.pattern.permute.xlu0 0
      %2557 = vperm.xlu0 %2556, %v2485
      %v2558 = vpop.permute.xlu0 %2557
      %2561 = vset.pattern.permute.xlu0 0
      %2562 = vperm.xlu0 %2561, %v2486
      %v2563 = vpop.permute.xlu0 %2562
      %2566 = vset.pattern.permute.xlu0 0
      %2567 = vperm.xlu0 %2566, %v2487
      %v2568 = vpop.permute.xlu0 %2567
      %2571 = vset.pattern.permute.xlu0 0
      %2572 = vperm.xlu0 %2571, %v2488
      %v2573 = vpop.permute.xlu0 %2572
      %2576 = vset.pattern.permute.xlu0 0
      %2577 = vperm.xlu0 %2576, %v2489
      %v2578 = vpop.permute.xlu0 %2577
      %2581 = vset.pattern.permute.xlu0 0
      %2582 = vperm.xlu0 %2581, %v2490
      %v2583 = vpop.permute.xlu0 %2582
      %2586 = vset.pattern.permute.xlu0 0
      %2587 = vperm.xlu0 %2586, %v2491
      %v2588 = vpop.permute.xlu0 %2587
      %2591 = vset.pattern.permute.xlu0 0
      %2592 = vperm.xlu0 %2591, %v2492
      %v2593 = vpop.permute.xlu0 %2592
      %2596 = vset.pattern.permute.xlu0 0
      %2597 = vperm.xlu0 %2596, %v2493
      %v2598 = vpop.permute.xlu0 %2597
      %2601 = vset.pattern.permute.xlu0 0
      %2602 = vperm.xlu0 %2601, %v2494
      %v2603 = vpop.permute.xlu0 %2602
      %2606 = vset.pattern.permute.xlu0 0
      %2607 = vperm.xlu0 %2606, %v2495
      %v2608 = vpop.permute.xlu0 %2607
      %2611 = vset.pattern.permute.xlu0 0
      %2612 = vperm.xlu0 %2611, %v2496
      %v2613 = vpop.permute.xlu0 %2612
      %2616 = vset.pattern.permute.xlu0 0
      %2617 = vperm.xlu0 %2616, %v2497
      %v2618 = vpop.permute.xlu0 %2617
      %2621 = vset.pattern.permute.xlu0 0
      %2622 = vperm.xlu0 %2621, %v2498
      %v2623 = vpop.permute.xlu0 %2622
      %2626 = vset.pattern.permute.xlu0 0
      %2627 = vperm.xlu0 %2626, %v2499
      %v2628 = vpop.permute.xlu0 %2627
      %2631 = vset.pattern.permute.xlu0 0
      %2632 = vperm.xlu0 %2631, %v2500
      %v2633 = vpop.permute.xlu0 %2632
      %2636 = vset.pattern.permute.xlu0 0
      %2637 = vperm.xlu0 %2636, %v2501
      %v2638 = vpop.permute.xlu0 %2637
      %2641 = vset.pattern.permute.xlu0 0
      %2642 = vperm.xlu0 %2641, %v2502
      %v2643 = vpop.permute.xlu0 %2642
      %2646 = vset.pattern.permute.xlu0 0
      %2647 = vperm.xlu0 %2646, %v2503
      %v2648 = vpop.permute.xlu0 %2647
      %2651 = vset.pattern.permute.xlu0 0
      %2652 = vperm.xlu0 %2651, %v2504
      %v2653 = vpop.permute.xlu0 %2652
      %2656 = vset.pattern.permute.xlu0 0
      %2657 = vperm.xlu0 %2656, %v2505
      %v2658 = vpop.permute.xlu0 %2657
      %2661 = vset.pattern.permute.xlu0 0
      %2662 = vperm.xlu0 %2661, %v2506
      %v2663 = vpop.permute.xlu0 %2662
      %2666 = vset.pattern.permute.xlu0 0
      %2667 = vperm.xlu0 %2666, %v2507
      %v2668 = vpop.permute.xlu0 %2667
      %2671 = vset.pattern.permute.xlu0 0
      %2672 = vperm.xlu0 %2671, %v2508
      %v2673 = vpop.permute.xlu0 %2672
      %2676 = vset.pattern.permute.xlu0 0
      %2677 = vperm.xlu0 %2676, %v2509
      %v2678 = vpop.permute.xlu0 %2677
      %2681 = vset.pattern.permute.xlu0 0
      %2682 = vperm.xlu0 %2681, %v2510
      %v2683 = vpop.permute.xlu0 %2682
      %2686 = vset.pattern.permute.xlu0 0
      %2687 = vperm.xlu0 %2686, %v2511
      %v2688 = vpop.permute.xlu0 %2687
      %2691 = vset.pattern.permute.xlu0 0
      %2692 = vperm.xlu0 %2691, %v2512
      %v2693 = vpop.permute.xlu0 %2692
      %2696 = vset.pattern.permute.xlu0 0
      %2697 = vperm.xlu0 %2696, %v2513
      %v2698 = vpop.permute.xlu0 %2697
      %2701 = vset.pattern.permute.xlu0 0
      %2702 = vperm.xlu0 %2701, %v2514
      %v2703 = vpop.permute.xlu0 %2702
      %2706 = vset.pattern.permute.xlu0 0
      %2707 = vperm.xlu0 %2706, %v2515
      %v2708 = vpop.permute.xlu0 %2707
      %2711 = vset.pattern.permute.xlu0 0
      %2712 = vperm.xlu0 %2711, %v2516
      %v2713 = vpop.permute.xlu0 %2712
      %2716 = vset.pattern.permute.xlu0 0
      %2717 = vperm.xlu0 %2716, %v2517
      %v2718 = vpop.permute.xlu0 %2717
      %2721 = vset.pattern.permute.xlu0 0
      %2722 = vperm.xlu0 %2721, %v2518
      %v2723 = vpop.permute.xlu0 %2722
      %2726 = vset.pattern.permute.xlu0 0
      %2727 = vperm.xlu0 %2726, %v2519
      %v2728 = vpop.permute.xlu0 %2727
      %2731 = vset.pattern.permute.xlu0 0
      %2732 = vperm.xlu0 %2731, %v2520
      %v2733 = vpop.permute.xlu0 %2732
      %2736 = vset.pattern.permute.xlu0 0
      %2737 = vperm.xlu0 %2736, %v2521
      %v2738 = vpop.permute.xlu0 %2737
      %2741 = vset.pattern.permute.xlu0 0
      %2742 = vperm.xlu0 %2741, %v2522
      %v2743 = vpop.permute.xlu0 %2742
      %2746 = vset.pattern.permute.xlu0 0
      %2747 = vperm.xlu0 %2746, %v2523
      %v2748 = vpop.permute.xlu0 %2747
      %2751 = vset.pattern.permute.xlu0 0
      %2752 = vperm.xlu0 %2751, %v2524
      %v2753 = vpop.permute.xlu0 %2752
      %2756 = vset.pattern.permute.xlu0 0
      %2757 = vperm.xlu0 %2756, %v2525
      %v2758 = vpop.permute.xlu0 %2757
      %2761 = vset.pattern.permute.xlu0 0
      %2762 = vperm.xlu0 %2761, %v2526
      %v2763 = vpop.permute.xlu0 %2762
      %2766 = vset.pattern.permute.xlu0 0
      %2767 = vperm.xlu0 %2766, %v2527
      %v2768 = vpop.permute.xlu0 %2767
      %2771 = vset.pattern.permute.xlu0 0
      %2772 = vperm.xlu0 %2771, %v2528
      %v2773 = vpop.permute.xlu0 %2772
      %2776 = vset.pattern.permute.xlu0 0
      %2777 = vperm.xlu0 %2776, %v2529
      %v2778 = vpop.permute.xlu0 %2777
      %2781 = vset.pattern.permute.xlu0 0
      %2782 = vperm.xlu0 %2781, %v2530
      %v2783 = vpop.permute.xlu0 %2782
      %2786 = vset.pattern.permute.xlu0 0
      %2787 = vperm.xlu0 %2786, %v2531
      %v2788 = vpop.permute.xlu0 %2787
      %2791 = vset.pattern.permute.xlu0 0
      %2792 = vperm.xlu0 %2791, %v2532
      %v2793 = vpop.permute.xlu0 %2792
      %2796 = vset.pattern.permute.xlu0 0
      %2797 = vperm.xlu0 %2796, %v2533
      %v2798 = vpop.permute.xlu0 %2797
      %2801 = vset.pattern.permute.xlu0 0
      %2802 = vperm.xlu0 %2801, %v2534
      %v2803 = vpop.permute.xlu0 %2802
      %2806 = vset.pattern.permute.xlu0 0
      %2807 = vperm.xlu0 %2806, %v2535
      %v2808 = vpop.permute.xlu0 %2807
      %2811 = vset.pattern.permute.xlu0 0
      %2812 = vperm.xlu0 %2811, %v2536
      %v2813 = vpop.permute.xlu0 %2812
      %2816 = vset.pattern.permute.xlu0 0
      %2817 = vperm.xlu0 %2816, %v2537
      %v2818 = vpop.permute.xlu0 %2817
      %v2821 = vperm.slane %v2539, 0
      %v2823 = vmul.f32 %v2543, %v2821
      %v2824 = vmul.f32 %v2548, %v2821
      %v2825 = vmul.f32 %v2553, %v2821
      %v2826 = vmul.f32 %v2558, %v2821
      %v2827 = vmul.f32 %v2563, %v2821
      %v2828 = vmul.f32 %v2568, %v2821
      %v2829 = vmul.f32 %v2573, %v2821
      %v2830 = vmul.f32 %v2578, %v2821
      %v2831 = vmul.f32 %v2583, %v2821
      %v2832 = vmul.f32 %v2588, %v2821
      %v2833 = vmul.f32 %v2593, %v2821
      %v2834 = vmul.f32 %v2598, %v2821
      %v2835 = vmul.f32 %v2603, %v2821
      %v2836 = vmul.f32 %v2608, %v2821
      %v2837 = vmul.f32 %v2613, %v2821
      %v2838 = vmul.f32 %v2618, %v2821
      %v2839 = vmul.f32 %v2623, %v2821
      %v2840 = vmul.f32 %v2628, %v2821
      %v2841 = vmul.f32 %v2633, %v2821
      %v2842 = vmul.f32 %v2638, %v2821
      %v2843 = vmul.f32 %v2643, %v2821
      %v2844 = vmul.f32 %v2648, %v2821
      %v2845 = vmul.f32 %v2653, %v2821
      %v2846 = vmul.f32 %v2658, %v2821
      %v2847 = vmul.f32 %v2663, %v2821
      %v2848 = vmul.f32 %v2668, %v2821
      %v2849 = vmul.f32 %v2673, %v2821
      %v2850 = vmul.f32 %v2678, %v2821
      %v2851 = vmul.f32 %v2683, %v2821
      %v2852 = vmul.f32 %v2688, %v2821
      %v2853 = vmul.f32 %v2693, %v2821
      %v2854 = vmul.f32 %v2698, %v2821
      %v2855 = vmul.f32 %v2703, %v2821
      %v2856 = vmul.f32 %v2708, %v2821
      %v2857 = vmul.f32 %v2713, %v2821
      %v2858 = vmul.f32 %v2718, %v2821
      %v2859 = vmul.f32 %v2723, %v2821
      %v2860 = vmul.f32 %v2728, %v2821
      %v2861 = vmul.f32 %v2733, %v2821
      %v2862 = vmul.f32 %v2738, %v2821
      %v2863 = vmul.f32 %v2743, %v2821
      %v2864 = vmul.f32 %v2748, %v2821
      %v2865 = vmul.f32 %v2753, %v2821
      %v2866 = vmul.f32 %v2758, %v2821
      %v2867 = vmul.f32 %v2763, %v2821
      %v2868 = vmul.f32 %v2768, %v2821
      %v2869 = vmul.f32 %v2773, %v2821
      %v2870 = vmul.f32 %v2778, %v2821
      %v2871 = vmul.f32 %v2783, %v2821
      %v2872 = vmul.f32 %v2788, %v2821
      %v2873 = vmul.f32 %v2793, %v2821
      %v2874 = vmul.f32 %v2798, %v2821
      %v2875 = vmul.f32 %v2803, %v2821
      %v2876 = vmul.f32 %v2808, %v2821
      %v2877 = vmul.f32 %v2813, %v2821
      %v2878 = vmul.f32 %v2818, %v2821
      %v2879 = vadd.f32 %v2426, %v2823
      %v2880 = vadd.f32 %v2427, %v2824
      %v2881 = vadd.f32 %v2428, %v2825
      %v2882 = vadd.f32 %v2429, %v2826
      %v2883 = vadd.f32 %v2430, %v2827
      %v2884 = vadd.f32 %v2431, %v2828
      %v2885 = vadd.f32 %v2432, %v2829
      %v2886 = vadd.f32 %v2433, %v2830
      %v2887 = vadd.f32 %v2434, %v2831
      %v2888 = vadd.f32 %v2435, %v2832
      %v2889 = vadd.f32 %v2436, %v2833
      %v2890 = vadd.f32 %v2437, %v2834
      %v2891 = vadd.f32 %v2438, %v2835
      %v2892 = vadd.f32 %v2439, %v2836
      %v2893 = vadd.f32 %v2440, %v2837
      %v2894 = vadd.f32 %v2441, %v2838
      %v2895 = vadd.f32 %v2442, %v2839
      %v2896 = vadd.f32 %v2443, %v2840
      %v2897 = vadd.f32 %v2444, %v2841
      %v2898 = vadd.f32 %v2445, %v2842
      %v2899 = vadd.f32 %v2446, %v2843
      %v2900 = vadd.f32 %v2447, %v2844
      %v2901 = vadd.f32 %v2448, %v2845
      %v2902 = vadd.f32 %v2449, %v2846
      %v2903 = vadd.f32 %v2450, %v2847
      %v2904 = vadd.f32 %v2451, %v2848
      %v2905 = vadd.f32 %v2452, %v2849
      %v2906 = vadd.f32 %v2453, %v2850
      %v2907 = vadd.f32 %v2454, %v2851
      %v2908 = vadd.f32 %v2455, %v2852
      %v2909 = vadd.f32 %v2456, %v2853
      %v2910 = vadd.f32 %v2457, %v2854
      %v2911 = vadd.f32 %v2458, %v2855
      %v2912 = vadd.f32 %v2459, %v2856
      %v2913 = vadd.f32 %v2460, %v2857
      %v2914 = vadd.f32 %v2461, %v2858
      %v2915 = vadd.f32 %v2462, %v2859
      %v2916 = vadd.f32 %v2463, %v2860
      %v2917 = vadd.f32 %v2464, %v2861
      %v2918 = vadd.f32 %v2465, %v2862
      %v2919 = vadd.f32 %v2466, %v2863
      %v2920 = vadd.f32 %v2467, %v2864
      %v2921 = vadd.f32 %v2468, %v2865
      %v2922 = vadd.f32 %v2469, %v2866
      %v2923 = vadd.f32 %v2470, %v2867
      %v2924 = vadd.f32 %v2471, %v2868
      %v2925 = vadd.f32 %v2472, %v2869
      %v2926 = vadd.f32 %v2473, %v2870
      %v2927 = vadd.f32 %v2474, %v2871
      %v2928 = vadd.f32 %v2475, %v2872
      %v2929 = vadd.f32 %v2476, %v2873
      %v2930 = vadd.f32 %v2477, %v2874
      %v2931 = vadd.f32 %v2478, %v2875
      %v2932 = vadd.f32 %v2479, %v2876
      %v2933 = vadd.f32 %v2480, %v2877
      %v2934 = vadd.f32 %v2481, %v2878
      %v2935 = vld [vmem:[%s207 + $0x11] sm:$0xff]
      %v2936 = vld [vmem:[%s207 + $0x19] sm:$0xff]
      %v2937 = vld [vmem:[%s207 + $0x21] sm:$0xff]
      %v2938 = vld [vmem:[%s207 + $0x29] sm:$0xff]
      %v2939 = vld [vmem:[%s207 + $0x31] sm:$0xff]
      %v2940 = vld [vmem:[%s207 + $0x39] sm:$0xff]
      %v2941 = vld [vmem:[%s207 + $0x41] sm:$0xff]
      %v2942 = vld [vmem:[%s207 + $0x49] sm:$0xff]
      %v2943 = vld [vmem:[%s207 + $0x51] sm:$0xff]
      %v2944 = vld [vmem:[%s207 + $0x59] sm:$0xff]
      %v2945 = vld [vmem:[%s207 + $0x61] sm:$0xff]
      %v2946 = vld [vmem:[%s207 + $0x69] sm:$0xff]
      %v2947 = vld [vmem:[%s207 + $0x71] sm:$0xff]
      %v2948 = vld [vmem:[%s207 + $0x79] sm:$0xff]
      %v2949 = vld [vmem:[%s207 + $0x81] sm:$0xff]
      %v2950 = vld [vmem:[%s207 + $0x89] sm:$0xff]
      %v2951 = vld [vmem:[%s207 + $0x91] sm:$0xff]
      %v2952 = vld [vmem:[%s207 + $0x99] sm:$0xff]
      %v2953 = vld [vmem:[%s207 + $0xa1] sm:$0xff]
      %v2954 = vld [vmem:[%s207 + $0xa9] sm:$0xff]
      %v2955 = vld [vmem:[%s207 + $0xb1] sm:$0xff]
      %v2956 = vld [vmem:[%s207 + $0xb9] sm:$0xff]
      %v2957 = vld [vmem:[%s207 + $0xc1] sm:$0xff]
      %v2958 = vld [vmem:[%s207 + $0xc9] sm:$0xff]
      %v2959 = vld [vmem:[%s207 + $0xd1] sm:$0xff]
      %v2960 = vld [vmem:[%s207 + $0xd9] sm:$0xff]
      %v2961 = vld [vmem:[%s207 + $0xe1] sm:$0xff]
      %v2962 = vld [vmem:[%s207 + $0xe9] sm:$0xff]
      %v2963 = vld [vmem:[%s207 + $0xf1] sm:$0xff]
      %v2964 = vld [vmem:[%s207 + $0xf9] sm:$0xff]
      %v2965 = vld [vmem:[%s207 + $0x101] sm:$0xff]
      %v2966 = vld [vmem:[%s207 + $0x109] sm:$0xff]
      %v2967 = vld [vmem:[%s207 + $0x111] sm:$0xff]
      %v2968 = vld [vmem:[%s207 + $0x119] sm:$0xff]
      %v2969 = vld [vmem:[%s207 + $0x121] sm:$0xff]
      %v2970 = vld [vmem:[%s207 + $0x129] sm:$0xff]
      %v2971 = vld [vmem:[%s207 + $0x131] sm:$0xff]
      %v2972 = vld [vmem:[%s207 + $0x139] sm:$0xff]
      %v2973 = vld [vmem:[%s207 + $0x141] sm:$0xff]
      %v2974 = vld [vmem:[%s207 + $0x149] sm:$0xff]
      %v2975 = vld [vmem:[%s207 + $0x151] sm:$0xff]
      %v2976 = vld [vmem:[%s207 + $0x159] sm:$0xff]
      %v2977 = vld [vmem:[%s207 + $0x161] sm:$0xff]
      %v2978 = vld [vmem:[%s207 + $0x169] sm:$0xff]
      %v2979 = vld [vmem:[%s207 + $0x171] sm:$0xff]
      %v2980 = vld [vmem:[%s207 + $0x179] sm:$0xff]
      %v2981 = vld [vmem:[%s207 + $0x181] sm:$0xff]
      %v2982 = vld [vmem:[%s207 + $0x189] sm:$0xff]
      %v2983 = vld [vmem:[%s207 + $0x191] sm:$0xff]
      %v2984 = vld [vmem:[%s207 + $0x199] sm:$0xff]
      %v2985 = vld [vmem:[%s207 + $0x1a1] sm:$0xff]
      %v2986 = vld [vmem:[%s207 + $0x1a9] sm:$0xff]
      %v2987 = vld [vmem:[%s207 + $0x1b1] sm:$0xff]
      %v2988 = vld [vmem:[%s207 + $0x1b9] sm:$0xff]
      %v2989 = vld [vmem:[%s207 + $0x1c1] sm:$0xff]
      %v2990 = vld [vmem:[%s207 + $0x1c9] sm:$0xff]
      %s2991 = scalar_lea.vmem %s2, 6
      %v2992 = vld [vmem:[%s2991] sm:$0x1]
      %2994 = vset.pattern.permute.xlu0 0
      %2995 = vperm.xlu0 %2994, %v2935
      %v2996 = vpop.permute.xlu0 %2995
      %2999 = vset.pattern.permute.xlu0 0
      %3000 = vperm.xlu0 %2999, %v2936
      %v3001 = vpop.permute.xlu0 %3000
      %3004 = vset.pattern.permute.xlu0 0
      %3005 = vperm.xlu0 %3004, %v2937
      %v3006 = vpop.permute.xlu0 %3005
      %3009 = vset.pattern.permute.xlu0 0
      %3010 = vperm.xlu0 %3009, %v2938
      %v3011 = vpop.permute.xlu0 %3010
      %3014 = vset.pattern.permute.xlu0 0
      %3015 = vperm.xlu0 %3014, %v2939
      %v3016 = vpop.permute.xlu0 %3015
      %3019 = vset.pattern.permute.xlu0 0
      %3020 = vperm.xlu0 %3019, %v2940
      %v3021 = vpop.permute.xlu0 %3020
      %3024 = vset.pattern.permute.xlu0 0
      %3025 = vperm.xlu0 %3024, %v2941
      %v3026 = vpop.permute.xlu0 %3025
      %3029 = vset.pattern.permute.xlu0 0
      %3030 = vperm.xlu0 %3029, %v2942
      %v3031 = vpop.permute.xlu0 %3030
      %3034 = vset.pattern.permute.xlu0 0
      %3035 = vperm.xlu0 %3034, %v2943
      %v3036 = vpop.permute.xlu0 %3035
      %3039 = vset.pattern.permute.xlu0 0
      %3040 = vperm.xlu0 %3039, %v2944
      %v3041 = vpop.permute.xlu0 %3040
      %3044 = vset.pattern.permute.xlu0 0
      %3045 = vperm.xlu0 %3044, %v2945
      %v3046 = vpop.permute.xlu0 %3045
      %3049 = vset.pattern.permute.xlu0 0
      %3050 = vperm.xlu0 %3049, %v2946
      %v3051 = vpop.permute.xlu0 %3050
      %3054 = vset.pattern.permute.xlu0 0
      %3055 = vperm.xlu0 %3054, %v2947
      %v3056 = vpop.permute.xlu0 %3055
      %3059 = vset.pattern.permute.xlu0 0
      %3060 = vperm.xlu0 %3059, %v2948
      %v3061 = vpop.permute.xlu0 %3060
      %3064 = vset.pattern.permute.xlu0 0
      %3065 = vperm.xlu0 %3064, %v2949
      %v3066 = vpop.permute.xlu0 %3065
      %3069 = vset.pattern.permute.xlu0 0
      %3070 = vperm.xlu0 %3069, %v2950
      %v3071 = vpop.permute.xlu0 %3070
      %3074 = vset.pattern.permute.xlu0 0
      %3075 = vperm.xlu0 %3074, %v2951
      %v3076 = vpop.permute.xlu0 %3075
      %3079 = vset.pattern.permute.xlu0 0
      %3080 = vperm.xlu0 %3079, %v2952
      %v3081 = vpop.permute.xlu0 %3080
      %3084 = vset.pattern.permute.xlu0 0
      %3085 = vperm.xlu0 %3084, %v2953
      %v3086 = vpop.permute.xlu0 %3085
      %3089 = vset.pattern.permute.xlu0 0
      %3090 = vperm.xlu0 %3089, %v2954
      %v3091 = vpop.permute.xlu0 %3090
      %3094 = vset.pattern.permute.xlu0 0
      %3095 = vperm.xlu0 %3094, %v2955
      %v3096 = vpop.permute.xlu0 %3095
      %3099 = vset.pattern.permute.xlu0 0
      %3100 = vperm.xlu0 %3099, %v2956
      %v3101 = vpop.permute.xlu0 %3100
      %3104 = vset.pattern.permute.xlu0 0
      %3105 = vperm.xlu0 %3104, %v2957
      %v3106 = vpop.permute.xlu0 %3105
      %3109 = vset.pattern.permute.xlu0 0
      %3110 = vperm.xlu0 %3109, %v2958
      %v3111 = vpop.permute.xlu0 %3110
      %3114 = vset.pattern.permute.xlu0 0
      %3115 = vperm.xlu0 %3114, %v2959
      %v3116 = vpop.permute.xlu0 %3115
      %3119 = vset.pattern.permute.xlu0 0
      %3120 = vperm.xlu0 %3119, %v2960
      %v3121 = vpop.permute.xlu0 %3120
      %3124 = vset.pattern.permute.xlu0 0
      %3125 = vperm.xlu0 %3124, %v2961
      %v3126 = vpop.permute.xlu0 %3125
      %3129 = vset.pattern.permute.xlu0 0
      %3130 = vperm.xlu0 %3129, %v2962
      %v3131 = vpop.permute.xlu0 %3130
      %3134 = vset.pattern.permute.xlu0 0
      %3135 = vperm.xlu0 %3134, %v2963
      %v3136 = vpop.permute.xlu0 %3135
      %3139 = vset.pattern.permute.xlu0 0
      %3140 = vperm.xlu0 %3139, %v2964
      %v3141 = vpop.permute.xlu0 %3140
      %3144 = vset.pattern.permute.xlu0 0
      %3145 = vperm.xlu0 %3144, %v2965
      %v3146 = vpop.permute.xlu0 %3145
      %3149 = vset.pattern.permute.xlu0 0
      %3150 = vperm.xlu0 %3149, %v2966
      %v3151 = vpop.permute.xlu0 %3150
      %3154 = vset.pattern.permute.xlu0 0
      %3155 = vperm.xlu0 %3154, %v2967
      %v3156 = vpop.permute.xlu0 %3155
      %3159 = vset.pattern.permute.xlu0 0
      %3160 = vperm.xlu0 %3159, %v2968
      %v3161 = vpop.permute.xlu0 %3160
      %3164 = vset.pattern.permute.xlu0 0
      %3165 = vperm.xlu0 %3164, %v2969
      %v3166 = vpop.permute.xlu0 %3165
      %3169 = vset.pattern.permute.xlu0 0
      %3170 = vperm.xlu0 %3169, %v2970
      %v3171 = vpop.permute.xlu0 %3170
      %3174 = vset.pattern.permute.xlu0 0
      %3175 = vperm.xlu0 %3174, %v2971
      %v3176 = vpop.permute.xlu0 %3175
      %3179 = vset.pattern.permute.xlu0 0
      %3180 = vperm.xlu0 %3179, %v2972
      %v3181 = vpop.permute.xlu0 %3180
      %3184 = vset.pattern.permute.xlu0 0
      %3185 = vperm.xlu0 %3184, %v2973
      %v3186 = vpop.permute.xlu0 %3185
      %3189 = vset.pattern.permute.xlu0 0
      %3190 = vperm.xlu0 %3189, %v2974
      %v3191 = vpop.permute.xlu0 %3190
      %3194 = vset.pattern.permute.xlu0 0
      %3195 = vperm.xlu0 %3194, %v2975
      %v3196 = vpop.permute.xlu0 %3195
      %3199 = vset.pattern.permute.xlu0 0
      %3200 = vperm.xlu0 %3199, %v2976
      %v3201 = vpop.permute.xlu0 %3200
      %3204 = vset.pattern.permute.xlu0 0
      %3205 = vperm.xlu0 %3204, %v2977
      %v3206 = vpop.permute.xlu0 %3205
      %3209 = vset.pattern.permute.xlu0 0
      %3210 = vperm.xlu0 %3209, %v2978
      %v3211 = vpop.permute.xlu0 %3210
      %3214 = vset.pattern.permute.xlu0 0
      %3215 = vperm.xlu0 %3214, %v2979
      %v3216 = vpop.permute.xlu0 %3215
      %3219 = vset.pattern.permute.xlu0 0
      %3220 = vperm.xlu0 %3219, %v2980
      %v3221 = vpop.permute.xlu0 %3220
      %3224 = vset.pattern.permute.xlu0 0
      %3225 = vperm.xlu0 %3224, %v2981
      %v3226 = vpop.permute.xlu0 %3225
      %3229 = vset.pattern.permute.xlu0 0
      %3230 = vperm.xlu0 %3229, %v2982
      %v3231 = vpop.permute.xlu0 %3230
      %3234 = vset.pattern.permute.xlu0 0
      %3235 = vperm.xlu0 %3234, %v2983
      %v3236 = vpop.permute.xlu0 %3235
      %3239 = vset.pattern.permute.xlu0 0
      %3240 = vperm.xlu0 %3239, %v2984
      %v3241 = vpop.permute.xlu0 %3240
      %3244 = vset.pattern.permute.xlu0 0
      %3245 = vperm.xlu0 %3244, %v2985
      %v3246 = vpop.permute.xlu0 %3245
      %3249 = vset.pattern.permute.xlu0 0
      %3250 = vperm.xlu0 %3249, %v2986
      %v3251 = vpop.permute.xlu0 %3250
      %3254 = vset.pattern.permute.xlu0 0
      %3255 = vperm.xlu0 %3254, %v2987
      %v3256 = vpop.permute.xlu0 %3255
      %3259 = vset.pattern.permute.xlu0 0
      %3260 = vperm.xlu0 %3259, %v2988
      %v3261 = vpop.permute.xlu0 %3260
      %3264 = vset.pattern.permute.xlu0 0
      %3265 = vperm.xlu0 %3264, %v2989
      %v3266 = vpop.permute.xlu0 %3265
      %3269 = vset.pattern.permute.xlu0 0
      %3270 = vperm.xlu0 %3269, %v2990
      %v3271 = vpop.permute.xlu0 %3270
      %v3274 = vperm.slane %v2992, 0
      %v3276 = vmul.f32 %v2996, %v3274
      %v3277 = vmul.f32 %v3001, %v3274
      %v3278 = vmul.f32 %v3006, %v3274
      %v3279 = vmul.f32 %v3011, %v3274
      %v3280 = vmul.f32 %v3016, %v3274
      %v3281 = vmul.f32 %v3021, %v3274
      %v3282 = vmul.f32 %v3026, %v3274
      %v3283 = vmul.f32 %v3031, %v3274
      %v3284 = vmul.f32 %v3036, %v3274
      %v3285 = vmul.f32 %v3041, %v3274
      %v3286 = vmul.f32 %v3046, %v3274
      %v3287 = vmul.f32 %v3051, %v3274
      %v3288 = vmul.f32 %v3056, %v3274
      %v3289 = vmul.f32 %v3061, %v3274
      %v3290 = vmul.f32 %v3066, %v3274
      %v3291 = vmul.f32 %v3071, %v3274
      %v3292 = vmul.f32 %v3076, %v3274
      %v3293 = vmul.f32 %v3081, %v3274
      %v3294 = vmul.f32 %v3086, %v3274
      %v3295 = vmul.f32 %v3091, %v3274
      %v3296 = vmul.f32 %v3096, %v3274
      %v3297 = vmul.f32 %v3101, %v3274
      %v3298 = vmul.f32 %v3106, %v3274
      %v3299 = vmul.f32 %v3111, %v3274
      %v3300 = vmul.f32 %v3116, %v3274
      %v3301 = vmul.f32 %v3121, %v3274
      %v3302 = vmul.f32 %v3126, %v3274
      %v3303 = vmul.f32 %v3131, %v3274
      %v3304 = vmul.f32 %v3136, %v3274
      %v3305 = vmul.f32 %v3141, %v3274
      %v3306 = vmul.f32 %v3146, %v3274
      %v3307 = vmul.f32 %v3151, %v3274
      %v3308 = vmul.f32 %v3156, %v3274
      %v3309 = vmul.f32 %v3161, %v3274
      %v3310 = vmul.f32 %v3166, %v3274
      %v3311 = vmul.f32 %v3171, %v3274
      %v3312 = vmul.f32 %v3176, %v3274
      %v3313 = vmul.f32 %v3181, %v3274
      %v3314 = vmul.f32 %v3186, %v3274
      %v3315 = vmul.f32 %v3191, %v3274
      %v3316 = vmul.f32 %v3196, %v3274
      %v3317 = vmul.f32 %v3201, %v3274
      %v3318 = vmul.f32 %v3206, %v3274
      %v3319 = vmul.f32 %v3211, %v3274
      %v3320 = vmul.f32 %v3216, %v3274
      %v3321 = vmul.f32 %v3221, %v3274
      %v3322 = vmul.f32 %v3226, %v3274
      %v3323 = vmul.f32 %v3231, %v3274
      %v3324 = vmul.f32 %v3236, %v3274
      %v3325 = vmul.f32 %v3241, %v3274
      %v3326 = vmul.f32 %v3246, %v3274
      %v3327 = vmul.f32 %v3251, %v3274
      %v3328 = vmul.f32 %v3256, %v3274
      %v3329 = vmul.f32 %v3261, %v3274
      %v3330 = vmul.f32 %v3266, %v3274
      %v3331 = vmul.f32 %v3271, %v3274
      %v3332 = vadd.f32 %v2879, %v3276
      %v3333 = vadd.f32 %v2880, %v3277
      %v3334 = vadd.f32 %v2881, %v3278
      %v3335 = vadd.f32 %v2882, %v3279
      %v3336 = vadd.f32 %v2883, %v3280
      %v3337 = vadd.f32 %v2884, %v3281
      %v3338 = vadd.f32 %v2885, %v3282
      %v3339 = vadd.f32 %v2886, %v3283
      %v3340 = vadd.f32 %v2887, %v3284
      %v3341 = vadd.f32 %v2888, %v3285
      %v3342 = vadd.f32 %v2889, %v3286
      %v3343 = vadd.f32 %v2890, %v3287
      %v3344 = vadd.f32 %v2891, %v3288
      %v3345 = vadd.f32 %v2892, %v3289
      %v3346 = vadd.f32 %v2893, %v3290
      %v3347 = vadd.f32 %v2894, %v3291
      %v3348 = vadd.f32 %v2895, %v3292
      %v3349 = vadd.f32 %v2896, %v3293
      %v3350 = vadd.f32 %v2897, %v3294
      %v3351 = vadd.f32 %v2898, %v3295
      %v3352 = vadd.f32 %v2899, %v3296
      %v3353 = vadd.f32 %v2900, %v3297
      %v3354 = vadd.f32 %v2901, %v3298
      %v3355 = vadd.f32 %v2902, %v3299
      %v3356 = vadd.f32 %v2903, %v3300
      %v3357 = vadd.f32 %v2904, %v3301
      %v3358 = vadd.f32 %v2905, %v3302
      %v3359 = vadd.f32 %v2906, %v3303
      %v3360 = vadd.f32 %v2907, %v3304
      %v3361 = vadd.f32 %v2908, %v3305
      %v3362 = vadd.f32 %v2909, %v3306
      %v3363 = vadd.f32 %v2910, %v3307
      %v3364 = vadd.f32 %v2911, %v3308
      %v3365 = vadd.f32 %v2912, %v3309
      %v3366 = vadd.f32 %v2913, %v3310
      %v3367 = vadd.f32 %v2914, %v3311
      %v3368 = vadd.f32 %v2915, %v3312
      %v3369 = vadd.f32 %v2916, %v3313
      %v3370 = vadd.f32 %v2917, %v3314
      %v3371 = vadd.f32 %v2918, %v3315
      %v3372 = vadd.f32 %v2919, %v3316
      %v3373 = vadd.f32 %v2920, %v3317
      %v3374 = vadd.f32 %v2921, %v3318
      %v3375 = vadd.f32 %v2922, %v3319
      %v3376 = vadd.f32 %v2923, %v3320
      %v3377 = vadd.f32 %v2924, %v3321
      %v3378 = vadd.f32 %v2925, %v3322
      %v3379 = vadd.f32 %v2926, %v3323
      %v3380 = vadd.f32 %v2927, %v3324
      %v3381 = vadd.f32 %v2928, %v3325
      %v3382 = vadd.f32 %v2929, %v3326
      %v3383 = vadd.f32 %v2930, %v3327
      %v3384 = vadd.f32 %v2931, %v3328
      %v3385 = vadd.f32 %v2932, %v3329
      %v3386 = vadd.f32 %v2933, %v3330
      %v3387 = vadd.f32 %v2934, %v3331
      %v3388 = vld [vmem:[%s212 + $0x11] sm:$0xff]
      %v3389 = vld [vmem:[%s212 + $0x19] sm:$0xff]
      %v3390 = vld [vmem:[%s212 + $0x21] sm:$0xff]
      %v3391 = vld [vmem:[%s212 + $0x29] sm:$0xff]
      %v3392 = vld [vmem:[%s212 + $0x31] sm:$0xff]
      %v3393 = vld [vmem:[%s212 + $0x39] sm:$0xff]
      %v3394 = vld [vmem:[%s212 + $0x41] sm:$0xff]
      %v3395 = vld [vmem:[%s212 + $0x49] sm:$0xff]
      %v3396 = vld [vmem:[%s212 + $0x51] sm:$0xff]
      %v3397 = vld [vmem:[%s212 + $0x59] sm:$0xff]
      %v3398 = vld [vmem:[%s212 + $0x61] sm:$0xff]
      %v3399 = vld [vmem:[%s212 + $0x69] sm:$0xff]
      %v3400 = vld [vmem:[%s212 + $0x71] sm:$0xff]
      %v3401 = vld [vmem:[%s212 + $0x79] sm:$0xff]
      %v3402 = vld [vmem:[%s212 + $0x81] sm:$0xff]
      %v3403 = vld [vmem:[%s212 + $0x89] sm:$0xff]
      %v3404 = vld [vmem:[%s212 + $0x91] sm:$0xff]
      %v3405 = vld [vmem:[%s212 + $0x99] sm:$0xff]
      %v3406 = vld [vmem:[%s212 + $0xa1] sm:$0xff]
      %v3407 = vld [vmem:[%s212 + $0xa9] sm:$0xff]
      %v3408 = vld [vmem:[%s212 + $0xb1] sm:$0xff]
      %v3409 = vld [vmem:[%s212 + $0xb9] sm:$0xff]
      %v3410 = vld [vmem:[%s212 + $0xc1] sm:$0xff]
      %v3411 = vld [vmem:[%s212 + $0xc9] sm:$0xff]
      %v3412 = vld [vmem:[%s212 + $0xd1] sm:$0xff]
      %v3413 = vld [vmem:[%s212 + $0xd9] sm:$0xff]
      %v3414 = vld [vmem:[%s212 + $0xe1] sm:$0xff]
      %v3415 = vld [vmem:[%s212 + $0xe9] sm:$0xff]
      %v3416 = vld [vmem:[%s212 + $0xf1] sm:$0xff]
      %v3417 = vld [vmem:[%s212 + $0xf9] sm:$0xff]
      %v3418 = vld [vmem:[%s212 + $0x101] sm:$0xff]
      %v3419 = vld [vmem:[%s212 + $0x109] sm:$0xff]
      %v3420 = vld [vmem:[%s212 + $0x111] sm:$0xff]
      %v3421 = vld [vmem:[%s212 + $0x119] sm:$0xff]
      %v3422 = vld [vmem:[%s212 + $0x121] sm:$0xff]
      %v3423 = vld [vmem:[%s212 + $0x129] sm:$0xff]
      %v3424 = vld [vmem:[%s212 + $0x131] sm:$0xff]
      %v3425 = vld [vmem:[%s212 + $0x139] sm:$0xff]
      %v3426 = vld [vmem:[%s212 + $0x141] sm:$0xff]
      %v3427 = vld [vmem:[%s212 + $0x149] sm:$0xff]
      %v3428 = vld [vmem:[%s212 + $0x151] sm:$0xff]
      %v3429 = vld [vmem:[%s212 + $0x159] sm:$0xff]
      %v3430 = vld [vmem:[%s212 + $0x161] sm:$0xff]
      %v3431 = vld [vmem:[%s212 + $0x169] sm:$0xff]
      %v3432 = vld [vmem:[%s212 + $0x171] sm:$0xff]
      %v3433 = vld [vmem:[%s212 + $0x179] sm:$0xff]
      %v3434 = vld [vmem:[%s212 + $0x181] sm:$0xff]
      %v3435 = vld [vmem:[%s212 + $0x189] sm:$0xff]
      %v3436 = vld [vmem:[%s212 + $0x191] sm:$0xff]
      %v3437 = vld [vmem:[%s212 + $0x199] sm:$0xff]
      %v3438 = vld [vmem:[%s212 + $0x1a1] sm:$0xff]
      %v3439 = vld [vmem:[%s212 + $0x1a9] sm:$0xff]
      %v3440 = vld [vmem:[%s212 + $0x1b1] sm:$0xff]
      %v3441 = vld [vmem:[%s212 + $0x1b9] sm:$0xff]
      %v3442 = vld [vmem:[%s212 + $0x1c1] sm:$0xff]
      %v3443 = vld [vmem:[%s212 + $0x1c9] sm:$0xff]
      %s3444 = scalar_lea.vmem %s2, 7
      %v3445 = vld [vmem:[%s3444] sm:$0x1]
      %3447 = vset.pattern.permute.xlu0 0
      %3448 = vperm.xlu0 %3447, %v3388
      %v3449 = vpop.permute.xlu0 %3448
      %3452 = vset.pattern.permute.xlu0 0
      %3453 = vperm.xlu0 %3452, %v3389
      %v3454 = vpop.permute.xlu0 %3453
      %3457 = vset.pattern.permute.xlu0 0
      %3458 = vperm.xlu0 %3457, %v3390
      %v3459 = vpop.permute.xlu0 %3458
      %3462 = vset.pattern.permute.xlu0 0
      %3463 = vperm.xlu0 %3462, %v3391
      %v3464 = vpop.permute.xlu0 %3463
      %3467 = vset.pattern.permute.xlu0 0
      %3468 = vperm.xlu0 %3467, %v3392
      %v3469 = vpop.permute.xlu0 %3468
      %3472 = vset.pattern.permute.xlu0 0
      %3473 = vperm.xlu0 %3472, %v3393
      %v3474 = vpop.permute.xlu0 %3473
      %3477 = vset.pattern.permute.xlu0 0
      %3478 = vperm.xlu0 %3477, %v3394
      %v3479 = vpop.permute.xlu0 %3478
      %3482 = vset.pattern.permute.xlu0 0
      %3483 = vperm.xlu0 %3482, %v3395
      %v3484 = vpop.permute.xlu0 %3483
      %3487 = vset.pattern.permute.xlu0 0
      %3488 = vperm.xlu0 %3487, %v3396
      %v3489 = vpop.permute.xlu0 %3488
      %3492 = vset.pattern.permute.xlu0 0
      %3493 = vperm.xlu0 %3492, %v3397
      %v3494 = vpop.permute.xlu0 %3493
      %3497 = vset.pattern.permute.xlu0 0
      %3498 = vperm.xlu0 %3497, %v3398
      %v3499 = vpop.permute.xlu0 %3498
      %3502 = vset.pattern.permute.xlu0 0
      %3503 = vperm.xlu0 %3502, %v3399
      %v3504 = vpop.permute.xlu0 %3503
      %3507 = vset.pattern.permute.xlu0 0
      %3508 = vperm.xlu0 %3507, %v3400
      %v3509 = vpop.permute.xlu0 %3508
      %3512 = vset.pattern.permute.xlu0 0
      %3513 = vperm.xlu0 %3512, %v3401
      %v3514 = vpop.permute.xlu0 %3513
      %3517 = vset.pattern.permute.xlu0 0
      %3518 = vperm.xlu0 %3517, %v3402
      %v3519 = vpop.permute.xlu0 %3518
      %3522 = vset.pattern.permute.xlu0 0
      %3523 = vperm.xlu0 %3522, %v3403
      %v3524 = vpop.permute.xlu0 %3523
      %3527 = vset.pattern.permute.xlu0 0
      %3528 = vperm.xlu0 %3527, %v3404
      %v3529 = vpop.permute.xlu0 %3528
      %3532 = vset.pattern.permute.xlu0 0
      %3533 = vperm.xlu0 %3532, %v3405
      %v3534 = vpop.permute.xlu0 %3533
      %3537 = vset.pattern.permute.xlu0 0
      %3538 = vperm.xlu0 %3537, %v3406
      %v3539 = vpop.permute.xlu0 %3538
      %3542 = vset.pattern.permute.xlu0 0
      %3543 = vperm.xlu0 %3542, %v3407
      %v3544 = vpop.permute.xlu0 %3543
      %3547 = vset.pattern.permute.xlu0 0
      %3548 = vperm.xlu0 %3547, %v3408
      %v3549 = vpop.permute.xlu0 %3548
      %3552 = vset.pattern.permute.xlu0 0
      %3553 = vperm.xlu0 %3552, %v3409
      %v3554 = vpop.permute.xlu0 %3553
      %3557 = vset.pattern.permute.xlu0 0
      %3558 = vperm.xlu0 %3557, %v3410
      %v3559 = vpop.permute.xlu0 %3558
      %3562 = vset.pattern.permute.xlu0 0
      %3563 = vperm.xlu0 %3562, %v3411
      %v3564 = vpop.permute.xlu0 %3563
      %3567 = vset.pattern.permute.xlu0 0
      %3568 = vperm.xlu0 %3567, %v3412
      %v3569 = vpop.permute.xlu0 %3568
      %3572 = vset.pattern.permute.xlu0 0
      %3573 = vperm.xlu0 %3572, %v3413
      %v3574 = vpop.permute.xlu0 %3573
      %3577 = vset.pattern.permute.xlu0 0
      %3578 = vperm.xlu0 %3577, %v3414
      %v3579 = vpop.permute.xlu0 %3578
      %3582 = vset.pattern.permute.xlu0 0
      %3583 = vperm.xlu0 %3582, %v3415
      %v3584 = vpop.permute.xlu0 %3583
      %3587 = vset.pattern.permute.xlu0 0
      %3588 = vperm.xlu0 %3587, %v3416
      %v3589 = vpop.permute.xlu0 %3588
      %3592 = vset.pattern.permute.xlu0 0
      %3593 = vperm.xlu0 %3592, %v3417
      %v3594 = vpop.permute.xlu0 %3593
      %3597 = vset.pattern.permute.xlu0 0
      %3598 = vperm.xlu0 %3597, %v3418
      %v3599 = vpop.permute.xlu0 %3598
      %3602 = vset.pattern.permute.xlu0 0
      %3603 = vperm.xlu0 %3602, %v3419
      %v3604 = vpop.permute.xlu0 %3603
      %3607 = vset.pattern.permute.xlu0 0
      %3608 = vperm.xlu0 %3607, %v3420
      %v3609 = vpop.permute.xlu0 %3608
      %3612 = vset.pattern.permute.xlu0 0
      %3613 = vperm.xlu0 %3612, %v3421
      %v3614 = vpop.permute.xlu0 %3613
      %3617 = vset.pattern.permute.xlu0 0
      %3618 = vperm.xlu0 %3617, %v3422
      %v3619 = vpop.permute.xlu0 %3618
      %3622 = vset.pattern.permute.xlu0 0
      %3623 = vperm.xlu0 %3622, %v3423
      %v3624 = vpop.permute.xlu0 %3623
      %3627 = vset.pattern.permute.xlu0 0
      %3628 = vperm.xlu0 %3627, %v3424
      %v3629 = vpop.permute.xlu0 %3628
      %3632 = vset.pattern.permute.xlu0 0
      %3633 = vperm.xlu0 %3632, %v3425
      %v3634 = vpop.permute.xlu0 %3633
      %3637 = vset.pattern.permute.xlu0 0
      %3638 = vperm.xlu0 %3637, %v3426
      %v3639 = vpop.permute.xlu0 %3638
      %3642 = vset.pattern.permute.xlu0 0
      %3643 = vperm.xlu0 %3642, %v3427
      %v3644 = vpop.permute.xlu0 %3643
      %3647 = vset.pattern.permute.xlu0 0
      %3648 = vperm.xlu0 %3647, %v3428
      %v3649 = vpop.permute.xlu0 %3648
      %3652 = vset.pattern.permute.xlu0 0
      %3653 = vperm.xlu0 %3652, %v3429
      %v3654 = vpop.permute.xlu0 %3653
      %3657 = vset.pattern.permute.xlu0 0
      %3658 = vperm.xlu0 %3657, %v3430
      %v3659 = vpop.permute.xlu0 %3658
      %3662 = vset.pattern.permute.xlu0 0
      %3663 = vperm.xlu0 %3662, %v3431
      %v3664 = vpop.permute.xlu0 %3663
      %3667 = vset.pattern.permute.xlu0 0
      %3668 = vperm.xlu0 %3667, %v3432
      %v3669 = vpop.permute.xlu0 %3668
      %3672 = vset.pattern.permute.xlu0 0
      %3673 = vperm.xlu0 %3672, %v3433
      %v3674 = vpop.permute.xlu0 %3673
      %3677 = vset.pattern.permute.xlu0 0
      %3678 = vperm.xlu0 %3677, %v3434
      %v3679 = vpop.permute.xlu0 %3678
      %3682 = vset.pattern.permute.xlu0 0
      %3683 = vperm.xlu0 %3682, %v3435
      %v3684 = vpop.permute.xlu0 %3683
      %3687 = vset.pattern.permute.xlu0 0
      %3688 = vperm.xlu0 %3687, %v3436
      %v3689 = vpop.permute.xlu0 %3688
      %3692 = vset.pattern.permute.xlu0 0
      %3693 = vperm.xlu0 %3692, %v3437
      %v3694 = vpop.permute.xlu0 %3693
      %3697 = vset.pattern.permute.xlu0 0
      %3698 = vperm.xlu0 %3697, %v3438
      %v3699 = vpop.permute.xlu0 %3698
      %3702 = vset.pattern.permute.xlu0 0
      %3703 = vperm.xlu0 %3702, %v3439
      %v3704 = vpop.permute.xlu0 %3703
      %3707 = vset.pattern.permute.xlu0 0
      %3708 = vperm.xlu0 %3707, %v3440
      %v3709 = vpop.permute.xlu0 %3708
      %3712 = vset.pattern.permute.xlu0 0
      %3713 = vperm.xlu0 %3712, %v3441
      %v3714 = vpop.permute.xlu0 %3713
      %3717 = vset.pattern.permute.xlu0 0
      %3718 = vperm.xlu0 %3717, %v3442
      %v3719 = vpop.permute.xlu0 %3718
      %3722 = vset.pattern.permute.xlu0 0
      %3723 = vperm.xlu0 %3722, %v3443
      %v3724 = vpop.permute.xlu0 %3723
      %v3727 = vperm.slane %v3445, 0
      %v3729 = vmul.f32 %v3449, %v3727
      %v3730 = vmul.f32 %v3454, %v3727
      %v3731 = vmul.f32 %v3459, %v3727
      %v3732 = vmul.f32 %v3464, %v3727
      %v3733 = vmul.f32 %v3469, %v3727
      %v3734 = vmul.f32 %v3474, %v3727
      %v3735 = vmul.f32 %v3479, %v3727
      %v3736 = vmul.f32 %v3484, %v3727
      %v3737 = vmul.f32 %v3489, %v3727
      %v3738 = vmul.f32 %v3494, %v3727
      %v3739 = vmul.f32 %v3499, %v3727
      %v3740 = vmul.f32 %v3504, %v3727
      %v3741 = vmul.f32 %v3509, %v3727
      %v3742 = vmul.f32 %v3514, %v3727
      %v3743 = vmul.f32 %v3519, %v3727
      %v3744 = vmul.f32 %v3524, %v3727
      %v3745 = vmul.f32 %v3529, %v3727
      %v3746 = vmul.f32 %v3534, %v3727
      %v3747 = vmul.f32 %v3539, %v3727
      %v3748 = vmul.f32 %v3544, %v3727
      %v3749 = vmul.f32 %v3549, %v3727
      %v3750 = vmul.f32 %v3554, %v3727
      %v3751 = vmul.f32 %v3559, %v3727
      %v3752 = vmul.f32 %v3564, %v3727
      %v3753 = vmul.f32 %v3569, %v3727
      %v3754 = vmul.f32 %v3574, %v3727
      %v3755 = vmul.f32 %v3579, %v3727
      %v3756 = vmul.f32 %v3584, %v3727
      %v3757 = vmul.f32 %v3589, %v3727
      %v3758 = vmul.f32 %v3594, %v3727
      %v3759 = vmul.f32 %v3599, %v3727
      %v3760 = vmul.f32 %v3604, %v3727
      %v3761 = vmul.f32 %v3609, %v3727
      %v3762 = vmul.f32 %v3614, %v3727
      %v3763 = vmul.f32 %v3619, %v3727
      %v3764 = vmul.f32 %v3624, %v3727
      %v3765 = vmul.f32 %v3629, %v3727
      %v3766 = vmul.f32 %v3634, %v3727
      %v3767 = vmul.f32 %v3639, %v3727
      %v3768 = vmul.f32 %v3644, %v3727
      %v3769 = vmul.f32 %v3649, %v3727
      %v3770 = vmul.f32 %v3654, %v3727
      %v3771 = vmul.f32 %v3659, %v3727
      %v3772 = vmul.f32 %v3664, %v3727
      %v3773 = vmul.f32 %v3669, %v3727
      %v3774 = vmul.f32 %v3674, %v3727
      %v3775 = vmul.f32 %v3679, %v3727
      %v3776 = vmul.f32 %v3684, %v3727
      %v3777 = vmul.f32 %v3689, %v3727
      %v3778 = vmul.f32 %v3694, %v3727
      %v3779 = vmul.f32 %v3699, %v3727
      %v3780 = vmul.f32 %v3704, %v3727
      %v3781 = vmul.f32 %v3709, %v3727
      %v3782 = vmul.f32 %v3714, %v3727
      %v3783 = vmul.f32 %v3719, %v3727
      %v3784 = vmul.f32 %v3724, %v3727
      %v3785 = vadd.f32 %v3332, %v3729
      %v3786 = vadd.f32 %v3333, %v3730
      %v3787 = vadd.f32 %v3334, %v3731
      %v3788 = vadd.f32 %v3335, %v3732
      %v3789 = vadd.f32 %v3336, %v3733
      %v3790 = vadd.f32 %v3337, %v3734
      %v3791 = vadd.f32 %v3338, %v3735
      %v3792 = vadd.f32 %v3339, %v3736
      %v3793 = vadd.f32 %v3340, %v3737
      %v3794 = vadd.f32 %v3341, %v3738
      %v3795 = vadd.f32 %v3342, %v3739
      %v3796 = vadd.f32 %v3343, %v3740
      %v3797 = vadd.f32 %v3344, %v3741
      %v3798 = vadd.f32 %v3345, %v3742
      %v3799 = vadd.f32 %v3346, %v3743
      %v3800 = vadd.f32 %v3347, %v3744
      %v3801 = vadd.f32 %v3348, %v3745
      %v3802 = vadd.f32 %v3349, %v3746
      %v3803 = vadd.f32 %v3350, %v3747
      %v3804 = vadd.f32 %v3351, %v3748
      %v3805 = vadd.f32 %v3352, %v3749
      %v3806 = vadd.f32 %v3353, %v3750
      %v3807 = vadd.f32 %v3354, %v3751
      %v3808 = vadd.f32 %v3355, %v3752
      %v3809 = vadd.f32 %v3356, %v3753
      %v3810 = vadd.f32 %v3357, %v3754
      %v3811 = vadd.f32 %v3358, %v3755
      %v3812 = vadd.f32 %v3359, %v3756
      %v3813 = vadd.f32 %v3360, %v3757
      %v3814 = vadd.f32 %v3361, %v3758
      %v3815 = vadd.f32 %v3362, %v3759
      %v3816 = vadd.f32 %v3363, %v3760
      %v3817 = vadd.f32 %v3364, %v3761
      %v3818 = vadd.f32 %v3365, %v3762
      %v3819 = vadd.f32 %v3366, %v3763
      %v3820 = vadd.f32 %v3367, %v3764
      %v3821 = vadd.f32 %v3368, %v3765
      %v3822 = vadd.f32 %v3369, %v3766
      %v3823 = vadd.f32 %v3370, %v3767
      %v3824 = vadd.f32 %v3371, %v3768
      %v3825 = vadd.f32 %v3372, %v3769
      %v3826 = vadd.f32 %v3373, %v3770
      %v3827 = vadd.f32 %v3374, %v3771
      %v3828 = vadd.f32 %v3375, %v3772
      %v3829 = vadd.f32 %v3376, %v3773
      %v3830 = vadd.f32 %v3377, %v3774
      %v3831 = vadd.f32 %v3378, %v3775
      %v3832 = vadd.f32 %v3379, %v3776
      %v3833 = vadd.f32 %v3380, %v3777
      %v3834 = vadd.f32 %v3381, %v3778
      %v3835 = vadd.f32 %v3382, %v3779
      %v3836 = vadd.f32 %v3383, %v3780
      %v3837 = vadd.f32 %v3384, %v3781
      %v3838 = vadd.f32 %v3385, %v3782
      %v3839 = vadd.f32 %v3386, %v3783
      %v3840 = vadd.f32 %v3387, %v3784
      %v3841 = vld [vmem:[%s207 + $0x20] sm:$0xff]
      %v3842 = vld [vmem:[%s207 + $0x28] sm:$0xff]
      %v3843 = vld [vmem:[%s207 + $0x30] sm:$0xff]
      %v3844 = vld [vmem:[%s207 + $0x38] sm:$0xff]
      %v3845 = vld [vmem:[%s207 + $0x40] sm:$0xff]
      %v3846 = vld [vmem:[%s207 + $0x48] sm:$0xff]
      %v3847 = vld [vmem:[%s207 + $0x50] sm:$0xff]
      %v3848 = vld [vmem:[%s207 + $0x58] sm:$0xff]
      %v3849 = vld [vmem:[%s207 + $0x60] sm:$0xff]
      %v3850 = vld [vmem:[%s207 + $0x68] sm:$0xff]
      %v3851 = vld [vmem:[%s207 + $0x70] sm:$0xff]
      %v3852 = vld [vmem:[%s207 + $0x78] sm:$0xff]
      %v3853 = vld [vmem:[%s207 + $0x80] sm:$0xff]
      %v3854 = vld [vmem:[%s207 + $0x88] sm:$0xff]
      %v3855 = vld [vmem:[%s207 + $0x90] sm:$0xff]
      %v3856 = vld [vmem:[%s207 + $0x98] sm:$0xff]
      %v3857 = vld [vmem:[%s207 + $0xa0] sm:$0xff]
      %v3858 = vld [vmem:[%s207 + $0xa8] sm:$0xff]
      %v3859 = vld [vmem:[%s207 + $0xb0] sm:$0xff]
      %v3860 = vld [vmem:[%s207 + $0xb8] sm:$0xff]
      %v3861 = vld [vmem:[%s207 + $0xc0] sm:$0xff]
      %v3862 = vld [vmem:[%s207 + $0xc8] sm:$0xff]
      %v3863 = vld [vmem:[%s207 + $0xd0] sm:$0xff]
      %v3864 = vld [vmem:[%s207 + $0xd8] sm:$0xff]
      %v3865 = vld [vmem:[%s207 + $0xe0] sm:$0xff]
      %v3866 = vld [vmem:[%s207 + $0xe8] sm:$0xff]
      %v3867 = vld [vmem:[%s207 + $0xf0] sm:$0xff]
      %v3868 = vld [vmem:[%s207 + $0xf8] sm:$0xff]
      %v3869 = vld [vmem:[%s207 + $0x100] sm:$0xff]
      %v3870 = vld [vmem:[%s207 + $0x108] sm:$0xff]
      %v3871 = vld [vmem:[%s207 + $0x110] sm:$0xff]
      %v3872 = vld [vmem:[%s207 + $0x118] sm:$0xff]
      %v3873 = vld [vmem:[%s207 + $0x120] sm:$0xff]
      %v3874 = vld [vmem:[%s207 + $0x128] sm:$0xff]
      %v3875 = vld [vmem:[%s207 + $0x130] sm:$0xff]
      %v3876 = vld [vmem:[%s207 + $0x138] sm:$0xff]
      %v3877 = vld [vmem:[%s207 + $0x140] sm:$0xff]
      %v3878 = vld [vmem:[%s207 + $0x148] sm:$0xff]
      %v3879 = vld [vmem:[%s207 + $0x150] sm:$0xff]
      %v3880 = vld [vmem:[%s207 + $0x158] sm:$0xff]
      %v3881 = vld [vmem:[%s207 + $0x160] sm:$0xff]
      %v3882 = vld [vmem:[%s207 + $0x168] sm:$0xff]
      %v3883 = vld [vmem:[%s207 + $0x170] sm:$0xff]
      %v3884 = vld [vmem:[%s207 + $0x178] sm:$0xff]
      %v3885 = vld [vmem:[%s207 + $0x180] sm:$0xff]
      %v3886 = vld [vmem:[%s207 + $0x188] sm:$0xff]
      %v3887 = vld [vmem:[%s207 + $0x190] sm:$0xff]
      %v3888 = vld [vmem:[%s207 + $0x198] sm:$0xff]
      %v3889 = vld [vmem:[%s207 + $0x1a0] sm:$0xff]
      %v3890 = vld [vmem:[%s207 + $0x1a8] sm:$0xff]
      %v3891 = vld [vmem:[%s207 + $0x1b0] sm:$0xff]
      %v3892 = vld [vmem:[%s207 + $0x1b8] sm:$0xff]
      %v3893 = vld [vmem:[%s207 + $0x1c0] sm:$0xff]
      %v3894 = vld [vmem:[%s207 + $0x1c8] sm:$0xff]
      %v3895 = vld [vmem:[%s207 + $0x1d0] sm:$0xff]
      %v3896 = vld [vmem:[%s207 + $0x1d8] sm:$0xff]
      %s3897 = scalar_lea.vmem %s2, 8
      %v3898 = vld [vmem:[%s3897] sm:$0x1]
      %3900 = vset.pattern.permute.xlu0 0
      %3901 = vperm.xlu0 %3900, %v3841
      %v3902 = vpop.permute.xlu0 %3901
      %3905 = vset.pattern.permute.xlu0 0
      %3906 = vperm.xlu0 %3905, %v3842
      %v3907 = vpop.permute.xlu0 %3906
      %3910 = vset.pattern.permute.xlu0 0
      %3911 = vperm.xlu0 %3910, %v3843
      %v3912 = vpop.permute.xlu0 %3911
      %3915 = vset.pattern.permute.xlu0 0
      %3916 = vperm.xlu0 %3915, %v3844
      %v3917 = vpop.permute.xlu0 %3916
      %3920 = vset.pattern.permute.xlu0 0
      %3921 = vperm.xlu0 %3920, %v3845
      %v3922 = vpop.permute.xlu0 %3921
      %3925 = vset.pattern.permute.xlu0 0
      %3926 = vperm.xlu0 %3925, %v3846
      %v3927 = vpop.permute.xlu0 %3926
      %3930 = vset.pattern.permute.xlu0 0
      %3931 = vperm.xlu0 %3930, %v3847
      %v3932 = vpop.permute.xlu0 %3931
      %3935 = vset.pattern.permute.xlu0 0
      %3936 = vperm.xlu0 %3935, %v3848
      %v3937 = vpop.permute.xlu0 %3936
      %3940 = vset.pattern.permute.xlu0 0
      %3941 = vperm.xlu0 %3940, %v3849
      %v3942 = vpop.permute.xlu0 %3941
      %3945 = vset.pattern.permute.xlu0 0
      %3946 = vperm.xlu0 %3945, %v3850
      %v3947 = vpop.permute.xlu0 %3946
      %3950 = vset.pattern.permute.xlu0 0
      %3951 = vperm.xlu0 %3950, %v3851
      %v3952 = vpop.permute.xlu0 %3951
      %3955 = vset.pattern.permute.xlu0 0
      %3956 = vperm.xlu0 %3955, %v3852
      %v3957 = vpop.permute.xlu0 %3956
      %3960 = vset.pattern.permute.xlu0 0
      %3961 = vperm.xlu0 %3960, %v3853
      %v3962 = vpop.permute.xlu0 %3961
      %3965 = vset.pattern.permute.xlu0 0
      %3966 = vperm.xlu0 %3965, %v3854
      %v3967 = vpop.permute.xlu0 %3966
      %3970 = vset.pattern.permute.xlu0 0
      %3971 = vperm.xlu0 %3970, %v3855
      %v3972 = vpop.permute.xlu0 %3971
      %3975 = vset.pattern.permute.xlu0 0
      %3976 = vperm.xlu0 %3975, %v3856
      %v3977 = vpop.permute.xlu0 %3976
      %3980 = vset.pattern.permute.xlu0 0
      %3981 = vperm.xlu0 %3980, %v3857
      %v3982 = vpop.permute.xlu0 %3981
      %3985 = vset.pattern.permute.xlu0 0
      %3986 = vperm.xlu0 %3985, %v3858
      %v3987 = vpop.permute.xlu0 %3986
      %3990 = vset.pattern.permute.xlu0 0
      %3991 = vperm.xlu0 %3990, %v3859
      %v3992 = vpop.permute.xlu0 %3991
      %3995 = vset.pattern.permute.xlu0 0
      %3996 = vperm.xlu0 %3995, %v3860
      %v3997 = vpop.permute.xlu0 %3996
      %4000 = vset.pattern.permute.xlu0 0
      %4001 = vperm.xlu0 %4000, %v3861
      %v4002 = vpop.permute.xlu0 %4001
      %4005 = vset.pattern.permute.xlu0 0
      %4006 = vperm.xlu0 %4005, %v3862
      %v4007 = vpop.permute.xlu0 %4006
      %4010 = vset.pattern.permute.xlu0 0
      %4011 = vperm.xlu0 %4010, %v3863
      %v4012 = vpop.permute.xlu0 %4011
      %4015 = vset.pattern.permute.xlu0 0
      %4016 = vperm.xlu0 %4015, %v3864
      %v4017 = vpop.permute.xlu0 %4016
      %4020 = vset.pattern.permute.xlu0 0
      %4021 = vperm.xlu0 %4020, %v3865
      %v4022 = vpop.permute.xlu0 %4021
      %4025 = vset.pattern.permute.xlu0 0
      %4026 = vperm.xlu0 %4025, %v3866
      %v4027 = vpop.permute.xlu0 %4026
      %4030 = vset.pattern.permute.xlu0 0
      %4031 = vperm.xlu0 %4030, %v3867
      %v4032 = vpop.permute.xlu0 %4031
      %4035 = vset.pattern.permute.xlu0 0
      %4036 = vperm.xlu0 %4035, %v3868
      %v4037 = vpop.permute.xlu0 %4036
      %4040 = vset.pattern.permute.xlu0 0
      %4041 = vperm.xlu0 %4040, %v3869
      %v4042 = vpop.permute.xlu0 %4041
      %4045 = vset.pattern.permute.xlu0 0
      %4046 = vperm.xlu0 %4045, %v3870
      %v4047 = vpop.permute.xlu0 %4046
      %4050 = vset.pattern.permute.xlu0 0
      %4051 = vperm.xlu0 %4050, %v3871
      %v4052 = vpop.permute.xlu0 %4051
      %4055 = vset.pattern.permute.xlu0 0
      %4056 = vperm.xlu0 %4055, %v3872
      %v4057 = vpop.permute.xlu0 %4056
      %4060 = vset.pattern.permute.xlu0 0
      %4061 = vperm.xlu0 %4060, %v3873
      %v4062 = vpop.permute.xlu0 %4061
      %4065 = vset.pattern.permute.xlu0 0
      %4066 = vperm.xlu0 %4065, %v3874
      %v4067 = vpop.permute.xlu0 %4066
      %4070 = vset.pattern.permute.xlu0 0
      %4071 = vperm.xlu0 %4070, %v3875
      %v4072 = vpop.permute.xlu0 %4071
      %4075 = vset.pattern.permute.xlu0 0
      %4076 = vperm.xlu0 %4075, %v3876
      %v4077 = vpop.permute.xlu0 %4076
      %4080 = vset.pattern.permute.xlu0 0
      %4081 = vperm.xlu0 %4080, %v3877
      %v4082 = vpop.permute.xlu0 %4081
      %4085 = vset.pattern.permute.xlu0 0
      %4086 = vperm.xlu0 %4085, %v3878
      %v4087 = vpop.permute.xlu0 %4086
      %4090 = vset.pattern.permute.xlu0 0
      %4091 = vperm.xlu0 %4090, %v3879
      %v4092 = vpop.permute.xlu0 %4091
      %4095 = vset.pattern.permute.xlu0 0
      %4096 = vperm.xlu0 %4095, %v3880
      %v4097 = vpop.permute.xlu0 %4096
      %4100 = vset.pattern.permute.xlu0 0
      %4101 = vperm.xlu0 %4100, %v3881
      %v4102 = vpop.permute.xlu0 %4101
      %4105 = vset.pattern.permute.xlu0 0
      %4106 = vperm.xlu0 %4105, %v3882
      %v4107 = vpop.permute.xlu0 %4106
      %4110 = vset.pattern.permute.xlu0 0
      %4111 = vperm.xlu0 %4110, %v3883
      %v4112 = vpop.permute.xlu0 %4111
      %4115 = vset.pattern.permute.xlu0 0
      %4116 = vperm.xlu0 %4115, %v3884
      %v4117 = vpop.permute.xlu0 %4116
      %4120 = vset.pattern.permute.xlu0 0
      %4121 = vperm.xlu0 %4120, %v3885
      %v4122 = vpop.permute.xlu0 %4121
      %4125 = vset.pattern.permute.xlu0 0
      %4126 = vperm.xlu0 %4125, %v3886
      %v4127 = vpop.permute.xlu0 %4126
      %4130 = vset.pattern.permute.xlu0 0
      %4131 = vperm.xlu0 %4130, %v3887
      %v4132 = vpop.permute.xlu0 %4131
      %4135 = vset.pattern.permute.xlu0 0
      %4136 = vperm.xlu0 %4135, %v3888
      %v4137 = vpop.permute.xlu0 %4136
      %4140 = vset.pattern.permute.xlu0 0
      %4141 = vperm.xlu0 %4140, %v3889
      %v4142 = vpop.permute.xlu0 %4141
      %4145 = vset.pattern.permute.xlu0 0
      %4146 = vperm.xlu0 %4145, %v3890
      %v4147 = vpop.permute.xlu0 %4146
      %4150 = vset.pattern.permute.xlu0 0
      %4151 = vperm.xlu0 %4150, %v3891
      %v4152 = vpop.permute.xlu0 %4151
      %4155 = vset.pattern.permute.xlu0 0
      %4156 = vperm.xlu0 %4155, %v3892
      %v4157 = vpop.permute.xlu0 %4156
      %4160 = vset.pattern.permute.xlu0 0
      %4161 = vperm.xlu0 %4160, %v3893
      %v4162 = vpop.permute.xlu0 %4161
      %4165 = vset.pattern.permute.xlu0 0
      %4166 = vperm.xlu0 %4165, %v3894
      %v4167 = vpop.permute.xlu0 %4166
      %4170 = vset.pattern.permute.xlu0 0
      %4171 = vperm.xlu0 %4170, %v3895
      %v4172 = vpop.permute.xlu0 %4171
      %4175 = vset.pattern.permute.xlu0 0
      %4176 = vperm.xlu0 %4175, %v3896
      %v4177 = vpop.permute.xlu0 %4176
      %v4180 = vperm.slane %v3898, 0
      %v4182 = vmul.f32 %v3902, %v4180
      %v4183 = vmul.f32 %v3907, %v4180
      %v4184 = vmul.f32 %v3912, %v4180
      %v4185 = vmul.f32 %v3917, %v4180
      %v4186 = vmul.f32 %v3922, %v4180
      %v4187 = vmul.f32 %v3927, %v4180
      %v4188 = vmul.f32 %v3932, %v4180
      %v4189 = vmul.f32 %v3937, %v4180
      %v4190 = vmul.f32 %v3942, %v4180
      %v4191 = vmul.f32 %v3947, %v4180
      %v4192 = vmul.f32 %v3952, %v4180
      %v4193 = vmul.f32 %v3957, %v4180
      %v4194 = vmul.f32 %v3962, %v4180
      %v4195 = vmul.f32 %v3967, %v4180
      %v4196 = vmul.f32 %v3972, %v4180
      %v4197 = vmul.f32 %v3977, %v4180
      %v4198 = vmul.f32 %v3982, %v4180
      %v4199 = vmul.f32 %v3987, %v4180
      %v4200 = vmul.f32 %v3992, %v4180
      %v4201 = vmul.f32 %v3997, %v4180
      %v4202 = vmul.f32 %v4002, %v4180
      %v4203 = vmul.f32 %v4007, %v4180
      %v4204 = vmul.f32 %v4012, %v4180
      %v4205 = vmul.f32 %v4017, %v4180
      %v4206 = vmul.f32 %v4022, %v4180
      %v4207 = vmul.f32 %v4027, %v4180
      %v4208 = vmul.f32 %v4032, %v4180
      %v4209 = vmul.f32 %v4037, %v4180
      %v4210 = vmul.f32 %v4042, %v4180
      %v4211 = vmul.f32 %v4047, %v4180
      %v4212 = vmul.f32 %v4052, %v4180
      %v4213 = vmul.f32 %v4057, %v4180
      %v4214 = vmul.f32 %v4062, %v4180
      %v4215 = vmul.f32 %v4067, %v4180
      %v4216 = vmul.f32 %v4072, %v4180
      %v4217 = vmul.f32 %v4077, %v4180
      %v4218 = vmul.f32 %v4082, %v4180
      %v4219 = vmul.f32 %v4087, %v4180
      %v4220 = vmul.f32 %v4092, %v4180
      %v4221 = vmul.f32 %v4097, %v4180
      %v4222 = vmul.f32 %v4102, %v4180
      %v4223 = vmul.f32 %v4107, %v4180
      %v4224 = vmul.f32 %v4112, %v4180
      %v4225 = vmul.f32 %v4117, %v4180
      %v4226 = vmul.f32 %v4122, %v4180
      %v4227 = vmul.f32 %v4127, %v4180
      %v4228 = vmul.f32 %v4132, %v4180
      %v4229 = vmul.f32 %v4137, %v4180
      %v4230 = vmul.f32 %v4142, %v4180
      %v4231 = vmul.f32 %v4147, %v4180
      %v4232 = vmul.f32 %v4152, %v4180
      %v4233 = vmul.f32 %v4157, %v4180
      %v4234 = vmul.f32 %v4162, %v4180
      %v4235 = vmul.f32 %v4167, %v4180
      %v4236 = vmul.f32 %v4172, %v4180
      %v4237 = vmul.f32 %v4177, %v4180
      %v4238 = vadd.f32 %v3785, %v4182
      %v4239 = vadd.f32 %v3786, %v4183
      %v4240 = vadd.f32 %v3787, %v4184
      %v4241 = vadd.f32 %v3788, %v4185
      %v4242 = vadd.f32 %v3789, %v4186
      %v4243 = vadd.f32 %v3790, %v4187
      %v4244 = vadd.f32 %v3791, %v4188
      %v4245 = vadd.f32 %v3792, %v4189
      %v4246 = vadd.f32 %v3793, %v4190
      %v4247 = vadd.f32 %v3794, %v4191
      %v4248 = vadd.f32 %v3795, %v4192
      %v4249 = vadd.f32 %v3796, %v4193
      %v4250 = vadd.f32 %v3797, %v4194
      %v4251 = vadd.f32 %v3798, %v4195
      %v4252 = vadd.f32 %v3799, %v4196
      %v4253 = vadd.f32 %v3800, %v4197
      %v4254 = vadd.f32 %v3801, %v4198
      %v4255 = vadd.f32 %v3802, %v4199
      %v4256 = vadd.f32 %v3803, %v4200
      %v4257 = vadd.f32 %v3804, %v4201
      %v4258 = vadd.f32 %v3805, %v4202
      %v4259 = vadd.f32 %v3806, %v4203
      %v4260 = vadd.f32 %v3807, %v4204
      %v4261 = vadd.f32 %v3808, %v4205
      %v4262 = vadd.f32 %v3809, %v4206
      %v4263 = vadd.f32 %v3810, %v4207
      %v4264 = vadd.f32 %v3811, %v4208
      %v4265 = vadd.f32 %v3812, %v4209
      %v4266 = vadd.f32 %v3813, %v4210
      %v4267 = vadd.f32 %v3814, %v4211
      %v4268 = vadd.f32 %v3815, %v4212
      %v4269 = vadd.f32 %v3816, %v4213
      %v4270 = vadd.f32 %v3817, %v4214
      %v4271 = vadd.f32 %v3818, %v4215
      %v4272 = vadd.f32 %v3819, %v4216
      %v4273 = vadd.f32 %v3820, %v4217
      %v4274 = vadd.f32 %v3821, %v4218
      %v4275 = vadd.f32 %v3822, %v4219
      %v4276 = vadd.f32 %v3823, %v4220
      %v4277 = vadd.f32 %v3824, %v4221
      %v4278 = vadd.f32 %v3825, %v4222
      %v4279 = vadd.f32 %v3826, %v4223
      %v4280 = vadd.f32 %v3827, %v4224
      %v4281 = vadd.f32 %v3828, %v4225
      %v4282 = vadd.f32 %v3829, %v4226
      %v4283 = vadd.f32 %v3830, %v4227
      %v4284 = vadd.f32 %v3831, %v4228
      %v4285 = vadd.f32 %v3832, %v4229
      %v4286 = vadd.f32 %v3833, %v4230
      %v4287 = vadd.f32 %v3834, %v4231
      %v4288 = vadd.f32 %v3835, %v4232
      %v4289 = vadd.f32 %v3836, %v4233
      %v4290 = vadd.f32 %v3837, %v4234
      %v4291 = vadd.f32 %v3838, %v4235
      %v4292 = vadd.f32 %v3839, %v4236
      %v4293 = vadd.f32 %v3840, %v4237
      %v4294 = vld [vmem:[%s212 + $0x20] sm:$0xff]
      %v4295 = vld [vmem:[%s212 + $0x28] sm:$0xff]
      %v4296 = vld [vmem:[%s212 + $0x30] sm:$0xff]
      %v4297 = vld [vmem:[%s212 + $0x38] sm:$0xff]
      %v4298 = vld [vmem:[%s212 + $0x40] sm:$0xff]
      %v4299 = vld [vmem:[%s212 + $0x48] sm:$0xff]
      %v4300 = vld [vmem:[%s212 + $0x50] sm:$0xff]
      %v4301 = vld [vmem:[%s212 + $0x58] sm:$0xff]
      %v4302 = vld [vmem:[%s212 + $0x60] sm:$0xff]
      %v4303 = vld [vmem:[%s212 + $0x68] sm:$0xff]
      %v4304 = vld [vmem:[%s212 + $0x70] sm:$0xff]
      %v4305 = vld [vmem:[%s212 + $0x78] sm:$0xff]
      %v4306 = vld [vmem:[%s212 + $0x80] sm:$0xff]
      %v4307 = vld [vmem:[%s212 + $0x88] sm:$0xff]
      %v4308 = vld [vmem:[%s212 + $0x90] sm:$0xff]
      %v4309 = vld [vmem:[%s212 + $0x98] sm:$0xff]
      %v4310 = vld [vmem:[%s212 + $0xa0] sm:$0xff]
      %v4311 = vld [vmem:[%s212 + $0xa8] sm:$0xff]
      %v4312 = vld [vmem:[%s212 + $0xb0] sm:$0xff]
      %v4313 = vld [vmem:[%s212 + $0xb8] sm:$0xff]
      %v4314 = vld [vmem:[%s212 + $0xc0] sm:$0xff]
      %v4315 = vld [vmem:[%s212 + $0xc8] sm:$0xff]
      %v4316 = vld [vmem:[%s212 + $0xd0] sm:$0xff]
      %v4317 = vld [vmem:[%s212 + $0xd8] sm:$0xff]
      %v4318 = vld [vmem:[%s212 + $0xe0] sm:$0xff]
      %v4319 = vld [vmem:[%s212 + $0xe8] sm:$0xff]
      %v4320 = vld [vmem:[%s212 + $0xf0] sm:$0xff]
      %v4321 = vld [vmem:[%s212 + $0xf8] sm:$0xff]
      %v4322 = vld [vmem:[%s212 + $0x100] sm:$0xff]
      %v4323 = vld [vmem:[%s212 + $0x108] sm:$0xff]
      %v4324 = vld [vmem:[%s212 + $0x110] sm:$0xff]
      %v4325 = vld [vmem:[%s212 + $0x118] sm:$0xff]
      %v4326 = vld [vmem:[%s212 + $0x120] sm:$0xff]
      %v4327 = vld [vmem:[%s212 + $0x128] sm:$0xff]
      %v4328 = vld [vmem:[%s212 + $0x130] sm:$0xff]
      %v4329 = vld [vmem:[%s212 + $0x138] sm:$0xff]
      %v4330 = vld [vmem:[%s212 + $0x140] sm:$0xff]
      %v4331 = vld [vmem:[%s212 + $0x148] sm:$0xff]
      %v4332 = vld [vmem:[%s212 + $0x150] sm:$0xff]
      %v4333 = vld [vmem:[%s212 + $0x158] sm:$0xff]
      %v4334 = vld [vmem:[%s212 + $0x160] sm:$0xff]
      %v4335 = vld [vmem:[%s212 + $0x168] sm:$0xff]
      %v4336 = vld [vmem:[%s212 + $0x170] sm:$0xff]
      %v4337 = vld [vmem:[%s212 + $0x178] sm:$0xff]
      %v4338 = vld [vmem:[%s212 + $0x180] sm:$0xff]
      %v4339 = vld [vmem:[%s212 + $0x188] sm:$0xff]
      %v4340 = vld [vmem:[%s212 + $0x190] sm:$0xff]
      %v4341 = vld [vmem:[%s212 + $0x198] sm:$0xff]
      %v4342 = vld [vmem:[%s212 + $0x1a0] sm:$0xff]
      %v4343 = vld [vmem:[%s212 + $0x1a8] sm:$0xff]
      %v4344 = vld [vmem:[%s212 + $0x1b0] sm:$0xff]
      %v4345 = vld [vmem:[%s212 + $0x1b8] sm:$0xff]
      %v4346 = vld [vmem:[%s212 + $0x1c0] sm:$0xff]
      %v4347 = vld [vmem:[%s212 + $0x1c8] sm:$0xff]
      %v4348 = vld [vmem:[%s212 + $0x1d0] sm:$0xff]
      %v4349 = vld [vmem:[%s212 + $0x1d8] sm:$0xff]
      %s4350 = scalar_lea.vmem %s2, 9
      %v4351 = vld [vmem:[%s4350] sm:$0x1]
      %4353 = vset.pattern.permute.xlu0 0
      %4354 = vperm.xlu0 %4353, %v4294
      %v4355 = vpop.permute.xlu0 %4354
      %4358 = vset.pattern.permute.xlu0 0
      %4359 = vperm.xlu0 %4358, %v4295
      %v4360 = vpop.permute.xlu0 %4359
      %4363 = vset.pattern.permute.xlu0 0
      %4364 = vperm.xlu0 %4363, %v4296
      %v4365 = vpop.permute.xlu0 %4364
      %4368 = vset.pattern.permute.xlu0 0
      %4369 = vperm.xlu0 %4368, %v4297
      %v4370 = vpop.permute.xlu0 %4369
      %4373 = vset.pattern.permute.xlu0 0
      %4374 = vperm.xlu0 %4373, %v4298
      %v4375 = vpop.permute.xlu0 %4374
      %4378 = vset.pattern.permute.xlu0 0
      %4379 = vperm.xlu0 %4378, %v4299
      %v4380 = vpop.permute.xlu0 %4379
      %4383 = vset.pattern.permute.xlu0 0
      %4384 = vperm.xlu0 %4383, %v4300
      %v4385 = vpop.permute.xlu0 %4384
      %4388 = vset.pattern.permute.xlu0 0
      %4389 = vperm.xlu0 %4388, %v4301
      %v4390 = vpop.permute.xlu0 %4389
      %4393 = vset.pattern.permute.xlu0 0
      %4394 = vperm.xlu0 %4393, %v4302
      %v4395 = vpop.permute.xlu0 %4394
      %4398 = vset.pattern.permute.xlu0 0
      %4399 = vperm.xlu0 %4398, %v4303
      %v4400 = vpop.permute.xlu0 %4399
      %4403 = vset.pattern.permute.xlu0 0
      %4404 = vperm.xlu0 %4403, %v4304
      %v4405 = vpop.permute.xlu0 %4404
      %4408 = vset.pattern.permute.xlu0 0
      %4409 = vperm.xlu0 %4408, %v4305
      %v4410 = vpop.permute.xlu0 %4409
      %4413 = vset.pattern.permute.xlu0 0
      %4414 = vperm.xlu0 %4413, %v4306
      %v4415 = vpop.permute.xlu0 %4414
      %4418 = vset.pattern.permute.xlu0 0
      %4419 = vperm.xlu0 %4418, %v4307
      %v4420 = vpop.permute.xlu0 %4419
      %4423 = vset.pattern.permute.xlu0 0
      %4424 = vperm.xlu0 %4423, %v4308
      %v4425 = vpop.permute.xlu0 %4424
      %4428 = vset.pattern.permute.xlu0 0
      %4429 = vperm.xlu0 %4428, %v4309
      %v4430 = vpop.permute.xlu0 %4429
      %4433 = vset.pattern.permute.xlu0 0
      %4434 = vperm.xlu0 %4433, %v4310
      %v4435 = vpop.permute.xlu0 %4434
      %4438 = vset.pattern.permute.xlu0 0
      %4439 = vperm.xlu0 %4438, %v4311
      %v4440 = vpop.permute.xlu0 %4439
      %4443 = vset.pattern.permute.xlu0 0
      %4444 = vperm.xlu0 %4443, %v4312
      %v4445 = vpop.permute.xlu0 %4444
      %4448 = vset.pattern.permute.xlu0 0
      %4449 = vperm.xlu0 %4448, %v4313
      %v4450 = vpop.permute.xlu0 %4449
      %4453 = vset.pattern.permute.xlu0 0
      %4454 = vperm.xlu0 %4453, %v4314
      %v4455 = vpop.permute.xlu0 %4454
      %4458 = vset.pattern.permute.xlu0 0
      %4459 = vperm.xlu0 %4458, %v4315
      %v4460 = vpop.permute.xlu0 %4459
      %4463 = vset.pattern.permute.xlu0 0
      %4464 = vperm.xlu0 %4463, %v4316
      %v4465 = vpop.permute.xlu0 %4464
      %4468 = vset.pattern.permute.xlu0 0
      %4469 = vperm.xlu0 %4468, %v4317
      %v4470 = vpop.permute.xlu0 %4469
      %4473 = vset.pattern.permute.xlu0 0
      %4474 = vperm.xlu0 %4473, %v4318
      %v4475 = vpop.permute.xlu0 %4474
      %4478 = vset.pattern.permute.xlu0 0
      %4479 = vperm.xlu0 %4478, %v4319
      %v4480 = vpop.permute.xlu0 %4479
      %4483 = vset.pattern.permute.xlu0 0
      %4484 = vperm.xlu0 %4483, %v4320
      %v4485 = vpop.permute.xlu0 %4484
      %4488 = vset.pattern.permute.xlu0 0
      %4489 = vperm.xlu0 %4488, %v4321
      %v4490 = vpop.permute.xlu0 %4489
      %4493 = vset.pattern.permute.xlu0 0
      %4494 = vperm.xlu0 %4493, %v4322
      %v4495 = vpop.permute.xlu0 %4494
      %4498 = vset.pattern.permute.xlu0 0
      %4499 = vperm.xlu0 %4498, %v4323
      %v4500 = vpop.permute.xlu0 %4499
      %4503 = vset.pattern.permute.xlu0 0
      %4504 = vperm.xlu0 %4503, %v4324
      %v4505 = vpop.permute.xlu0 %4504
      %4508 = vset.pattern.permute.xlu0 0
      %4509 = vperm.xlu0 %4508, %v4325
      %v4510 = vpop.permute.xlu0 %4509
      %4513 = vset.pattern.permute.xlu0 0
      %4514 = vperm.xlu0 %4513, %v4326
      %v4515 = vpop.permute.xlu0 %4514
      %4518 = vset.pattern.permute.xlu0 0
      %4519 = vperm.xlu0 %4518, %v4327
      %v4520 = vpop.permute.xlu0 %4519
      %4523 = vset.pattern.permute.xlu0 0
      %4524 = vperm.xlu0 %4523, %v4328
      %v4525 = vpop.permute.xlu0 %4524
      %4528 = vset.pattern.permute.xlu0 0
      %4529 = vperm.xlu0 %4528, %v4329
      %v4530 = vpop.permute.xlu0 %4529
      %4533 = vset.pattern.permute.xlu0 0
      %4534 = vperm.xlu0 %4533, %v4330
      %v4535 = vpop.permute.xlu0 %4534
      %4538 = vset.pattern.permute.xlu0 0
      %4539 = vperm.xlu0 %4538, %v4331
      %v4540 = vpop.permute.xlu0 %4539
      %4543 = vset.pattern.permute.xlu0 0
      %4544 = vperm.xlu0 %4543, %v4332
      %v4545 = vpop.permute.xlu0 %4544
      %4548 = vset.pattern.permute.xlu0 0
      %4549 = vperm.xlu0 %4548, %v4333
      %v4550 = vpop.permute.xlu0 %4549
      %4553 = vset.pattern.permute.xlu0 0
      %4554 = vperm.xlu0 %4553, %v4334
      %v4555 = vpop.permute.xlu0 %4554
      %4558 = vset.pattern.permute.xlu0 0
      %4559 = vperm.xlu0 %4558, %v4335
      %v4560 = vpop.permute.xlu0 %4559
      %4563 = vset.pattern.permute.xlu0 0
      %4564 = vperm.xlu0 %4563, %v4336
      %v4565 = vpop.permute.xlu0 %4564
      %4568 = vset.pattern.permute.xlu0 0
      %4569 = vperm.xlu0 %4568, %v4337
      %v4570 = vpop.permute.xlu0 %4569
      %4573 = vset.pattern.permute.xlu0 0
      %4574 = vperm.xlu0 %4573, %v4338
      %v4575 = vpop.permute.xlu0 %4574
      %4578 = vset.pattern.permute.xlu0 0
      %4579 = vperm.xlu0 %4578, %v4339
      %v4580 = vpop.permute.xlu0 %4579
      %4583 = vset.pattern.permute.xlu0 0
      %4584 = vperm.xlu0 %4583, %v4340
      %v4585 = vpop.permute.xlu0 %4584
      %4588 = vset.pattern.permute.xlu0 0
      %4589 = vperm.xlu0 %4588, %v4341
      %v4590 = vpop.permute.xlu0 %4589
      %4593 = vset.pattern.permute.xlu0 0
      %4594 = vperm.xlu0 %4593, %v4342
      %v4595 = vpop.permute.xlu0 %4594
      %4598 = vset.pattern.permute.xlu0 0
      %4599 = vperm.xlu0 %4598, %v4343
      %v4600 = vpop.permute.xlu0 %4599
      %4603 = vset.pattern.permute.xlu0 0
      %4604 = vperm.xlu0 %4603, %v4344
      %v4605 = vpop.permute.xlu0 %4604
      %4608 = vset.pattern.permute.xlu0 0
      %4609 = vperm.xlu0 %4608, %v4345
      %v4610 = vpop.permute.xlu0 %4609
      %4613 = vset.pattern.permute.xlu0 0
      %4614 = vperm.xlu0 %4613, %v4346
      %v4615 = vpop.permute.xlu0 %4614
      %4618 = vset.pattern.permute.xlu0 0
      %4619 = vperm.xlu0 %4618, %v4347
      %v4620 = vpop.permute.xlu0 %4619
      %4623 = vset.pattern.permute.xlu0 0
      %4624 = vperm.xlu0 %4623, %v4348
      %v4625 = vpop.permute.xlu0 %4624
      %4628 = vset.pattern.permute.xlu0 0
      %4629 = vperm.xlu0 %4628, %v4349
      %v4630 = vpop.permute.xlu0 %4629
      %v4633 = vperm.slane %v4351, 0
      %v4635 = vmul.f32 %v4355, %v4633
      %v4636 = vmul.f32 %v4360, %v4633
      %v4637 = vmul.f32 %v4365, %v4633
      %v4638 = vmul.f32 %v4370, %v4633
      %v4639 = vmul.f32 %v4375, %v4633
      %v4640 = vmul.f32 %v4380, %v4633
      %v4641 = vmul.f32 %v4385, %v4633
      %v4642 = vmul.f32 %v4390, %v4633
      %v4643 = vmul.f32 %v4395, %v4633
      %v4644 = vmul.f32 %v4400, %v4633
      %v4645 = vmul.f32 %v4405, %v4633
      %v4646 = vmul.f32 %v4410, %v4633
      %v4647 = vmul.f32 %v4415, %v4633
      %v4648 = vmul.f32 %v4420, %v4633
      %v4649 = vmul.f32 %v4425, %v4633
      %v4650 = vmul.f32 %v4430, %v4633
      %v4651 = vmul.f32 %v4435, %v4633
      %v4652 = vmul.f32 %v4440, %v4633
      %v4653 = vmul.f32 %v4445, %v4633
      %v4654 = vmul.f32 %v4450, %v4633
      %v4655 = vmul.f32 %v4455, %v4633
      %v4656 = vmul.f32 %v4460, %v4633
      %v4657 = vmul.f32 %v4465, %v4633
      %v4658 = vmul.f32 %v4470, %v4633
      %v4659 = vmul.f32 %v4475, %v4633
      %v4660 = vmul.f32 %v4480, %v4633
      %v4661 = vmul.f32 %v4485, %v4633
      %v4662 = vmul.f32 %v4490, %v4633
      %v4663 = vmul.f32 %v4495, %v4633
      %v4664 = vmul.f32 %v4500, %v4633
      %v4665 = vmul.f32 %v4505, %v4633
      %v4666 = vmul.f32 %v4510, %v4633
      %v4667 = vmul.f32 %v4515, %v4633
      %v4668 = vmul.f32 %v4520, %v4633
      %v4669 = vmul.f32 %v4525, %v4633
      %v4670 = vmul.f32 %v4530, %v4633
      %v4671 = vmul.f32 %v4535, %v4633
      %v4672 = vmul.f32 %v4540, %v4633
      %v4673 = vmul.f32 %v4545, %v4633
      %v4674 = vmul.f32 %v4550, %v4633
      %v4675 = vmul.f32 %v4555, %v4633
      %v4676 = vmul.f32 %v4560, %v4633
      %v4677 = vmul.f32 %v4565, %v4633
      %v4678 = vmul.f32 %v4570, %v4633
      %v4679 = vmul.f32 %v4575, %v4633
      %v4680 = vmul.f32 %v4580, %v4633
      %v4681 = vmul.f32 %v4585, %v4633
      %v4682 = vmul.f32 %v4590, %v4633
      %v4683 = vmul.f32 %v4595, %v4633
      %v4684 = vmul.f32 %v4600, %v4633
      %v4685 = vmul.f32 %v4605, %v4633
      %v4686 = vmul.f32 %v4610, %v4633
      %v4687 = vmul.f32 %v4615, %v4633
      %v4688 = vmul.f32 %v4620, %v4633
      %v4689 = vmul.f32 %v4625, %v4633
      %v4690 = vmul.f32 %v4630, %v4633
      %v4691 = vadd.f32 %v4238, %v4635
      %v4692 = vadd.f32 %v4239, %v4636
      %v4693 = vadd.f32 %v4240, %v4637
      %v4694 = vadd.f32 %v4241, %v4638
      %v4695 = vadd.f32 %v4242, %v4639
      %v4696 = vadd.f32 %v4243, %v4640
      %v4697 = vadd.f32 %v4244, %v4641
      %v4698 = vadd.f32 %v4245, %v4642
      %v4699 = vadd.f32 %v4246, %v4643
      %v4700 = vadd.f32 %v4247, %v4644
      %v4701 = vadd.f32 %v4248, %v4645
      %v4702 = vadd.f32 %v4249, %v4646
      %v4703 = vadd.f32 %v4250, %v4647
      %v4704 = vadd.f32 %v4251, %v4648
      %v4705 = vadd.f32 %v4252, %v4649
      %v4706 = vadd.f32 %v4253, %v4650
      %v4707 = vadd.f32 %v4254, %v4651
      %v4708 = vadd.f32 %v4255, %v4652
      %v4709 = vadd.f32 %v4256, %v4653
      %v4710 = vadd.f32 %v4257, %v4654
      %v4711 = vadd.f32 %v4258, %v4655
      %v4712 = vadd.f32 %v4259, %v4656
      %v4713 = vadd.f32 %v4260, %v4657
      %v4714 = vadd.f32 %v4261, %v4658
      %v4715 = vadd.f32 %v4262, %v4659
      %v4716 = vadd.f32 %v4263, %v4660
      %v4717 = vadd.f32 %v4264, %v4661
      %v4718 = vadd.f32 %v4265, %v4662
      %v4719 = vadd.f32 %v4266, %v4663
      %v4720 = vadd.f32 %v4267, %v4664
      %v4721 = vadd.f32 %v4268, %v4665
      %v4722 = vadd.f32 %v4269, %v4666
      %v4723 = vadd.f32 %v4270, %v4667
      %v4724 = vadd.f32 %v4271, %v4668
      %v4725 = vadd.f32 %v4272, %v4669
      %v4726 = vadd.f32 %v4273, %v4670
      %v4727 = vadd.f32 %v4274, %v4671
      %v4728 = vadd.f32 %v4275, %v4672
      %v4729 = vadd.f32 %v4276, %v4673
      %v4730 = vadd.f32 %v4277, %v4674
      %v4731 = vadd.f32 %v4278, %v4675
      %v4732 = vadd.f32 %v4279, %v4676
      %v4733 = vadd.f32 %v4280, %v4677
      %v4734 = vadd.f32 %v4281, %v4678
      %v4735 = vadd.f32 %v4282, %v4679
      %v4736 = vadd.f32 %v4283, %v4680
      %v4737 = vadd.f32 %v4284, %v4681
      %v4738 = vadd.f32 %v4285, %v4682
      %v4739 = vadd.f32 %v4286, %v4683
      %v4740 = vadd.f32 %v4287, %v4684
      %v4741 = vadd.f32 %v4288, %v4685
      %v4742 = vadd.f32 %v4289, %v4686
      %v4743 = vadd.f32 %v4290, %v4687
      %v4744 = vadd.f32 %v4291, %v4688
      %v4745 = vadd.f32 %v4292, %v4689
      %v4746 = vadd.f32 %v4293, %v4690
      %v4747 = vld [vmem:[%s207 + $0x21] sm:$0xff]
      %v4748 = vld [vmem:[%s207 + $0x29] sm:$0xff]
      %v4749 = vld [vmem:[%s207 + $0x31] sm:$0xff]
      %v4750 = vld [vmem:[%s207 + $0x39] sm:$0xff]
      %v4751 = vld [vmem:[%s207 + $0x41] sm:$0xff]
      %v4752 = vld [vmem:[%s207 + $0x49] sm:$0xff]
      %v4753 = vld [vmem:[%s207 + $0x51] sm:$0xff]
      %v4754 = vld [vmem:[%s207 + $0x59] sm:$0xff]
      %v4755 = vld [vmem:[%s207 + $0x61] sm:$0xff]
      %v4756 = vld [vmem:[%s207 + $0x69] sm:$0xff]
      %v4757 = vld [vmem:[%s207 + $0x71] sm:$0xff]
      %v4758 = vld [vmem:[%s207 + $0x79] sm:$0xff]
      %v4759 = vld [vmem:[%s207 + $0x81] sm:$0xff]
      %v4760 = vld [vmem:[%s207 + $0x89] sm:$0xff]
      %v4761 = vld [vmem:[%s207 + $0x91] sm:$0xff]
      %v4762 = vld [vmem:[%s207 + $0x99] sm:$0xff]
      %v4763 = vld [vmem:[%s207 + $0xa1] sm:$0xff]
      %v4764 = vld [vmem:[%s207 + $0xa9] sm:$0xff]
      %v4765 = vld [vmem:[%s207 + $0xb1] sm:$0xff]
      %v4766 = vld [vmem:[%s207 + $0xb9] sm:$0xff]
      %v4767 = vld [vmem:[%s207 + $0xc1] sm:$0xff]
      %v4768 = vld [vmem:[%s207 + $0xc9] sm:$0xff]
      %v4769 = vld [vmem:[%s207 + $0xd1] sm:$0xff]
      %v4770 = vld [vmem:[%s207 + $0xd9] sm:$0xff]
      %v4771 = vld [vmem:[%s207 + $0xe1] sm:$0xff]
      %v4772 = vld [vmem:[%s207 + $0xe9] sm:$0xff]
      %v4773 = vld [vmem:[%s207 + $0xf1] sm:$0xff]
      %v4774 = vld [vmem:[%s207 + $0xf9] sm:$0xff]
      %v4775 = vld [vmem:[%s207 + $0x101] sm:$0xff]
      %v4776 = vld [vmem:[%s207 + $0x109] sm:$0xff]
      %v4777 = vld [vmem:[%s207 + $0x111] sm:$0xff]
      %v4778 = vld [vmem:[%s207 + $0x119] sm:$0xff]
      %v4779 = vld [vmem:[%s207 + $0x121] sm:$0xff]
      %v4780 = vld [vmem:[%s207 + $0x129] sm:$0xff]
      %v4781 = vld [vmem:[%s207 + $0x131] sm:$0xff]
      %v4782 = vld [vmem:[%s207 + $0x139] sm:$0xff]
      %v4783 = vld [vmem:[%s207 + $0x141] sm:$0xff]
      %v4784 = vld [vmem:[%s207 + $0x149] sm:$0xff]
      %v4785 = vld [vmem:[%s207 + $0x151] sm:$0xff]
      %v4786 = vld [vmem:[%s207 + $0x159] sm:$0xff]
      %v4787 = vld [vmem:[%s207 + $0x161] sm:$0xff]
      %v4788 = vld [vmem:[%s207 + $0x169] sm:$0xff]
      %v4789 = vld [vmem:[%s207 + $0x171] sm:$0xff]
      %v4790 = vld [vmem:[%s207 + $0x179] sm:$0xff]
      %v4791 = vld [vmem:[%s207 + $0x181] sm:$0xff]
      %v4792 = vld [vmem:[%s207 + $0x189] sm:$0xff]
      %v4793 = vld [vmem:[%s207 + $0x191] sm:$0xff]
      %v4794 = vld [vmem:[%s207 + $0x199] sm:$0xff]
      %v4795 = vld [vmem:[%s207 + $0x1a1] sm:$0xff]
      %v4796 = vld [vmem:[%s207 + $0x1a9] sm:$0xff]
      %v4797 = vld [vmem:[%s207 + $0x1b1] sm:$0xff]
      %v4798 = vld [vmem:[%s207 + $0x1b9] sm:$0xff]
      %v4799 = vld [vmem:[%s207 + $0x1c1] sm:$0xff]
      %v4800 = vld [vmem:[%s207 + $0x1c9] sm:$0xff]
      %v4801 = vld [vmem:[%s207 + $0x1d1] sm:$0xff]
      %v4802 = vld [vmem:[%s207 + $0x1d9] sm:$0xff]
      %s4803 = scalar_lea.vmem %s2, 10
      %v4804 = vld [vmem:[%s4803] sm:$0x1]
      %4806 = vset.pattern.permute.xlu0 0
      %4807 = vperm.xlu0 %4806, %v4747
      %v4808 = vpop.permute.xlu0 %4807
      %4811 = vset.pattern.permute.xlu0 0
      %4812 = vperm.xlu0 %4811, %v4748
      %v4813 = vpop.permute.xlu0 %4812
      %4816 = vset.pattern.permute.xlu0 0
      %4817 = vperm.xlu0 %4816, %v4749
      %v4818 = vpop.permute.xlu0 %4817
      %4821 = vset.pattern.permute.xlu0 0
      %4822 = vperm.xlu0 %4821, %v4750
      %v4823 = vpop.permute.xlu0 %4822
      %4826 = vset.pattern.permute.xlu0 0
      %4827 = vperm.xlu0 %4826, %v4751
      %v4828 = vpop.permute.xlu0 %4827
      %4831 = vset.pattern.permute.xlu0 0
      %4832 = vperm.xlu0 %4831, %v4752
      %v4833 = vpop.permute.xlu0 %4832
      %4836 = vset.pattern.permute.xlu0 0
      %4837 = vperm.xlu0 %4836, %v4753
      %v4838 = vpop.permute.xlu0 %4837
      %4841 = vset.pattern.permute.xlu0 0
      %4842 = vperm.xlu0 %4841, %v4754
      %v4843 = vpop.permute.xlu0 %4842
      %4846 = vset.pattern.permute.xlu0 0
      %4847 = vperm.xlu0 %4846, %v4755
      %v4848 = vpop.permute.xlu0 %4847
      %4851 = vset.pattern.permute.xlu0 0
      %4852 = vperm.xlu0 %4851, %v4756
      %v4853 = vpop.permute.xlu0 %4852
      %4856 = vset.pattern.permute.xlu0 0
      %4857 = vperm.xlu0 %4856, %v4757
      %v4858 = vpop.permute.xlu0 %4857
      %4861 = vset.pattern.permute.xlu0 0
      %4862 = vperm.xlu0 %4861, %v4758
      %v4863 = vpop.permute.xlu0 %4862
      %4866 = vset.pattern.permute.xlu0 0
      %4867 = vperm.xlu0 %4866, %v4759
      %v4868 = vpop.permute.xlu0 %4867
      %4871 = vset.pattern.permute.xlu0 0
      %4872 = vperm.xlu0 %4871, %v4760
      %v4873 = vpop.permute.xlu0 %4872
      %4876 = vset.pattern.permute.xlu0 0
      %4877 = vperm.xlu0 %4876, %v4761
      %v4878 = vpop.permute.xlu0 %4877
      %4881 = vset.pattern.permute.xlu0 0
      %4882 = vperm.xlu0 %4881, %v4762
      %v4883 = vpop.permute.xlu0 %4882
      %4886 = vset.pattern.permute.xlu0 0
      %4887 = vperm.xlu0 %4886, %v4763
      %v4888 = vpop.permute.xlu0 %4887
      %4891 = vset.pattern.permute.xlu0 0
      %4892 = vperm.xlu0 %4891, %v4764
      %v4893 = vpop.permute.xlu0 %4892
      %4896 = vset.pattern.permute.xlu0 0
      %4897 = vperm.xlu0 %4896, %v4765
      %v4898 = vpop.permute.xlu0 %4897
      %4901 = vset.pattern.permute.xlu0 0
      %4902 = vperm.xlu0 %4901, %v4766
      %v4903 = vpop.permute.xlu0 %4902
      %4906 = vset.pattern.permute.xlu0 0
      %4907 = vperm.xlu0 %4906, %v4767
      %v4908 = vpop.permute.xlu0 %4907
      %4911 = vset.pattern.permute.xlu0 0
      %4912 = vperm.xlu0 %4911, %v4768
      %v4913 = vpop.permute.xlu0 %4912
      %4916 = vset.pattern.permute.xlu0 0
      %4917 = vperm.xlu0 %4916, %v4769
      %v4918 = vpop.permute.xlu0 %4917
      %4921 = vset.pattern.permute.xlu0 0
      %4922 = vperm.xlu0 %4921, %v4770
      %v4923 = vpop.permute.xlu0 %4922
      %4926 = vset.pattern.permute.xlu0 0
      %4927 = vperm.xlu0 %4926, %v4771
      %v4928 = vpop.permute.xlu0 %4927
      %4931 = vset.pattern.permute.xlu0 0
      %4932 = vperm.xlu0 %4931, %v4772
      %v4933 = vpop.permute.xlu0 %4932
      %4936 = vset.pattern.permute.xlu0 0
      %4937 = vperm.xlu0 %4936, %v4773
      %v4938 = vpop.permute.xlu0 %4937
      %4941 = vset.pattern.permute.xlu0 0
      %4942 = vperm.xlu0 %4941, %v4774
      %v4943 = vpop.permute.xlu0 %4942
      %4946 = vset.pattern.permute.xlu0 0
      %4947 = vperm.xlu0 %4946, %v4775
      %v4948 = vpop.permute.xlu0 %4947
      %4951 = vset.pattern.permute.xlu0 0
      %4952 = vperm.xlu0 %4951, %v4776
      %v4953 = vpop.permute.xlu0 %4952
      %4956 = vset.pattern.permute.xlu0 0
      %4957 = vperm.xlu0 %4956, %v4777
      %v4958 = vpop.permute.xlu0 %4957
      %4961 = vset.pattern.permute.xlu0 0
      %4962 = vperm.xlu0 %4961, %v4778
      %v4963 = vpop.permute.xlu0 %4962
      %4966 = vset.pattern.permute.xlu0 0
      %4967 = vperm.xlu0 %4966, %v4779
      %v4968 = vpop.permute.xlu0 %4967
      %4971 = vset.pattern.permute.xlu0 0
      %4972 = vperm.xlu0 %4971, %v4780
      %v4973 = vpop.permute.xlu0 %4972
      %4976 = vset.pattern.permute.xlu0 0
      %4977 = vperm.xlu0 %4976, %v4781
      %v4978 = vpop.permute.xlu0 %4977
      %4981 = vset.pattern.permute.xlu0 0
      %4982 = vperm.xlu0 %4981, %v4782
      %v4983 = vpop.permute.xlu0 %4982
      %4986 = vset.pattern.permute.xlu0 0
      %4987 = vperm.xlu0 %4986, %v4783
      %v4988 = vpop.permute.xlu0 %4987
      %4991 = vset.pattern.permute.xlu0 0
      %4992 = vperm.xlu0 %4991, %v4784
      %v4993 = vpop.permute.xlu0 %4992
      %4996 = vset.pattern.permute.xlu0 0
      %4997 = vperm.xlu0 %4996, %v4785
      %v4998 = vpop.permute.xlu0 %4997
      %5001 = vset.pattern.permute.xlu0 0
      %5002 = vperm.xlu0 %5001, %v4786
      %v5003 = vpop.permute.xlu0 %5002
      %5006 = vset.pattern.permute.xlu0 0
      %5007 = vperm.xlu0 %5006, %v4787
      %v5008 = vpop.permute.xlu0 %5007
      %5011 = vset.pattern.permute.xlu0 0
      %5012 = vperm.xlu0 %5011, %v4788
      %v5013 = vpop.permute.xlu0 %5012
      %5016 = vset.pattern.permute.xlu0 0
      %5017 = vperm.xlu0 %5016, %v4789
      %v5018 = vpop.permute.xlu0 %5017
      %5021 = vset.pattern.permute.xlu0 0
      %5022 = vperm.xlu0 %5021, %v4790
      %v5023 = vpop.permute.xlu0 %5022
      %5026 = vset.pattern.permute.xlu0 0
      %5027 = vperm.xlu0 %5026, %v4791
      %v5028 = vpop.permute.xlu0 %5027
      %5031 = vset.pattern.permute.xlu0 0
      %5032 = vperm.xlu0 %5031, %v4792
      %v5033 = vpop.permute.xlu0 %5032
      %5036 = vset.pattern.permute.xlu0 0
      %5037 = vperm.xlu0 %5036, %v4793
      %v5038 = vpop.permute.xlu0 %5037
      %5041 = vset.pattern.permute.xlu0 0
      %5042 = vperm.xlu0 %5041, %v4794
      %v5043 = vpop.permute.xlu0 %5042
      %5046 = vset.pattern.permute.xlu0 0
      %5047 = vperm.xlu0 %5046, %v4795
      %v5048 = vpop.permute.xlu0 %5047
      %5051 = vset.pattern.permute.xlu0 0
      %5052 = vperm.xlu0 %5051, %v4796
      %v5053 = vpop.permute.xlu0 %5052
      %5056 = vset.pattern.permute.xlu0 0
      %5057 = vperm.xlu0 %5056, %v4797
      %v5058 = vpop.permute.xlu0 %5057
      %5061 = vset.pattern.permute.xlu0 0
      %5062 = vperm.xlu0 %5061, %v4798
      %v5063 = vpop.permute.xlu0 %5062
      %5066 = vset.pattern.permute.xlu0 0
      %5067 = vperm.xlu0 %5066, %v4799
      %v5068 = vpop.permute.xlu0 %5067
      %5071 = vset.pattern.permute.xlu0 0
      %5072 = vperm.xlu0 %5071, %v4800
      %v5073 = vpop.permute.xlu0 %5072
      %5076 = vset.pattern.permute.xlu0 0
      %5077 = vperm.xlu0 %5076, %v4801
      %v5078 = vpop.permute.xlu0 %5077
      %5081 = vset.pattern.permute.xlu0 0
      %5082 = vperm.xlu0 %5081, %v4802
      %v5083 = vpop.permute.xlu0 %5082
      %v5086 = vperm.slane %v4804, 0
      %v5088 = vmul.f32 %v4808, %v5086
      %v5089 = vmul.f32 %v4813, %v5086
      %v5090 = vmul.f32 %v4818, %v5086
      %v5091 = vmul.f32 %v4823, %v5086
      %v5092 = vmul.f32 %v4828, %v5086
      %v5093 = vmul.f32 %v4833, %v5086
      %v5094 = vmul.f32 %v4838, %v5086
      %v5095 = vmul.f32 %v4843, %v5086
      %v5096 = vmul.f32 %v4848, %v5086
      %v5097 = vmul.f32 %v4853, %v5086
      %v5098 = vmul.f32 %v4858, %v5086
      %v5099 = vmul.f32 %v4863, %v5086
      %v5100 = vmul.f32 %v4868, %v5086
      %v5101 = vmul.f32 %v4873, %v5086
      %v5102 = vmul.f32 %v4878, %v5086
      %v5103 = vmul.f32 %v4883, %v5086
      %v5104 = vmul.f32 %v4888, %v5086
      %v5105 = vmul.f32 %v4893, %v5086
      %v5106 = vmul.f32 %v4898, %v5086
      %v5107 = vmul.f32 %v4903, %v5086
      %v5108 = vmul.f32 %v4908, %v5086
      %v5109 = vmul.f32 %v4913, %v5086
      %v5110 = vmul.f32 %v4918, %v5086
      %v5111 = vmul.f32 %v4923, %v5086
      %v5112 = vmul.f32 %v4928, %v5086
      %v5113 = vmul.f32 %v4933, %v5086
      %v5114 = vmul.f32 %v4938, %v5086
      %v5115 = vmul.f32 %v4943, %v5086
      %v5116 = vmul.f32 %v4948, %v5086
      %v5117 = vmul.f32 %v4953, %v5086
      %v5118 = vmul.f32 %v4958, %v5086
      %v5119 = vmul.f32 %v4963, %v5086
      %v5120 = vmul.f32 %v4968, %v5086
      %v5121 = vmul.f32 %v4973, %v5086
      %v5122 = vmul.f32 %v4978, %v5086
      %v5123 = vmul.f32 %v4983, %v5086
      %v5124 = vmul.f32 %v4988, %v5086
      %v5125 = vmul.f32 %v4993, %v5086
      %v5126 = vmul.f32 %v4998, %v5086
      %v5127 = vmul.f32 %v5003, %v5086
      %v5128 = vmul.f32 %v5008, %v5086
      %v5129 = vmul.f32 %v5013, %v5086
      %v5130 = vmul.f32 %v5018, %v5086
      %v5131 = vmul.f32 %v5023, %v5086
      %v5132 = vmul.f32 %v5028, %v5086
      %v5133 = vmul.f32 %v5033, %v5086
      %v5134 = vmul.f32 %v5038, %v5086
      %v5135 = vmul.f32 %v5043, %v5086
      %v5136 = vmul.f32 %v5048, %v5086
      %v5137 = vmul.f32 %v5053, %v5086
      %v5138 = vmul.f32 %v5058, %v5086
      %v5139 = vmul.f32 %v5063, %v5086
      %v5140 = vmul.f32 %v5068, %v5086
      %v5141 = vmul.f32 %v5073, %v5086
      %v5142 = vmul.f32 %v5078, %v5086
      %v5143 = vmul.f32 %v5083, %v5086
      %v5144 = vadd.f32 %v4691, %v5088
      %v5145 = vadd.f32 %v4692, %v5089
      %v5146 = vadd.f32 %v4693, %v5090
      %v5147 = vadd.f32 %v4694, %v5091
      %v5148 = vadd.f32 %v4695, %v5092
      %v5149 = vadd.f32 %v4696, %v5093
      %v5150 = vadd.f32 %v4697, %v5094
      %v5151 = vadd.f32 %v4698, %v5095
      %v5152 = vadd.f32 %v4699, %v5096
      %v5153 = vadd.f32 %v4700, %v5097
      %v5154 = vadd.f32 %v4701, %v5098
      %v5155 = vadd.f32 %v4702, %v5099
      %v5156 = vadd.f32 %v4703, %v5100
      %v5157 = vadd.f32 %v4704, %v5101
      %v5158 = vadd.f32 %v4705, %v5102
      %v5159 = vadd.f32 %v4706, %v5103
      %v5160 = vadd.f32 %v4707, %v5104
      %v5161 = vadd.f32 %v4708, %v5105
      %v5162 = vadd.f32 %v4709, %v5106
      %v5163 = vadd.f32 %v4710, %v5107
      %v5164 = vadd.f32 %v4711, %v5108
      %v5165 = vadd.f32 %v4712, %v5109
      %v5166 = vadd.f32 %v4713, %v5110
      %v5167 = vadd.f32 %v4714, %v5111
      %v5168 = vadd.f32 %v4715, %v5112
      %v5169 = vadd.f32 %v4716, %v5113
      %v5170 = vadd.f32 %v4717, %v5114
      %v5171 = vadd.f32 %v4718, %v5115
      %v5172 = vadd.f32 %v4719, %v5116
      %v5173 = vadd.f32 %v4720, %v5117
      %v5174 = vadd.f32 %v4721, %v5118
      %v5175 = vadd.f32 %v4722, %v5119
      %v5176 = vadd.f32 %v4723, %v5120
      %v5177 = vadd.f32 %v4724, %v5121
      %v5178 = vadd.f32 %v4725, %v5122
      %v5179 = vadd.f32 %v4726, %v5123
      %v5180 = vadd.f32 %v4727, %v5124
      %v5181 = vadd.f32 %v4728, %v5125
      %v5182 = vadd.f32 %v4729, %v5126
      %v5183 = vadd.f32 %v4730, %v5127
      %v5184 = vadd.f32 %v4731, %v5128
      %v5185 = vadd.f32 %v4732, %v5129
      %v5186 = vadd.f32 %v4733, %v5130
      %v5187 = vadd.f32 %v4734, %v5131
      %v5188 = vadd.f32 %v4735, %v5132
      %v5189 = vadd.f32 %v4736, %v5133
      %v5190 = vadd.f32 %v4737, %v5134
      %v5191 = vadd.f32 %v4738, %v5135
      %v5192 = vadd.f32 %v4739, %v5136
      %v5193 = vadd.f32 %v4740, %v5137
      %v5194 = vadd.f32 %v4741, %v5138
      %v5195 = vadd.f32 %v4742, %v5139
      %v5196 = vadd.f32 %v4743, %v5140
      %v5197 = vadd.f32 %v4744, %v5141
      %v5198 = vadd.f32 %v4745, %v5142
      %v5199 = vadd.f32 %v4746, %v5143
      %v5200 = vld [vmem:[%s212 + $0x21] sm:$0xff]
      %v5201 = vld [vmem:[%s212 + $0x29] sm:$0xff]
      %v5202 = vld [vmem:[%s212 + $0x31] sm:$0xff]
      %v5203 = vld [vmem:[%s212 + $0x39] sm:$0xff]
      %v5204 = vld [vmem:[%s212 + $0x41] sm:$0xff]
      %v5205 = vld [vmem:[%s212 + $0x49] sm:$0xff]
      %v5206 = vld [vmem:[%s212 + $0x51] sm:$0xff]
      %v5207 = vld [vmem:[%s212 + $0x59] sm:$0xff]
      %v5208 = vld [vmem:[%s212 + $0x61] sm:$0xff]
      %v5209 = vld [vmem:[%s212 + $0x69] sm:$0xff]
      %v5210 = vld [vmem:[%s212 + $0x71] sm:$0xff]
      %v5211 = vld [vmem:[%s212 + $0x79] sm:$0xff]
      %v5212 = vld [vmem:[%s212 + $0x81] sm:$0xff]
      %v5213 = vld [vmem:[%s212 + $0x89] sm:$0xff]
      %v5214 = vld [vmem:[%s212 + $0x91] sm:$0xff]
      %v5215 = vld [vmem:[%s212 + $0x99] sm:$0xff]
      %v5216 = vld [vmem:[%s212 + $0xa1] sm:$0xff]
      %v5217 = vld [vmem:[%s212 + $0xa9] sm:$0xff]
      %v5218 = vld [vmem:[%s212 + $0xb1] sm:$0xff]
      %v5219 = vld [vmem:[%s212 + $0xb9] sm:$0xff]
      %v5220 = vld [vmem:[%s212 + $0xc1] sm:$0xff]
      %v5221 = vld [vmem:[%s212 + $0xc9] sm:$0xff]
      %v5222 = vld [vmem:[%s212 + $0xd1] sm:$0xff]
      %v5223 = vld [vmem:[%s212 + $0xd9] sm:$0xff]
      %v5224 = vld [vmem:[%s212 + $0xe1] sm:$0xff]
      %v5225 = vld [vmem:[%s212 + $0xe9] sm:$0xff]
      %v5226 = vld [vmem:[%s212 + $0xf1] sm:$0xff]
      %v5227 = vld [vmem:[%s212 + $0xf9] sm:$0xff]
      %v5228 = vld [vmem:[%s212 + $0x101] sm:$0xff]
      %v5229 = vld [vmem:[%s212 + $0x109] sm:$0xff]
      %v5230 = vld [vmem:[%s212 + $0x111] sm:$0xff]
      %v5231 = vld [vmem:[%s212 + $0x119] sm:$0xff]
      %v5232 = vld [vmem:[%s212 + $0x121] sm:$0xff]
      %v5233 = vld [vmem:[%s212 + $0x129] sm:$0xff]
      %v5234 = vld [vmem:[%s212 + $0x131] sm:$0xff]
      %v5235 = vld [vmem:[%s212 + $0x139] sm:$0xff]
      %v5236 = vld [vmem:[%s212 + $0x141] sm:$0xff]
      %v5237 = vld [vmem:[%s212 + $0x149] sm:$0xff]
      %v5238 = vld [vmem:[%s212 + $0x151] sm:$0xff]
      %v5239 = vld [vmem:[%s212 + $0x159] sm:$0xff]
      %v5240 = vld [vmem:[%s212 + $0x161] sm:$0xff]
      %v5241 = vld [vmem:[%s212 + $0x169] sm:$0xff]
      %v5242 = vld [vmem:[%s212 + $0x171] sm:$0xff]
      %v5243 = vld [vmem:[%s212 + $0x179] sm:$0xff]
      %v5244 = vld [vmem:[%s212 + $0x181] sm:$0xff]
      %v5245 = vld [vmem:[%s212 + $0x189] sm:$0xff]
      %v5246 = vld [vmem:[%s212 + $0x191] sm:$0xff]
      %v5247 = vld [vmem:[%s212 + $0x199] sm:$0xff]
      %v5248 = vld [vmem:[%s212 + $0x1a1] sm:$0xff]
      %v5249 = vld [vmem:[%s212 + $0x1a9] sm:$0xff]
      %v5250 = vld [vmem:[%s212 + $0x1b1] sm:$0xff]
      %v5251 = vld [vmem:[%s212 + $0x1b9] sm:$0xff]
      %v5252 = vld [vmem:[%s212 + $0x1c1] sm:$0xff]
      %v5253 = vld [vmem:[%s212 + $0x1c9] sm:$0xff]
      %v5254 = vld [vmem:[%s212 + $0x1d1] sm:$0xff]
      %v5255 = vld [vmem:[%s212 + $0x1d9] sm:$0xff]
      %s5256 = scalar_lea.vmem %s2, 11
      %v5257 = vld [vmem:[%s5256] sm:$0x1]
      %5259 = vset.pattern.permute.xlu0 0
      %5260 = vperm.xlu0 %5259, %v5200
      %v5261 = vpop.permute.xlu0 %5260
      %5264 = vset.pattern.permute.xlu0 0
      %5265 = vperm.xlu0 %5264, %v5201
      %v5266 = vpop.permute.xlu0 %5265
      %5269 = vset.pattern.permute.xlu0 0
      %5270 = vperm.xlu0 %5269, %v5202
      %v5271 = vpop.permute.xlu0 %5270
      %5274 = vset.pattern.permute.xlu0 0
      %5275 = vperm.xlu0 %5274, %v5203
      %v5276 = vpop.permute.xlu0 %5275
      %5279 = vset.pattern.permute.xlu0 0
      %5280 = vperm.xlu0 %5279, %v5204
      %v5281 = vpop.permute.xlu0 %5280
      %5284 = vset.pattern.permute.xlu0 0
      %5285 = vperm.xlu0 %5284, %v5205
      %v5286 = vpop.permute.xlu0 %5285
      %5289 = vset.pattern.permute.xlu0 0
      %5290 = vperm.xlu0 %5289, %v5206
      %v5291 = vpop.permute.xlu0 %5290
      %5294 = vset.pattern.permute.xlu0 0
      %5295 = vperm.xlu0 %5294, %v5207
      %v5296 = vpop.permute.xlu0 %5295
      %5299 = vset.pattern.permute.xlu0 0
      %5300 = vperm.xlu0 %5299, %v5208
      %v5301 = vpop.permute.xlu0 %5300
      %5304 = vset.pattern.permute.xlu0 0
      %5305 = vperm.xlu0 %5304, %v5209
      %v5306 = vpop.permute.xlu0 %5305
      %5309 = vset.pattern.permute.xlu0 0
      %5310 = vperm.xlu0 %5309, %v5210
      %v5311 = vpop.permute.xlu0 %5310
      %5314 = vset.pattern.permute.xlu0 0
      %5315 = vperm.xlu0 %5314, %v5211
      %v5316 = vpop.permute.xlu0 %5315
      %5319 = vset.pattern.permute.xlu0 0
      %5320 = vperm.xlu0 %5319, %v5212
      %v5321 = vpop.permute.xlu0 %5320
      %5324 = vset.pattern.permute.xlu0 0
      %5325 = vperm.xlu0 %5324, %v5213
      %v5326 = vpop.permute.xlu0 %5325
      %5329 = vset.pattern.permute.xlu0 0
      %5330 = vperm.xlu0 %5329, %v5214
      %v5331 = vpop.permute.xlu0 %5330
      %5334 = vset.pattern.permute.xlu0 0
      %5335 = vperm.xlu0 %5334, %v5215
      %v5336 = vpop.permute.xlu0 %5335
      %5339 = vset.pattern.permute.xlu0 0
      %5340 = vperm.xlu0 %5339, %v5216
      %v5341 = vpop.permute.xlu0 %5340
      %5344 = vset.pattern.permute.xlu0 0
      %5345 = vperm.xlu0 %5344, %v5217
      %v5346 = vpop.permute.xlu0 %5345
      %5349 = vset.pattern.permute.xlu0 0
      %5350 = vperm.xlu0 %5349, %v5218
      %v5351 = vpop.permute.xlu0 %5350
      %5354 = vset.pattern.permute.xlu0 0
      %5355 = vperm.xlu0 %5354, %v5219
      %v5356 = vpop.permute.xlu0 %5355
      %5359 = vset.pattern.permute.xlu0 0
      %5360 = vperm.xlu0 %5359, %v5220
      %v5361 = vpop.permute.xlu0 %5360
      %5364 = vset.pattern.permute.xlu0 0
      %5365 = vperm.xlu0 %5364, %v5221
      %v5366 = vpop.permute.xlu0 %5365
      %5369 = vset.pattern.permute.xlu0 0
      %5370 = vperm.xlu0 %5369, %v5222
      %v5371 = vpop.permute.xlu0 %5370
      %5374 = vset.pattern.permute.xlu0 0
      %5375 = vperm.xlu0 %5374, %v5223
      %v5376 = vpop.permute.xlu0 %5375
      %5379 = vset.pattern.permute.xlu0 0
      %5380 = vperm.xlu0 %5379, %v5224
      %v5381 = vpop.permute.xlu0 %5380
      %5384 = vset.pattern.permute.xlu0 0
      %5385 = vperm.xlu0 %5384, %v5225
      %v5386 = vpop.permute.xlu0 %5385
      %5389 = vset.pattern.permute.xlu0 0
      %5390 = vperm.xlu0 %5389, %v5226
      %v5391 = vpop.permute.xlu0 %5390
      %5394 = vset.pattern.permute.xlu0 0
      %5395 = vperm.xlu0 %5394, %v5227
      %v5396 = vpop.permute.xlu0 %5395
      %5399 = vset.pattern.permute.xlu0 0
      %5400 = vperm.xlu0 %5399, %v5228
      %v5401 = vpop.permute.xlu0 %5400
      %5404 = vset.pattern.permute.xlu0 0
      %5405 = vperm.xlu0 %5404, %v5229
      %v5406 = vpop.permute.xlu0 %5405
      %5409 = vset.pattern.permute.xlu0 0
      %5410 = vperm.xlu0 %5409, %v5230
      %v5411 = vpop.permute.xlu0 %5410
      %5414 = vset.pattern.permute.xlu0 0
      %5415 = vperm.xlu0 %5414, %v5231
      %v5416 = vpop.permute.xlu0 %5415
      %5419 = vset.pattern.permute.xlu0 0
      %5420 = vperm.xlu0 %5419, %v5232
      %v5421 = vpop.permute.xlu0 %5420
      %5424 = vset.pattern.permute.xlu0 0
      %5425 = vperm.xlu0 %5424, %v5233
      %v5426 = vpop.permute.xlu0 %5425
      %5429 = vset.pattern.permute.xlu0 0
      %5430 = vperm.xlu0 %5429, %v5234
      %v5431 = vpop.permute.xlu0 %5430
      %5434 = vset.pattern.permute.xlu0 0
      %5435 = vperm.xlu0 %5434, %v5235
      %v5436 = vpop.permute.xlu0 %5435
      %5439 = vset.pattern.permute.xlu0 0
      %5440 = vperm.xlu0 %5439, %v5236
      %v5441 = vpop.permute.xlu0 %5440
      %5444 = vset.pattern.permute.xlu0 0
      %5445 = vperm.xlu0 %5444, %v5237
      %v5446 = vpop.permute.xlu0 %5445
      %5449 = vset.pattern.permute.xlu0 0
      %5450 = vperm.xlu0 %5449, %v5238
      %v5451 = vpop.permute.xlu0 %5450
      %5454 = vset.pattern.permute.xlu0 0
      %5455 = vperm.xlu0 %5454, %v5239
      %v5456 = vpop.permute.xlu0 %5455
      %5459 = vset.pattern.permute.xlu0 0
      %5460 = vperm.xlu0 %5459, %v5240
      %v5461 = vpop.permute.xlu0 %5460
      %5464 = vset.pattern.permute.xlu0 0
      %5465 = vperm.xlu0 %5464, %v5241
      %v5466 = vpop.permute.xlu0 %5465
      %5469 = vset.pattern.permute.xlu0 0
      %5470 = vperm.xlu0 %5469, %v5242
      %v5471 = vpop.permute.xlu0 %5470
      %5474 = vset.pattern.permute.xlu0 0
      %5475 = vperm.xlu0 %5474, %v5243
      %v5476 = vpop.permute.xlu0 %5475
      %5479 = vset.pattern.permute.xlu0 0
      %5480 = vperm.xlu0 %5479, %v5244
      %v5481 = vpop.permute.xlu0 %5480
      %5484 = vset.pattern.permute.xlu0 0
      %5485 = vperm.xlu0 %5484, %v5245
      %v5486 = vpop.permute.xlu0 %5485
      %5489 = vset.pattern.permute.xlu0 0
      %5490 = vperm.xlu0 %5489, %v5246
      %v5491 = vpop.permute.xlu0 %5490
      %5494 = vset.pattern.permute.xlu0 0
      %5495 = vperm.xlu0 %5494, %v5247
      %v5496 = vpop.permute.xlu0 %5495
      %5499 = vset.pattern.permute.xlu0 0
      %5500 = vperm.xlu0 %5499, %v5248
      %v5501 = vpop.permute.xlu0 %5500
      %5504 = vset.pattern.permute.xlu0 0
      %5505 = vperm.xlu0 %5504, %v5249
      %v5506 = vpop.permute.xlu0 %5505
      %5509 = vset.pattern.permute.xlu0 0
      %5510 = vperm.xlu0 %5509, %v5250
      %v5511 = vpop.permute.xlu0 %5510
      %5514 = vset.pattern.permute.xlu0 0
      %5515 = vperm.xlu0 %5514, %v5251
      %v5516 = vpop.permute.xlu0 %5515
      %5519 = vset.pattern.permute.xlu0 0
      %5520 = vperm.xlu0 %5519, %v5252
      %v5521 = vpop.permute.xlu0 %5520
      %5524 = vset.pattern.permute.xlu0 0
      %5525 = vperm.xlu0 %5524, %v5253
      %v5526 = vpop.permute.xlu0 %5525
      %5529 = vset.pattern.permute.xlu0 0
      %5530 = vperm.xlu0 %5529, %v5254
      %v5531 = vpop.permute.xlu0 %5530
      %5534 = vset.pattern.permute.xlu0 0
      %5535 = vperm.xlu0 %5534, %v5255
      %v5536 = vpop.permute.xlu0 %5535
      %v5539 = vperm.slane %v5257, 0
      %v5541 = vmul.f32 %v5261, %v5539
      %v5542 = vmul.f32 %v5266, %v5539
      %v5543 = vmul.f32 %v5271, %v5539
      %v5544 = vmul.f32 %v5276, %v5539
      %v5545 = vmul.f32 %v5281, %v5539
      %v5546 = vmul.f32 %v5286, %v5539
      %v5547 = vmul.f32 %v5291, %v5539
      %v5548 = vmul.f32 %v5296, %v5539
      %v5549 = vmul.f32 %v5301, %v5539
      %v5550 = vmul.f32 %v5306, %v5539
      %v5551 = vmul.f32 %v5311, %v5539
      %v5552 = vmul.f32 %v5316, %v5539
      %v5553 = vmul.f32 %v5321, %v5539
      %v5554 = vmul.f32 %v5326, %v5539
      %v5555 = vmul.f32 %v5331, %v5539
      %v5556 = vmul.f32 %v5336, %v5539
      %v5557 = vmul.f32 %v5341, %v5539
      %v5558 = vmul.f32 %v5346, %v5539
      %v5559 = vmul.f32 %v5351, %v5539
      %v5560 = vmul.f32 %v5356, %v5539
      %v5561 = vmul.f32 %v5361, %v5539
      %v5562 = vmul.f32 %v5366, %v5539
      %v5563 = vmul.f32 %v5371, %v5539
      %v5564 = vmul.f32 %v5376, %v5539
      %v5565 = vmul.f32 %v5381, %v5539
      %v5566 = vmul.f32 %v5386, %v5539
      %v5567 = vmul.f32 %v5391, %v5539
      %v5568 = vmul.f32 %v5396, %v5539
      %v5569 = vmul.f32 %v5401, %v5539
      %v5570 = vmul.f32 %v5406, %v5539
      %v5571 = vmul.f32 %v5411, %v5539
      %v5572 = vmul.f32 %v5416, %v5539
      %v5573 = vmul.f32 %v5421, %v5539
      %v5574 = vmul.f32 %v5426, %v5539
      %v5575 = vmul.f32 %v5431, %v5539
      %v5576 = vmul.f32 %v5436, %v5539
      %v5577 = vmul.f32 %v5441, %v5539
      %v5578 = vmul.f32 %v5446, %v5539
      %v5579 = vmul.f32 %v5451, %v5539
      %v5580 = vmul.f32 %v5456, %v5539
      %v5581 = vmul.f32 %v5461, %v5539
      %v5582 = vmul.f32 %v5466, %v5539
      %v5583 = vmul.f32 %v5471, %v5539
      %v5584 = vmul.f32 %v5476, %v5539
      %v5585 = vmul.f32 %v5481, %v5539
      %v5586 = vmul.f32 %v5486, %v5539
      %v5587 = vmul.f32 %v5491, %v5539
      %v5588 = vmul.f32 %v5496, %v5539
      %v5589 = vmul.f32 %v5501, %v5539
      %v5590 = vmul.f32 %v5506, %v5539
      %v5591 = vmul.f32 %v5511, %v5539
      %v5592 = vmul.f32 %v5516, %v5539
      %v5593 = vmul.f32 %v5521, %v5539
      %v5594 = vmul.f32 %v5526, %v5539
      %v5595 = vmul.f32 %v5531, %v5539
      %v5596 = vmul.f32 %v5536, %v5539
      %v5597 = vadd.f32 %v5144, %v5541
      %v5598 = vadd.f32 %v5145, %v5542
      %v5599 = vadd.f32 %v5146, %v5543
      %v5600 = vadd.f32 %v5147, %v5544
      %v5601 = vadd.f32 %v5148, %v5545
      %v5602 = vadd.f32 %v5149, %v5546
      %v5603 = vadd.f32 %v5150, %v5547
      %v5604 = vadd.f32 %v5151, %v5548
      %v5605 = vadd.f32 %v5152, %v5549
      %v5606 = vadd.f32 %v5153, %v5550
      %v5607 = vadd.f32 %v5154, %v5551
      %v5608 = vadd.f32 %v5155, %v5552
      %v5609 = vadd.f32 %v5156, %v5553
      %v5610 = vadd.f32 %v5157, %v5554
      %v5611 = vadd.f32 %v5158, %v5555
      %v5612 = vadd.f32 %v5159, %v5556
      %v5613 = vadd.f32 %v5160, %v5557
      %v5614 = vadd.f32 %v5161, %v5558
      %v5615 = vadd.f32 %v5162, %v5559
      %v5616 = vadd.f32 %v5163, %v5560
      %v5617 = vadd.f32 %v5164, %v5561
      %v5618 = vadd.f32 %v5165, %v5562
      %v5619 = vadd.f32 %v5166, %v5563
      %v5620 = vadd.f32 %v5167, %v5564
      %v5621 = vadd.f32 %v5168, %v5565
      %v5622 = vadd.f32 %v5169, %v5566
      %v5623 = vadd.f32 %v5170, %v5567
      %v5624 = vadd.f32 %v5171, %v5568
      %v5625 = vadd.f32 %v5172, %v5569
      %v5626 = vadd.f32 %v5173, %v5570
      %v5627 = vadd.f32 %v5174, %v5571
      %v5628 = vadd.f32 %v5175, %v5572
      %v5629 = vadd.f32 %v5176, %v5573
      %v5630 = vadd.f32 %v5177, %v5574
      %v5631 = vadd.f32 %v5178, %v5575
      %v5632 = vadd.f32 %v5179, %v5576
      %v5633 = vadd.f32 %v5180, %v5577
      %v5634 = vadd.f32 %v5181, %v5578
      %v5635 = vadd.f32 %v5182, %v5579
      %v5636 = vadd.f32 %v5183, %v5580
      %v5637 = vadd.f32 %v5184, %v5581
      %v5638 = vadd.f32 %v5185, %v5582
      %v5639 = vadd.f32 %v5186, %v5583
      %v5640 = vadd.f32 %v5187, %v5584
      %v5641 = vadd.f32 %v5188, %v5585
      %v5642 = vadd.f32 %v5189, %v5586
      %v5643 = vadd.f32 %v5190, %v5587
      %v5644 = vadd.f32 %v5191, %v5588
      %v5645 = vadd.f32 %v5192, %v5589
      %v5646 = vadd.f32 %v5193, %v5590
      %v5647 = vadd.f32 %v5194, %v5591
      %v5648 = vadd.f32 %v5195, %v5592
      %v5649 = vadd.f32 %v5196, %v5593
      %v5650 = vadd.f32 %v5197, %v5594
      %v5651 = vadd.f32 %v5198, %v5595
      %v5652 = vadd.f32 %v5199, %v5596
      %v5653 = vld [vmem:[%s3] sm:$0x1]
      %v5655 = vperm.slane %v5653, 0
      %v5657 = vadd.f32 %v5597, %v5655
      %v5658 = vadd.f32 %v5598, %v5655
      %v5659 = vadd.f32 %v5599, %v5655
      %v5660 = vadd.f32 %v5600, %v5655
      %v5661 = vadd.f32 %v5601, %v5655
      %v5662 = vadd.f32 %v5602, %v5655
      %v5663 = vadd.f32 %v5603, %v5655
      %v5664 = vadd.f32 %v5604, %v5655
      %v5665 = vadd.f32 %v5605, %v5655
      %v5666 = vadd.f32 %v5606, %v5655
      %v5667 = vadd.f32 %v5607, %v5655
      %v5668 = vadd.f32 %v5608, %v5655
      %v5669 = vadd.f32 %v5609, %v5655
      %v5670 = vadd.f32 %v5610, %v5655
      %v5671 = vadd.f32 %v5611, %v5655
      %v5672 = vadd.f32 %v5612, %v5655
      %v5673 = vadd.f32 %v5613, %v5655
      %v5674 = vadd.f32 %v5614, %v5655
      %v5675 = vadd.f32 %v5615, %v5655
      %v5676 = vadd.f32 %v5616, %v5655
      %v5677 = vadd.f32 %v5617, %v5655
      %v5678 = vadd.f32 %v5618, %v5655
      %v5679 = vadd.f32 %v5619, %v5655
      %v5680 = vadd.f32 %v5620, %v5655
      %v5681 = vadd.f32 %v5621, %v5655
      %v5682 = vadd.f32 %v5622, %v5655
      %v5683 = vadd.f32 %v5623, %v5655
      %v5684 = vadd.f32 %v5624, %v5655
      %v5685 = vadd.f32 %v5625, %v5655
      %v5686 = vadd.f32 %v5626, %v5655
      %v5687 = vadd.f32 %v5627, %v5655
      %v5688 = vadd.f32 %v5628, %v5655
      %v5689 = vadd.f32 %v5629, %v5655
      %v5690 = vadd.f32 %v5630, %v5655
      %v5691 = vadd.f32 %v5631, %v5655
      %v5692 = vadd.f32 %v5632, %v5655
      %v5693 = vadd.f32 %v5633, %v5655
      %v5694 = vadd.f32 %v5634, %v5655
      %v5695 = vadd.f32 %v5635, %v5655
      %v5696 = vadd.f32 %v5636, %v5655
      %v5697 = vadd.f32 %v5637, %v5655
      %v5698 = vadd.f32 %v5638, %v5655
      %v5699 = vadd.f32 %v5639, %v5655
      %v5700 = vadd.f32 %v5640, %v5655
      %v5701 = vadd.f32 %v5641, %v5655
      %v5702 = vadd.f32 %v5642, %v5655
      %v5703 = vadd.f32 %v5643, %v5655
      %v5704 = vadd.f32 %v5644, %v5655
      %v5705 = vadd.f32 %v5645, %v5655
      %v5706 = vadd.f32 %v5646, %v5655
      %v5707 = vadd.f32 %v5647, %v5655
      %v5708 = vadd.f32 %v5648, %v5655
      %v5709 = vadd.f32 %v5649, %v5655
      %v5710 = vadd.f32 %v5650, %v5655
      %v5711 = vadd.f32 %v5651, %v5655
      %v5712 = vadd.f32 %v5652, %v5655
      %v5713 = vmax.f32 %v5657, 0.0
      %v5714 = vmax.f32 %v5658, 0.0
      %v5715 = vmax.f32 %v5659, 0.0
      %v5716 = vmax.f32 %v5660, 0.0
      %v5717 = vmax.f32 %v5661, 0.0
      %v5718 = vmax.f32 %v5662, 0.0
      %v5719 = vmax.f32 %v5663, 0.0
      %v5720 = vmax.f32 %v5664, 0.0
      %v5721 = vmax.f32 %v5665, 0.0
      %v5722 = vmax.f32 %v5666, 0.0
      %v5723 = vmax.f32 %v5667, 0.0
      %v5724 = vmax.f32 %v5668, 0.0
      %v5725 = vmax.f32 %v5669, 0.0
      %v5726 = vmax.f32 %v5670, 0.0
      %v5727 = vmax.f32 %v5671, 0.0
      %v5728 = vmax.f32 %v5672, 0.0
      %v5729 = vmax.f32 %v5673, 0.0
      %v5730 = vmax.f32 %v5674, 0.0
      %v5731 = vmax.f32 %v5675, 0.0
      %v5732 = vmax.f32 %v5676, 0.0
      %v5733 = vmax.f32 %v5677, 0.0
      %v5734 = vmax.f32 %v5678, 0.0
      %v5735 = vmax.f32 %v5679, 0.0
      %v5736 = vmax.f32 %v5680, 0.0
      %v5737 = vmax.f32 %v5681, 0.0
      %v5738 = vmax.f32 %v5682, 0.0
      %v5739 = vmax.f32 %v5683, 0.0
      %v5740 = vmax.f32 %v5684, 0.0
      %v5741 = vmax.f32 %v5685, 0.0
      %v5742 = vmax.f32 %v5686, 0.0
      %v5743 = vmax.f32 %v5687, 0.0
      %v5744 = vmax.f32 %v5688, 0.0
      %v5745 = vmax.f32 %v5689, 0.0
      %v5746 = vmax.f32 %v5690, 0.0
      %v5747 = vmax.f32 %v5691, 0.0
      %v5748 = vmax.f32 %v5692, 0.0
      %v5749 = vmax.f32 %v5693, 0.0
      %v5750 = vmax.f32 %v5694, 0.0
      %v5751 = vmax.f32 %v5695, 0.0
      %v5752 = vmax.f32 %v5696, 0.0
      %v5753 = vmax.f32 %v5697, 0.0
      %v5754 = vmax.f32 %v5698, 0.0
      %v5755 = vmax.f32 %v5699, 0.0
      %v5756 = vmax.f32 %v5700, 0.0
      %v5757 = vmax.f32 %v5701, 0.0
      %v5758 = vmax.f32 %v5702, 0.0
      %v5759 = vmax.f32 %v5703, 0.0
      %v5760 = vmax.f32 %v5704, 0.0
      %v5761 = vmax.f32 %v5705, 0.0
      %v5762 = vmax.f32 %v5706, 0.0
      %v5763 = vmax.f32 %v5707, 0.0
      %v5764 = vmax.f32 %v5708, 0.0
      %v5765 = vmax.f32 %v5709, 0.0
      %v5766 = vmax.f32 %v5710, 0.0
      %v5767 = vmax.f32 %v5711, 0.0
      %v5768 = vmax.f32 %v5712, 0.0
      %5825 = vrot.lane.b32.xlu0 %v5713, 112
      %v5826 = vpop.permute.xlu0 %5825
      %5827 = vrot.lane.b32.xlu0 %v5714, 112
      %v5828 = vpop.permute.xlu0 %5827
      %5829 = vrot.lane.b32.xlu0 %v5715, 112
      %v5830 = vpop.permute.xlu0 %5829
      %5831 = vrot.lane.b32.xlu0 %v5716, 112
      %v5832 = vpop.permute.xlu0 %5831
      %5833 = vrot.lane.b32.xlu0 %v5717, 112
      %v5834 = vpop.permute.xlu0 %5833
      %5835 = vrot.lane.b32.xlu0 %v5718, 112
      %v5836 = vpop.permute.xlu0 %5835
      %5837 = vrot.lane.b32.xlu0 %v5719, 112
      %v5838 = vpop.permute.xlu0 %5837
      %5839 = vrot.lane.b32.xlu0 %v5720, 112
      %v5840 = vpop.permute.xlu0 %5839
      %5841 = vrot.lane.b32.xlu0 %v5721, 112
      %v5842 = vpop.permute.xlu0 %5841
      %5843 = vrot.lane.b32.xlu0 %v5722, 112
      %v5844 = vpop.permute.xlu0 %5843
      %5845 = vrot.lane.b32.xlu0 %v5723, 112
      %v5846 = vpop.permute.xlu0 %5845
      %5847 = vrot.lane.b32.xlu0 %v5724, 112
      %v5848 = vpop.permute.xlu0 %5847
      %5849 = vrot.lane.b32.xlu0 %v5725, 112
      %v5850 = vpop.permute.xlu0 %5849
      %5851 = vrot.lane.b32.xlu0 %v5726, 112
      %v5852 = vpop.permute.xlu0 %5851
      %5853 = vrot.lane.b32.xlu0 %v5727, 112
      %v5854 = vpop.permute.xlu0 %5853
      %5855 = vrot.lane.b32.xlu0 %v5728, 112
      %v5856 = vpop.permute.xlu0 %5855
      %5857 = vrot.lane.b32.xlu0 %v5729, 112
      %v5858 = vpop.permute.xlu0 %5857
      %5859 = vrot.lane.b32.xlu0 %v5730, 112
      %v5860 = vpop.permute.xlu0 %5859
      %5861 = vrot.lane.b32.xlu0 %v5731, 112
      %v5862 = vpop.permute.xlu0 %5861
      %5863 = vrot.lane.b32.xlu0 %v5732, 112
      %v5864 = vpop.permute.xlu0 %5863
      %5865 = vrot.lane.b32.xlu0 %v5733, 112
      %v5866 = vpop.permute.xlu0 %5865
      %5867 = vrot.lane.b32.xlu0 %v5734, 112
      %v5868 = vpop.permute.xlu0 %5867
      %5869 = vrot.lane.b32.xlu0 %v5735, 112
      %v5870 = vpop.permute.xlu0 %5869
      %5871 = vrot.lane.b32.xlu0 %v5736, 112
      %v5872 = vpop.permute.xlu0 %5871
      %5873 = vrot.lane.b32.xlu0 %v5737, 112
      %v5874 = vpop.permute.xlu0 %5873
      %5875 = vrot.lane.b32.xlu0 %v5738, 112
      %v5876 = vpop.permute.xlu0 %5875
      %5877 = vrot.lane.b32.xlu0 %v5739, 112
      %v5878 = vpop.permute.xlu0 %5877
      %5879 = vrot.lane.b32.xlu0 %v5740, 112
      %v5880 = vpop.permute.xlu0 %5879
      %5881 = vrot.lane.b32.xlu0 %v5741, 112
      %v5882 = vpop.permute.xlu0 %5881
      %5883 = vrot.lane.b32.xlu0 %v5742, 112
      %v5884 = vpop.permute.xlu0 %5883
      %5885 = vrot.lane.b32.xlu0 %v5743, 112
      %v5886 = vpop.permute.xlu0 %5885
      %5887 = vrot.lane.b32.xlu0 %v5744, 112
      %v5888 = vpop.permute.xlu0 %5887
      %5889 = vrot.lane.b32.xlu0 %v5745, 112
      %v5890 = vpop.permute.xlu0 %5889
      %5891 = vrot.lane.b32.xlu0 %v5746, 112
      %v5892 = vpop.permute.xlu0 %5891
      %5893 = vrot.lane.b32.xlu0 %v5747, 112
      %v5894 = vpop.permute.xlu0 %5893
      %5895 = vrot.lane.b32.xlu0 %v5748, 112
      %v5896 = vpop.permute.xlu0 %5895
      %5897 = vrot.lane.b32.xlu0 %v5749, 112
      %v5898 = vpop.permute.xlu0 %5897
      %5899 = vrot.lane.b32.xlu0 %v5750, 112
      %v5900 = vpop.permute.xlu0 %5899
      %5901 = vrot.lane.b32.xlu0 %v5751, 112
      %v5902 = vpop.permute.xlu0 %5901
      %5903 = vrot.lane.b32.xlu0 %v5752, 112
      %v5904 = vpop.permute.xlu0 %5903
      %5905 = vrot.lane.b32.xlu0 %v5753, 112
      %v5906 = vpop.permute.xlu0 %5905
      %5907 = vrot.lane.b32.xlu0 %v5754, 112
      %v5908 = vpop.permute.xlu0 %5907
      %5909 = vrot.lane.b32.xlu0 %v5755, 112
      %v5910 = vpop.permute.xlu0 %5909
      %5911 = vrot.lane.b32.xlu0 %v5756, 112
      %v5912 = vpop.permute.xlu0 %5911
      %5913 = vrot.lane.b32.xlu0 %v5757, 112
      %v5914 = vpop.permute.xlu0 %5913
      %5915 = vrot.lane.b32.xlu0 %v5758, 112
      %v5916 = vpop.permute.xlu0 %5915
      %5917 = vrot.lane.b32.xlu0 %v5759, 112
      %v5918 = vpop.permute.xlu0 %5917
      %5919 = vrot.lane.b32.xlu0 %v5760, 112
      %v5920 = vpop.permute.xlu0 %5919
      %5921 = vrot.lane.b32.xlu0 %v5761, 112
      %v5922 = vpop.permute.xlu0 %5921
      %5923 = vrot.lane.b32.xlu0 %v5762, 112
      %v5924 = vpop.permute.xlu0 %5923
      %5925 = vrot.lane.b32.xlu0 %v5763, 112
      %v5926 = vpop.permute.xlu0 %5925
      %5927 = vrot.lane.b32.xlu0 %v5764, 112
      %v5928 = vpop.permute.xlu0 %5927
      %5929 = vrot.lane.b32.xlu0 %v5765, 112
      %v5930 = vpop.permute.xlu0 %5929
      %5931 = vrot.lane.b32.xlu0 %v5766, 112
      %v5932 = vpop.permute.xlu0 %5931
      %5933 = vrot.lane.b32.xlu0 %v5767, 112
      %v5934 = vpop.permute.xlu0 %5933
      %5935 = vrot.lane.b32.xlu0 %v5768, 112
      %v5936 = vpop.permute.xlu0 %5935
      %v5993 = vmax.f32 %v5713, %v5826
      %v5994 = vmax.f32 %v5714, %v5828
      %v5995 = vmax.f32 %v5715, %v5830
      %v5996 = vmax.f32 %v5716, %v5832
      %v5997 = vmax.f32 %v5717, %v5834
      %v5998 = vmax.f32 %v5718, %v5836
      %v5999 = vmax.f32 %v5719, %v5838
      %v6000 = vmax.f32 %v5720, %v5840
      %v6001 = vmax.f32 %v5721, %v5842
      %v6002 = vmax.f32 %v5722, %v5844
      %v6003 = vmax.f32 %v5723, %v5846
      %v6004 = vmax.f32 %v5724, %v5848
      %v6005 = vmax.f32 %v5725, %v5850
      %v6006 = vmax.f32 %v5726, %v5852
      %v6007 = vmax.f32 %v5727, %v5854
      %v6008 = vmax.f32 %v5728, %v5856
      %v6009 = vmax.f32 %v5729, %v5858
      %v6010 = vmax.f32 %v5730, %v5860
      %v6011 = vmax.f32 %v5731, %v5862
      %v6012 = vmax.f32 %v5732, %v5864
      %v6013 = vmax.f32 %v5733, %v5866
      %v6014 = vmax.f32 %v5734, %v5868
      %v6015 = vmax.f32 %v5735, %v5870
      %v6016 = vmax.f32 %v5736, %v5872
      %v6017 = vmax.f32 %v5737, %v5874
      %v6018 = vmax.f32 %v5738, %v5876
      %v6019 = vmax.f32 %v5739, %v5878
      %v6020 = vmax.f32 %v5740, %v5880
      %v6021 = vmax.f32 %v5741, %v5882
      %v6022 = vmax.f32 %v5742, %v5884
      %v6023 = vmax.f32 %v5743, %v5886
      %v6024 = vmax.f32 %v5744, %v5888
      %v6025 = vmax.f32 %v5745, %v5890
      %v6026 = vmax.f32 %v5746, %v5892
      %v6027 = vmax.f32 %v5747, %v5894
      %v6028 = vmax.f32 %v5748, %v5896
      %v6029 = vmax.f32 %v5749, %v5898
      %v6030 = vmax.f32 %v5750, %v5900
      %v6031 = vmax.f32 %v5751, %v5902
      %v6032 = vmax.f32 %v5752, %v5904
      %v6033 = vmax.f32 %v5753, %v5906
      %v6034 = vmax.f32 %v5754, %v5908
      %v6035 = vmax.f32 %v5755, %v5910
      %v6036 = vmax.f32 %v5756, %v5912
      %v6037 = vmax.f32 %v5757, %v5914
      %v6038 = vmax.f32 %v5758, %v5916
      %v6039 = vmax.f32 %v5759, %v5918
      %v6040 = vmax.f32 %v5760, %v5920
      %v6041 = vmax.f32 %v5761, %v5922
      %v6042 = vmax.f32 %v5762, %v5924
      %v6043 = vmax.f32 %v5763, %v5926
      %v6044 = vmax.f32 %v5764, %v5928
      %v6045 = vmax.f32 %v5765, %v5930
      %v6046 = vmax.f32 %v5766, %v5932
      %v6047 = vmax.f32 %v5767, %v5934
      %v6048 = vmax.f32 %v5768, %v5936
      %v6049 = vmax.f32 %v5993, %v5995
      %v6050 = vmax.f32 %v5994, %v5996
      %v6051 = vmax.f32 %v5997, %v5999
      %v6052 = vmax.f32 %v5998, %v6000
      %v6053 = vmax.f32 %v6001, %v6003
      %v6054 = vmax.f32 %v6002, %v6004
      %v6055 = vmax.f32 %v6005, %v6007
      %v6056 = vmax.f32 %v6006, %v6008
      %v6057 = vmax.f32 %v6009, %v6011
      %v6058 = vmax.f32 %v6010, %v6012
      %v6059 = vmax.f32 %v6013, %v6015
      %v6060 = vmax.f32 %v6014, %v6016
      %v6061 = vmax.f32 %v6017, %v6019
      %v6062 = vmax.f32 %v6018, %v6020
      %v6063 = vmax.f32 %v6021, %v6023
      %v6064 = vmax.f32 %v6022, %v6024
      %v6065 = vmax.f32 %v6025, %v6027
      %v6066 = vmax.f32 %v6026, %v6028
      %v6067 = vmax.f32 %v6029, %v6031
      %v6068 = vmax.f32 %v6030, %v6032
      %v6069 = vmax.f32 %v6033, %v6035
      %v6070 = vmax.f32 %v6034, %v6036
      %v6071 = vmax.f32 %v6037, %v6039
      %v6072 = vmax.f32 %v6038, %v6040
      %v6073 = vmax.f32 %v6041, %v6043
      %v6074 = vmax.f32 %v6042, %v6044
      %v6075 = vmax.f32 %v6045, %v6047
      %v6076 = vmax.f32 %v6046, %v6048
      %v6077 = vpack.c.bf16 %v6049, %v6049
      %v6078 = vpack.c.bf16 %v6050, %v6050
      %v6079 = vpack.c.bf16 %v6051, %v6051
      %v6080 = vpack.c.bf16 %v6052, %v6052
      %v6081 = vpack.c.bf16 %v6053, %v6053
      %v6082 = vpack.c.bf16 %v6054, %v6054
      %v6083 = vpack.c.bf16 %v6055, %v6055
      %v6084 = vpack.c.bf16 %v6056, %v6056
      %v6085 = vpack.c.bf16 %v6057, %v6057
      %v6086 = vpack.c.bf16 %v6058, %v6058
      %v6087 = vpack.c.bf16 %v6059, %v6059
      %v6088 = vpack.c.bf16 %v6060, %v6060
      %v6089 = vpack.c.bf16 %v6061, %v6061
      %v6090 = vpack.c.bf16 %v6062, %v6062
      %v6091 = vpack.c.bf16 %v6063, %v6063
      %v6092 = vpack.c.bf16 %v6064, %v6064
      %v6093 = vpack.c.bf16 %v6065, %v6065
      %v6094 = vpack.c.bf16 %v6066, %v6066
      %v6095 = vpack.c.bf16 %v6067, %v6067
      %v6096 = vpack.c.bf16 %v6068, %v6068
      %v6097 = vpack.c.bf16 %v6069, %v6069
      %v6098 = vpack.c.bf16 %v6070, %v6070
      %v6099 = vpack.c.bf16 %v6071, %v6071
      %v6100 = vpack.c.bf16 %v6072, %v6072
      %v6101 = vpack.c.bf16 %v6073, %v6073
      %v6102 = vpack.c.bf16 %v6074, %v6074
      %v6103 = vpack.c.bf16 %v6075, %v6075
      %v6104 = vpack.c.bf16 %v6076, %v6076
      %vm6105 = vcmask 125952
      %6106 = vst.msk [vmem:[%s217] sm:$0xf] %vm6105, %v6077
      %vm6107 = vcmask 124928
      %6108 = vst.msk [vmem:[%s217 + $0x4] sm:$0x7] %vm6107, %v6078
      %6109 = vst.msk [vmem:[%s217 + $0x8] sm:$0xf] %vm6105, %v6079
      %6110 = vst.msk [vmem:[%s217 + $0xc] sm:$0x7] %vm6107, %v6080
      %6111 = vst.msk [vmem:[%s217 + $0x10] sm:$0xf] %vm6105, %v6081
      %6112 = vst.msk [vmem:[%s217 + $0x14] sm:$0x7] %vm6107, %v6082
      %6113 = vst.msk [vmem:[%s217 + $0x18] sm:$0xf] %vm6105, %v6083
      %6114 = vst.msk [vmem:[%s217 + $0x1c] sm:$0x7] %vm6107, %v6084
      %6115 = vst.msk [vmem:[%s217 + $0x20] sm:$0xf] %vm6105, %v6085
      %6116 = vst.msk [vmem:[%s217 + $0x24] sm:$0x7] %vm6107, %v6086
      %6117 = vst.msk [vmem:[%s217 + $0x28] sm:$0xf] %vm6105, %v6087
      %6118 = vst.msk [vmem:[%s217 + $0x2c] sm:$0x7] %vm6107, %v6088
      %6119 = vst.msk [vmem:[%s217 + $0x30] sm:$0xf] %vm6105, %v6089
      %6120 = vst.msk [vmem:[%s217 + $0x34] sm:$0x7] %vm6107, %v6090
      %6121 = vst.msk [vmem:[%s217 + $0x38] sm:$0xf] %vm6105, %v6091
      %6122 = vst.msk [vmem:[%s217 + $0x3c] sm:$0x7] %vm6107, %v6092
      %6123 = vst.msk [vmem:[%s217 + $0x40] sm:$0xf] %vm6105, %v6093
      %6124 = vst.msk [vmem:[%s217 + $0x44] sm:$0x7] %vm6107, %v6094
      %6125 = vst.msk [vmem:[%s217 + $0x48] sm:$0xf] %vm6105, %v6095
      %6126 = vst.msk [vmem:[%s217 + $0x4c] sm:$0x7] %vm6107, %v6096
      %6127 = vst.msk [vmem:[%s217 + $0x50] sm:$0xf] %vm6105, %v6097
      %6128 = vst.msk [vmem:[%s217 + $0x54] sm:$0x7] %vm6107, %v6098
      %6129 = vst.msk [vmem:[%s217 + $0x58] sm:$0xf] %vm6105, %v6099
      %6130 = vst.msk [vmem:[%s217 + $0x5c] sm:$0x7] %vm6107, %v6100
      %6131 = vst.msk [vmem:[%s217 + $0x60] sm:$0xf] %vm6105, %v6101
      %6132 = vst.msk [vmem:[%s217 + $0x64] sm:$0x7] %vm6107, %v6102
      %6133 = vst.msk [vmem:[%s217 + $0x68] sm:$0xf] %vm6105, %v6103
      %6134 = vst.msk [vmem:[%s217 + $0x6c] sm:$0x7] %vm6107, %v6104
      %p6135 = scmp.lt.s32.totalorder %s15, 1
      %s6136 = scalar_select %p6135, %s15, 1
      %s6137 = smul.addr %s6136, 28
      %s6138 = smul.addr %s6137, 4
      %s6139 = scalar_lea.vmem %s4, %s6138
      // Predicated region
      $region37: #{net_forward.4} parent=35 // pred_check
        %p6140 = pneg %p127
      $region38: #{net_forward.4} parent=35 // pred_check_branch
        %6142 = sbr.rel (%p6140) target = $region40
      $region39: #{net_forward.4} parent=35 // pred_region
        _
      $region40: #{net_forward.4} parent=35 // pred_fallthru
        _
    $region36: #{net_forward.4} parent=5 // pred_fallthru
      _
    %p6143 = scmp.le.s32.totalorder 2, %s10
    // Predicated region
    $region41: #{net_forward.4} parent=5 // pred_check
      %p6144 = pneg %p6143
    $region42: #{net_forward.4} parent=5 // pred_check_branch
      %6146 = sbr.rel (%p6144) target = $region44
    $region43: #{net_forward.4} parent=5 // pred_region
      %s6147 = ssub.s32 %s10, 2
      // Predicated region
      $region45: #{net_forward.4} parent=43 // pred_check
        %p6148 = pneg %p133
      $region46: #{net_forward.4} parent=43 // pred_check_branch
        %6150 = sbr.rel (%p6148) target = $region48
      $region47: #{net_forward.4} parent=43 // pred_region
        %p6151 = scmp.lt.s32.totalorder %s16, 1
        %s6152 = scalar_select %p6151, %s16, 1
        %s6153 = smul.addr %s6152, 28
        %s6154 = smul.addr %s6153, 4
        %s6155 = scalar_lea.vmem %s4, %s6154
      $region48: #{net_forward.4} parent=43 // pred_fallthru
        _
    $region44: #{net_forward.4} parent=5 // pred_fallthru
      _
  $region6: #{net_forward.4} parent=0 // loop_footer
    %s14 = sadd.s32 1, %s10
  $region7: #{net_forward.4} parent=0 // loop_footer_branch
    %9 = sbr.rel target = $region3
  $region8: #{net_forward.4} parent=0 // loop_exit
    _

// kernel: net_forward.7
$region0: #{net_forward.7}
  #allocation0 [shape = 'u32[]', space=smem, size = 0x4, offset = 0x4, fixed_abs, tag = 'smem constant byte address 0x4 - core index']
  #allocation1 [shape = 'u32[72,128]{1,0:T(1,128)}', space=vmem, size = 0x9000, scoped, tag = 'internal scratch']
  %s0 = inlined_call_operand.vmem [shape: bf16[2,4032], index: 0, kind: input, shape index: {}]
  %s1 = inlined_call_operand.vmem [shape: bf16[4032,128], index: 1, kind: input, shape index: {}]
  %s2 = inlined_call_operand.vmem [shape: f32[1,128], index: 2, kind: input, shape index: {}]
  %s3 = inlined_call_operand.vmem [shape: bf16[128,10], index: 3, kind: input, shape index: {}]
  %s4 = inlined_call_operand.vmem [shape: f32[1,10], index: 4, kind: input, shape index: {}]
  %s5 = inlined_call_operand.hbm [shape: f32[2,10], index: 5, kind: output, shape index: {}]
  %s6 = sld [smem:[#allocation0]]
  $region30: #{net_forward.7} parent=0
    _
  %s8 = ssub.s32 1, %s6
  %s9 = scalar_select 0, %s8, %s6
  $region1: #{net_forward.7} parent=0
    #allocation2 [shape = 'u8[1024]{0}', space=vmem, size = 0x400, scoped, tag = 'output window, operand 0, single buffered']
    #allocation3 [shape = 's32[1]{0}', space=sflag, size = 0x4, scoped, tag = 'scoped memory for net_forward.7']
    %10 = vsyncpa [#allocation3], 0
    // Predicated region
    $region2: #{net_forward.7} parent=1 // pred_check
      _
    $region3: #{net_forward.7} parent=1 // pred_check_branch
      %12 = sbr.rel (0) target = $region5
    $region4: #{net_forward.7} parent=1 // pred_region
      _
    $region5: #{net_forward.7} parent=1 // pred_fallthru
      _
    // Predicated region
    $region6: #{net_forward.7} parent=1 // pred_check
      _
    $region7: #{net_forward.7} parent=1 // pred_check_branch
      %14 = sbr.rel (0) target = $region9
    $region8: #{net_forward.7} parent=1 // pred_region
      _
    $region9: #{net_forward.7} parent=1 // pred_fallthru
      _
    // Predicated region
    $region10: #{net_forward.7} parent=1 // pred_check
      _
    $region11: #{net_forward.7} parent=1 // pred_check_branch
      %16 = sbr.rel (0) target = $region13
    $region12: #{net_forward.7} parent=1 // pred_region
      _
    $region13: #{net_forward.7} parent=1 // pred_fallthru
      _
    // Predicated region
    $region14: #{net_forward.7} parent=1 // pred_check
      _
    $region15: #{net_forward.7} parent=1 // pred_check_branch
      %18 = sbr.rel (0) target = $region17
    $region16: #{net_forward.7} parent=1 // pred_region
      _
    $region17: #{net_forward.7} parent=1 // pred_fallthru
      _
    // Predicated region
    $region18: #{net_forward.7} parent=1 // pred_check
      _
    $region19: #{net_forward.7} parent=1 // pred_check_branch
      %20 = sbr.rel (0) target = $region21
    $region20: #{net_forward.7} parent=1 // pred_region
      _
    $region21: #{net_forward.7} parent=1 // pred_fallthru
      _
    %v22 = vld [vmem:[%s0] sm:$0xff]
    %v23 = vld [vmem:[%s0 + $0x8] sm:$0xff]
    %v24 = vld [vmem:[%s0 + $0x10] sm:$0xff]
    %v25 = vld [vmem:[%s0 + $0x18] sm:$0xff]
    %v26 = vld [vmem:[%s1] sm:$0xf]
    %v27 = vld [vmem:[%s1 + $0x4] sm:$0xf]
    %v28 = vld [vmem:[%s1 + $0x8] sm:$0xf]
    %v29 = vld [vmem:[%s1 + $0xc] sm:$0xf]
    %v30 = vld [vmem:[%s1 + $0x10] sm:$0xf]
    %v31 = vld [vmem:[%s1 + $0x14] sm:$0xf]
    %v32 = vld [vmem:[%s1 + $0x18] sm:$0xf]
    %v33 = vld [vmem:[%s1 + $0x1c] sm:$0xf]
    %v34 = vld [vmem:[%s1 + $0x20] sm:$0xf]
    %v35 = vld [vmem:[%s1 + $0x24] sm:$0xf]
    %v36 = vld [vmem:[%s1 + $0x28] sm:$0xf]
    %v37 = vld [vmem:[%s1 + $0x2c] sm:$0xf]
    %v38 = vld [vmem:[%s1 + $0x30] sm:$0xf]
    %v39 = vld [vmem:[%s1 + $0x34] sm:$0xf]
    %v40 = vld [vmem:[%s1 + $0x38] sm:$0xf]
    %v41 = vld [vmem:[%s1 + $0x3c] sm:$0xf]
    %v42 = vld [vmem:[%s1 + $0x40] sm:$0xf]
    %v43 = vld [vmem:[%s1 + $0x44] sm:$0xf]
    %v44 = vld [vmem:[%s1 + $0x48] sm:$0xf]
    %v45 = vld [vmem:[%s1 + $0x4c] sm:$0xf]
    %v46 = vld [vmem:[%s1 + $0x50] sm:$0xf]
    %v47 = vld [vmem:[%s1 + $0x54] sm:$0xf]
    %v48 = vld [vmem:[%s1 + $0x58] sm:$0xf]
    %v49 = vld [vmem:[%s1 + $0x5c] sm:$0xf]
    %v50 = vld [vmem:[%s1 + $0x60] sm:$0xf]
    %v51 = vld [vmem:[%s1 + $0x64] sm:$0xf]
    %v52 = vld [vmem:[%s1 + $0x68] sm:$0xf]
    %v53 = vld [vmem:[%s1 + $0x6c] sm:$0xf]
    %v54 = vld [vmem:[%s1 + $0x70] sm:$0xf]
    %v55 = vld [vmem:[%s1 + $0x74] sm:$0xf]
    %v56 = vld [vmem:[%s1 + $0x78] sm:$0xf]
    %v57 = vld [vmem:[%s1 + $0x7c] sm:$0xf]
    %v58 = vld [vmem:[%s1 + $0x80] sm:$0xf]
    %v59 = vld [vmem:[%s1 + $0x84] sm:$0xf]
    %v60 = vld [vmem:[%s1 + $0x88] sm:$0xf]
    %v61 = vld [vmem:[%s1 + $0x8c] sm:$0xf]
    %v62 = vld [vmem:[%s1 + $0x90] sm:$0xf]
    %v63 = vld [vmem:[%s1 + $0x94] sm:$0xf]
    %v64 = vld [vmem:[%s1 + $0x98] sm:$0xf]
    %v65 = vld [vmem:[%s1 + $0x9c] sm:$0xf]
    %v66 = vld [vmem:[%s1 + $0xa0] sm:$0xf]
    %v67 = vld [vmem:[%s1 + $0xa4] sm:$0xf]
    %v68 = vld [vmem:[%s1 + $0xa8] sm:$0xf]
    %v69 = vld [vmem:[%s1 + $0xac] sm:$0xf]
    %v70 = vld [vmem:[%s1 + $0xb0] sm:$0xf]
    %v71 = vld [vmem:[%s1 + $0xb4] sm:$0xf]
    %v72 = vld [vmem:[%s1 + $0xb8] sm:$0xf]
    %v73 = vld [vmem:[%s1 + $0xbc] sm:$0xf]
    %v74 = vld [vmem:[%s1 + $0xc0] sm:$0xf]
    %v75 = vld [vmem:[%s1 + $0xc4] sm:$0xf]
    %v76 = vld [vmem:[%s1 + $0xc8] sm:$0xf]
    %v77 = vld [vmem:[%s1 + $0xcc] sm:$0xf]
    %v78 = vld [vmem:[%s1 + $0xd0] sm:$0xf]
    %v79 = vld [vmem:[%s1 + $0xd4] sm:$0xf]
    %v80 = vld [vmem:[%s1 + $0xd8] sm:$0xf]
    %v81 = vld [vmem:[%s1 + $0xdc] sm:$0xf]
    %v82 = vld [vmem:[%s1 + $0xe0] sm:$0xf]
    %v83 = vld [vmem:[%s1 + $0xe4] sm:$0xf]
    %v84 = vld [vmem:[%s1 + $0xe8] sm:$0xf]
    %v85 = vld [vmem:[%s1 + $0xec] sm:$0xf]
    %v86 = vld [vmem:[%s1 + $0xf0] sm:$0xf]
    %v87 = vld [vmem:[%s1 + $0xf4] sm:$0xf]
    %v88 = vld [vmem:[%s1 + $0xf8] sm:$0xf]
    %v89 = vld [vmem:[%s1 + $0xfc] sm:$0xf]
    %v90 = vld [vmem:[%s1 + $0x100] sm:$0xf]
    %v91 = vld [vmem:[%s1 + $0x104] sm:$0xf]
    %v92 = vld [vmem:[%s1 + $0x108] sm:$0xf]
    %v93 = vld [vmem:[%s1 + $0x10c] sm:$0xf]
    %v94 = vld [vmem:[%s1 + $0x110] sm:$0xf]
    %v95 = vld [vmem:[%s1 + $0x114] sm:$0xf]
    %v96 = vld [vmem:[%s1 + $0x118] sm:$0xf]
    %v97 = vld [vmem:[%s1 + $0x11c] sm:$0xf]
    %v98 = vld [vmem:[%s1 + $0x120] sm:$0xf]
    %v99 = vld [vmem:[%s1 + $0x124] sm:$0xf]
    %v100 = vld [vmem:[%s1 + $0x128] sm:$0xf]
    %v101 = vld [vmem:[%s1 + $0x12c] sm:$0xf]
    %v102 = vld [vmem:[%s1 + $0x130] sm:$0xf]
    %v103 = vld [vmem:[%s1 + $0x134] sm:$0xf]
    %v104 = vld [vmem:[%s1 + $0x138] sm:$0xf]
    %v105 = vld [vmem:[%s1 + $0x13c] sm:$0xf]
    %v106 = vld [vmem:[%s1 + $0x140] sm:$0xf]
    %v107 = vld [vmem:[%s1 + $0x144] sm:$0xf]
    %v108 = vld [vmem:[%s1 + $0x148] sm:$0xf]
    %v109 = vld [vmem:[%s1 + $0x14c] sm:$0xf]
    %v110 = vld [vmem:[%s1 + $0x150] sm:$0xf]
    %v111 = vld [vmem:[%s1 + $0x154] sm:$0xf]
    %v112 = vld [vmem:[%s1 + $0x158] sm:$0xf]
    %v113 = vld [vmem:[%s1 + $0x15c] sm:$0xf]
    %v114 = vld [vmem:[%s1 + $0x160] sm:$0xf]
    %v115 = vld [vmem:[%s1 + $0x164] sm:$0xf]
    %v116 = vld [vmem:[%s1 + $0x168] sm:$0xf]
    %v117 = vld [vmem:[%s1 + $0x16c] sm:$0xf]
    %v118 = vld [vmem:[%s1 + $0x170] sm:$0xf]
    %v119 = vld [vmem:[%s1 + $0x174] sm:$0xf]
    %v120 = vld [vmem:[%s1 + $0x178] sm:$0xf]
    %v121 = vld [vmem:[%s1 + $0x17c] sm:$0xf]
    %v122 = vld [vmem:[%s1 + $0x180] sm:$0xf]
    %v123 = vld [vmem:[%s1 + $0x184] sm:$0xf]
    %v124 = vld [vmem:[%s1 + $0x188] sm:$0xf]
    %v125 = vld [vmem:[%s1 + $0x18c] sm:$0xf]
    %v126 = vld [vmem:[%s1 + $0x190] sm:$0xf]
    %v127 = vld [vmem:[%s1 + $0x194] sm:$0xf]
    %v128 = vld [vmem:[%s1 + $0x198] sm:$0xf]
    %v129 = vld [vmem:[%s1 + $0x19c] sm:$0xf]
    %v130 = vld [vmem:[%s1 + $0x1a0] sm:$0xf]
    %v131 = vld [vmem:[%s1 + $0x1a4] sm:$0xf]
    %v132 = vld [vmem:[%s1 + $0x1a8] sm:$0xf]
    %v133 = vld [vmem:[%s1 + $0x1ac] sm:$0xf]
    %v134 = vld [vmem:[%s1 + $0x1b0] sm:$0xf]
    %v135 = vld [vmem:[%s1 + $0x1b4] sm:$0xf]
    %v136 = vld [vmem:[%s1 + $0x1b8] sm:$0xf]
    %v137 = vld [vmem:[%s1 + $0x1bc] sm:$0xf]
    %v138 = vld [vmem:[%s1 + $0x1c0] sm:$0xf]
    %v139 = vld [vmem:[%s1 + $0x1c4] sm:$0xf]
    %v140 = vld [vmem:[%s1 + $0x1c8] sm:$0xf]
    %v141 = vld [vmem:[%s1 + $0x1cc] sm:$0xf]
    %v142 = vld [vmem:[%s1 + $0x1d0] sm:$0xf]
    %v143 = vld [vmem:[%s1 + $0x1d4] sm:$0xf]
    %v144 = vld [vmem:[%s1 + $0x1d8] sm:$0xf]
    %v145 = vld [vmem:[%s1 + $0x1dc] sm:$0xf]
    %v146 = vld [vmem:[%s1 + $0x1e0] sm:$0xf]
    %v147 = vld [vmem:[%s1 + $0x1e4] sm:$0xf]
    %v148 = vld [vmem:[%s1 + $0x1e8] sm:$0xf]
    %v149 = vld [vmem:[%s1 + $0x1ec] sm:$0xf]
    %v150 = vld [vmem:[%s1 + $0x1f0] sm:$0xf]
    %v151 = vld [vmem:[%s1 + $0x1f4] sm:$0xf]
    %v152 = vld [vmem:[%s1 + $0x1f8] sm:$0xf]
    %v153 = vld [vmem:[%s1 + $0x1fc] sm:$0xf]
    %v154 = vld [vmem:[%s1 + $0x200] sm:$0xf]
    %v155 = vld [vmem:[%s1 + $0x204] sm:$0xf]
    %v156 = vld [vmem:[%s1 + $0x208] sm:$0xf]
    %v157 = vld [vmem:[%s1 + $0x20c] sm:$0xf]
    %v158 = vld [vmem:[%s1 + $0x210] sm:$0xf]
    %v159 = vld [vmem:[%s1 + $0x214] sm:$0xf]
    %v160 = vld [vmem:[%s1 + $0x218] sm:$0xf]
    %v161 = vld [vmem:[%s1 + $0x21c] sm:$0xf]
    %v162 = vld [vmem:[%s1 + $0x220] sm:$0xf]
    %v163 = vld [vmem:[%s1 + $0x224] sm:$0xf]
    %v164 = vld [vmem:[%s1 + $0x228] sm:$0xf]
    %v165 = vld [vmem:[%s1 + $0x22c] sm:$0xf]
    %v166 = vld [vmem:[%s1 + $0x230] sm:$0xf]
    %v167 = vld [vmem:[%s1 + $0x234] sm:$0xf]
    %v168 = vld [vmem:[%s1 + $0x238] sm:$0xf]
    %v169 = vld [vmem:[%s1 + $0x23c] sm:$0xf]
    %v170 = vld [vmem:[%s1 + $0x240] sm:$0xf]
    %v171 = vld [vmem:[%s1 + $0x244] sm:$0xf]
    %v172 = vld [vmem:[%s1 + $0x248] sm:$0xf]
    %v173 = vld [vmem:[%s1 + $0x24c] sm:$0xf]
    %v174 = vld [vmem:[%s1 + $0x250] sm:$0xf]
    %v175 = vld [vmem:[%s1 + $0x254] sm:$0xf]
    %v176 = vld [vmem:[%s1 + $0x258] sm:$0xf]
    %v177 = vld [vmem:[%s1 + $0x25c] sm:$0xf]
    %v178 = vld [vmem:[%s1 + $0x260] sm:$0xf]
    %v179 = vld [vmem:[%s1 + $0x264] sm:$0xf]
    %v180 = vld [vmem:[%s1 + $0x268] sm:$0xf]
    %v181 = vld [vmem:[%s1 + $0x26c] sm:$0xf]
    %v182 = vld [vmem:[%s1 + $0x270] sm:$0xf]
    %v183 = vld [vmem:[%s1 + $0x274] sm:$0xf]
    %v184 = vld [vmem:[%s1 + $0x278] sm:$0xf]
    %v185 = vld [vmem:[%s1 + $0x27c] sm:$0xf]
    %v186 = vld [vmem:[%s1 + $0x280] sm:$0xf]
    %v187 = vld [vmem:[%s1 + $0x284] sm:$0xf]
    %v188 = vld [vmem:[%s1 + $0x288] sm:$0xf]
    %v189 = vld [vmem:[%s1 + $0x28c] sm:$0xf]
    %v190 = vld [vmem:[%s1 + $0x290] sm:$0xf]
    %v191 = vld [vmem:[%s1 + $0x294] sm:$0xf]
    %v192 = vld [vmem:[%s1 + $0x298] sm:$0xf]
    %v193 = vld [vmem:[%s1 + $0x29c] sm:$0xf]
    %v194 = vld [vmem:[%s1 + $0x2a0] sm:$0xf]
    %v195 = vld [vmem:[%s1 + $0x2a4] sm:$0xf]
    %v196 = vld [vmem:[%s1 + $0x2a8] sm:$0xf]
    %v197 = vld [vmem:[%s1 + $0x2ac] sm:$0xf]
    %v198 = vld [vmem:[%s1 + $0x2b0] sm:$0xf]
    %v199 = vld [vmem:[%s1 + $0x2b4] sm:$0xf]
    %v200 = vld [vmem:[%s1 + $0x2b8] sm:$0xf]
    %v201 = vld [vmem:[%s1 + $0x2bc] sm:$0xf]
    %v202 = vld [vmem:[%s1 + $0x2c0] sm:$0xf]
    %v203 = vld [vmem:[%s1 + $0x2c4] sm:$0xf]
    %v204 = vld [vmem:[%s1 + $0x2c8] sm:$0xf]
    %v205 = vld [vmem:[%s1 + $0x2cc] sm:$0xf]
    %v206 = vld [vmem:[%s1 + $0x2d0] sm:$0xf]
    %v207 = vld [vmem:[%s1 + $0x2d4] sm:$0xf]
    %v208 = vld [vmem:[%s1 + $0x2d8] sm:$0xf]
    %v209 = vld [vmem:[%s1 + $0x2dc] sm:$0xf]
    %v210 = vld [vmem:[%s1 + $0x2e0] sm:$0xf]
    %v211 = vld [vmem:[%s1 + $0x2e4] sm:$0xf]
    %v212 = vld [vmem:[%s1 + $0x2e8] sm:$0xf]
    %v213 = vld [vmem:[%s1 + $0x2ec] sm:$0xf]
    %v214 = vld [vmem:[%s1 + $0x2f0] sm:$0xf]
    %v215 = vld [vmem:[%s1 + $0x2f4] sm:$0xf]
    %v216 = vld [vmem:[%s1 + $0x2f8] sm:$0xf]
    %v217 = vld [vmem:[%s1 + $0x2fc] sm:$0xf]
    %v218 = vld [vmem:[%s1 + $0x300] sm:$0xf]
    %v219 = vld [vmem:[%s1 + $0x304] sm:$0xf]
    %v220 = vld [vmem:[%s1 + $0x308] sm:$0xf]
    %v221 = vld [vmem:[%s1 + $0x30c] sm:$0xf]
    %v222 = vld [vmem:[%s1 + $0x310] sm:$0xf]
    %v223 = vld [vmem:[%s1 + $0x314] sm:$0xf]
    %v224 = vld [vmem:[%s1 + $0x318] sm:$0xf]
    %v225 = vld [vmem:[%s1 + $0x31c] sm:$0xf]
    %v226 = vld [vmem:[%s1 + $0x320] sm:$0xf]
    %v227 = vld [vmem:[%s1 + $0x324] sm:$0xf]
    %v228 = vld [vmem:[%s1 + $0x328] sm:$0xf]
    %v229 = vld [vmem:[%s1 + $0x32c] sm:$0xf]
    %v230 = vld [vmem:[%s1 + $0x330] sm:$0xf]
    %v231 = vld [vmem:[%s1 + $0x334] sm:$0xf]
    %v232 = vld [vmem:[%s1 + $0x338] sm:$0xf]
    %v233 = vld [vmem:[%s1 + $0x33c] sm:$0xf]
    %v234 = vld [vmem:[%s1 + $0x340] sm:$0xf]
    %v235 = vld [vmem:[%s1 + $0x344] sm:$0xf]
    %v236 = vld [vmem:[%s1 + $0x348] sm:$0xf]
    %v237 = vld [vmem:[%s1 + $0x34c] sm:$0xf]
    %v238 = vld [vmem:[%s1 + $0x350] sm:$0xf]
    %v239 = vld [vmem:[%s1 + $0x354] sm:$0xf]
    %v240 = vld [vmem:[%s1 + $0x358] sm:$0xf]
    %v241 = vld [vmem:[%s1 + $0x35c] sm:$0xf]
    %v242 = vld [vmem:[%s1 + $0x360] sm:$0xf]
    %v243 = vld [vmem:[%s1 + $0x364] sm:$0xf]
    %v244 = vld [vmem:[%s1 + $0x368] sm:$0xf]
    %v245 = vld [vmem:[%s1 + $0x36c] sm:$0xf]
    %v246 = vld [vmem:[%s1 + $0x370] sm:$0xf]
    %v247 = vld [vmem:[%s1 + $0x374] sm:$0xf]
    %v248 = vld [vmem:[%s1 + $0x378] sm:$0xf]
    %v249 = vld [vmem:[%s1 + $0x37c] sm:$0xf]
    %v250 = vld [vmem:[%s1 + $0x380] sm:$0xf]
    %v251 = vld [vmem:[%s1 + $0x384] sm:$0xf]
    %v252 = vld [vmem:[%s1 + $0x388] sm:$0xf]
    %v253 = vld [vmem:[%s1 + $0x38c] sm:$0xf]
    %v254 = vld [vmem:[%s1 + $0x390] sm:$0xf]
    %v255 = vld [vmem:[%s1 + $0x394] sm:$0xf]
    %v256 = vld [vmem:[%s1 + $0x398] sm:$0xf]
    %v257 = vld [vmem:[%s1 + $0x39c] sm:$0xf]
    %v258 = vld [vmem:[%s1 + $0x3a0] sm:$0xf]
    %v259 = vld [vmem:[%s1 + $0x3a4] sm:$0xf]
    %v260 = vld [vmem:[%s1 + $0x3a8] sm:$0xf]
    %v261 = vld [vmem:[%s1 + $0x3ac] sm:$0xf]
    %v262 = vld [vmem:[%s1 + $0x3b0] sm:$0xf]
    %v263 = vld [vmem:[%s1 + $0x3b4] sm:$0xf]
    %v264 = vld [vmem:[%s1 + $0x3b8] sm:$0xf]
    %v265 = vld [vmem:[%s1 + $0x3bc] sm:$0xf]
    %v266 = vld [vmem:[%s1 + $0x3c0] sm:$0xf]
    %v267 = vld [vmem:[%s1 + $0x3c4] sm:$0xf]
    %v268 = vld [vmem:[%s1 + $0x3c8] sm:$0xf]
    %v269 = vld [vmem:[%s1 + $0x3cc] sm:$0xf]
    %v270 = vld [vmem:[%s1 + $0x3d0] sm:$0xf]
    %v271 = vld [vmem:[%s1 + $0x3d4] sm:$0xf]
    %v272 = vld [vmem:[%s1 + $0x3d8] sm:$0xf]
    %v273 = vld [vmem:[%s1 + $0x3dc] sm:$0xf]
    %v274 = vld [vmem:[%s1 + $0x3e0] sm:$0xf]
    %v275 = vld [vmem:[%s1 + $0x3e4] sm:$0xf]
    %v276 = vld [vmem:[%s1 + $0x3e8] sm:$0xf]
    %v277 = vld [vmem:[%s1 + $0x3ec] sm:$0xf]
    %v278 = vld [vmem:[%s1 + $0x3f0] sm:$0xf]
    %v279 = vld [vmem:[%s1 + $0x3f4] sm:$0xf]
    %v280 = vld [vmem:[%s1 + $0x3f8] sm:$0xf]
    %v281 = vld [vmem:[%s1 + $0x3fc] sm:$0xf]
    %v282 = vld [vmem:[%s1 + $0x400] sm:$0xf]
    %v283 = vld [vmem:[%s1 + $0x404] sm:$0xf]
    %v284 = vld [vmem:[%s1 + $0x408] sm:$0xf]
    %v285 = vld [vmem:[%s1 + $0x40c] sm:$0xf]
    %v286 = vld [vmem:[%s1 + $0x410] sm:$0xf]
    %v287 = vld [vmem:[%s1 + $0x414] sm:$0xf]
    %v288 = vld [vmem:[%s1 + $0x418] sm:$0xf]
    %v289 = vld [vmem:[%s1 + $0x41c] sm:$0xf]
    %v290 = vld [vmem:[%s1 + $0x420] sm:$0xf]
    %v291 = vld [vmem:[%s1 + $0x424] sm:$0xf]
    %v292 = vld [vmem:[%s1 + $0x428] sm:$0xf]
    %v293 = vld [vmem:[%s1 + $0x42c] sm:$0xf]
    %v294 = vld [vmem:[%s1 + $0x430] sm:$0xf]
    %v295 = vld [vmem:[%s1 + $0x434] sm:$0xf]
    %v296 = vld [vmem:[%s1 + $0x438] sm:$0xf]
    %v297 = vld [vmem:[%s1 + $0x43c] sm:$0xf]
    %v298 = vld [vmem:[%s1 + $0x440] sm:$0xf]
    %v299 = vld [vmem:[%s1 + $0x444] sm:$0xf]
    %v300 = vld [vmem:[%s1 + $0x448] sm:$0xf]
    %v301 = vld [vmem:[%s1 + $0x44c] sm:$0xf]
    %v302 = vld [vmem:[%s1 + $0x450] sm:$0xf]
    %v303 = vld [vmem:[%s1 + $0x454] sm:$0xf]
    %v304 = vld [vmem:[%s1 + $0x458] sm:$0xf]
    %v305 = vld [vmem:[%s1 + $0x45c] sm:$0xf]
    %v306 = vld [vmem:[%s1 + $0x460] sm:$0xf]
    %v307 = vld [vmem:[%s1 + $0x464] sm:$0xf]
    %v308 = vld [vmem:[%s1 + $0x468] sm:$0xf]
    %v309 = vld [vmem:[%s1 + $0x46c] sm:$0xf]
    %v310 = vld [vmem:[%s1 + $0x470] sm:$0xf]
    %v311 = vld [vmem:[%s1 + $0x474] sm:$0xf]
    %v312 = vld [vmem:[%s1 + $0x478] sm:$0xf]
    %v313 = vld [vmem:[%s1 + $0x47c] sm:$0xf]
    %v314 = vld [vmem:[%s1 + $0x480] sm:$0xf]
    %v315 = vld [vmem:[%s1 + $0x484] sm:$0xf]
    %v316 = vld [vmem:[%s1 + $0x488] sm:$0xf]
    %v317 = vld [vmem:[%s1 + $0x48c] sm:$0xf]
    %v318 = vld [vmem:[%s1 + $0x490] sm:$0xf]
    %v319 = vld [vmem:[%s1 + $0x494] sm:$0xf]
    %v320 = vld [vmem:[%s1 + $0x498] sm:$0xf]
    %v321 = vld [vmem:[%s1 + $0x49c] sm:$0xf]
    %v322 = vld [vmem:[%s1 + $0x4a0] sm:$0xf]
    %v323 = vld [vmem:[%s1 + $0x4a4] sm:$0xf]
    %v324 = vld [vmem:[%s1 + $0x4a8] sm:$0xf]
    %v325 = vld [vmem:[%s1 + $0x4ac] sm:$0xf]
    %v326 = vld [vmem:[%s1 + $0x4b0] sm:$0xf]
    %v327 = vld [vmem:[%s1 + $0x4b4] sm:$0xf]
    %v328 = vld [vmem:[%s1 + $0x4b8] sm:$0xf]
    %v329 = vld [vmem:[%s1 + $0x4bc] sm:$0xf]
    %v330 = vld [vmem:[%s1 + $0x4c0] sm:$0xf]
    %v331 = vld [vmem:[%s1 + $0x4c4] sm:$0xf]
    %v332 = vld [vmem:[%s1 + $0x4c8] sm:$0xf]
    %v333 = vld [vmem:[%s1 + $0x4cc] sm:$0xf]
    %v334 = vld [vmem:[%s1 + $0x4d0] sm:$0xf]
    %v335 = vld [vmem:[%s1 + $0x4d4] sm:$0xf]
    %v336 = vld [vmem:[%s1 + $0x4d8] sm:$0xf]
    %v337 = vld [vmem:[%s1 + $0x4dc] sm:$0xf]
    %v338 = vld [vmem:[%s1 + $0x4e0] sm:$0xf]
    %v339 = vld [vmem:[%s1 + $0x4e4] sm:$0xf]
    %v340 = vld [vmem:[%s1 + $0x4e8] sm:$0xf]
    %v341 = vld [vmem:[%s1 + $0x4ec] sm:$0xf]
    %v342 = vld [vmem:[%s1 + $0x4f0] sm:$0xf]
    %v343 = vld [vmem:[%s1 + $0x4f4] sm:$0xf]
    %v344 = vld [vmem:[%s1 + $0x4f8] sm:$0xf]
    %v345 = vld [vmem:[%s1 + $0x4fc] sm:$0xf]
    %v346 = vld [vmem:[%s1 + $0x500] sm:$0xf]
    %v347 = vld [vmem:[%s1 + $0x504] sm:$0xf]
    %v348 = vld [vmem:[%s1 + $0x508] sm:$0xf]
    %v349 = vld [vmem:[%s1 + $0x50c] sm:$0xf]
    %v350 = vld [vmem:[%s1 + $0x510] sm:$0xf]
    %v351 = vld [vmem:[%s1 + $0x514] sm:$0xf]
    %v352 = vld [vmem:[%s1 + $0x518] sm:$0xf]
    %v353 = vld [vmem:[%s1 + $0x51c] sm:$0xf]
    %v354 = vld [vmem:[%s1 + $0x520] sm:$0xf]
    %v355 = vld [vmem:[%s1 + $0x524] sm:$0xf]
    %v356 = vld [vmem:[%s1 + $0x528] sm:$0xf]
    %v357 = vld [vmem:[%s1 + $0x52c] sm:$0xf]
    %v358 = vld [vmem:[%s1 + $0x530] sm:$0xf]
    %v359 = vld [vmem:[%s1 + $0x534] sm:$0xf]
    %v360 = vld [vmem:[%s1 + $0x538] sm:$0xf]
    %v361 = vld [vmem:[%s1 + $0x53c] sm:$0xf]
    %v362 = vld [vmem:[%s1 + $0x540] sm:$0xf]
    %v363 = vld [vmem:[%s1 + $0x544] sm:$0xf]
    %v364 = vld [vmem:[%s1 + $0x548] sm:$0xf]
    %v365 = vld [vmem:[%s1 + $0x54c] sm:$0xf]
    %v366 = vld [vmem:[%s1 + $0x550] sm:$0xf]
    %v367 = vld [vmem:[%s1 + $0x554] sm:$0xf]
    %v368 = vld [vmem:[%s1 + $0x558] sm:$0xf]
    %v369 = vld [vmem:[%s1 + $0x55c] sm:$0xf]
    %v370 = vld [vmem:[%s1 + $0x560] sm:$0xf]
    %v371 = vld [vmem:[%s1 + $0x564] sm:$0xf]
    %v372 = vld [vmem:[%s1 + $0x568] sm:$0xf]
    %v373 = vld [vmem:[%s1 + $0x56c] sm:$0xf]
    %v374 = vld [vmem:[%s1 + $0x570] sm:$0xf]
    %v375 = vld [vmem:[%s1 + $0x574] sm:$0xf]
    %v376 = vld [vmem:[%s1 + $0x578] sm:$0xf]
    %v377 = vld [vmem:[%s1 + $0x57c] sm:$0xf]
    %v378 = vld [vmem:[%s1 + $0x580] sm:$0xf]
    %v379 = vld [vmem:[%s1 + $0x584] sm:$0xf]
    %v380 = vld [vmem:[%s1 + $0x588] sm:$0xf]
    %v381 = vld [vmem:[%s1 + $0x58c] sm:$0xf]
    %v382 = vld [vmem:[%s1 + $0x590] sm:$0xf]
    %v383 = vld [vmem:[%s1 + $0x594] sm:$0xf]
    %v384 = vld [vmem:[%s1 + $0x598] sm:$0xf]
    %v385 = vld [vmem:[%s1 + $0x59c] sm:$0xf]
    %v386 = vld [vmem:[%s1 + $0x5a0] sm:$0xf]
    %v387 = vld [vmem:[%s1 + $0x5a4] sm:$0xf]
    %v388 = vld [vmem:[%s1 + $0x5a8] sm:$0xf]
    %v389 = vld [vmem:[%s1 + $0x5ac] sm:$0xf]
    %v390 = vld [vmem:[%s1 + $0x5b0] sm:$0xf]
    %v391 = vld [vmem:[%s1 + $0x5b4] sm:$0xf]
    %v392 = vld [vmem:[%s1 + $0x5b8] sm:$0xf]
    %v393 = vld [vmem:[%s1 + $0x5bc] sm:$0xf]
    %v394 = vld [vmem:[%s1 + $0x5c0] sm:$0xf]
    %v395 = vld [vmem:[%s1 + $0x5c4] sm:$0xf]
    %v396 = vld [vmem:[%s1 + $0x5c8] sm:$0xf]
    %v397 = vld [vmem:[%s1 + $0x5cc] sm:$0xf]
    %v398 = vld [vmem:[%s1 + $0x5d0] sm:$0xf]
    %v399 = vld [vmem:[%s1 + $0x5d4] sm:$0xf]
    %v400 = vld [vmem:[%s1 + $0x5d8] sm:$0xf]
    %v401 = vld [vmem:[%s1 + $0x5dc] sm:$0xf]
    %v402 = vld [vmem:[%s1 + $0x5e0] sm:$0xf]
    %v403 = vld [vmem:[%s1 + $0x5e4] sm:$0xf]
    %v404 = vld [vmem:[%s1 + $0x5e8] sm:$0xf]
    %v405 = vld [vmem:[%s1 + $0x5ec] sm:$0xf]
    %v406 = vld [vmem:[%s1 + $0x5f0] sm:$0xf]
    %v407 = vld [vmem:[%s1 + $0x5f4] sm:$0xf]
    %v408 = vld [vmem:[%s1 + $0x5f8] sm:$0xf]
    %v409 = vld [vmem:[%s1 + $0x5fc] sm:$0xf]
    %v410 = vld [vmem:[%s1 + $0x600] sm:$0xf]
    %v411 = vld [vmem:[%s1 + $0x604] sm:$0xf]
    %v412 = vld [vmem:[%s1 + $0x608] sm:$0xf]
    %v413 = vld [vmem:[%s1 + $0x60c] sm:$0xf]
    %v414 = vld [vmem:[%s1 + $0x610] sm:$0xf]
    %v415 = vld [vmem:[%s1 + $0x614] sm:$0xf]
    %v416 = vld [vmem:[%s1 + $0x618] sm:$0xf]
    %v417 = vld [vmem:[%s1 + $0x61c] sm:$0xf]
    %v418 = vld [vmem:[%s1 + $0x620] sm:$0xf]
    %v419 = vld [vmem:[%s1 + $0x624] sm:$0xf]
    %v420 = vld [vmem:[%s1 + $0x628] sm:$0xf]
    %v421 = vld [vmem:[%s1 + $0x62c] sm:$0xf]
    %v422 = vld [vmem:[%s1 + $0x630] sm:$0xf]
    %v423 = vld [vmem:[%s1 + $0x634] sm:$0xf]
    %v424 = vld [vmem:[%s1 + $0x638] sm:$0xf]
    %v425 = vld [vmem:[%s1 + $0x63c] sm:$0xf]
    %v426 = vld [vmem:[%s1 + $0x640] sm:$0xf]
    %v427 = vld [vmem:[%s1 + $0x644] sm:$0xf]
    %v428 = vld [vmem:[%s1 + $0x648] sm:$0xf]
    %v429 = vld [vmem:[%s1 + $0x64c] sm:$0xf]
    %v430 = vld [vmem:[%s1 + $0x650] sm:$0xf]
    %v431 = vld [vmem:[%s1 + $0x654] sm:$0xf]
    %v432 = vld [vmem:[%s1 + $0x658] sm:$0xf]
    %v433 = vld [vmem:[%s1 + $0x65c] sm:$0xf]
    %v434 = vld [vmem:[%s1 + $0x660] sm:$0xf]
    %v435 = vld [vmem:[%s1 + $0x664] sm:$0xf]
    %v436 = vld [vmem:[%s1 + $0x668] sm:$0xf]
    %v437 = vld [vmem:[%s1 + $0x66c] sm:$0xf]
    %v438 = vld [vmem:[%s1 + $0x670] sm:$0xf]
    %v439 = vld [vmem:[%s1 + $0x674] sm:$0xf]
    %v440 = vld [vmem:[%s1 + $0x678] sm:$0xf]
    %v441 = vld [vmem:[%s1 + $0x67c] sm:$0xf]
    %v442 = vld [vmem:[%s1 + $0x680] sm:$0xf]
    %v443 = vld [vmem:[%s1 + $0x684] sm:$0xf]
    %v444 = vld [vmem:[%s1 + $0x688] sm:$0xf]
    %v445 = vld [vmem:[%s1 + $0x68c] sm:$0xf]
    %v446 = vld [vmem:[%s1 + $0x690] sm:$0xf]
    %v447 = vld [vmem:[%s1 + $0x694] sm:$0xf]
    %v448 = vld [vmem:[%s1 + $0x698] sm:$0xf]
    %v449 = vld [vmem:[%s1 + $0x69c] sm:$0xf]
    %v450 = vld [vmem:[%s1 + $0x6a0] sm:$0xf]
    %v451 = vld [vmem:[%s1 + $0x6a4] sm:$0xf]
    %v452 = vld [vmem:[%s1 + $0x6a8] sm:$0xf]
    %v453 = vld [vmem:[%s1 + $0x6ac] sm:$0xf]
    %v454 = vld [vmem:[%s1 + $0x6b0] sm:$0xf]
    %v455 = vld [vmem:[%s1 + $0x6b4] sm:$0xf]
    %v456 = vld [vmem:[%s1 + $0x6b8] sm:$0xf]
    %v457 = vld [vmem:[%s1 + $0x6bc] sm:$0xf]
    %v458 = vld [vmem:[%s1 + $0x6c0] sm:$0xf]
    %v459 = vld [vmem:[%s1 + $0x6c4] sm:$0xf]
    %v460 = vld [vmem:[%s1 + $0x6c8] sm:$0xf]
    %v461 = vld [vmem:[%s1 + $0x6cc] sm:$0xf]
    %v462 = vld [vmem:[%s1 + $0x6d0] sm:$0xf]
    %v463 = vld [vmem:[%s1 + $0x6d4] sm:$0xf]
    %v464 = vld [vmem:[%s1 + $0x6d8] sm:$0xf]
    %v465 = vld [vmem:[%s1 + $0x6dc] sm:$0xf]
    %v466 = vld [vmem:[%s1 + $0x6e0] sm:$0xf]
    %v467 = vld [vmem:[%s1 + $0x6e4] sm:$0xf]
    %v468 = vld [vmem:[%s1 + $0x6e8] sm:$0xf]
    %v469 = vld [vmem:[%s1 + $0x6ec] sm:$0xf]
    %v470 = vld [vmem:[%s1 + $0x6f0] sm:$0xf]
    %v471 = vld [vmem:[%s1 + $0x6f4] sm:$0xf]
    %v472 = vld [vmem:[%s1 + $0x6f8] sm:$0xf]
    %v473 = vld [vmem:[%s1 + $0x6fc] sm:$0xf]
    %v474 = vld [vmem:[%s1 + $0x700] sm:$0xf]
    %v475 = vld [vmem:[%s1 + $0x704] sm:$0xf]
    %v476 = vld [vmem:[%s1 + $0x708] sm:$0xf]
    %v477 = vld [vmem:[%s1 + $0x70c] sm:$0xf]
    %v478 = vld [vmem:[%s1 + $0x710] sm:$0xf]
    %v479 = vld [vmem:[%s1 + $0x714] sm:$0xf]
    %v480 = vld [vmem:[%s1 + $0x718] sm:$0xf]
    %v481 = vld [vmem:[%s1 + $0x71c] sm:$0xf]
    %v482 = vld [vmem:[%s1 + $0x720] sm:$0xf]
    %v483 = vld [vmem:[%s1 + $0x724] sm:$0xf]
    %v484 = vld [vmem:[%s1 + $0x728] sm:$0xf]
    %v485 = vld [vmem:[%s1 + $0x72c] sm:$0xf]
    %v486 = vld [vmem:[%s1 + $0x730] sm:$0xf]
    %v487 = vld [vmem:[%s1 + $0x734] sm:$0xf]
    %v488 = vld [vmem:[%s1 + $0x738] sm:$0xf]
    %v489 = vld [vmem:[%s1 + $0x73c] sm:$0xf]
    %v490 = vld [vmem:[%s1 + $0x740] sm:$0xf]
    %v491 = vld [vmem:[%s1 + $0x744] sm:$0xf]
    %v492 = vld [vmem:[%s1 + $0x748] sm:$0xf]
    %v493 = vld [vmem:[%s1 + $0x74c] sm:$0xf]
    %v494 = vld [vmem:[%s1 + $0x750] sm:$0xf]
    %v495 = vld [vmem:[%s1 + $0x754] sm:$0xf]
    %v496 = vld [vmem:[%s1 + $0x758] sm:$0xf]
    %v497 = vld [vmem:[%s1 + $0x75c] sm:$0xf]
    %v498 = vld [vmem:[%s1 + $0x760] sm:$0xf]
    %v499 = vld [vmem:[%s1 + $0x764] sm:$0xf]
    %v500 = vld [vmem:[%s1 + $0x768] sm:$0xf]
    %v501 = vld [vmem:[%s1 + $0x76c] sm:$0xf]
    %v502 = vld [vmem:[%s1 + $0x770] sm:$0xf]
    %v503 = vld [vmem:[%s1 + $0x774] sm:$0xf]
    %v504 = vld [vmem:[%s1 + $0x778] sm:$0xf]
    %v505 = vld [vmem:[%s1 + $0x77c] sm:$0xf]
    %v506 = vld [vmem:[%s1 + $0x780] sm:$0xf]
    %v507 = vld [vmem:[%s1 + $0x784] sm:$0xf]
    %v508 = vld [vmem:[%s1 + $0x788] sm:$0xf]
    %v509 = vld [vmem:[%s1 + $0x78c] sm:$0xf]
    %v510 = vld [vmem:[%s1 + $0x790] sm:$0xf]
    %v511 = vld [vmem:[%s1 + $0x794] sm:$0xf]
    %v512 = vld [vmem:[%s1 + $0x798] sm:$0xf]
    %v513 = vld [vmem:[%s1 + $0x79c] sm:$0xf]
    %v514 = vld [vmem:[%s1 + $0x7a0] sm:$0xf]
    %v515 = vld [vmem:[%s1 + $0x7a4] sm:$0xf]
    %v516 = vld [vmem:[%s1 + $0x7a8] sm:$0xf]
    %v517 = vld [vmem:[%s1 + $0x7ac] sm:$0xf]
    %v518 = vld [vmem:[%s1 + $0x7b0] sm:$0xf]
    %v519 = vld [vmem:[%s1 + $0x7b4] sm:$0xf]
    %v520 = vld [vmem:[%s1 + $0x7b8] sm:$0xf]
    %v521 = vld [vmem:[%s1 + $0x7bc] sm:$0xf]
    %v522 = vld [vmem:[%s1 + $0x7c0] sm:$0xf]
    %v523 = vld [vmem:[%s1 + $0x7c4] sm:$0xf]
    %v524 = vld [vmem:[%s1 + $0x7c8] sm:$0xf]
    %v525 = vld [vmem:[%s1 + $0x7cc] sm:$0xf]
    %v526 = vld [vmem:[%s1 + $0x7d0] sm:$0xf]
    %v527 = vld [vmem:[%s1 + $0x7d4] sm:$0xf]
    %v528 = vld [vmem:[%s1 + $0x7d8] sm:$0xf]
    %v529 = vld [vmem:[%s1 + $0x7dc] sm:$0xf]
    %v530 = vld [vmem:[%s2] sm:$0x1]
    %v532 = vperm.slane %v530, 0
    %535 = vst [vmem:[#allocation1] ss:$9 sm:$0xff] %v22
    %v536 = vld [vmem:[#allocation1] sm:$0xff]
    %v537 = vld [vmem:[#allocation1 + $0x9] sm:$0xff]
    %v538 = vld [vmem:[#allocation1 + $0x12] sm:$0xff]
    %v539 = vld [vmem:[#allocation1 + $0x1b] sm:$0xff]
    %v540 = vld [vmem:[#allocation1 + $0x24] sm:$0xff]
    %v541 = vld [vmem:[#allocation1 + $0x2d] sm:$0xff]
    %v542 = vld [vmem:[#allocation1 + $0x36] sm:$0xff]
    %v543 = vld [vmem:[#allocation1 + $0x3f] sm:$0xff]
    %545 = vst [vmem:[#allocation1] ss:$9 sm:$0xff] %v23
    %v546 = vld [vmem:[#allocation1] sm:$0xff]
    %v547 = vld [vmem:[#allocation1 + $0x9] sm:$0xff]
    %v548 = vld [vmem:[#allocation1 + $0x12] sm:$0xff]
    %v549 = vld [vmem:[#allocation1 + $0x1b] sm:$0xff]
    %v550 = vld [vmem:[#allocation1 + $0x24] sm:$0xff]
    %v551 = vld [vmem:[#allocation1 + $0x2d] sm:$0xff]
    %v552 = vld [vmem:[#allocation1 + $0x36] sm:$0xff]
    %v553 = vld [vmem:[#allocation1 + $0x3f] sm:$0xff]
    %555 = vst [vmem:[#allocation1] ss:$9 sm:$0xff] %v24
    %v556 = vld [vmem:[#allocation1] sm:$0xff]
    %v557 = vld [vmem:[#allocation1 + $0x9] sm:$0xff]
    %v558 = vld [vmem:[#allocation1 + $0x12] sm:$0xff]
    %v559 = vld [vmem:[#allocation1 + $0x1b] sm:$0xff]
    %v560 = vld [vmem:[#allocation1 + $0x24] sm:$0xff]
    %v561 = vld [vmem:[#allocation1 + $0x2d] sm:$0xff]
    %v562 = vld [vmem:[#allocation1 + $0x36] sm:$0xff]
    %v563 = vld [vmem:[#allocation1 + $0x3f] sm:$0xff]
    %565 = vst [vmem:[#allocation1] ss:$9 sm:$0xff] %v25
    %v566 = vld [vmem:[#allocation1] sm:$0xff]
    %v567 = vld [vmem:[#allocation1 + $0x9] sm:$0xff]
    %v568 = vld [vmem:[#allocation1 + $0x12] sm:$0xff]
    %v569 = vld [vmem:[#allocation1 + $0x1b] sm:$0xff]
    %v570 = vld [vmem:[#allocation1 + $0x24] sm:$0xff]
    %v571 = vld [vmem:[#allocation1 + $0x2d] sm:$0xff]
    %v572 = vld [vmem:[#allocation1 + $0x36] sm:$0xff]
    %v573 = vld [vmem:[#allocation1 + $0x3f] sm:$0xff]
    %v1109 = vunpack.c.l.b16 %v26
    %v1110 = vunpack.c.l.b16 %v27
    %v1111 = vunpack.c.l.b16 %v28
    %v1112 = vunpack.c.l.b16 %v29
    %v1113 = vunpack.c.l.b16 %v30
    %v1114 = vunpack.c.l.b16 %v31
    %v1115 = vunpack.c.l.b16 %v32
    %v1116 = vunpack.c.l.b16 %v33
    %v1117 = vunpack.c.l.b16 %v34
    %v1118 = vunpack.c.l.b16 %v35
    %v1119 = vunpack.c.l.b16 %v36
    %v1120 = vunpack.c.l.b16 %v37
    %v1121 = vunpack.c.l.b16 %v38
    %v1122 = vunpack.c.l.b16 %v39
    %v1123 = vunpack.c.l.b16 %v40
    %v1124 = vunpack.c.l.b16 %v41
    %v1125 = vunpack.c.l.b16 %v42
    %v1126 = vunpack.c.l.b16 %v43
    %v1127 = vunpack.c.l.b16 %v44
    %v1128 = vunpack.c.l.b16 %v45
    %v1129 = vunpack.c.l.b16 %v46
    %v1130 = vunpack.c.l.b16 %v47
    %v1131 = vunpack.c.l.b16 %v48
    %v1132 = vunpack.c.l.b16 %v49
    %v1133 = vunpack.c.l.b16 %v50
    %v1134 = vunpack.c.l.b16 %v51
    %v1135 = vunpack.c.l.b16 %v52
    %v1136 = vunpack.c.l.b16 %v53
    %v1137 = vunpack.c.l.b16 %v54
    %v1138 = vunpack.c.l.b16 %v55
    %v1139 = vunpack.c.l.b16 %v56
    %v1140 = vunpack.c.l.b16 %v57
    %v1141 = vunpack.c.l.b16 %v58
    %v1142 = vunpack.c.l.b16 %v59
    %v1143 = vunpack.c.l.b16 %v60
    %v1144 = vunpack.c.l.b16 %v61
    %v1145 = vunpack.c.l.b16 %v62
    %v1146 = vunpack.c.l.b16 %v63
    %v1147 = vunpack.c.l.b16 %v64
    %v1148 = vunpack.c.l.b16 %v65
    %v1149 = vunpack.c.l.b16 %v66
    %v1150 = vunpack.c.l.b16 %v67
    %v1151 = vunpack.c.l.b16 %v68
    %v1152 = vunpack.c.l.b16 %v69
    %v1153 = vunpack.c.l.b16 %v70
    %v1154 = vunpack.c.l.b16 %v71
    %v1155 = vunpack.c.l.b16 %v72
    %v1156 = vunpack.c.l.b16 %v73
    %v1157 = vunpack.c.l.b16 %v74
    %v1158 = vunpack.c.l.b16 %v75
    %v1159 = vunpack.c.l.b16 %v76
    %v1160 = vunpack.c.l.b16 %v77
    %v1161 = vunpack.c.l.b16 %v78
    %v1162 = vunpack.c.l.b16 %v79
    %v1163 = vunpack.c.l.b16 %v80
    %v1164 = vunpack.c.l.b16 %v81
    %v1165 = vunpack.c.l.b16 %v82
    %v1166 = vunpack.c.l.b16 %v83
    %v1167 = vunpack.c.l.b16 %v84
    %v1168 = vunpack.c.l.b16 %v85
    %v1169 = vunpack.c.l.b16 %v86
    %v1170 = vunpack.c.l.b16 %v87
    %v1171 = vunpack.c.l.b16 %v88
    %v1172 = vunpack.c.l.b16 %v89
    %v1173 = vunpack.c.l.b16 %v90
    %v1174 = vunpack.c.l.b16 %v91
    %v1175 = vunpack.c.l.b16 %v92
    %v1176 = vunpack.c.l.b16 %v93
    %v1177 = vunpack.c.l.b16 %v94
    %v1178 = vunpack.c.l.b16 %v95
    %v1179 = vunpack.c.l.b16 %v96
    %v1180 = vunpack.c.l.b16 %v97
    %v1181 = vunpack.c.l.b16 %v98
    %v1182 = vunpack.c.l.b16 %v99
    %v1183 = vunpack.c.l.b16 %v100
    %v1184 = vunpack.c.l.b16 %v101
    %v1185 = vunpack.c.l.b16 %v102
    %v1186 = vunpack.c.l.b16 %v103
    %v1187 = vunpack.c.l.b16 %v104
    %v1188 = vunpack.c.l.b16 %v105
    %v1189 = vunpack.c.l.b16 %v106
    %v1190 = vunpack.c.l.b16 %v107
    %v1191 = vunpack.c.l.b16 %v108
    %v1192 = vunpack.c.l.b16 %v109
    %v1193 = vunpack.c.l.b16 %v110
    %v1194 = vunpack.c.l.b16 %v111
    %v1195 = vunpack.c.l.b16 %v112
    %v1196 = vunpack.c.l.b16 %v113
    %v1197 = vunpack.c.l.b16 %v114
    %v1198 = vunpack.c.l.b16 %v115
    %v1199 = vunpack.c.l.b16 %v116
    %v1200 = vunpack.c.l.b16 %v117
    %v1201 = vunpack.c.l.b16 %v118
    %v1202 = vunpack.c.l.b16 %v119
    %v1203 = vunpack.c.l.b16 %v120
    %v1204 = vunpack.c.l.b16 %v121
    %v1205 = vunpack.c.l.b16 %v122
    %v1206 = vunpack.c.l.b16 %v123
    %v1207 = vunpack.c.l.b16 %v124
    %v1208 = vunpack.c.l.b16 %v125
    %v1209 = vunpack.c.l.b16 %v126
    %v1210 = vunpack.c.l.b16 %v127
    %v1211 = vunpack.c.l.b16 %v128
    %v1212 = vunpack.c.l.b16 %v129
    %v1213 = vunpack.c.l.b16 %v130
    %v1214 = vunpack.c.l.b16 %v131
    %v1215 = vunpack.c.l.b16 %v132
    %v1216 = vunpack.c.l.b16 %v133
    %v1217 = vunpack.c.l.b16 %v134
    %v1218 = vunpack.c.l.b16 %v135
    %v1219 = vunpack.c.l.b16 %v136
    %v1220 = vunpack.c.l.b16 %v137
    %v1221 = vunpack.c.l.b16 %v138
    %v1222 = vunpack.c.l.b16 %v139
    %v1223 = vunpack.c.l.b16 %v140
    %v1224 = vunpack.c.l.b16 %v141
    %v1225 = vunpack.c.l.b16 %v142
    %v1226 = vunpack.c.l.b16 %v143
    %v1227 = vunpack.c.l.b16 %v144
    %v1228 = vunpack.c.l.b16 %v145
    %v1229 = vunpack.c.l.b16 %v146
    %v1230 = vunpack.c.l.b16 %v147
    %v1231 = vunpack.c.l.b16 %v148
    %v1232 = vunpack.c.l.b16 %v149
    %v1233 = vunpack.c.l.b16 %v150
    %v1234 = vunpack.c.l.b16 %v151
    %v1235 = vunpack.c.l.b16 %v152
    %v1236 = vunpack.c.l.b16 %v153
    %v1237 = vunpack.c.l.b16 %v154
    %v1238 = vunpack.c.l.b16 %v155
    %v1239 = vunpack.c.l.b16 %v156
    %v1240 = vunpack.c.l.b16 %v157
    %v1241 = vunpack.c.l.b16 %v158
    %v1242 = vunpack.c.l.b16 %v159
    %v1243 = vunpack.c.l.b16 %v160
    %v1244 = vunpack.c.l.b16 %v161
    %v1245 = vunpack.c.l.b16 %v162
    %v1246 = vunpack.c.l.b16 %v163
    %v1247 = vunpack.c.l.b16 %v164
    %v1248 = vunpack.c.l.b16 %v165
    %v1249 = vunpack.c.l.b16 %v166
    %v1250 = vunpack.c.l.b16 %v167
    %v1251 = vunpack.c.l.b16 %v168
    %v1252 = vunpack.c.l.b16 %v169
    %v1253 = vunpack.c.l.b16 %v170
    %v1254 = vunpack.c.l.b16 %v171
    %v1255 = vunpack.c.l.b16 %v172
    %v1256 = vunpack.c.l.b16 %v173
    %v1257 = vunpack.c.l.b16 %v174
    %v1258 = vunpack.c.l.b16 %v175
    %v1259 = vunpack.c.l.b16 %v176
    %v1260 = vunpack.c.l.b16 %v177
    %v1261 = vunpack.c.l.b16 %v178
    %v1262 = vunpack.c.l.b16 %v179
    %v1263 = vunpack.c.l.b16 %v180
    %v1264 = vunpack.c.l.b16 %v181
    %v1265 = vunpack.c.l.b16 %v182
    %v1266 = vunpack.c.l.b16 %v183
    %v1267 = vunpack.c.l.b16 %v184
    %v1268 = vunpack.c.l.b16 %v185
    %v1269 = vunpack.c.l.b16 %v186
    %v1270 = vunpack.c.l.b16 %v187
    %v1271 = vunpack.c.l.b16 %v188
    %v1272 = vunpack.c.l.b16 %v189
    %v1273 = vunpack.c.l.b16 %v190
    %v1274 = vunpack.c.l.b16 %v191
    %v1275 = vunpack.c.l.b16 %v192
    %v1276 = vunpack.c.l.b16 %v193
    %v1277 = vunpack.c.l.b16 %v194
    %v1278 = vunpack.c.l.b16 %v195
    %v1279 = vunpack.c.l.b16 %v196
    %v1280 = vunpack.c.l.b16 %v197
    %v1281 = vunpack.c.l.b16 %v198
    %v1282 = vunpack.c.l.b16 %v199
    %v1283 = vunpack.c.l.b16 %v200
    %v1284 = vunpack.c.l.b16 %v201
    %v1285 = vunpack.c.l.b16 %v202
    %v1286 = vunpack.c.l.b16 %v203
    %v1287 = vunpack.c.l.b16 %v204
    %v1288 = vunpack.c.l.b16 %v205
    %v1289 = vunpack.c.l.b16 %v206
    %v1290 = vunpack.c.l.b16 %v207
    %v1291 = vunpack.c.l.b16 %v208
    %v1292 = vunpack.c.l.b16 %v209
    %v1293 = vunpack.c.l.b16 %v210
    %v1294 = vunpack.c.l.b16 %v211
    %v1295 = vunpack.c.l.b16 %v212
    %v1296 = vunpack.c.l.b16 %v213
    %v1297 = vunpack.c.l.b16 %v214
    %v1298 = vunpack.c.l.b16 %v215
    %v1299 = vunpack.c.l.b16 %v216
    %v1300 = vunpack.c.l.b16 %v217
    %v1301 = vunpack.c.l.b16 %v218
    %v1302 = vunpack.c.l.b16 %v219
    %v1303 = vunpack.c.l.b16 %v220
    %v1304 = vunpack.c.l.b16 %v221
    %v1305 = vunpack.c.l.b16 %v222
    %v1306 = vunpack.c.l.b16 %v223
    %v1307 = vunpack.c.l.b16 %v224
    %v1308 = vunpack.c.l.b16 %v225
    %v1309 = vunpack.c.l.b16 %v226
    %v1310 = vunpack.c.l.b16 %v227
    %v1311 = vunpack.c.l.b16 %v228
    %v1312 = vunpack.c.l.b16 %v229
    %v1313 = vunpack.c.l.b16 %v230
    %v1314 = vunpack.c.l.b16 %v231
    %v1315 = vunpack.c.l.b16 %v232
    %v1316 = vunpack.c.l.b16 %v233
    %v1317 = vunpack.c.l.b16 %v234
    %v1318 = vunpack.c.l.b16 %v235
    %v1319 = vunpack.c.l.b16 %v236
    %v1320 = vunpack.c.l.b16 %v237
    %v1321 = vunpack.c.l.b16 %v238
    %v1322 = vunpack.c.l.b16 %v239
    %v1323 = vunpack.c.l.b16 %v240
    %v1324 = vunpack.c.l.b16 %v241
    %v1325 = vunpack.c.l.b16 %v242
    %v1326 = vunpack.c.l.b16 %v243
    %v1327 = vunpack.c.l.b16 %v244
    %v1328 = vunpack.c.l.b16 %v245
    %v1329 = vunpack.c.l.b16 %v246
    %v1330 = vunpack.c.l.b16 %v247
    %v1331 = vunpack.c.l.b16 %v248
    %v1332 = vunpack.c.l.b16 %v249
    %v1333 = vunpack.c.l.b16 %v250
    %v1334 = vunpack.c.l.b16 %v251
    %v1335 = vunpack.c.l.b16 %v252
    %v1336 = vunpack.c.l.b16 %v253
    %v1337 = vunpack.c.l.b16 %v254
    %v1338 = vunpack.c.l.b16 %v255
    %v1339 = vunpack.c.l.b16 %v256
    %v1340 = vunpack.c.l.b16 %v257
    %v1341 = vunpack.c.l.b16 %v258
    %v1342 = vunpack.c.l.b16 %v259
    %v1343 = vunpack.c.l.b16 %v260
    %v1344 = vunpack.c.l.b16 %v261
    %v1345 = vunpack.c.l.b16 %v262
    %v1346 = vunpack.c.l.b16 %v263
    %v1347 = vunpack.c.l.b16 %v264
    %v1348 = vunpack.c.l.b16 %v265
    %v1349 = vunpack.c.l.b16 %v266
    %v1350 = vunpack.c.l.b16 %v267
    %v1351 = vunpack.c.l.b16 %v268
    %v1352 = vunpack.c.l.b16 %v269
    %v1353 = vunpack.c.l.b16 %v270
    %v1354 = vunpack.c.l.b16 %v271
    %v1355 = vunpack.c.l.b16 %v272
    %v1356 = vunpack.c.l.b16 %v273
    %v1357 = vunpack.c.l.b16 %v274
    %v1358 = vunpack.c.l.b16 %v275
    %v1359 = vunpack.c.l.b16 %v276
    %v1360 = vunpack.c.l.b16 %v277
    %v1361 = vunpack.c.l.b16 %v278
    %v1362 = vunpack.c.l.b16 %v279
    %v1363 = vunpack.c.l.b16 %v280
    %v1364 = vunpack.c.l.b16 %v281
    %v1365 = vunpack.c.l.b16 %v282
    %v1366 = vunpack.c.l.b16 %v283
    %v1367 = vunpack.c.l.b16 %v284
    %v1368 = vunpack.c.l.b16 %v285
    %v1369 = vunpack.c.l.b16 %v286
    %v1370 = vunpack.c.l.b16 %v287
    %v1371 = vunpack.c.l.b16 %v288
    %v1372 = vunpack.c.l.b16 %v289
    %v1373 = vunpack.c.l.b16 %v290
    %v1374 = vunpack.c.l.b16 %v291
    %v1375 = vunpack.c.l.b16 %v292
    %v1376 = vunpack.c.l.b16 %v293
    %v1377 = vunpack.c.l.b16 %v294
    %v1378 = vunpack.c.l.b16 %v295
    %v1379 = vunpack.c.l.b16 %v296
    %v1380 = vunpack.c.l.b16 %v297
    %v1381 = vunpack.c.l.b16 %v298
    %v1382 = vunpack.c.l.b16 %v299
    %v1383 = vunpack.c.l.b16 %v300
    %v1384 = vunpack.c.l.b16 %v301
    %v1385 = vunpack.c.l.b16 %v302
    %v1386 = vunpack.c.l.b16 %v303
    %v1387 = vunpack.c.l.b16 %v304
    %v1388 = vunpack.c.l.b16 %v305
    %v1389 = vunpack.c.l.b16 %v306
    %v1390 = vunpack.c.l.b16 %v307
    %v1391 = vunpack.c.l.b16 %v308
    %v1392 = vunpack.c.l.b16 %v309
    %v1393 = vunpack.c.l.b16 %v310
    %v1394 = vunpack.c.l.b16 %v311
    %v1395 = vunpack.c.l.b16 %v312
    %v1396 = vunpack.c.l.b16 %v313
    %v1397 = vunpack.c.l.b16 %v314
    %v1398 = vunpack.c.l.b16 %v315
    %v1399 = vunpack.c.l.b16 %v316
    %v1400 = vunpack.c.l.b16 %v317
    %v1401 = vunpack.c.l.b16 %v318
    %v1402 = vunpack.c.l.b16 %v319
    %v1403 = vunpack.c.l.b16 %v320
    %v1404 = vunpack.c.l.b16 %v321
    %v1405 = vunpack.c.l.b16 %v322
    %v1406 = vunpack.c.l.b16 %v323
    %v1407 = vunpack.c.l.b16 %v324
    %v1408 = vunpack.c.l.b16 %v325
    %v1409 = vunpack.c.l.b16 %v326
    %v1410 = vunpack.c.l.b16 %v327
    %v1411 = vunpack.c.l.b16 %v328
    %v1412 = vunpack.c.l.b16 %v329
    %v1413 = vunpack.c.l.b16 %v330
    %v1414 = vunpack.c.l.b16 %v331
    %v1415 = vunpack.c.l.b16 %v332
    %v1416 = vunpack.c.l.b16 %v333
    %v1417 = vunpack.c.l.b16 %v334
    %v1418 = vunpack.c.l.b16 %v335
    %v1419 = vunpack.c.l.b16 %v336
    %v1420 = vunpack.c.l.b16 %v337
    %v1421 = vunpack.c.l.b16 %v338
    %v1422 = vunpack.c.l.b16 %v339
    %v1423 = vunpack.c.l.b16 %v340
    %v1424 = vunpack.c.l.b16 %v341
    %v1425 = vunpack.c.l.b16 %v342
    %v1426 = vunpack.c.l.b16 %v343
    %v1427 = vunpack.c.l.b16 %v344
    %v1428 = vunpack.c.l.b16 %v345
    %v1429 = vunpack.c.l.b16 %v346
    %v1430 = vunpack.c.l.b16 %v347
    %v1431 = vunpack.c.l.b16 %v348
    %v1432 = vunpack.c.l.b16 %v349
    %v1433 = vunpack.c.l.b16 %v350
    %v1434 = vunpack.c.l.b16 %v351
    %v1435 = vunpack.c.l.b16 %v352
    %v1436 = vunpack.c.l.b16 %v353
    %v1437 = vunpack.c.l.b16 %v354
    %v1438 = vunpack.c.l.b16 %v355
    %v1439 = vunpack.c.l.b16 %v356
    %v1440 = vunpack.c.l.b16 %v357
    %v1441 = vunpack.c.l.b16 %v358
    %v1442 = vunpack.c.l.b16 %v359
    %v1443 = vunpack.c.l.b16 %v360
    %v1444 = vunpack.c.l.b16 %v361
    %v1445 = vunpack.c.l.b16 %v362
    %v1446 = vunpack.c.l.b16 %v363
    %v1447 = vunpack.c.l.b16 %v364
    %v1448 = vunpack.c.l.b16 %v365
    %v1449 = vunpack.c.l.b16 %v366
    %v1450 = vunpack.c.l.b16 %v367
    %v1451 = vunpack.c.l.b16 %v368
    %v1452 = vunpack.c.l.b16 %v369
    %v1453 = vunpack.c.l.b16 %v370
    %v1454 = vunpack.c.l.b16 %v371
    %v1455 = vunpack.c.l.b16 %v372
    %v1456 = vunpack.c.l.b16 %v373
    %v1457 = vunpack.c.l.b16 %v374
    %v1458 = vunpack.c.l.b16 %v375
    %v1459 = vunpack.c.l.b16 %v376
    %v1460 = vunpack.c.l.b16 %v377
    %v1461 = vunpack.c.l.b16 %v378
    %v1462 = vunpack.c.l.b16 %v379
    %v1463 = vunpack.c.l.b16 %v380
    %v1464 = vunpack.c.l.b16 %v381
    %v1465 = vunpack.c.l.b16 %v382
    %v1466 = vunpack.c.l.b16 %v383
    %v1467 = vunpack.c.l.b16 %v384
    %v1468 = vunpack.c.l.b16 %v385
    %v1469 = vunpack.c.l.b16 %v386
    %v1470 = vunpack.c.l.b16 %v387
    %v1471 = vunpack.c.l.b16 %v388
    %v1472 = vunpack.c.l.b16 %v389
    %v1473 = vunpack.c.l.b16 %v390
    %v1474 = vunpack.c.l.b16 %v391
    %v1475 = vunpack.c.l.b16 %v392
    %v1476 = vunpack.c.l.b16 %v393
    %v1477 = vunpack.c.l.b16 %v394
    %v1478 = vunpack.c.l.b16 %v395
    %v1479 = vunpack.c.l.b16 %v396
    %v1480 = vunpack.c.l.b16 %v397
    %v1481 = vunpack.c.l.b16 %v398
    %v1482 = vunpack.c.l.b16 %v399
    %v1483 = vunpack.c.l.b16 %v400
    %v1484 = vunpack.c.l.b16 %v401
    %v1485 = vunpack.c.l.b16 %v402
    %v1486 = vunpack.c.l.b16 %v403
    %v1487 = vunpack.c.l.b16 %v404
    %v1488 = vunpack.c.l.b16 %v405
    %v1489 = vunpack.c.l.b16 %v406
    %v1490 = vunpack.c.l.b16 %v407
    %v1491 = vunpack.c.l.b16 %v408
    %v1492 = vunpack.c.l.b16 %v409
    %v1493 = vunpack.c.l.b16 %v410
    %v1494 = vunpack.c.l.b16 %v411
    %v1495 = vunpack.c.l.b16 %v412
    %v1496 = vunpack.c.l.b16 %v413
    %v1497 = vunpack.c.l.b16 %v414
    %v1498 = vunpack.c.l.b16 %v415
    %v1499 = vunpack.c.l.b16 %v416
    %v1500 = vunpack.c.l.b16 %v417
    %v1501 = vunpack.c.l.b16 %v418
    %v1502 = vunpack.c.l.b16 %v419
    %v1503 = vunpack.c.l.b16 %v420
    %v1504 = vunpack.c.l.b16 %v421
    %v1505 = vunpack.c.l.b16 %v422
    %v1506 = vunpack.c.l.b16 %v423
    %v1507 = vunpack.c.l.b16 %v424
    %v1508 = vunpack.c.l.b16 %v425
    %v1509 = vunpack.c.l.b16 %v426
    %v1510 = vunpack.c.l.b16 %v427
    %v1511 = vunpack.c.l.b16 %v428
    %v1512 = vunpack.c.l.b16 %v429
    %v1513 = vunpack.c.l.b16 %v430
    %v1514 = vunpack.c.l.b16 %v431
    %v1515 = vunpack.c.l.b16 %v432
    %v1516 = vunpack.c.l.b16 %v433
    %v1517 = vunpack.c.l.b16 %v434
    %v1518 = vunpack.c.l.b16 %v435
    %v1519 = vunpack.c.l.b16 %v436
    %v1520 = vunpack.c.l.b16 %v437
    %v1521 = vunpack.c.l.b16 %v438
    %v1522 = vunpack.c.l.b16 %v439
    %v1523 = vunpack.c.l.b16 %v440
    %v1524 = vunpack.c.l.b16 %v441
    %v1525 = vunpack.c.l.b16 %v442
    %v1526 = vunpack.c.l.b16 %v443
    %v1527 = vunpack.c.l.b16 %v444
    %v1528 = vunpack.c.l.b16 %v445
    %v1529 = vunpack.c.l.b16 %v446
    %v1530 = vunpack.c.l.b16 %v447
    %v1531 = vunpack.c.l.b16 %v448
    %v1532 = vunpack.c.l.b16 %v449
    %v1533 = vunpack.c.l.b16 %v450
    %v1534 = vunpack.c.l.b16 %v451
    %v1535 = vunpack.c.l.b16 %v452
    %v1536 = vunpack.c.l.b16 %v453
    %v1537 = vunpack.c.l.b16 %v454
    %v1538 = vunpack.c.l.b16 %v455
    %v1539 = vunpack.c.l.b16 %v456
    %v1540 = vunpack.c.l.b16 %v457
    %v1541 = vunpack.c.l.b16 %v458
    %v1542 = vunpack.c.l.b16 %v459
    %v1543 = vunpack.c.l.b16 %v460
    %v1544 = vunpack.c.l.b16 %v461
    %v1545 = vunpack.c.l.b16 %v462
    %v1546 = vunpack.c.l.b16 %v463
    %v1547 = vunpack.c.l.b16 %v464
    %v1548 = vunpack.c.l.b16 %v465
    %v1549 = vunpack.c.l.b16 %v466
    %v1550 = vunpack.c.l.b16 %v467
    %v1551 = vunpack.c.l.b16 %v468
    %v1552 = vunpack.c.l.b16 %v469
    %v1553 = vunpack.c.l.b16 %v470
    %v1554 = vunpack.c.l.b16 %v471
    %v1555 = vunpack.c.l.b16 %v472
    %v1556 = vunpack.c.l.b16 %v473
    %v1557 = vunpack.c.l.b16 %v474
    %v1558 = vunpack.c.l.b16 %v475
    %v1559 = vunpack.c.l.b16 %v476
    %v1560 = vunpack.c.l.b16 %v477
    %v1561 = vunpack.c.l.b16 %v478
    %v1562 = vunpack.c.l.b16 %v479
    %v1563 = vunpack.c.l.b16 %v480
    %v1564 = vunpack.c.l.b16 %v481
    %v1565 = vunpack.c.l.b16 %v482
    %v1566 = vunpack.c.l.b16 %v483
    %v1567 = vunpack.c.l.b16 %v484
    %v1568 = vunpack.c.l.b16 %v485
    %v1569 = vunpack.c.l.b16 %v486
    %v1570 = vunpack.c.l.b16 %v487
    %v1571 = vunpack.c.l.b16 %v488
    %v1572 = vunpack.c.l.b16 %v489
    %v1573 = vunpack.c.l.b16 %v490
    %v1574 = vunpack.c.l.b16 %v491
    %v1575 = vunpack.c.l.b16 %v492
    %v1576 = vunpack.c.l.b16 %v493
    %v1577 = vunpack.c.l.b16 %v494
    %v1578 = vunpack.c.l.b16 %v495
    %v1579 = vunpack.c.l.b16 %v496
    %v1580 = vunpack.c.l.b16 %v497
    %v1581 = vunpack.c.l.b16 %v498
    %v1582 = vunpack.c.l.b16 %v499
    %v1583 = vunpack.c.l.b16 %v500
    %v1584 = vunpack.c.l.b16 %v501
    %v1585 = vunpack.c.l.b16 %v502
    %v1586 = vunpack.c.l.b16 %v503
    %v1587 = vunpack.c.l.b16 %v504
    %v1588 = vunpack.c.l.b16 %v505
    %v1589 = vunpack.c.l.b16 %v506
    %v1590 = vunpack.c.l.b16 %v507
    %v1591 = vunpack.c.l.b16 %v508
    %v1592 = vunpack.c.l.b16 %v509
    %v1593 = vunpack.c.l.b16 %v510
    %v1594 = vunpack.c.l.b16 %v511
    %v1595 = vunpack.c.l.b16 %v512
    %v1596 = vunpack.c.l.b16 %v513
    %v1597 = vunpack.c.l.b16 %v514
    %v1598 = vunpack.c.l.b16 %v515
    %v1599 = vunpack.c.l.b16 %v516
    %v1600 = vunpack.c.l.b16 %v517
    %v1601 = vunpack.c.l.b16 %v518
    %v1602 = vunpack.c.l.b16 %v519
    %v1603 = vunpack.c.l.b16 %v520
    %v1604 = vunpack.c.l.b16 %v521
    %v1605 = vunpack.c.l.b16 %v522
    %v1606 = vunpack.c.l.b16 %v523
    %v1607 = vunpack.c.l.b16 %v524
    %v1608 = vunpack.c.l.b16 %v525
    %v1609 = vunpack.c.l.b16 %v526
    %v1610 = vunpack.c.l.b16 %v527
    %v1611 = vunpack.c.l.b16 %v528
    %v1612 = vunpack.c.l.b16 %v529
    %v1613 = vpack.c.b16 %v1110, %v1109
    %v1614 = vpack.c.b16 %v1112, %v1111
    %v1615 = vpack.c.b16 %v1114, %v1113
    %v1616 = vpack.c.b16 %v1116, %v1115
    %v1617 = vpack.c.b16 %v1118, %v1117
    %v1618 = vpack.c.b16 %v1120, %v1119
    %v1619 = vpack.c.b16 %v1122, %v1121
    %v1620 = vpack.c.b16 %v1124, %v1123
    %v1621 = vpack.c.b16 %v1126, %v1125
    %v1622 = vpack.c.b16 %v1128, %v1127
    %v1623 = vpack.c.b16 %v1130, %v1129
    %v1624 = vpack.c.b16 %v1132, %v1131
    %v1625 = vpack.c.b16 %v1134, %v1133
    %v1626 = vpack.c.b16 %v1136, %v1135
    %v1627 = vpack.c.b16 %v1138, %v1137
    %v1628 = vpack.c.b16 %v1140, %v1139
    %v1629 = vpack.c.b16 %v1142, %v1141
    %v1630 = vpack.c.b16 %v1144, %v1143
    %v1631 = vpack.c.b16 %v1146, %v1145
    %v1632 = vpack.c.b16 %v1148, %v1147
    %v1633 = vpack.c.b16 %v1150, %v1149
    %v1634 = vpack.c.b16 %v1152, %v1151
    %v1635 = vpack.c.b16 %v1154, %v1153
    %v1636 = vpack.c.b16 %v1156, %v1155
    %v1637 = vpack.c.b16 %v1158, %v1157
    %v1638 = vpack.c.b16 %v1160, %v1159
    %v1639 = vpack.c.b16 %v1162, %v1161
    %v1640 = vpack.c.b16 %v1164, %v1163
    %v1641 = vpack.c.b16 %v1166, %v1165
    %v1642 = vpack.c.b16 %v1168, %v1167
    %v1643 = vpack.c.b16 %v1170, %v1169
    %v1644 = vpack.c.b16 %v1172, %v1171
    %v1645 = vpack.c.b16 %v1174, %v1173
    %v1646 = vpack.c.b16 %v1176, %v1175
    %v1647 = vpack.c.b16 %v1178, %v1177
    %v1648 = vpack.c.b16 %v1180, %v1179
    %v1649 = vpack.c.b16 %v1182, %v1181
    %v1650 = vpack.c.b16 %v1184, %v1183
    %v1651 = vpack.c.b16 %v1186, %v1185
    %v1652 = vpack.c.b16 %v1188, %v1187
    %v1653 = vpack.c.b16 %v1190, %v1189
    %v1654 = vpack.c.b16 %v1192, %v1191
    %v1655 = vpack.c.b16 %v1194, %v1193
    %v1656 = vpack.c.b16 %v1196, %v1195
    %v1657 = vpack.c.b16 %v1198, %v1197
    %v1658 = vpack.c.b16 %v1200, %v1199
    %v1659 = vpack.c.b16 %v1202, %v1201
    %v1660 = vpack.c.b16 %v1204, %v1203
    %v1661 = vpack.c.b16 %v1206, %v1205
    %v1662 = vpack.c.b16 %v1208, %v1207
    %v1663 = vpack.c.b16 %v1210, %v1209
    %v1664 = vpack.c.b16 %v1212, %v1211
    %v1665 = vpack.c.b16 %v1214, %v1213
    %v1666 = vpack.c.b16 %v1216, %v1215
    %v1667 = vpack.c.b16 %v1218, %v1217
    %v1668 = vpack.c.b16 %v1220, %v1219
    %v1669 = vpack.c.b16 %v1222, %v1221
    %v1670 = vpack.c.b16 %v1224, %v1223
    %v1671 = vpack.c.b16 %v1226, %v1225
    %v1672 = vpack.c.b16 %v1228, %v1227
    %v1673 = vpack.c.b16 %v1230, %v1229
    %v1674 = vpack.c.b16 %v1232, %v1231
    %v1675 = vpack.c.b16 %v1234, %v1233
    %v1676 = vpack.c.b16 %v1236, %v1235
    %v1677 = vpack.c.b16 %v1238, %v1237
    %v1678 = vpack.c.b16 %v1240, %v1239
    %v1679 = vpack.c.b16 %v1242, %v1241
    %v1680 = vpack.c.b16 %v1244, %v1243
    %v1681 = vpack.c.b16 %v1246, %v1245
    %v1682 = vpack.c.b16 %v1248, %v1247
    %v1683 = vpack.c.b16 %v1250, %v1249
    %v1684 = vpack.c.b16 %v1252, %v1251
    %v1685 = vpack.c.b16 %v1254, %v1253
    %v1686 = vpack.c.b16 %v1256, %v1255
    %v1687 = vpack.c.b16 %v1258, %v1257
    %v1688 = vpack.c.b16 %v1260, %v1259
    %v1689 = vpack.c.b16 %v1262, %v1261
    %v1690 = vpack.c.b16 %v1264, %v1263
    %v1691 = vpack.c.b16 %v1266, %v1265
    %v1692 = vpack.c.b16 %v1268, %v1267
    %v1693 = vpack.c.b16 %v1270, %v1269
    %v1694 = vpack.c.b16 %v1272, %v1271
    %v1695 = vpack.c.b16 %v1274, %v1273
    %v1696 = vpack.c.b16 %v1276, %v1275
    %v1697 = vpack.c.b16 %v1278, %v1277
    %v1698 = vpack.c.b16 %v1280, %v1279
    %v1699 = vpack.c.b16 %v1282, %v1281
    %v1700 = vpack.c.b16 %v1284, %v1283
    %v1701 = vpack.c.b16 %v1286, %v1285
    %v1702 = vpack.c.b16 %v1288, %v1287
    %v1703 = vpack.c.b16 %v1290, %v1289
    %v1704 = vpack.c.b16 %v1292, %v1291
    %v1705 = vpack.c.b16 %v1294, %v1293
    %v1706 = vpack.c.b16 %v1296, %v1295
    %v1707 = vpack.c.b16 %v1298, %v1297
    %v1708 = vpack.c.b16 %v1300, %v1299
    %v1709 = vpack.c.b16 %v1302, %v1301
    %v1710 = vpack.c.b16 %v1304, %v1303
    %v1711 = vpack.c.b16 %v1306, %v1305
    %v1712 = vpack.c.b16 %v1308, %v1307
    %v1713 = vpack.c.b16 %v1310, %v1309
    %v1714 = vpack.c.b16 %v1312, %v1311
    %v1715 = vpack.c.b16 %v1314, %v1313
    %v1716 = vpack.c.b16 %v1316, %v1315
    %v1717 = vpack.c.b16 %v1318, %v1317
    %v1718 = vpack.c.b16 %v1320, %v1319
    %v1719 = vpack.c.b16 %v1322, %v1321
    %v1720 = vpack.c.b16 %v1324, %v1323
    %v1721 = vpack.c.b16 %v1326, %v1325
    %v1722 = vpack.c.b16 %v1328, %v1327
    %v1723 = vpack.c.b16 %v1330, %v1329
    %v1724 = vpack.c.b16 %v1332, %v1331
    %v1725 = vpack.c.b16 %v1334, %v1333
    %v1726 = vpack.c.b16 %v1336, %v1335
    %v1727 = vpack.c.b16 %v1338, %v1337
    %v1728 = vpack.c.b16 %v1340, %v1339
    %v1729 = vpack.c.b16 %v1342, %v1341
    %v1730 = vpack.c.b16 %v1344, %v1343
    %v1731 = vpack.c.b16 %v1346, %v1345
    %v1732 = vpack.c.b16 %v1348, %v1347
    %v1733 = vpack.c.b16 %v1350, %v1349
    %v1734 = vpack.c.b16 %v1352, %v1351
    %v1735 = vpack.c.b16 %v1354, %v1353
    %v1736 = vpack.c.b16 %v1356, %v1355
    %v1737 = vpack.c.b16 %v1358, %v1357
    %v1738 = vpack.c.b16 %v1360, %v1359
    %v1739 = vpack.c.b16 %v1362, %v1361
    %v1740 = vpack.c.b16 %v1364, %v1363
    %v1741 = vpack.c.b16 %v1366, %v1365
    %v1742 = vpack.c.b16 %v1368, %v1367
    %v1743 = vpack.c.b16 %v1370, %v1369
    %v1744 = vpack.c.b16 %v1372, %v1371
    %v1745 = vpack.c.b16 %v1374, %v1373
    %v1746 = vpack.c.b16 %v1376, %v1375
    %v1747 = vpack.c.b16 %v1378, %v1377
    %v1748 = vpack.c.b16 %v1380, %v1379
    %v1749 = vpack.c.b16 %v1382, %v1381
    %v1750 = vpack.c.b16 %v1384, %v1383
    %v1751 = vpack.c.b16 %v1386, %v1385
    %v1752 = vpack.c.b16 %v1388, %v1387
    %v1753 = vpack.c.b16 %v1390, %v1389
    %v1754 = vpack.c.b16 %v1392, %v1391
    %v1755 = vpack.c.b16 %v1394, %v1393
    %v1756 = vpack.c.b16 %v1396, %v1395
    %v1757 = vpack.c.b16 %v1398, %v1397
    %v1758 = vpack.c.b16 %v1400, %v1399
    %v1759 = vpack.c.b16 %v1402, %v1401
    %v1760 = vpack.c.b16 %v1404, %v1403
    %v1761 = vpack.c.b16 %v1406, %v1405
    %v1762 = vpack.c.b16 %v1408, %v1407
    %v1763 = vpack.c.b16 %v1410, %v1409
    %v1764 = vpack.c.b16 %v1412, %v1411
    %v1765 = vpack.c.b16 %v1414, %v1413
    %v1766 = vpack.c.b16 %v1416, %v1415
    %v1767 = vpack.c.b16 %v1418, %v1417
    %v1768 = vpack.c.b16 %v1420, %v1419
    %v1769 = vpack.c.b16 %v1422, %v1421
    %v1770 = vpack.c.b16 %v1424, %v1423
    %v1771 = vpack.c.b16 %v1426, %v1425
    %v1772 = vpack.c.b16 %v1428, %v1427
    %v1773 = vpack.c.b16 %v1430, %v1429
    %v1774 = vpack.c.b16 %v1432, %v1431
    %v1775 = vpack.c.b16 %v1434, %v1433
    %v1776 = vpack.c.b16 %v1436, %v1435
    %v1777 = vpack.c.b16 %v1438, %v1437
    %v1778 = vpack.c.b16 %v1440, %v1439
    %v1779 = vpack.c.b16 %v1442, %v1441
    %v1780 = vpack.c.b16 %v1444, %v1443
    %v1781 = vpack.c.b16 %v1446, %v1445
    %v1782 = vpack.c.b16 %v1448, %v1447
    %v1783 = vpack.c.b16 %v1450, %v1449
    %v1784 = vpack.c.b16 %v1452, %v1451
    %v1785 = vpack.c.b16 %v1454, %v1453
    %v1786 = vpack.c.b16 %v1456, %v1455
    %v1787 = vpack.c.b16 %v1458, %v1457
    %v1788 = vpack.c.b16 %v1460, %v1459
    %v1789 = vpack.c.b16 %v1462, %v1461
    %v1790 = vpack.c.b16 %v1464, %v1463
    %v1791 = vpack.c.b16 %v1466, %v1465
    %v1792 = vpack.c.b16 %v1468, %v1467
    %v1793 = vpack.c.b16 %v1470, %v1469
    %v1794 = vpack.c.b16 %v1472, %v1471
    %v1795 = vpack.c.b16 %v1474, %v1473
    %v1796 = vpack.c.b16 %v1476, %v1475
    %v1797 = vpack.c.b16 %v1478, %v1477
    %v1798 = vpack.c.b16 %v1480, %v1479
    %v1799 = vpack.c.b16 %v1482, %v1481
    %v1800 = vpack.c.b16 %v1484, %v1483
    %v1801 = vpack.c.b16 %v1486, %v1485
    %v1802 = vpack.c.b16 %v1488, %v1487
    %v1803 = vpack.c.b16 %v1490, %v1489
    %v1804 = vpack.c.b16 %v1492, %v1491
    %v1805 = vpack.c.b16 %v1494, %v1493
    %v1806 = vpack.c.b16 %v1496, %v1495
    %v1807 = vpack.c.b16 %v1498, %v1497
    %v1808 = vpack.c.b16 %v1500, %v1499
    %v1809 = vpack.c.b16 %v1502, %v1501
    %v1810 = vpack.c.b16 %v1504, %v1503
    %v1811 = vpack.c.b16 %v1506, %v1505
    %v1812 = vpack.c.b16 %v1508, %v1507
    %v1813 = vpack.c.b16 %v1510, %v1509
    %v1814 = vpack.c.b16 %v1512, %v1511
    %v1815 = vpack.c.b16 %v1514, %v1513
    %v1816 = vpack.c.b16 %v1516, %v1515
    %v1817 = vpack.c.b16 %v1518, %v1517
    %v1818 = vpack.c.b16 %v1520, %v1519
    %v1819 = vpack.c.b16 %v1522, %v1521
    %v1820 = vpack.c.b16 %v1524, %v1523
    %v1821 = vpack.c.b16 %v1526, %v1525
    %v1822 = vpack.c.b16 %v1528, %v1527
    %v1823 = vpack.c.b16 %v1530, %v1529
    %v1824 = vpack.c.b16 %v1532, %v1531
    %v1825 = vpack.c.b16 %v1534, %v1533
    %v1826 = vpack.c.b16 %v1536, %v1535
    %v1827 = vpack.c.b16 %v1538, %v1537
    %v1828 = vpack.c.b16 %v1540, %v1539
    %v1829 = vpack.c.b16 %v1542, %v1541
    %v1830 = vpack.c.b16 %v1544, %v1543
    %v1831 = vpack.c.b16 %v1546, %v1545
    %v1832 = vpack.c.b16 %v1548, %v1547
    %v1833 = vpack.c.b16 %v1550, %v1549
    %v1834 = vpack.c.b16 %v1552, %v1551
    %v1835 = vpack.c.b16 %v1554, %v1553
    %v1836 = vpack.c.b16 %v1556, %v1555
    %v1837 = vpack.c.b16 %v1558, %v1557
    %v1838 = vpack.c.b16 %v1560, %v1559
    %v1839 = vpack.c.b16 %v1562, %v1561
    %v1840 = vpack.c.b16 %v1564, %v1563
    %v1841 = vpack.c.b16 %v1566, %v1565
    %v1842 = vpack.c.b16 %v1568, %v1567
    %v1843 = vpack.c.b16 %v1570, %v1569
    %v1844 = vpack.c.b16 %v1572, %v1571
    %v1845 = vpack.c.b16 %v1574, %v1573
    %v1846 = vpack.c.b16 %v1576, %v1575
    %v1847 = vpack.c.b16 %v1578, %v1577
    %v1848 = vpack.c.b16 %v1580, %v1579
    %v1849 = vpack.c.b16 %v1582, %v1581
    %v1850 = vpack.c.b16 %v1584, %v1583
    %v1851 = vpack.c.b16 %v1586, %v1585
    %v1852 = vpack.c.b16 %v1588, %v1587
    %v1853 = vpack.c.b16 %v1590, %v1589
    %v1854 = vpack.c.b16 %v1592, %v1591
    %v1855 = vpack.c.b16 %v1594, %v1593
    %v1856 = vpack.c.b16 %v1596, %v1595
    %v1857 = vpack.c.b16 %v1598, %v1597
    %v1858 = vpack.c.b16 %v1600, %v1599
    %v1859 = vpack.c.b16 %v1602, %v1601
    %v1860 = vpack.c.b16 %v1604, %v1603
    %v1861 = vpack.c.b16 %v1606, %v1605
    %v1862 = vpack.c.b16 %v1608, %v1607
    %v1863 = vpack.c.b16 %v1610, %v1609
    %v1864 = vpack.c.b16 %v1612, %v1611
    %vm2117 = vcmask 523264
    %v2118 = vsel %vm2117, %v573, 0
    %2120 = vmatpush.bf16.msra.mxu0 %v1620
    %2121 = vmatpush.bf16.msra.mxu0 %v1619
    %2122 = vmatpush.bf16.msra.mxu0 %v1618
    %2123 = vmatpush.bf16.msra.mxu0 %v1617
    %2124 = vmatpush.bf16.msra.mxu0 %v1616
    %2125 = vmatpush.bf16.msra.mxu0 %v1615
    %2126 = vmatpush.bf16.msra.mxu0 %v1614
    %2127 = vmatpush.bf16.msra.mxu0 %v1613
    %2128 = vmatmul.bf16.gmra.mxu0 %v536
    %v2129 = vpop.f32.mrf.mxu0
    %v2130 = vadd.f32 %v532, %v2129
    %v2131 = vpop.f32.mrf.mxu0
    %2132 = vdwg.mxu0
    %2133 = vmatpush.bf16.msra.mxu0 %v1628
    %2134 = vmatpush.bf16.msra.mxu0 %v1627
    %2135 = vmatpush.bf16.msra.mxu0 %v1626
    %2136 = vmatpush.bf16.msra.mxu0 %v1625
    %2137 = vmatpush.bf16.msra.mxu0 %v1624
    %2138 = vmatpush.bf16.msra.mxu0 %v1623
    %2139 = vmatpush.bf16.msra.mxu0 %v1622
    %2140 = vmatpush.bf16.msra.mxu0 %v1621
    %2141 = vmatmul.bf16.gmra.mxu0 %v537
    %v2142 = vpop.f32.mrf.mxu0
    %v2143 = vadd.f32 %v2130, %v2142
    %v2144 = vpop.f32.mrf.mxu0
    %2145 = vdwg.mxu0
    %2146 = vmatpush.bf16.msra.mxu0 %v1636
    %2147 = vmatpush.bf16.msra.mxu0 %v1635
    %2148 = vmatpush.bf16.msra.mxu0 %v1634
    %2149 = vmatpush.bf16.msra.mxu0 %v1633
    %2150 = vmatpush.bf16.msra.mxu0 %v1632
    %2151 = vmatpush.bf16.msra.mxu0 %v1631
    %2152 = vmatpush.bf16.msra.mxu0 %v1630
    %2153 = vmatpush.bf16.msra.mxu0 %v1629
    %2154 = vmatmul.bf16.gmra.mxu0 %v538
    %v2155 = vpop.f32.mrf.mxu0
    %v2156 = vadd.f32 %v2143, %v2155
    %v2157 = vpop.f32.mrf.mxu0
    %2158 = vdwg.mxu0
    %2159 = vmatpush.bf16.msra.mxu0 %v1644
    %2160 = vmatpush.bf16.msra.mxu0 %v1643
    %2161 = vmatpush.bf16.msra.mxu0 %v1642
    %2162 = vmatpush.bf16.msra.mxu0 %v1641
    %2163 = vmatpush.bf16.msra.mxu0 %v1640
    %2164 = vmatpush.bf16.msra.mxu0 %v1639
    %2165 = vmatpush.bf16.msra.mxu0 %v1638
    %2166 = vmatpush.bf16.msra.mxu0 %v1637
    %2167 = vmatmul.bf16.gmra.mxu0 %v539
    %v2168 = vpop.f32.mrf.mxu0
    %v2169 = vadd.f32 %v2156, %v2168
    %v2170 = vpop.f32.mrf.mxu0
    %2171 = vdwg.mxu0
    %2172 = vmatpush.bf16.msra.mxu0 %v1652
    %2173 = vmatpush.bf16.msra.mxu0 %v1651
    %2174 = vmatpush.bf16.msra.mxu0 %v1650
    %2175 = vmatpush.bf16.msra.mxu0 %v1649
    %2176 = vmatpush.bf16.msra.mxu0 %v1648
    %2177 = vmatpush.bf16.msra.mxu0 %v1647
    %2178 = vmatpush.bf16.msra.mxu0 %v1646
    %2179 = vmatpush.bf16.msra.mxu0 %v1645
    %2180 = vmatmul.bf16.gmra.mxu0 %v540
    %v2181 = vpop.f32.mrf.mxu0
    %v2182 = vadd.f32 %v2169, %v2181
    %v2183 = vpop.f32.mrf.mxu0
    %2184 = vdwg.mxu0
    %2185 = vmatpush.bf16.msra.mxu0 %v1660
    %2186 = vmatpush.bf16.msra.mxu0 %v1659
    %2187 = vmatpush.bf16.msra.mxu0 %v1658
    %2188 = vmatpush.bf16.msra.mxu0 %v1657
    %2189 = vmatpush.bf16.msra.mxu0 %v1656
    %2190 = vmatpush.bf16.msra.mxu0 %v1655
    %2191 = vmatpush.bf16.msra.mxu0 %v1654
    %2192 = vmatpush.bf16.msra.mxu0 %v1653
    %2193 = vmatmul.bf16.gmra.mxu0 %v541
    %v2194 = vpop.f32.mrf.mxu0
    %v2195 = vadd.f32 %v2182, %v2194
    %v2196 = vpop.f32.mrf.mxu0
    %2197 = vdwg.mxu0
    %2198 = vmatpush.bf16.msra.mxu0 %v1668
    %2199 = vmatpush.bf16.msra.mxu0 %v1667
    %2200 = vmatpush.bf16.msra.mxu0 %v1666
    %2201 = vmatpush.bf16.msra.mxu0 %v1665
    %2202 = vmatpush.bf16.msra.mxu0 %v1664
    %2203 = vmatpush.bf16.msra.mxu0 %v1663
    %2204 = vmatpush.bf16.msra.mxu0 %v1662
    %2205 = vmatpush.bf16.msra.mxu0 %v1661
    %2206 = vmatmul.bf16.gmra.mxu0 %v542
    %v2207 = vpop.f32.mrf.mxu0
    %v2208 = vadd.f32 %v2195, %v2207
    %v2209 = vpop.f32.mrf.mxu0
    %2210 = vdwg.mxu0
    %2211 = vmatpush.bf16.msra.mxu0 %v1676
    %2212 = vmatpush.bf16.msra.mxu0 %v1675
    %2213 = vmatpush.bf16.msra.mxu0 %v1674
    %2214 = vmatpush.bf16.msra.mxu0 %v1673
    %2215 = vmatpush.bf16.msra.mxu0 %v1672
    %2216 = vmatpush.bf16.msra.mxu0 %v1671
    %2217 = vmatpush.bf16.msra.mxu0 %v1670
    %2218 = vmatpush.bf16.msra.mxu0 %v1669
    %2219 = vmatmul.bf16.gmra.mxu0 %v543
    %v2220 = vpop.f32.mrf.mxu0
    %v2221 = vadd.f32 %v2208, %v2220
    %v2222 = vpop.f32.mrf.mxu0
    %2223 = vdwg.mxu0
    %2224 = vmatpush.bf16.msra.mxu0 %v1684
    %2225 = vmatpush.bf16.msra.mxu0 %v1683
    %2226 = vmatpush.bf16.msra.mxu0 %v1682
    %2227 = vmatpush.bf16.msra.mxu0 %v1681
    %2228 = vmatpush.bf16.msra.mxu0 %v1680
    %2229 = vmatpush.bf16.msra.mxu0 %v1679
    %2230 = vmatpush.bf16.msra.mxu0 %v1678
    %2231 = vmatpush.bf16.msra.mxu0 %v1677
    %2232 = vmatmul.bf16.gmra.mxu0 %v546
    %v2233 = vpop.f32.mrf.mxu0
    %v2234 = vadd.f32 %v2221, %v2233
    %v2235 = vpop.f32.mrf.mxu0
    %2236 = vdwg.mxu0
    %2237 = vmatpush.bf16.msra.mxu0 %v1692
    %2238 = vmatpush.bf16.msra.mxu0 %v1691
    %2239 = vmatpush.bf16.msra.mxu0 %v1690
    %2240 = vmatpush.bf16.msra.mxu0 %v1689
    %2241 = vmatpush.bf16.msra.mxu0 %v1688
    %2242 = vmatpush.bf16.msra.mxu0 %v1687
    %2243 = vmatpush.bf16.msra.mxu0 %v1686
    %2244 = vmatpush.bf16.msra.mxu0 %v1685
    %2245 = vmatmul.bf16.gmra.mxu0 %v547
    %v2246 = vpop.f32.mrf.mxu0
    %v2247 = vadd.f32 %v2234, %v2246
    %v2248 = vpop.f32.mrf.mxu0
    %2249 = vdwg.mxu0
    %2250 = vmatpush.bf16.msra.mxu0 %v1700
    %2251 = vmatpush.bf16.msra.mxu0 %v1699
    %2252 = vmatpush.bf16.msra.mxu0 %v1698
    %2253 = vmatpush.bf16.msra.mxu0 %v1697
    %2254 = vmatpush.bf16.msra.mxu0 %v1696
    %2255 = vmatpush.bf16.msra.mxu0 %v1695
    %2256 = vmatpush.bf16.msra.mxu0 %v1694
    %2257 = vmatpush.bf16.msra.mxu0 %v1693
    %2258 = vmatmul.bf16.gmra.mxu0 %v548
    %v2259 = vpop.f32.mrf.mxu0
    %v2260 = vadd.f32 %v2247, %v2259
    %v2261 = vpop.f32.mrf.mxu0
    %2262 = vdwg.mxu0
    %2263 = vmatpush.bf16.msra.mxu0 %v1708
    %2264 = vmatpush.bf16.msra.mxu0 %v1707
    %2265 = vmatpush.bf16.msra.mxu0 %v1706
    %2266 = vmatpush.bf16.msra.mxu0 %v1705
    %2267 = vmatpush.bf16.msra.mxu0 %v1704
    %2268 = vmatpush.bf16.msra.mxu0 %v1703
    %2269 = vmatpush.bf16.msra.mxu0 %v1702
    %2270 = vmatpush.bf16.msra.mxu0 %v1701
    %2271 = vmatmul.bf16.gmra.mxu0 %v549
    %v2272 = vpop.f32.mrf.mxu0
    %v2273 = vadd.f32 %v2260, %v2272
    %v2274 = vpop.f32.mrf.mxu0
    %2275 = vdwg.mxu0
    %2276 = vmatpush.bf16.msra.mxu0 %v1716
    %2277 = vmatpush.bf16.msra.mxu0 %v1715
    %2278 = vmatpush.bf16.msra.mxu0 %v1714
    %2279 = vmatpush.bf16.msra.mxu0 %v1713
    %2280 = vmatpush.bf16.msra.mxu0 %v1712
    %2281 = vmatpush.bf16.msra.mxu0 %v1711
    %2282 = vmatpush.bf16.msra.mxu0 %v1710
    %2283 = vmatpush.bf16.msra.mxu0 %v1709
    %2284 = vmatmul.bf16.gmra.mxu0 %v550
    %v2285 = vpop.f32.mrf.mxu0
    %v2286 = vadd.f32 %v2273, %v2285
    %v2287 = vpop.f32.mrf.mxu0
    %2288 = vdwg.mxu0
    %2289 = vmatpush.bf16.msra.mxu0 %v1724
    %2290 = vmatpush.bf16.msra.mxu0 %v1723
    %2291 = vmatpush.bf16.msra.mxu0 %v1722
    %2292 = vmatpush.bf16.msra.mxu0 %v1721
    %2293 = vmatpush.bf16.msra.mxu0 %v1720
    %2294 = vmatpush.bf16.msra.mxu0 %v1719
    %2295 = vmatpush.bf16.msra.mxu0 %v1718
    %2296 = vmatpush.bf16.msra.mxu0 %v1717
    %2297 = vmatmul.bf16.gmra.mxu0 %v551
    %v2298 = vpop.f32.mrf.mxu0
    %v2299 = vadd.f32 %v2286, %v2298
    %v2300 = vpop.f32.mrf.mxu0
    %2301 = vdwg.mxu0
    %2302 = vmatpush.bf16.msra.mxu0 %v1732
    %2303 = vmatpush.bf16.msra.mxu0 %v1731
    %2304 = vmatpush.bf16.msra.mxu0 %v1730
    %2305 = vmatpush.bf16.msra.mxu0 %v1729
    %2306 = vmatpush.bf16.msra.mxu0 %v1728
    %2307 = vmatpush.bf16.msra.mxu0 %v1727
    %2308 = vmatpush.bf16.msra.mxu0 %v1726
    %2309 = vmatpush.bf16.msra.mxu0 %v1725
    %2310 = vmatmul.bf16.gmra.mxu0 %v552
    %v2311 = vpop.f32.mrf.mxu0
    %v2312 = vadd.f32 %v2299, %v2311
    %v2313 = vpop.f32.mrf.mxu0
    %2314 = vdwg.mxu0
    %2315 = vmatpush.bf16.msra.mxu0 %v1740
    %2316 = vmatpush.bf16.msra.mxu0 %v1739
    %2317 = vmatpush.bf16.msra.mxu0 %v1738
    %2318 = vmatpush.bf16.msra.mxu0 %v1737
    %2319 = vmatpush.bf16.msra.mxu0 %v1736
    %2320 = vmatpush.bf16.msra.mxu0 %v1735
    %2321 = vmatpush.bf16.msra.mxu0 %v1734
    %2322 = vmatpush.bf16.msra.mxu0 %v1733
    %2323 = vmatmul.bf16.gmra.mxu0 %v553
    %v2324 = vpop.f32.mrf.mxu0
    %v2325 = vadd.f32 %v2312, %v2324
    %v2326 = vpop.f32.mrf.mxu0
    %2327 = vdwg.mxu0
    %2328 = vmatpush.bf16.msra.mxu0 %v1748
    %2329 = vmatpush.bf16.msra.mxu0 %v1747
    %2330 = vmatpush.bf16.msra.mxu0 %v1746
    %2331 = vmatpush.bf16.msra.mxu0 %v1745
    %2332 = vmatpush.bf16.msra.mxu0 %v1744
    %2333 = vmatpush.bf16.msra.mxu0 %v1743
    %2334 = vmatpush.bf16.msra.mxu0 %v1742
    %2335 = vmatpush.bf16.msra.mxu0 %v1741
    %2336 = vmatmul.bf16.gmra.mxu0 %v556
    %v2337 = vpop.f32.mrf.mxu0
    %v2338 = vadd.f32 %v2325, %v2337
    %v2339 = vpop.f32.mrf.mxu0
    %2340 = vdwg.mxu0
    %2341 = vmatpush.bf16.msra.mxu0 %v1756
    %2342 = vmatpush.bf16.msra.mxu0 %v1755
    %2343 = vmatpush.bf16.msra.mxu0 %v1754
    %2344 = vmatpush.bf16.msra.mxu0 %v1753
    %2345 = vmatpush.bf16.msra.mxu0 %v1752
    %2346 = vmatpush.bf16.msra.mxu0 %v1751
    %2347 = vmatpush.bf16.msra.mxu0 %v1750
    %2348 = vmatpush.bf16.msra.mxu0 %v1749
    %2349 = vmatmul.bf16.gmra.mxu0 %v557
    %v2350 = vpop.f32.mrf.mxu0
    %v2351 = vadd.f32 %v2338, %v2350
    %v2352 = vpop.f32.mrf.mxu0
    %2353 = vdwg.mxu0
    %2354 = vmatpush.bf16.msra.mxu0 %v1764
    %2355 = vmatpush.bf16.msra.mxu0 %v1763
    %2356 = vmatpush.bf16.msra.mxu0 %v1762
    %2357 = vmatpush.bf16.msra.mxu0 %v1761
    %2358 = vmatpush.bf16.msra.mxu0 %v1760
    %2359 = vmatpush.bf16.msra.mxu0 %v1759
    %2360 = vmatpush.bf16.msra.mxu0 %v1758
    %2361 = vmatpush.bf16.msra.mxu0 %v1757
    %2362 = vmatmul.bf16.gmra.mxu0 %v558
    %v2363 = vpop.f32.mrf.mxu0
    %v2364 = vadd.f32 %v2351, %v2363
    %v2365 = vpop.f32.mrf.mxu0
    %2366 = vdwg.mxu0
    %2367 = vmatpush.bf16.msra.mxu0 %v1772
    %2368 = vmatpush.bf16.msra.mxu0 %v1771
    %2369 = vmatpush.bf16.msra.mxu0 %v1770
    %2370 = vmatpush.bf16.msra.mxu0 %v1769
    %2371 = vmatpush.bf16.msra.mxu0 %v1768
    %2372 = vmatpush.bf16.msra.mxu0 %v1767
    %2373 = vmatpush.bf16.msra.mxu0 %v1766
    %2374 = vmatpush.bf16.msra.mxu0 %v1765
    %2375 = vmatmul.bf16.gmra.mxu0 %v559
    %v2376 = vpop.f32.mrf.mxu0
    %v2377 = vadd.f32 %v2364, %v2376
    %v2378 = vpop.f32.mrf.mxu0
    %2379 = vdwg.mxu0
    %2380 = vmatpush.bf16.msra.mxu0 %v1780
    %2381 = vmatpush.bf16.msra.mxu0 %v1779
    %2382 = vmatpush.bf16.msra.mxu0 %v1778
    %2383 = vmatpush.bf16.msra.mxu0 %v1777
    %2384 = vmatpush.bf16.msra.mxu0 %v1776
    %2385 = vmatpush.bf16.msra.mxu0 %v1775
    %2386 = vmatpush.bf16.msra.mxu0 %v1774
    %2387 = vmatpush.bf16.msra.mxu0 %v1773
    %2388 = vmatmul.bf16.gmra.mxu0 %v560
    %v2389 = vpop.f32.mrf.mxu0
    %v2390 = vadd.f32 %v2377, %v2389
    %v2391 = vpop.f32.mrf.mxu0
    %2392 = vdwg.mxu0
    %2393 = vmatpush.bf16.msra.mxu0 %v1788
    %2394 = vmatpush.bf16.msra.mxu0 %v1787
    %2395 = vmatpush.bf16.msra.mxu0 %v1786
    %2396 = vmatpush.bf16.msra.mxu0 %v1785
    %2397 = vmatpush.bf16.msra.mxu0 %v1784
    %2398 = vmatpush.bf16.msra.mxu0 %v1783
    %2399 = vmatpush.bf16.msra.mxu0 %v1782
    %2400 = vmatpush.bf16.msra.mxu0 %v1781
    %2401 = vmatmul.bf16.gmra.mxu0 %v561
    %v2402 = vpop.f32.mrf.mxu0
    %v2403 = vadd.f32 %v2390, %v2402
    %v2404 = vpop.f32.mrf.mxu0
    %2405 = vdwg.mxu0
    %2406 = vmatpush.bf16.msra.mxu0 %v1796
    %2407 = vmatpush.bf16.msra.mxu0 %v1795
    %2408 = vmatpush.bf16.msra.mxu0 %v1794
    %2409 = vmatpush.bf16.msra.mxu0 %v1793
    %2410 = vmatpush.bf16.msra.mxu0 %v1792
    %2411 = vmatpush.bf16.msra.mxu0 %v1791
    %2412 = vmatpush.bf16.msra.mxu0 %v1790
    %2413 = vmatpush.bf16.msra.mxu0 %v1789
    %2414 = vmatmul.bf16.gmra.mxu0 %v562
    %v2415 = vpop.f32.mrf.mxu0
    %v2416 = vadd.f32 %v2403, %v2415
    %v2417 = vpop.f32.mrf.mxu0
    %2418 = vdwg.mxu0
    %2419 = vmatpush.bf16.msra.mxu0 %v1804
    %2420 = vmatpush.bf16.msra.mxu0 %v1803
    %2421 = vmatpush.bf16.msra.mxu0 %v1802
    %2422 = vmatpush.bf16.msra.mxu0 %v1801
    %2423 = vmatpush.bf16.msra.mxu0 %v1800
    %2424 = vmatpush.bf16.msra.mxu0 %v1799
    %2425 = vmatpush.bf16.msra.mxu0 %v1798
    %2426 = vmatpush.bf16.msra.mxu0 %v1797
    %2427 = vmatmul.bf16.gmra.mxu0 %v563
    %v2428 = vpop.f32.mrf.mxu0
    %v2429 = vadd.f32 %v2416, %v2428
    %v2430 = vpop.f32.mrf.mxu0
    %2431 = vdwg.mxu0
    %2432 = vmatpush.bf16.msra.mxu0 %v1812
    %2433 = vmatpush.bf16.msra.mxu0 %v1811
    %2434 = vmatpush.bf16.msra.mxu0 %v1810
    %2435 = vmatpush.bf16.msra.mxu0 %v1809
    %2436 = vmatpush.bf16.msra.mxu0 %v1808
    %2437 = vmatpush.bf16.msra.mxu0 %v1807
    %2438 = vmatpush.bf16.msra.mxu0 %v1806
    %2439 = vmatpush.bf16.msra.mxu0 %v1805
    %2440 = vmatmul.bf16.gmra.mxu0 %v566
    %v2441 = vpop.f32.mrf.mxu0
    %v2442 = vadd.f32 %v2429, %v2441
    %v2443 = vpop.f32.mrf.mxu0
    %2444 = vdwg.mxu0
    %2445 = vmatpush.bf16.msra.mxu0 %v1820
    %2446 = vmatpush.bf16.msra.mxu0 %v1819
    %2447 = vmatpush.bf16.msra.mxu0 %v1818
    %2448 = vmatpush.bf16.msra.mxu0 %v1817
    %2449 = vmatpush.bf16.msra.mxu0 %v1816
    %2450 = vmatpush.bf16.msra.mxu0 %v1815
    %2451 = vmatpush.bf16.msra.mxu0 %v1814
    %2452 = vmatpush.bf16.msra.mxu0 %v1813
    %2453 = vmatmul.bf16.gmra.mxu0 %v567
    %v2454 = vpop.f32.mrf.mxu0
    %v2455 = vadd.f32 %v2442, %v2454
    %v2456 = vpop.f32.mrf.mxu0
    %2457 = vdwg.mxu0
    %2458 = vmatpush.bf16.msra.mxu0 %v1828
    %2459 = vmatpush.bf16.msra.mxu0 %v1827
    %2460 = vmatpush.bf16.msra.mxu0 %v1826
    %2461 = vmatpush.bf16.msra.mxu0 %v1825
    %2462 = vmatpush.bf16.msra.mxu0 %v1824
    %2463 = vmatpush.bf16.msra.mxu0 %v1823
    %2464 = vmatpush.bf16.msra.mxu0 %v1822
    %2465 = vmatpush.bf16.msra.mxu0 %v1821
    %2466 = vmatmul.bf16.gmra.mxu0 %v568
    %v2467 = vpop.f32.mrf.mxu0
    %v2468 = vadd.f32 %v2455, %v2467
    %v2469 = vpop.f32.mrf.mxu0
    %2470 = vdwg.mxu0
    %2471 = vmatpush.bf16.msra.mxu0 %v1836
    %2472 = vmatpush.bf16.msra.mxu0 %v1835
    %2473 = vmatpush.bf16.msra.mxu0 %v1834
    %2474 = vmatpush.bf16.msra.mxu0 %v1833
    %2475 = vmatpush.bf16.msra.mxu0 %v1832
    %2476 = vmatpush.bf16.msra.mxu0 %v1831
    %2477 = vmatpush.bf16.msra.mxu0 %v1830
    %2478 = vmatpush.bf16.msra.mxu0 %v1829
    %2479 = vmatmul.bf16.gmra.mxu0 %v569
    %v2480 = vpop.f32.mrf.mxu0
    %v2481 = vadd.f32 %v2468, %v2480
    %v2482 = vpop.f32.mrf.mxu0
    %2483 = vdwg.mxu0
    %2484 = vmatpush.bf16.msra.mxu0 %v1844
    %2485 = vmatpush.bf16.msra.mxu0 %v1843
    %2486 = vmatpush.bf16.msra.mxu0 %v1842
    %2487 = vmatpush.bf16.msra.mxu0 %v1841
    %2488 = vmatpush.bf16.msra.mxu0 %v1840
    %2489 = vmatpush.bf16.msra.mxu0 %v1839
    %2490 = vmatpush.bf16.msra.mxu0 %v1838
    %2491 = vmatpush.bf16.msra.mxu0 %v1837
    %2492 = vmatmul.bf16.gmra.mxu0 %v570
    %v2493 = vpop.f32.mrf.mxu0
    %v2494 = vadd.f32 %v2481, %v2493
    %v2495 = vpop.f32.mrf.mxu0
    %2496 = vdwg.mxu0
    %2497 = vmatpush.bf16.msra.mxu0 %v1852
    %2498 = vmatpush.bf16.msra.mxu0 %v1851
    %2499 = vmatpush.bf16.msra.mxu0 %v1850
    %2500 = vmatpush.bf16.msra.mxu0 %v1849
    %2501 = vmatpush.bf16.msra.mxu0 %v1848
    %2502 = vmatpush.bf16.msra.mxu0 %v1847
    %2503 = vmatpush.bf16.msra.mxu0 %v1846
    %2504 = vmatpush.bf16.msra.mxu0 %v1845
    %2505 = vmatmul.bf16.gmra.mxu0 %v571
    %v2506 = vpop.f32.mrf.mxu0
    %v2507 = vadd.f32 %v2494, %v2506
    %v2508 = vpop.f32.mrf.mxu0
    %2509 = vdwg.mxu0
    %2510 = vmatpush.bf16.msra.mxu0 %v1860
    %2511 = vmatpush.bf16.msra.mxu0 %v1859
    %2512 = vmatpush.bf16.msra.mxu0 %v1858
    %2513 = vmatpush.bf16.msra.mxu0 %v1857
    %2514 = vmatpush.bf16.msra.mxu0 %v1856
    %2515 = vmatpush.bf16.msra.mxu0 %v1855
    %2516 = vmatpush.bf16.msra.mxu0 %v1854
    %2517 = vmatpush.bf16.msra.mxu0 %v1853
    %2518 = vmatmul.bf16.gmra.mxu0 %v572
    %v2519 = vpop.f32.mrf.mxu0
    %v2520 = vadd.f32 %v2507, %v2519
    %v2521 = vpop.f32.mrf.mxu0
    %2522 = vdwg.mxu0
    %2523 = vmatpush.bf16.msra.mxu0 0
    %2524 = vmatpush.bf16.msra.mxu0 0
    %2525 = vmatpush.bf16.msra.mxu0 0
    %2526 = vmatpush.bf16.msra.mxu0 0
    %2527 = vmatpush.bf16.msra.mxu0 %v1864
    %2528 = vmatpush.bf16.msra.mxu0 %v1863
    %2529 = vmatpush.bf16.msra.mxu0 %v1862
    %2530 = vmatpush.bf16.msra.mxu0 %v1861
    %2531 = vmatmul.bf16.gmra.mxu0 %v2118
    %v2532 = vpop.f32.mrf.mxu0
    %v2533 = vadd.f32 %v2520, %v2532
    %v2534 = vpop.f32.mrf.mxu0
    %2535 = vdwg.mxu0
    %v2536 = vmax.f32 %v2533, 0.0
    %v2537 = vpack.c.bf16 %v2536, %v2536
    %v2538 = vld [vmem:[%s3] sm:$0xf]
    %v2539 = vld [vmem:[%s3 + $0x4] sm:$0xf]
    %v2540 = vld [vmem:[%s3 + $0x8] sm:$0xf]
    %v2541 = vld [vmem:[%s3 + $0xc] sm:$0xf]
    %v2542 = vld [vmem:[%s3 + $0x10] sm:$0xf]
    %v2543 = vld [vmem:[%s3 + $0x14] sm:$0xf]
    %v2544 = vld [vmem:[%s3 + $0x18] sm:$0xf]
    %v2545 = vld [vmem:[%s3 + $0x1c] sm:$0xf]
    %v2546 = vld [vmem:[%s3 + $0x20] sm:$0xf]
    %v2547 = vld [vmem:[%s3 + $0x24] sm:$0xf]
    %v2548 = vld [vmem:[%s3 + $0x28] sm:$0xf]
    %v2549 = vld [vmem:[%s3 + $0x2c] sm:$0xf]
    %v2550 = vld [vmem:[%s3 + $0x30] sm:$0xf]
    %v2551 = vld [vmem:[%s3 + $0x34] sm:$0xf]
    %v2552 = vld [vmem:[%s3 + $0x38] sm:$0xf]
    %v2553 = vld [vmem:[%s3 + $0x3c] sm:$0xf]
    %v2554 = vld [vmem:[%s4] sm:$0x1]
    %v2556 = vperm.slane %v2554, 0
    %v2574 = vunpack.c.l.b16 %v2538
    %v2575 = vunpack.c.l.b16 %v2539
    %v2576 = vunpack.c.l.b16 %v2540
    %v2577 = vunpack.c.l.b16 %v2541
    %v2578 = vunpack.c.l.b16 %v2542
    %v2579 = vunpack.c.l.b16 %v2543
    %v2580 = vunpack.c.l.b16 %v2544
    %v2581 = vunpack.c.l.b16 %v2545
    %v2582 = vunpack.c.l.b16 %v2546
    %v2583 = vunpack.c.l.b16 %v2547
    %v2584 = vunpack.c.l.b16 %v2548
    %v2585 = vunpack.c.l.b16 %v2549
    %v2586 = vunpack.c.l.b16 %v2550
    %v2587 = vunpack.c.l.b16 %v2551
    %v2588 = vunpack.c.l.b16 %v2552
    %v2589 = vunpack.c.l.b16 %v2553
    %v2590 = vpack.c.b16 %v2575, %v2574
    %v2591 = vpack.c.b16 %v2577, %v2576
    %v2592 = vpack.c.b16 %v2579, %v2578
    %v2593 = vpack.c.b16 %v2581, %v2580
    %v2594 = vpack.c.b16 %v2583, %v2582
    %v2595 = vpack.c.b16 %v2585, %v2584
    %v2596 = vpack.c.b16 %v2587, %v2586
    %v2597 = vpack.c.b16 %v2589, %v2588
    %2606 = vmatpush.bf16.msra.mxu0 %v2597
    %2607 = vmatpush.bf16.msra.mxu0 %v2596
    %2608 = vmatpush.bf16.msra.mxu0 %v2595
    %2609 = vmatpush.bf16.msra.mxu0 %v2594
    %2610 = vmatpush.bf16.msra.mxu0 %v2593
    %2611 = vmatpush.bf16.msra.mxu0 %v2592
    %2612 = vmatpush.bf16.msra.mxu0 %v2591
    %2613 = vmatpush.bf16.msra.mxu0 %v2590
    %2614 = vmatmul.bf16.gmra.mxu0 %v2537
    %v2615 = vpop.f32.mrf.mxu0
    %v2616 = vadd.f32 %v2556, %v2615
    %v2617 = vpop.f32.mrf.mxu0
    %2618 = vdwg.mxu0
    %vm2619 = vcmask 74752
    %v2620 = vsel %vm2619, %v2616, -inf
    %2621 = vmax.xlane.f32.xlu0 %v2620
    %v2622 = vpop.xlane.xlu0 %2621
    %v2623 = vsub.f32 %v2616, %v2622
    %v2624 = vmul.f32 %v2623, 1.442695
    %v2625 = vpow.pop %v2624
    %v2626 = vsel %vm2619, %v2625, 0.0
    %2627 = vadd.xlane.f32.xlu0 %v2626
    %v2628 = vpop.xlane.xlu0 %2627
    %v2629 = vrcp.pop %v2628
    %v2630 = vmul.f32 %v2625, %v2629
    %2631 = vst.msk [vmem:[#allocation2] sm:$0x3] %vm2619, %v2630
    // Predicated region
    $region22: #{net_forward.7} parent=1 // pred_check
      _
    $region23: #{net_forward.7} parent=1 // pred_check_branch
      %2633 = sbr.rel (0) target = $region25
    $region24: #{net_forward.7} parent=1 // pred_region
      %2635 = vsyncadd [#allocation3], 0
      %s2637 = sshll.u32 [#allocation2], 4
      %s2638 = int_to_ptr.vmem [resolvable:$true] %s2637
      %s2639 = sshll.u32 %s5, 4
      %s2640 = int_to_ptr.hbm [resolvable:$true] %s2639
      %2642 = dma.vmem_to_hbm [thread:$0]  %s2638, 32, %s2640, [#allocation3]
    $region25: #{net_forward.7} parent=1 // pred_fallthru
      _
    // Predicated region
    $region26: #{net_forward.7} parent=1 // pred_check
      _
    $region27: #{net_forward.7} parent=1 // pred_check_branch
      %2644 = sbr.rel (0) target = $region29
    $region28: #{net_forward.7} parent=1 // pred_region
      %2646 = dma.done [#allocation3], 32
    $region29: #{net_forward.7} parent=1 // pred_fallthru
      _
    %2647 = vsyncpa [#allocation3], 1

</llo_original>
